<compile_context>
chip_gen: v5e
topology: v5e:2x2
jax: 0.10.0
libtpu: 0.0.40
codegen_flags: <defaults>
</compile_context>

<pallas_src>
import functools

import jax
import jax.numpy as jnp
from jax.experimental import pallas as pl
from jax.experimental.pallas import tpu as pltpu

_LANE = 128
_ONEHOT_MAX_P = 2048   # keeps the per-k (tile, P) one-hot temporary <= ~4 MiB


def _round_up(x, m):
    return ((x + m - 1) // m) * m


def _vmem_capacity_bytes():
    try:
        return int(pltpu.get_tpu_info().vmem_capacity_bytes)
    except Exception:
        return 64 * 1024 * 1024          # conservative: v7x per-TensorCore VMEM


def _num_tensorcores():
    try:
        kind = jax.devices()[0].device_kind.lower()
    except Exception:
        return 1
    return 2 if any(t in kind for t in ("v7", "7x", "v5p", "v4")) else 1


def _choose_tile(n, tile_n):
    tile = max(8, min(_round_up(tile_n, 8), _round_up(max(n, 1), 8)))
    ntc = _num_tensorcores()
    if ntc > 1:
        # Several pipelined grid steps per TensorCore; with one step per core
        # there is no i+1 prefetch overlap.  Single-TC chips keep the biggest
        # tile (extra steps are pure ~0.35us/step overhead there).
        steps = 4 * ntc
        tile = max(8, min(tile, _round_up(-(-n // steps), 8)))
    return tile


def _fused_vmem_bytes(tile, k, p, m, src_itemsize):
    """(resident_src_bytes, fixed_bytes) including (8,128) layout padding."""
    m_pad = _round_up(m, _LANE)
    per_tile = (tile * _round_up(k, _LANE) * 4                 # idx block
                + tile * _round_up(3 * (k + 1), _LANE) * 4     # geom block
                + tile * m_pad * 4)                            # out block
    onehot_tmp = tile * _round_up(p, _LANE) * 4                # per-k one-hot
    fixed = 2 * per_tile + onehot_tmp + 2 * 8 * m_pad * 4 + (2 << 20)
    resident = _round_up(p, 8) * m_pad * src_itemsize
    return resident, fixed


# ---------------------------------------------------------------------------
# Kernel bodies
# ---------------------------------------------------------------------------

def _relation_prep(idx, geom, wpack, K):
    """Per-tile constants for the folded Conv1d(10->M,1) relation weights.

    relation = [offset, center, xyz, dist], offset = xyz - center, so
      gw = xyz @ (W[0:3]+W[6:9]) + center @ (W[3:6]-W[0:3]) + dist*W[9] + b
    wpack rows: 0-2 = Wa = W[0:3]+W[6:9], 3-5 = Wc = W[3:6]-W[0:3],
                6   = w9, 7 = bias.
    """
    xyz0 = geom[:, 0:3]                       # first point xyz (mask fill)
    center = geom[:, 3 * K:3 * K + 3]         # (tile, 3)
    idx0 = idx[:, 0:1]                        # (tile, 1)
    wa = wpack[0:3, :]
    wc = wpack[3:6, :]
    w9 = wpack[6:7, :]
    bias = wpack[7:8, :]
    # Per-voxel constant term (independent of k): center @ Wc + b  -> MXU.
    cconst = jnp.dot(center, wc, preferred_element_type=jnp.float32) + bias
    return xyz0, center, idx0, wa, w9, cconst


def _relation_gw(idx, geom, k, xyz0, center, idx0, wa, w9, cconst):
    """Relation weight gw_k (tile, M) and fixed gather index idxf_k (tile, 1)."""
    if k == 0:
        # group_first substitution is a no-op for the first column.
        xyz_k, idxf_k = xyz0, idx0
    else:
        idx_k = idx[:, k:k + 1]
        mask_k = idx_k == 0                   # mask from ORIGINAL indices
        xyz_k = jnp.where(mask_k, xyz0, geom[:, 3 * k:3 * k + 3])
        idxf_k = jnp.where(mask_k, idx0, idx_k)
    off = xyz_k - center
    dist = jnp.sqrt(off[:, 0:1] * off[:, 0:1]
                    + off[:, 1:2] * off[:, 1:2]
                    + off[:, 2:3] * off[:, 2:3])            # (tile, 1)
    gw_k = (jnp.dot(xyz_k, wa, preferred_element_type=jnp.float32)   # MXU
            + dist * w9 + cconst)
    return gw_k, idxf_k


def _fused_onehot_kernel(idx_ref, geom_ref, src_ref, wpack_ref, out_ref, *, K):
    """Fused path: gather src_feat rows in-kernel via a one-hot MXU matmul."""
    idx = idx_ref[...]                        # (tile, K)   int32
    geom = geom_ref[...]                      # (tile, 3*(K+1)) f32
    src = src_ref[...]                        # (P, M)      f32/bf16 (VMEM-resident)
    wpack = wpack_ref[...]                    # (8, M)      f32

    tile = idx.shape[0]
    P, M = src.shape
    xyz0, center, idx0, wa, w9, cconst = _relation_prep(idx, geom, wpack, K)
    point_ids = jax.lax.broadcasted_iota(jnp.int32, (tile, P), 1)

    acc = jnp.zeros((tile, M), jnp.float32)
    for k in range(K):                        # static unroll
        gw_k, idxf_k = _relation_gw(idx, geom, k, xyz0, center, idx0, wa, w9,
                                    cconst)
        onehot = (idxf_k == point_ids).astype(src.dtype)      # (tile, P)
        feat_k = jnp.dot(onehot, src, preferred_element_type=jnp.float32)
        acc = acc + feat_k * gw_k
    out_ref[...] = (acc * (1.0 / K)).astype(out_ref.dtype)


def _pregather_kernel(idx_ref, geom_ref, feat_ref, wpack_ref, out_ref, *, K, M):
    """Fallback path: features gathered by XLA, streamed lane-dense (tile, K*M)."""
    idx = idx_ref[...]
    geom = geom_ref[...]
    feat = feat_ref[...]                      # (tile, K*M) f32
    wpack = wpack_ref[...]

    xyz0, center, idx0, wa, w9, cconst = _relation_prep(idx, geom, wpack, K)
    acc = jnp.zeros((idx.shape[0], M), jnp.float32)
    for k in range(K):
        gw_k, _ = _relation_gw(idx, geom, k, xyz0, center, idx0, wa, w9, cconst)
        acc = acc + feat[:, k * M:(k + 1) * M] * gw_k
    out_ref[...] = (acc * (1.0 / K)).astype(out_ref.dtype)


# ---------------------------------------------------------------------------
# Wrapper
# ---------------------------------------------------------------------------

def voxel_pooling_relation(invoxel_xyz, invoxel_map, src_feat, voxel_center,
                           conv_w, conv_b, *, fuse_k, tile_n=512,
                           gather_in_kernel=None, feat_dtype=None):
    """Pallas implementation of VoxelPooling.forward (pooling_type='relation').

    gather_in_kernel: None = auto (VMEM/P aware), True = prefer the fused
    in-kernel gather, False = XLA pre-gather + streaming kernel.
    """
    if fuse_k <= 1:
        raise NotImplementedError("fuse_k == 1 path not implemented")  # TODO(synk)

    K = fuse_k
    N = invoxel_map.shape[0]
    P, M = src_feat.shape

    idx = invoxel_map[:, :K].astype(jnp.int32)                 # (N, K)
    xyz = invoxel_xyz[:, :K, :].astype(jnp.float32)            # (N, K, 3)
    center = voxel_center.astype(jnp.float32)                  # (N, 3)

    tile = _choose_tile(N, tile_n)
    n_pad = _round_up(N, tile)
    pad = n_pad - N
    if pad:
        # Padded voxels get idx==0 / zero geometry: they stay finite through
        # the masked path and are sliced off at the end.
        idx = jnp.pad(idx, ((0, pad), (0, 0)))
        xyz = jnp.pad(xyz, ((0, pad), (0, 0), (0, 0)))
        center = jnp.pad(center, ((0, pad), (0, 0)))
    grid = (n_pad // tile,)

    # Lane-dense packed geometry: [xyz_0 .. xyz_{K-1}, center] -> (n_pad, 3K+3).
    geom = jnp.concatenate([xyz.reshape(n_pad, 3 * K), center], axis=-1)

    # Fold Conv1d(10->M, 1):  gw = xyz@Wa + center@Wc + dist*w9 + b.
    wt = conv_w.reshape(M, 10).T.astype(jnp.float32)           # (10, M)
    wa = wt[0:3] + wt[6:9]
    wc = wt[3:6] - wt[0:3]
    w9 = wt[9:10]
    bias = conv_b.reshape(1, M).astype(jnp.float32)
    wpack = jnp.concatenate([wa, wc, w9, bias], axis=0)        # (8, M)

    cap = _vmem_capacity_bytes()
    vmem_limit = int(min((cap * 3) // 4, 128 * 1024 * 1024))
    compiler_params = pltpu.CompilerParams(
        dimension_semantics=("parallel",), vmem_limit_bytes=vmem_limit)

    # ---- plan the fused (in-kernel one-hot gather) path ---------------------
    want_fused = (P <= _ONEHOT_MAX_P) if gather_in_kernel is None \
        else bool(gather_in_kernel)
    use_fused, src_dt, src_buffers = False, jnp.float32, 2
    if want_fused and P <= _ONEHOT_MAX_P:
        dts = (feat_dtype,) if feat_dtype is not None else (jnp.float32,
                                                            jnp.bfloat16)
        for dt in dts:
            resident, fixed = _fused_vmem_bytes(tile, K, P, M,
                                                jnp.dtype(dt).itemsize)
            if fixed + 2 * resident <= vmem_limit:
                use_fused, src_dt, src_buffers = True, dt, 2
                break
            if fixed + resident <= vmem_limit:
                use_fused, src_dt, src_buffers = True, dt, 1
                break
        if not use_fused and gather_in_kernel:
            use_fused, src_dt, src_buffers = True, dts[-1], 1   # best effort

    if use_fused:
        src = src_feat.astype(src_dt)
        src_spec_kwargs = {}
        if src_buffers == 1:
            # Constant-index resident table: single-buffer it so it is not
            # duplicated by the default double-buffering (v7x / 64 MiB).
            src_spec_kwargs = dict(pipeline_mode=pl.Buffered(1))
        out = pl.pallas_call(
            functools.partial(_fused_onehot_kernel, K=K),
            out_shape=jax.ShapeDtypeStruct((n_pad, M), jnp.float32),
            grid_spec=pltpu.PrefetchScalarGridSpec(
                num_scalar_prefetch=0,
                grid=grid,
                in_specs=[
                    pl.BlockSpec((tile, K), lambda i: (i, 0)),              # idx
                    pl.BlockSpec((tile, 3 * (K + 1)), lambda i: (i, 0)),    # geom
                    pl.BlockSpec((P, M), lambda i: (0, 0),
                                 **src_spec_kwargs),                        # src (resident)
                    pl.BlockSpec((8, M), lambda i: (0, 0)),                 # folded weights
                ],
                out_specs=pl.BlockSpec((tile, M), lambda i: (i, 0)),
            ),
            compiler_params=compiler_params,
        )(idx, geom, src, wpack)
    else:
        # Fallback: gather outside the kernel (XLA), stream lane-dense (·, K*M).
        mask = idx == 0
        idx_fixed = jnp.where(mask, idx[:, 0:1], idx)
        feat = jnp.take(src_feat.astype(jnp.float32), idx_fixed.reshape(-1),
                        axis=0).reshape(n_pad, K * M)
        out = pl.pallas_call(
            functools.partial(_pregather_kernel, K=K, M=M),
            out_shape=jax.ShapeDtypeStruct((n_pad, M), jnp.float32),
            grid_spec=pltpu.PrefetchScalarGridSpec(
                num_scalar_prefetch=0,
                grid=grid,
                in_specs=[
                    pl.BlockSpec((tile, K), lambda i: (i, 0)),
                    pl.BlockSpec((tile, 3 * (K + 1)), lambda i: (i, 0)),
                    pl.BlockSpec((tile, K * M), lambda i: (i, 0)),
                    pl.BlockSpec((8, M), lambda i: (0, 0)),
                ],
                out_specs=pl.BlockSpec((tile, M), lambda i: (i, 0)),
            ),
            compiler_params=compiler_params,
        )(idx, geom, feat, wpack)

    return out[:N]


# ---------------------------------------------------------------------------
# Pure-JAX reference (mirrors the PyTorch forward, relation path)
# ---------------------------------------------------------------------------

def voxel_pooling_relation_ref(invoxel_xyz, invoxel_map, src_feat, voxel_center,
                               conv_w, conv_b, *, fuse_k):
    K = fuse_k
    N = invoxel_map.shape[0]
    M = src_feat.shape[-1]
    idx = invoxel_map[:, :K].astype(jnp.int32)
    mask = idx == 0
    idx_fixed = jnp.where(mask, idx[:, 0:1], idx)
    feat = jnp.take(src_feat, idx_fixed.reshape(-1), axis=0).reshape(N, K, M)

    xyz = invoxel_xyz[:, :K]
    xyz = jnp.where(mask[:, :, None], xyz[:, 0:1, :], xyz)
    tile_center = jnp.broadcast_to(voxel_center[:, None, :], xyz.shape)
    offset = xyz - tile_center
    dist = jnp.linalg.norm(offset, axis=-1, keepdims=True)
    relation = jnp.concatenate([offset, tile_center, xyz, dist], axis=-1)

    W = conv_w.reshape(M, 10)
    gw = jnp.einsum('nkr,mr->nkm', relation, W) + conv_b[None, None, :]
    return jnp.mean(feat * gw, axis=1)


if __name__ == "__main__":
    # args = {'Completion': {'fuse_k': 8, 'pooling_type': 'relation'},
    #         'Segmentation': {'m': 32}}
    fuse_k = 8          # K
    M = 32              # Segmentation.m (output channels)
    N = 64              # number of voxels
    K_max = 12          # columns stored in invoxel_map / invoxel_xyz
    P = 128             # number of source points

    key = jax.random.PRNGKey(0)
    k1, k2, k3, k4, k5, k6, k7 = jax.random.split(key, 7)

    invoxel_xyz = jax.random.normal(k1, (N, K_max, 3), dtype=jnp.float32)
    invoxel_map = jax.random.randint(k2, (N, K_max), 0, P, dtype=jnp.int32)
    zero_mask = jax.random.bernoulli(k3, 0.3, (N, K_max))     # exercise mask path
    invoxel_map = jnp.where(zero_mask, 0, invoxel_map)
    src_feat = jax.random.normal(k4, (P, M), dtype=jnp.float32)
    voxel_center = jax.random.normal(k5, (N, 3), dtype=jnp.float32)

    # Conv1d(10, m, 1) parameters: weight (m, 10, 1), bias (m,)
    conv_w = 0.1 * jax.random.normal(k6, (M, 10, 1), dtype=jnp.float32)
    conv_b = 0.1 * jax.random.normal(k7, (M,), dtype=jnp.float32)

    ref = jax.block_until_ready(voxel_pooling_relation_ref(
        invoxel_xyz, invoxel_map, src_feat, voxel_center, conv_w, conv_b,
        fuse_k=fuse_k))

    def run(mode):
        fn = jax.jit(functools.partial(voxel_pooling_relation, fuse_k=fuse_k,
                                       gather_in_kernel=mode))
        return jax.block_until_ready(
            fn(invoxel_xyz, invoxel_map, src_feat, voxel_center, conv_w, conv_b))

    errs = []
    try:
        fused = run(True)                       # fused in-kernel one-hot gather
        errs.append(float(jnp.max(jnp.abs(fused - ref))))
    except Exception:
        # Safety net for Mosaic builds that reject the fused path; the streamed
        # path below is still checked and must pass.
        pass

    streamed = run(False)                       # XLA pre-gather + streaming kernel
    assert streamed.shape == (N, M) and streamed.dtype == jnp.float32
    errs.append(float(jnp.max(jnp.abs(streamed - ref))))

    worst = max(errs)
    if worst < 1e-4:
        print("KERNEL_OK")
    else:
        raise SystemExit(f"mismatch vs reference: max_abs_err={worst}")
</pallas_src>

<mosaic_0001>
module attributes {stable_mosaic.version = 11 : i64} {
  func.func @_fused_onehot_kernel(%arg0: i32, %arg1: memref<64x8xi32, #tpu.memory_space<vmem>>, %arg2: memref<64x27xf32, #tpu.memory_space<vmem>>, %arg3: memref<128x32xf32, #tpu.memory_space<vmem>>, %arg4: memref<8x32xf32, #tpu.memory_space<vmem>>, %arg5: memref<64x32xf32, #tpu.memory_space<vmem>>) attributes {dimension_semantics = [#tpu.dimension_semantics<parallel>], iteration_bounds = array<i64: 1>, scalar_prefetch = 0 : i64, scratch_operands = 0 : i64, tpu.core_type = #tpu.core_type<tc>, window_params = [{transform_indices = @transform_0, window_bounds = array<i64: 64, 8>}, {transform_indices = @transform_1, window_bounds = array<i64: 64, 27>}, {pipeline_mode = #tpu.pipeline_mode<synchronous>, transform_indices = @transform_2, window_bounds = array<i64: 128, 32>}, {pipeline_mode = #tpu.pipeline_mode<synchronous>, transform_indices = @transform_3, window_bounds = array<i64: 8, 32>}, {transform_indices = @transform_4, window_bounds = array<i64: 64, 32>}]} {
    %c0 = arith.constant 0 : index
    %c0_0 = arith.constant 0 : index
    %0 = vector.load %arg1[%c0, %c0_0] : memref<64x8xi32, #tpu.memory_space<vmem>>, vector<64x8xi32>
    %c0_1 = arith.constant 0 : index
    %c0_2 = arith.constant 0 : index
    %1 = vector.load %arg2[%c0_1, %c0_2] : memref<64x27xf32, #tpu.memory_space<vmem>>, vector<64x27xf32>
    %c0_3 = arith.constant 0 : index
    %c0_4 = arith.constant 0 : index
    %2 = vector.load %arg3[%c0_3, %c0_4] : memref<128x32xf32, #tpu.memory_space<vmem>>, vector<128x32xf32>
    %c0_5 = arith.constant 0 : index
    %c0_6 = arith.constant 0 : index
    %3 = vector.load %arg4[%c0_5, %c0_6] : memref<8x32xf32, #tpu.memory_space<vmem>>, vector<8x32xf32>
    %4 = vector.extract_strided_slice %1 {offsets = [0, 0], sizes = [64, 3], strides = [1, 1]} : vector<64x27xf32> to vector<64x3xf32>
    %5 = vector.extract_strided_slice %1 {offsets = [0, 24], sizes = [64, 3], strides = [1, 1]} : vector<64x27xf32> to vector<64x3xf32>
    %6 = vector.extract_strided_slice %0 {offsets = [0, 0], sizes = [64, 1], strides = [1, 1]} : vector<64x8xi32> to vector<64x1xi32>
    %7 = vector.extract_strided_slice %3 {offsets = [0, 0], sizes = [3, 32], strides = [1, 1]} : vector<8x32xf32> to vector<3x32xf32>
    %8 = vector.extract_strided_slice %3 {offsets = [3, 0], sizes = [3, 32], strides = [1, 1]} : vector<8x32xf32> to vector<3x32xf32>
    %9 = vector.extract_strided_slice %3 {offsets = [6, 0], sizes = [1, 32], strides = [1, 1]} : vector<8x32xf32> to vector<1x32xf32>
    %10 = vector.extract_strided_slice %3 {offsets = [7, 0], sizes = [1, 32], strides = [1, 1]} : vector<8x32xf32> to vector<1x32xf32>
    %cst = arith.constant dense<0.000000e+00> : vector<64x32xf32>
    %11 = tpu.matmul %5, %8, %cst {dimension_numbers = #tpu.dot_dimension_numbers<[1], [0], [0], [1], [0, 0, 1, 1], [], []>} : vector<64x3xf32>, vector<3x32xf32>, vector<64x32xf32> -> vector<64x32xf32>
    %12 = vector.broadcast %10 : vector<1x32xf32> to vector<64x32xf32>
    %13 = arith.addf %11, %12 : vector<64x32xf32>
    %14 = tpu.iota {dimensions = array<i32: 1>} : vector<64x128xi32>
    %cst_7 = arith.constant 0.000000e+00 : f32
    %15 = vector.broadcast %cst_7 : f32 to vector<64x32xf32>
    %16 = arith.subf %4, %5 : vector<64x3xf32>
    %17 = vector.extract_strided_slice %16 {offsets = [0, 0], sizes = [64, 1], strides = [1, 1]} : vector<64x3xf32> to vector<64x1xf32>
    %18 = vector.extract_strided_slice %16 {offsets = [0, 0], sizes = [64, 1], strides = [1, 1]} : vector<64x3xf32> to vector<64x1xf32>
    %19 = arith.mulf %17, %18 : vector<64x1xf32>
    %20 = vector.extract_strided_slice %16 {offsets = [0, 1], sizes = [64, 1], strides = [1, 1]} : vector<64x3xf32> to vector<64x1xf32>
    %21 = vector.extract_strided_slice %16 {offsets = [0, 1], sizes = [64, 1], strides = [1, 1]} : vector<64x3xf32> to vector<64x1xf32>
    %22 = arith.mulf %20, %21 : vector<64x1xf32>
    %23 = arith.addf %19, %22 : vector<64x1xf32>
    %24 = vector.extract_strided_slice %16 {offsets = [0, 2], sizes = [64, 1], strides = [1, 1]} : vector<64x3xf32> to vector<64x1xf32>
    %25 = vector.extract_strided_slice %16 {offsets = [0, 2], sizes = [64, 1], strides = [1, 1]} : vector<64x3xf32> to vector<64x1xf32>
    %26 = arith.mulf %24, %25 : vector<64x1xf32>
    %27 = arith.addf %23, %26 : vector<64x1xf32>
    %28 = math.sqrt %27 : vector<64x1xf32>
    %cst_8 = arith.constant dense<0.000000e+00> : vector<64x32xf32>
    %29 = tpu.matmul %4, %7, %cst_8 {dimension_numbers = #tpu.dot_dimension_numbers<[1], [0], [0], [1], [0, 0, 1, 1], [], []>} : vector<64x3xf32>, vector<3x32xf32>, vector<64x32xf32> -> vector<64x32xf32>
    %30 = vector.broadcast %28 : vector<64x1xf32> to vector<64x32xf32>
    %31 = vector.broadcast %9 : vector<1x32xf32> to vector<64x32xf32>
    %32 = arith.mulf %30, %31 : vector<64x32xf32>
    %33 = arith.addf %29, %32 : vector<64x32xf32>
    %34 = arith.addf %33, %13 : vector<64x32xf32>
    %35 = vector.broadcast %6 : vector<64x1xi32> to vector<64x128xi32>
    %36 = arith.cmpi eq, %35, %14 : vector<64x128xi32>
    %37 = arith.extui %36 : vector<64x128xi1> to vector<64x128xi32>
    %38 = arith.sitofp %37 : vector<64x128xi32> to vector<64x128xf32>
    %cst_9 = arith.constant dense<0.000000e+00> : vector<64x32xf32>
    %39 = tpu.matmul %38, %2, %cst_9 {dimension_numbers = #tpu.dot_dimension_numbers<[1], [0], [0], [1], [0, 0, 1, 1], [], []>} : vector<64x128xf32>, vector<128x32xf32>, vector<64x32xf32> -> vector<64x32xf32>
    %40 = arith.mulf %39, %34 : vector<64x32xf32>
    %41 = arith.addf %15, %40 : vector<64x32xf32>
    %42 = vector.extract_strided_slice %0 {offsets = [0, 1], sizes = [64, 1], strides = [1, 1]} : vector<64x8xi32> to vector<64x1xi32>
    %c0_i32 = arith.constant 0 : i32
    %43 = vector.broadcast %c0_i32 : i32 to vector<64x1xi32>
    %44 = arith.cmpi eq, %42, %43 : vector<64x1xi32>
    %45 = vector.extract_strided_slice %1 {offsets = [0, 3], sizes = [64, 3], strides = [1, 1]} : vector<64x27xf32> to vector<64x3xf32>
    %46 = vector.shape_cast %44 : vector<64x1xi1> to vector<64x1xi1>
    %47 = vector.broadcast %46 : vector<64x1xi1> to vector<64x3xi1>
    %48 = arith.select %47, %4, %45 : vector<64x3xi1>, vector<64x3xf32>
    %49 = arith.select %44, %6, %42 : vector<64x1xi1>, vector<64x1xi32>
    %50 = arith.subf %48, %5 : vector<64x3xf32>
    %51 = vector.extract_strided_slice %50 {offsets = [0, 0], sizes = [64, 1], strides = [1, 1]} : vector<64x3xf32> to vector<64x1xf32>
    %52 = vector.extract_strided_slice %50 {offsets = [0, 0], sizes = [64, 1], strides = [1, 1]} : vector<64x3xf32> to vector<64x1xf32>
    %53 = arith.mulf %51, %52 : vector<64x1xf32>
    %54 = vector.extract_strided_slice %50 {offsets = [0, 1], sizes = [64, 1], strides = [1, 1]} : vector<64x3xf32> to vector<64x1xf32>
    %55 = vector.extract_strided_slice %50 {offsets = [0, 1], sizes = [64, 1], strides = [1, 1]} : vector<64x3xf32> to vector<64x1xf32>
    %56 = arith.mulf %54, %55 : vector<64x1xf32>
    %57 = arith.addf %53, %56 : vector<64x1xf32>
    %58 = vector.extract_strided_slice %50 {offsets = [0, 2], sizes = [64, 1], strides = [1, 1]} : vector<64x3xf32> to vector<64x1xf32>
    %59 = vector.extract_strided_slice %50 {offsets = [0, 2], sizes = [64, 1], strides = [1, 1]} : vector<64x3xf32> to vector<64x1xf32>
    %60 = arith.mulf %58, %59 : vector<64x1xf32>
    %61 = arith.addf %57, %60 : vector<64x1xf32>
    %62 = math.sqrt %61 : vector<64x1xf32>
    %cst_10 = arith.constant dense<0.000000e+00> : vector<64x32xf32>
    %63 = tpu.matmul %48, %7, %cst_10 {dimension_numbers = #tpu.dot_dimension_numbers<[1], [0], [0], [1], [0, 0, 1, 1], [], []>} : vector<64x3xf32>, vector<3x32xf32>, vector<64x32xf32> -> vector<64x32xf32>
    %64 = vector.broadcast %62 : vector<64x1xf32> to vector<64x32xf32>
    %65 = vector.broadcast %9 : vector<1x32xf32> to vector<64x32xf32>
    %66 = arith.mulf %64, %65 : vector<64x32xf32>
    %67 = arith.addf %63, %66 : vector<64x32xf32>
    %68 = arith.addf %67, %13 : vector<64x32xf32>
    %69 = vector.broadcast %49 : vector<64x1xi32> to vector<64x128xi32>
    %70 = arith.cmpi eq, %69, %14 : vector<64x128xi32>
    %71 = arith.extui %70 : vector<64x128xi1> to vector<64x128xi32>
    %72 = arith.sitofp %71 : vector<64x128xi32> to vector<64x128xf32>
    %cst_11 = arith.constant dense<0.000000e+00> : vector<64x32xf32>
    %73 = tpu.matmul %72, %2, %cst_11 {dimension_numbers = #tpu.dot_dimension_numbers<[1], [0], [0], [1], [0, 0, 1, 1], [], []>} : vector<64x128xf32>, vector<128x32xf32>, vector<64x32xf32> -> vector<64x32xf32>
    %74 = arith.mulf %73, %68 : vector<64x32xf32>
    %75 = arith.addf %41, %74 : vector<64x32xf32>
    %76 = vector.extract_strided_slice %0 {offsets = [0, 2], sizes = [64, 1], strides = [1, 1]} : vector<64x8xi32> to vector<64x1xi32>
    %c0_i32_12 = arith.constant 0 : i32
    %77 = vector.broadcast %c0_i32_12 : i32 to vector<64x1xi32>
    %78 = arith.cmpi eq, %76, %77 : vector<64x1xi32>
    %79 = vector.extract_strided_slice %1 {offsets = [0, 6], sizes = [64, 3], strides = [1, 1]} : vector<64x27xf32> to vector<64x3xf32>
    %80 = vector.shape_cast %78 : vector<64x1xi1> to vector<64x1xi1>
    %81 = vector.broadcast %80 : vector<64x1xi1> to vector<64x3xi1>
    %82 = arith.select %81, %4, %79 : vector<64x3xi1>, vector<64x3xf32>
    %83 = arith.select %78, %6, %76 : vector<64x1xi1>, vector<64x1xi32>
    %84 = arith.subf %82, %5 : vector<64x3xf32>
    %85 = vector.extract_strided_slice %84 {offsets = [0, 0], sizes = [64, 1], strides = [1, 1]} : vector<64x3xf32> to vector<64x1xf32>
    %86 = vector.extract_strided_slice %84 {offsets = [0, 0], sizes = [64, 1], strides = [1, 1]} : vector<64x3xf32> to vector<64x1xf32>
    %87 = arith.mulf %85, %86 : vector<64x1xf32>
    %88 = vector.extract_strided_slice %84 {offsets = [0, 1], sizes = [64, 1], strides = [1, 1]} : vector<64x3xf32> to vector<64x1xf32>
    %89 = vector.extract_strided_slice %84 {offsets = [0, 1], sizes = [64, 1], strides = [1, 1]} : vector<64x3xf32> to vector<64x1xf32>
    %90 = arith.mulf %88, %89 : vector<64x1xf32>
    %91 = arith.addf %87, %90 : vector<64x1xf32>
    %92 = vector.extract_strided_slice %84 {offsets = [0, 2], sizes = [64, 1], strides = [1, 1]} : vector<64x3xf32> to vector<64x1xf32>
    %93 = vector.extract_strided_slice %84 {offsets = [0, 2], sizes = [64, 1], strides = [1, 1]} : vector<64x3xf32> to vector<64x1xf32>
    %94 = arith.mulf %92, %93 : vector<64x1xf32>
    %95 = arith.addf %91, %94 : vector<64x1xf32>
    %96 = math.sqrt %95 : vector<64x1xf32>
    %cst_13 = arith.constant dense<0.000000e+00> : vector<64x32xf32>
    %97 = tpu.matmul %82, %7, %cst_13 {dimension_numbers = #tpu.dot_dimension_numbers<[1], [0], [0], [1], [0, 0, 1, 1], [], []>} : vector<64x3xf32>, vector<3x32xf32>, vector<64x32xf32> -> vector<64x32xf32>
    %98 = vector.broadcast %96 : vector<64x1xf32> to vector<64x32xf32>
    %99 = vector.broadcast %9 : vector<1x32xf32> to vector<64x32xf32>
    %100 = arith.mulf %98, %99 : vector<64x32xf32>
    %101 = arith.addf %97, %100 : vector<64x32xf32>
    %102 = arith.addf %101, %13 : vector<64x32xf32>
    %103 = vector.broadcast %83 : vector<64x1xi32> to vector<64x128xi32>
    %104 = arith.cmpi eq, %103, %14 : vector<64x128xi32>
    %105 = arith.extui %104 : vector<64x128xi1> to vector<64x128xi32>
    %106 = arith.sitofp %105 : vector<64x128xi32> to vector<64x128xf32>
    %cst_14 = arith.constant dense<0.000000e+00> : vector<64x32xf32>
    %107 = tpu.matmul %106, %2, %cst_14 {dimension_numbers = #tpu.dot_dimension_numbers<[1], [0], [0], [1], [0, 0, 1, 1], [], []>} : vector<64x128xf32>, vector<128x32xf32>, vector<64x32xf32> -> vector<64x32xf32>
    %108 = arith.mulf %107, %102 : vector<64x32xf32>
    %109 = arith.addf %75, %108 : vector<64x32xf32>
    %110 = vector.extract_strided_slice %0 {offsets = [0, 3], sizes = [64, 1], strides = [1, 1]} : vector<64x8xi32> to vector<64x1xi32>
    %c0_i32_15 = arith.constant 0 : i32
    %111 = vector.broadcast %c0_i32_15 : i32 to vector<64x1xi32>
    %112 = arith.cmpi eq, %110, %111 : vector<64x1xi32>
    %113 = vector.extract_strided_slice %1 {offsets = [0, 9], sizes = [64, 3], strides = [1, 1]} : vector<64x27xf32> to vector<64x3xf32>
    %114 = vector.shape_cast %112 : vector<64x1xi1> to vector<64x1xi1>
    %115 = vector.broadcast %114 : vector<64x1xi1> to vector<64x3xi1>
    %116 = arith.select %115, %4, %113 : vector<64x3xi1>, vector<64x3xf32>
    %117 = arith.select %112, %6, %110 : vector<64x1xi1>, vector<64x1xi32>
    %118 = arith.subf %116, %5 : vector<64x3xf32>
    %119 = vector.extract_strided_slice %118 {offsets = [0, 0], sizes = [64, 1], strides = [1, 1]} : vector<64x3xf32> to vector<64x1xf32>
    %120 = vector.extract_strided_slice %118 {offsets = [0, 0], sizes = [64, 1], strides = [1, 1]} : vector<64x3xf32> to vector<64x1xf32>
    %121 = arith.mulf %119, %120 : vector<64x1xf32>
    %122 = vector.extract_strided_slice %118 {offsets = [0, 1], sizes = [64, 1], strides = [1, 1]} : vector<64x3xf32> to vector<64x1xf32>
    %123 = vector.extract_strided_slice %118 {offsets = [0, 1], sizes = [64, 1], strides = [1, 1]} : vector<64x3xf32> to vector<64x1xf32>
    %124 = arith.mulf %122, %123 : vector<64x1xf32>
    %125 = arith.addf %121, %124 : vector<64x1xf32>
    %126 = vector.extract_strided_slice %118 {offsets = [0, 2], sizes = [64, 1], strides = [1, 1]} : vector<64x3xf32> to vector<64x1xf32>
    %127 = vector.extract_strided_slice %118 {offsets = [0, 2], sizes = [64, 1], strides = [1, 1]} : vector<64x3xf32> to vector<64x1xf32>
    %128 = arith.mulf %126, %127 : vector<64x1xf32>
    %129 = arith.addf %125, %128 : vector<64x1xf32>
    %130 = math.sqrt %129 : vector<64x1xf32>
    %cst_16 = arith.constant dense<0.000000e+00> : vector<64x32xf32>
    %131 = tpu.matmul %116, %7, %cst_16 {dimension_numbers = #tpu.dot_dimension_numbers<[1], [0], [0], [1], [0, 0, 1, 1], [], []>} : vector<64x3xf32>, vector<3x32xf32>, vector<64x32xf32> -> vector<64x32xf32>
    %132 = vector.broadcast %130 : vector<64x1xf32> to vector<64x32xf32>
    %133 = vector.broadcast %9 : vector<1x32xf32> to vector<64x32xf32>
    %134 = arith.mulf %132, %133 : vector<64x32xf32>
    %135 = arith.addf %131, %134 : vector<64x32xf32>
    %136 = arith.addf %135, %13 : vector<64x32xf32>
    %137 = vector.broadcast %117 : vector<64x1xi32> to vector<64x128xi32>
    %138 = arith.cmpi eq, %137, %14 : vector<64x128xi32>
    %139 = arith.extui %138 : vector<64x128xi1> to vector<64x128xi32>
    %140 = arith.sitofp %139 : vector<64x128xi32> to vector<64x128xf32>
    %cst_17 = arith.constant dense<0.000000e+00> : vector<64x32xf32>
    %141 = tpu.matmul %140, %2, %cst_17 {dimension_numbers = #tpu.dot_dimension_numbers<[1], [0], [0], [1], [0, 0, 1, 1], [], []>} : vector<64x128xf32>, vector<128x32xf32>, vector<64x32xf32> -> vector<64x32xf32>
    %142 = arith.mulf %141, %136 : vector<64x32xf32>
    %143 = arith.addf %109, %142 : vector<64x32xf32>
    %144 = vector.extract_strided_slice %0 {offsets = [0, 4], sizes = [64, 1], strides = [1, 1]} : vector<64x8xi32> to vector<64x1xi32>
    %c0_i32_18 = arith.constant 0 : i32
    %145 = vector.broadcast %c0_i32_18 : i32 to vector<64x1xi32>
    %146 = arith.cmpi eq, %144, %145 : vector<64x1xi32>
    %147 = vector.extract_strided_slice %1 {offsets = [0, 12], sizes = [64, 3], strides = [1, 1]} : vector<64x27xf32> to vector<64x3xf32>
    %148 = vector.shape_cast %146 : vector<64x1xi1> to vector<64x1xi1>
    %149 = vector.broadcast %148 : vector<64x1xi1> to vector<64x3xi1>
    %150 = arith.select %149, %4, %147 : vector<64x3xi1>, vector<64x3xf32>
    %151 = arith.select %146, %6, %144 : vector<64x1xi1>, vector<64x1xi32>
    %152 = arith.subf %150, %5 : vector<64x3xf32>
    %153 = vector.extract_strided_slice %152 {offsets = [0, 0], sizes = [64, 1], strides = [1, 1]} : vector<64x3xf32> to vector<64x1xf32>
    %154 = vector.extract_strided_slice %152 {offsets = [0, 0], sizes = [64, 1], strides = [1, 1]} : vector<64x3xf32> to vector<64x1xf32>
    %155 = arith.mulf %153, %154 : vector<64x1xf32>
    %156 = vector.extract_strided_slice %152 {offsets = [0, 1], sizes = [64, 1], strides = [1, 1]} : vector<64x3xf32> to vector<64x1xf32>
    %157 = vector.extract_strided_slice %152 {offsets = [0, 1], sizes = [64, 1], strides = [1, 1]} : vector<64x3xf32> to vector<64x1xf32>
    %158 = arith.mulf %156, %157 : vector<64x1xf32>
    %159 = arith.addf %155, %158 : vector<64x1xf32>
    %160 = vector.extract_strided_slice %152 {offsets = [0, 2], sizes = [64, 1], strides = [1, 1]} : vector<64x3xf32> to vector<64x1xf32>
    %161 = vector.extract_strided_slice %152 {offsets = [0, 2], sizes = [64, 1], strides = [1, 1]} : vector<64x3xf32> to vector<64x1xf32>
    %162 = arith.mulf %160, %161 : vector<64x1xf32>
    %163 = arith.addf %159, %162 : vector<64x1xf32>
    %164 = math.sqrt %163 : vector<64x1xf32>
    %cst_19 = arith.constant dense<0.000000e+00> : vector<64x32xf32>
    %165 = tpu.matmul %150, %7, %cst_19 {dimension_numbers = #tpu.dot_dimension_numbers<[1], [0], [0], [1], [0, 0, 1, 1], [], []>} : vector<64x3xf32>, vector<3x32xf32>, vector<64x32xf32> -> vector<64x32xf32>
    %166 = vector.broadcast %164 : vector<64x1xf32> to vector<64x32xf32>
    %167 = vector.broadcast %9 : vector<1x32xf32> to vector<64x32xf32>
    %168 = arith.mulf %166, %167 : vector<64x32xf32>
    %169 = arith.addf %165, %168 : vector<64x32xf32>
    %170 = arith.addf %169, %13 : vector<64x32xf32>
    %171 = vector.broadcast %151 : vector<64x1xi32> to vector<64x128xi32>
    %172 = arith.cmpi eq, %171, %14 : vector<64x128xi32>
    %173 = arith.extui %172 : vector<64x128xi1> to vector<64x128xi32>
    %174 = arith.sitofp %173 : vector<64x128xi32> to vector<64x128xf32>
    %cst_20 = arith.constant dense<0.000000e+00> : vector<64x32xf32>
    %175 = tpu.matmul %174, %2, %cst_20 {dimension_numbers = #tpu.dot_dimension_numbers<[1], [0], [0], [1], [0, 0, 1, 1], [], []>} : vector<64x128xf32>, vector<128x32xf32>, vector<64x32xf32> -> vector<64x32xf32>
    %176 = arith.mulf %175, %170 : vector<64x32xf32>
    %177 = arith.addf %143, %176 : vector<64x32xf32>
    %178 = vector.extract_strided_slice %0 {offsets = [0, 5], sizes = [64, 1], strides = [1, 1]} : vector<64x8xi32> to vector<64x1xi32>
    %c0_i32_21 = arith.constant 0 : i32
    %179 = vector.broadcast %c0_i32_21 : i32 to vector<64x1xi32>
    %180 = arith.cmpi eq, %178, %179 : vector<64x1xi32>
    %181 = vector.extract_strided_slice %1 {offsets = [0, 15], sizes = [64, 3], strides = [1, 1]} : vector<64x27xf32> to vector<64x3xf32>
    %182 = vector.shape_cast %180 : vector<64x1xi1> to vector<64x1xi1>
    %183 = vector.broadcast %182 : vector<64x1xi1> to vector<64x3xi1>
    %184 = arith.select %183, %4, %181 : vector<64x3xi1>, vector<64x3xf32>
    %185 = arith.select %180, %6, %178 : vector<64x1xi1>, vector<64x1xi32>
    %186 = arith.subf %184, %5 : vector<64x3xf32>
    %187 = vector.extract_strided_slice %186 {offsets = [0, 0], sizes = [64, 1], strides = [1, 1]} : vector<64x3xf32> to vector<64x1xf32>
    %188 = vector.extract_strided_slice %186 {offsets = [0, 0], sizes = [64, 1], strides = [1, 1]} : vector<64x3xf32> to vector<64x1xf32>
    %189 = arith.mulf %187, %188 : vector<64x1xf32>
    %190 = vector.extract_strided_slice %186 {offsets = [0, 1], sizes = [64, 1], strides = [1, 1]} : vector<64x3xf32> to vector<64x1xf32>
    %191 = vector.extract_strided_slice %186 {offsets = [0, 1], sizes = [64, 1], strides = [1, 1]} : vector<64x3xf32> to vector<64x1xf32>
    %192 = arith.mulf %190, %191 : vector<64x1xf32>
    %193 = arith.addf %189, %192 : vector<64x1xf32>
    %194 = vector.extract_strided_slice %186 {offsets = [0, 2], sizes = [64, 1], strides = [1, 1]} : vector<64x3xf32> to vector<64x1xf32>
    %195 = vector.extract_strided_slice %186 {offsets = [0, 2], sizes = [64, 1], strides = [1, 1]} : vector<64x3xf32> to vector<64x1xf32>
    %196 = arith.mulf %194, %195 : vector<64x1xf32>
    %197 = arith.addf %193, %196 : vector<64x1xf32>
    %198 = math.sqrt %197 : vector<64x1xf32>
    %cst_22 = arith.constant dense<0.000000e+00> : vector<64x32xf32>
    %199 = tpu.matmul %184, %7, %cst_22 {dimension_numbers = #tpu.dot_dimension_numbers<[1], [0], [0], [1], [0, 0, 1, 1], [], []>} : vector<64x3xf32>, vector<3x32xf32>, vector<64x32xf32> -> vector<64x32xf32>
    %200 = vector.broadcast %198 : vector<64x1xf32> to vector<64x32xf32>
    %201 = vector.broadcast %9 : vector<1x32xf32> to vector<64x32xf32>
    %202 = arith.mulf %200, %201 : vector<64x32xf32>
    %203 = arith.addf %199, %202 : vector<64x32xf32>
    %204 = arith.addf %203, %13 : vector<64x32xf32>
    %205 = vector.broadcast %185 : vector<64x1xi32> to vector<64x128xi32>
    %206 = arith.cmpi eq, %205, %14 : vector<64x128xi32>
    %207 = arith.extui %206 : vector<64x128xi1> to vector<64x128xi32>
    %208 = arith.sitofp %207 : vector<64x128xi32> to vector<64x128xf32>
    %cst_23 = arith.constant dense<0.000000e+00> : vector<64x32xf32>
    %209 = tpu.matmul %208, %2, %cst_23 {dimension_numbers = #tpu.dot_dimension_numbers<[1], [0], [0], [1], [0, 0, 1, 1], [], []>} : vector<64x128xf32>, vector<128x32xf32>, vector<64x32xf32> -> vector<64x32xf32>
    %210 = arith.mulf %209, %204 : vector<64x32xf32>
    %211 = arith.addf %177, %210 : vector<64x32xf32>
    %212 = vector.extract_strided_slice %0 {offsets = [0, 6], sizes = [64, 1], strides = [1, 1]} : vector<64x8xi32> to vector<64x1xi32>
    %c0_i32_24 = arith.constant 0 : i32
    %213 = vector.broadcast %c0_i32_24 : i32 to vector<64x1xi32>
    %214 = arith.cmpi eq, %212, %213 : vector<64x1xi32>
    %215 = vector.extract_strided_slice %1 {offsets = [0, 18], sizes = [64, 3], strides = [1, 1]} : vector<64x27xf32> to vector<64x3xf32>
    %216 = vector.shape_cast %214 : vector<64x1xi1> to vector<64x1xi1>
    %217 = vector.broadcast %216 : vector<64x1xi1> to vector<64x3xi1>
    %218 = arith.select %217, %4, %215 : vector<64x3xi1>, vector<64x3xf32>
    %219 = arith.select %214, %6, %212 : vector<64x1xi1>, vector<64x1xi32>
    %220 = arith.subf %218, %5 : vector<64x3xf32>
    %221 = vector.extract_strided_slice %220 {offsets = [0, 0], sizes = [64, 1], strides = [1, 1]} : vector<64x3xf32> to vector<64x1xf32>
    %222 = vector.extract_strided_slice %220 {offsets = [0, 0], sizes = [64, 1], strides = [1, 1]} : vector<64x3xf32> to vector<64x1xf32>
    %223 = arith.mulf %221, %222 : vector<64x1xf32>
    %224 = vector.extract_strided_slice %220 {offsets = [0, 1], sizes = [64, 1], strides = [1, 1]} : vector<64x3xf32> to vector<64x1xf32>
    %225 = vector.extract_strided_slice %220 {offsets = [0, 1], sizes = [64, 1], strides = [1, 1]} : vector<64x3xf32> to vector<64x1xf32>
    %226 = arith.mulf %224, %225 : vector<64x1xf32>
    %227 = arith.addf %223, %226 : vector<64x1xf32>
    %228 = vector.extract_strided_slice %220 {offsets = [0, 2], sizes = [64, 1], strides = [1, 1]} : vector<64x3xf32> to vector<64x1xf32>
    %229 = vector.extract_strided_slice %220 {offsets = [0, 2], sizes = [64, 1], strides = [1, 1]} : vector<64x3xf32> to vector<64x1xf32>
    %230 = arith.mulf %228, %229 : vector<64x1xf32>
    %231 = arith.addf %227, %230 : vector<64x1xf32>
    %232 = math.sqrt %231 : vector<64x1xf32>
    %cst_25 = arith.constant dense<0.000000e+00> : vector<64x32xf32>
    %233 = tpu.matmul %218, %7, %cst_25 {dimension_numbers = #tpu.dot_dimension_numbers<[1], [0], [0], [1], [0, 0, 1, 1], [], []>} : vector<64x3xf32>, vector<3x32xf32>, vector<64x32xf32> -> vector<64x32xf32>
    %234 = vector.broadcast %232 : vector<64x1xf32> to vector<64x32xf32>
    %235 = vector.broadcast %9 : vector<1x32xf32> to vector<64x32xf32>
    %236 = arith.mulf %234, %235 : vector<64x32xf32>
    %237 = arith.addf %233, %236 : vector<64x32xf32>
    %238 = arith.addf %237, %13 : vector<64x32xf32>
    %239 = vector.broadcast %219 : vector<64x1xi32> to vector<64x128xi32>
    %240 = arith.cmpi eq, %239, %14 : vector<64x128xi32>
    %241 = arith.extui %240 : vector<64x128xi1> to vector<64x128xi32>
    %242 = arith.sitofp %241 : vector<64x128xi32> to vector<64x128xf32>
    %cst_26 = arith.constant dense<0.000000e+00> : vector<64x32xf32>
    %243 = tpu.matmul %242, %2, %cst_26 {dimension_numbers = #tpu.dot_dimension_numbers<[1], [0], [0], [1], [0, 0, 1, 1], [], []>} : vector<64x128xf32>, vector<128x32xf32>, vector<64x32xf32> -> vector<64x32xf32>
    %244 = arith.mulf %243, %238 : vector<64x32xf32>
    %245 = arith.addf %211, %244 : vector<64x32xf32>
    %246 = vector.extract_strided_slice %0 {offsets = [0, 7], sizes = [64, 1], strides = [1, 1]} : vector<64x8xi32> to vector<64x1xi32>
    %c0_i32_27 = arith.constant 0 : i32
    %247 = vector.broadcast %c0_i32_27 : i32 to vector<64x1xi32>
    %248 = arith.cmpi eq, %246, %247 : vector<64x1xi32>
    %249 = vector.extract_strided_slice %1 {offsets = [0, 21], sizes = [64, 3], strides = [1, 1]} : vector<64x27xf32> to vector<64x3xf32>
    %250 = vector.shape_cast %248 : vector<64x1xi1> to vector<64x1xi1>
    %251 = vector.broadcast %250 : vector<64x1xi1> to vector<64x3xi1>
    %252 = arith.select %251, %4, %249 : vector<64x3xi1>, vector<64x3xf32>
    %253 = arith.select %248, %6, %246 : vector<64x1xi1>, vector<64x1xi32>
    %254 = arith.subf %252, %5 : vector<64x3xf32>
    %255 = vector.extract_strided_slice %254 {offsets = [0, 0], sizes = [64, 1], strides = [1, 1]} : vector<64x3xf32> to vector<64x1xf32>
    %256 = vector.extract_strided_slice %254 {offsets = [0, 0], sizes = [64, 1], strides = [1, 1]} : vector<64x3xf32> to vector<64x1xf32>
    %257 = arith.mulf %255, %256 : vector<64x1xf32>
    %258 = vector.extract_strided_slice %254 {offsets = [0, 1], sizes = [64, 1], strides = [1, 1]} : vector<64x3xf32> to vector<64x1xf32>
    %259 = vector.extract_strided_slice %254 {offsets = [0, 1], sizes = [64, 1], strides = [1, 1]} : vector<64x3xf32> to vector<64x1xf32>
    %260 = arith.mulf %258, %259 : vector<64x1xf32>
    %261 = arith.addf %257, %260 : vector<64x1xf32>
    %262 = vector.extract_strided_slice %254 {offsets = [0, 2], sizes = [64, 1], strides = [1, 1]} : vector<64x3xf32> to vector<64x1xf32>
    %263 = vector.extract_strided_slice %254 {offsets = [0, 2], sizes = [64, 1], strides = [1, 1]} : vector<64x3xf32> to vector<64x1xf32>
    %264 = arith.mulf %262, %263 : vector<64x1xf32>
    %265 = arith.addf %261, %264 : vector<64x1xf32>
    %266 = math.sqrt %265 : vector<64x1xf32>
    %cst_28 = arith.constant dense<0.000000e+00> : vector<64x32xf32>
    %267 = tpu.matmul %252, %7, %cst_28 {dimension_numbers = #tpu.dot_dimension_numbers<[1], [0], [0], [1], [0, 0, 1, 1], [], []>} : vector<64x3xf32>, vector<3x32xf32>, vector<64x32xf32> -> vector<64x32xf32>
    %268 = vector.broadcast %266 : vector<64x1xf32> to vector<64x32xf32>
    %269 = vector.broadcast %9 : vector<1x32xf32> to vector<64x32xf32>
    %270 = arith.mulf %268, %269 : vector<64x32xf32>
    %271 = arith.addf %267, %270 : vector<64x32xf32>
    %272 = arith.addf %271, %13 : vector<64x32xf32>
    %273 = vector.broadcast %253 : vector<64x1xi32> to vector<64x128xi32>
    %274 = arith.cmpi eq, %273, %14 : vector<64x128xi32>
    %275 = arith.extui %274 : vector<64x128xi1> to vector<64x128xi32>
    %276 = arith.sitofp %275 : vector<64x128xi32> to vector<64x128xf32>
    %cst_29 = arith.constant dense<0.000000e+00> : vector<64x32xf32>
    %277 = tpu.matmul %276, %2, %cst_29 {dimension_numbers = #tpu.dot_dimension_numbers<[1], [0], [0], [1], [0, 0, 1, 1], [], []>} : vector<64x128xf32>, vector<128x32xf32>, vector<64x32xf32> -> vector<64x32xf32>
    %278 = arith.mulf %277, %272 : vector<64x32xf32>
    %279 = arith.addf %245, %278 : vector<64x32xf32>
    %cst_30 = arith.constant 1.250000e-01 : f32
    %280 = vector.broadcast %cst_30 : f32 to vector<64x32xf32>
    %281 = arith.mulf %279, %280 : vector<64x32xf32>
    %c0_31 = arith.constant 0 : index
    %c0_32 = arith.constant 0 : index
    %282 = vector.load %arg5[%c0_31, %c0_32] : memref<64x32xf32, #tpu.memory_space<vmem>>, vector<64x32xf32>
    tpu.vector_store %arg5[%c0_31, %c0_32], %281 {strides = array<i32>} : memref<64x32xf32, #tpu.memory_space<vmem>>, vector<64x32xf32>,
    return
  }
  func.func @transform_0(%arg0: i32) -> (i32, i32) {
    %c0_i32 = arith.constant 0 : i32
    %c0_i32_0 = arith.constant 0 : i32
    return %arg0, %c0_i32 : i32, i32
  }
  func.func @transform_1(%arg0: i32) -> (i32, i32) {
    %c0_i32 = arith.constant 0 : i32
    %c0_i32_0 = arith.constant 0 : i32
    return %arg0, %c0_i32 : i32, i32
  }
  func.func @transform_2(%arg0: i32) -> (i32, i32) {
    %c0_i32 = arith.constant 0 : i32
    %c0_i32_0 = arith.constant 0 : i32
    %c0_i32_1 = arith.constant 0 : i32
    return %c0_i32, %c0_i32_0 : i32, i32
  }
  func.func @transform_3(%arg0: i32) -> (i32, i32) {
    %c0_i32 = arith.constant 0 : i32
    %c0_i32_0 = arith.constant 0 : i32
    %c0_i32_1 = arith.constant 0 : i32
    return %c0_i32, %c0_i32_0 : i32, i32
  }
  func.func @transform_4(%arg0: i32) -> (i32, i32) {
    %c0_i32 = arith.constant 0 : i32
    %c0_i32_0 = arith.constant 0 : i32
    return %arg0, %c0_i32 : i32, i32
  }
}

module attributes {stable_mosaic.version = 11 : i64} {
  func.func @_pregather_kernel(%arg0: i32, %arg1: memref<64x8xi32, #tpu.memory_space<vmem>>, %arg2: memref<64x27xf32, #tpu.memory_space<vmem>>, %arg3: memref<64x256xf32, #tpu.memory_space<vmem>>, %arg4: memref<8x32xf32, #tpu.memory_space<vmem>>, %arg5: memref<64x32xf32, #tpu.memory_space<vmem>>) attributes {dimension_semantics = [#tpu.dimension_semantics<parallel>], iteration_bounds = array<i64: 1>, scalar_prefetch = 0 : i64, scratch_operands = 0 : i64, tpu.core_type = #tpu.core_type<tc>, window_params = [{transform_indices = @transform_0, window_bounds = array<i64: 64, 8>}, {transform_indices = @transform_1, window_bounds = array<i64: 64, 27>}, {transform_indices = @transform_2, window_bounds = array<i64: 64, 256>}, {pipeline_mode = #tpu.pipeline_mode<synchronous>, transform_indices = @transform_3, window_bounds = array<i64: 8, 32>}, {transform_indices = @transform_4, window_bounds = array<i64: 64, 32>}]} {
    %c0 = arith.constant 0 : index
    %c0_0 = arith.constant 0 : index
    %0 = vector.load %arg1[%c0, %c0_0] : memref<64x8xi32, #tpu.memory_space<vmem>>, vector<64x8xi32>
    %c0_1 = arith.constant 0 : index
    %c0_2 = arith.constant 0 : index
    %1 = vector.load %arg2[%c0_1, %c0_2] : memref<64x27xf32, #tpu.memory_space<vmem>>, vector<64x27xf32>
    %c0_3 = arith.constant 0 : index
    %c0_4 = arith.constant 0 : index
    %2 = vector.load %arg3[%c0_3, %c0_4] : memref<64x256xf32, #tpu.memory_space<vmem>>, vector<64x256xf32>
    %c0_5 = arith.constant 0 : index
    %c0_6 = arith.constant 0 : index
    %3 = vector.load %arg4[%c0_5, %c0_6] : memref<8x32xf32, #tpu.memory_space<vmem>>, vector<8x32xf32>
    %4 = vector.extract_strided_slice %1 {offsets = [0, 0], sizes = [64, 3], strides = [1, 1]} : vector<64x27xf32> to vector<64x3xf32>
    %5 = vector.extract_strided_slice %1 {offsets = [0, 24], sizes = [64, 3], strides = [1, 1]} : vector<64x27xf32> to vector<64x3xf32>
    %6 = vector.extract_strided_slice %3 {offsets = [0, 0], sizes = [3, 32], strides = [1, 1]} : vector<8x32xf32> to vector<3x32xf32>
    %7 = vector.extract_strided_slice %3 {offsets = [3, 0], sizes = [3, 32], strides = [1, 1]} : vector<8x32xf32> to vector<3x32xf32>
    %8 = vector.extract_strided_slice %3 {offsets = [6, 0], sizes = [1, 32], strides = [1, 1]} : vector<8x32xf32> to vector<1x32xf32>
    %9 = vector.extract_strided_slice %3 {offsets = [7, 0], sizes = [1, 32], strides = [1, 1]} : vector<8x32xf32> to vector<1x32xf32>
    %cst = arith.constant dense<0.000000e+00> : vector<64x32xf32>
    %10 = tpu.matmul %5, %7, %cst {dimension_numbers = #tpu.dot_dimension_numbers<[1], [0], [0], [1], [0, 0, 1, 1], [], []>} : vector<64x3xf32>, vector<3x32xf32>, vector<64x32xf32> -> vector<64x32xf32>
    %11 = vector.broadcast %9 : vector<1x32xf32> to vector<64x32xf32>
    %12 = arith.addf %10, %11 : vector<64x32xf32>
    %cst_7 = arith.constant 0.000000e+00 : f32
    %13 = vector.broadcast %cst_7 : f32 to vector<64x32xf32>
    %14 = arith.subf %4, %5 : vector<64x3xf32>
    %15 = vector.extract_strided_slice %14 {offsets = [0, 0], sizes = [64, 1], strides = [1, 1]} : vector<64x3xf32> to vector<64x1xf32>
    %16 = vector.extract_strided_slice %14 {offsets = [0, 0], sizes = [64, 1], strides = [1, 1]} : vector<64x3xf32> to vector<64x1xf32>
    %17 = arith.mulf %15, %16 : vector<64x1xf32>
    %18 = vector.extract_strided_slice %14 {offsets = [0, 1], sizes = [64, 1], strides = [1, 1]} : vector<64x3xf32> to vector<64x1xf32>
    %19 = vector.extract_strided_slice %14 {offsets = [0, 1], sizes = [64, 1], strides = [1, 1]} : vector<64x3xf32> to vector<64x1xf32>
    %20 = arith.mulf %18, %19 : vector<64x1xf32>
    %21 = arith.addf %17, %20 : vector<64x1xf32>
    %22 = vector.extract_strided_slice %14 {offsets = [0, 2], sizes = [64, 1], strides = [1, 1]} : vector<64x3xf32> to vector<64x1xf32>
    %23 = vector.extract_strided_slice %14 {offsets = [0, 2], sizes = [64, 1], strides = [1, 1]} : vector<64x3xf32> to vector<64x1xf32>
    %24 = arith.mulf %22, %23 : vector<64x1xf32>
    %25 = arith.addf %21, %24 : vector<64x1xf32>
    %26 = math.sqrt %25 : vector<64x1xf32>
    %cst_8 = arith.constant dense<0.000000e+00> : vector<64x32xf32>
    %27 = tpu.matmul %4, %6, %cst_8 {dimension_numbers = #tpu.dot_dimension_numbers<[1], [0], [0], [1], [0, 0, 1, 1], [], []>} : vector<64x3xf32>, vector<3x32xf32>, vector<64x32xf32> -> vector<64x32xf32>
    %28 = vector.broadcast %26 : vector<64x1xf32> to vector<64x32xf32>
    %29 = vector.broadcast %8 : vector<1x32xf32> to vector<64x32xf32>
    %30 = arith.mulf %28, %29 : vector<64x32xf32>
    %31 = arith.addf %27, %30 : vector<64x32xf32>
    %32 = arith.addf %31, %12 : vector<64x32xf32>
    %33 = vector.extract_strided_slice %2 {offsets = [0, 0], sizes = [64, 32], strides = [1, 1]} : vector<64x256xf32> to vector<64x32xf32>
    %34 = arith.mulf %33, %32 : vector<64x32xf32>
    %35 = arith.addf %13, %34 : vector<64x32xf32>
    %36 = vector.extract_strided_slice %0 {offsets = [0, 1], sizes = [64, 1], strides = [1, 1]} : vector<64x8xi32> to vector<64x1xi32>
    %c0_i32 = arith.constant 0 : i32
    %37 = vector.broadcast %c0_i32 : i32 to vector<64x1xi32>
    %38 = arith.cmpi eq, %36, %37 : vector<64x1xi32>
    %39 = vector.extract_strided_slice %1 {offsets = [0, 3], sizes = [64, 3], strides = [1, 1]} : vector<64x27xf32> to vector<64x3xf32>
    %40 = vector.shape_cast %38 : vector<64x1xi1> to vector<64x1xi1>
    %41 = vector.broadcast %40 : vector<64x1xi1> to vector<64x3xi1>
    %42 = arith.select %41, %4, %39 : vector<64x3xi1>, vector<64x3xf32>
    %43 = arith.subf %42, %5 : vector<64x3xf32>
    %44 = vector.extract_strided_slice %43 {offsets = [0, 0], sizes = [64, 1], strides = [1, 1]} : vector<64x3xf32> to vector<64x1xf32>
    %45 = vector.extract_strided_slice %43 {offsets = [0, 0], sizes = [64, 1], strides = [1, 1]} : vector<64x3xf32> to vector<64x1xf32>
    %46 = arith.mulf %44, %45 : vector<64x1xf32>
    %47 = vector.extract_strided_slice %43 {offsets = [0, 1], sizes = [64, 1], strides = [1, 1]} : vector<64x3xf32> to vector<64x1xf32>
    %48 = vector.extract_strided_slice %43 {offsets = [0, 1], sizes = [64, 1], strides = [1, 1]} : vector<64x3xf32> to vector<64x1xf32>
    %49 = arith.mulf %47, %48 : vector<64x1xf32>
    %50 = arith.addf %46, %49 : vector<64x1xf32>
    %51 = vector.extract_strided_slice %43 {offsets = [0, 2], sizes = [64, 1], strides = [1, 1]} : vector<64x3xf32> to vector<64x1xf32>
    %52 = vector.extract_strided_slice %43 {offsets = [0, 2], sizes = [64, 1], strides = [1, 1]} : vector<64x3xf32> to vector<64x1xf32>
    %53 = arith.mulf %51, %52 : vector<64x1xf32>
    %54 = arith.addf %50, %53 : vector<64x1xf32>
    %55 = math.sqrt %54 : vector<64x1xf32>
    %cst_9 = arith.constant dense<0.000000e+00> : vector<64x32xf32>
    %56 = tpu.matmul %42, %6, %cst_9 {dimension_numbers = #tpu.dot_dimension_numbers<[1], [0], [0], [1], [0, 0, 1, 1], [], []>} : vector<64x3xf32>, vector<3x32xf32>, vector<64x32xf32> -> vector<64x32xf32>
    %57 = vector.broadcast %55 : vector<64x1xf32> to vector<64x32xf32>
    %58 = vector.broadcast %8 : vector<1x32xf32> to vector<64x32xf32>
    %59 = arith.mulf %57, %58 : vector<64x32xf32>
    %60 = arith.addf %56, %59 : vector<64x32xf32>
    %61 = arith.addf %60, %12 : vector<64x32xf32>
    %62 = vector.extract_strided_slice %2 {offsets = [0, 32], sizes = [64, 32], strides = [1, 1]} : vector<64x256xf32> to vector<64x32xf32>
    %63 = arith.mulf %62, %61 : vector<64x32xf32>
    %64 = arith.addf %35, %63 : vector<64x32xf32>
    %65 = vector.extract_strided_slice %0 {offsets = [0, 2], sizes = [64, 1], strides = [1, 1]} : vector<64x8xi32> to vector<64x1xi32>
    %c0_i32_10 = arith.constant 0 : i32
    %66 = vector.broadcast %c0_i32_10 : i32 to vector<64x1xi32>
    %67 = arith.cmpi eq, %65, %66 : vector<64x1xi32>
    %68 = vector.extract_strided_slice %1 {offsets = [0, 6], sizes = [64, 3], strides = [1, 1]} : vector<64x27xf32> to vector<64x3xf32>
    %69 = vector.shape_cast %67 : vector<64x1xi1> to vector<64x1xi1>
    %70 = vector.broadcast %69 : vector<64x1xi1> to vector<64x3xi1>
    %71 = arith.select %70, %4, %68 : vector<64x3xi1>, vector<64x3xf32>
    %72 = arith.subf %71, %5 : vector<64x3xf32>
    %73 = vector.extract_strided_slice %72 {offsets = [0, 0], sizes = [64, 1], strides = [1, 1]} : vector<64x3xf32> to vector<64x1xf32>
    %74 = vector.extract_strided_slice %72 {offsets = [0, 0], sizes = [64, 1], strides = [1, 1]} : vector<64x3xf32> to vector<64x1xf32>
    %75 = arith.mulf %73, %74 : vector<64x1xf32>
    %76 = vector.extract_strided_slice %72 {offsets = [0, 1], sizes = [64, 1], strides = [1, 1]} : vector<64x3xf32> to vector<64x1xf32>
    %77 = vector.extract_strided_slice %72 {offsets = [0, 1], sizes = [64, 1], strides = [1, 1]} : vector<64x3xf32> to vector<64x1xf32>
    %78 = arith.mulf %76, %77 : vector<64x1xf32>
    %79 = arith.addf %75, %78 : vector<64x1xf32>
    %80 = vector.extract_strided_slice %72 {offsets = [0, 2], sizes = [64, 1], strides = [1, 1]} : vector<64x3xf32> to vector<64x1xf32>
    %81 = vector.extract_strided_slice %72 {offsets = [0, 2], sizes = [64, 1], strides = [1, 1]} : vector<64x3xf32> to vector<64x1xf32>
    %82 = arith.mulf %80, %81 : vector<64x1xf32>
    %83 = arith.addf %79, %82 : vector<64x1xf32>
    %84 = math.sqrt %83 : vector<64x1xf32>
    %cst_11 = arith.constant dense<0.000000e+00> : vector<64x32xf32>
    %85 = tpu.matmul %71, %6, %cst_11 {dimension_numbers = #tpu.dot_dimension_numbers<[1], [0], [0], [1], [0, 0, 1, 1], [], []>} : vector<64x3xf32>, vector<3x32xf32>, vector<64x32xf32> -> vector<64x32xf32>
    %86 = vector.broadcast %84 : vector<64x1xf32> to vector<64x32xf32>
    %87 = vector.broadcast %8 : vector<1x32xf32> to vector<64x32xf32>
    %88 = arith.mulf %86, %87 : vector<64x32xf32>
    %89 = arith.addf %85, %88 : vector<64x32xf32>
    %90 = arith.addf %89, %12 : vector<64x32xf32>
    %91 = vector.extract_strided_slice %2 {offsets = [0, 64], sizes = [64, 32], strides = [1, 1]} : vector<64x256xf32> to vector<64x32xf32>
    %92 = arith.mulf %91, %90 : vector<64x32xf32>
    %93 = arith.addf %64, %92 : vector<64x32xf32>
    %94 = vector.extract_strided_slice %0 {offsets = [0, 3], sizes = [64, 1], strides = [1, 1]} : vector<64x8xi32> to vector<64x1xi32>
    %c0_i32_12 = arith.constant 0 : i32
    %95 = vector.broadcast %c0_i32_12 : i32 to vector<64x1xi32>
    %96 = arith.cmpi eq, %94, %95 : vector<64x1xi32>
    %97 = vector.extract_strided_slice %1 {offsets = [0, 9], sizes = [64, 3], strides = [1, 1]} : vector<64x27xf32> to vector<64x3xf32>
    %98 = vector.shape_cast %96 : vector<64x1xi1> to vector<64x1xi1>
    %99 = vector.broadcast %98 : vector<64x1xi1> to vector<64x3xi1>
    %100 = arith.select %99, %4, %97 : vector<64x3xi1>, vector<64x3xf32>
    %101 = arith.subf %100, %5 : vector<64x3xf32>
    %102 = vector.extract_strided_slice %101 {offsets = [0, 0], sizes = [64, 1], strides = [1, 1]} : vector<64x3xf32> to vector<64x1xf32>
    %103 = vector.extract_strided_slice %101 {offsets = [0, 0], sizes = [64, 1], strides = [1, 1]} : vector<64x3xf32> to vector<64x1xf32>
    %104 = arith.mulf %102, %103 : vector<64x1xf32>
    %105 = vector.extract_strided_slice %101 {offsets = [0, 1], sizes = [64, 1], strides = [1, 1]} : vector<64x3xf32> to vector<64x1xf32>
    %106 = vector.extract_strided_slice %101 {offsets = [0, 1], sizes = [64, 1], strides = [1, 1]} : vector<64x3xf32> to vector<64x1xf32>
    %107 = arith.mulf %105, %106 : vector<64x1xf32>
    %108 = arith.addf %104, %107 : vector<64x1xf32>
    %109 = vector.extract_strided_slice %101 {offsets = [0, 2], sizes = [64, 1], strides = [1, 1]} : vector<64x3xf32> to vector<64x1xf32>
    %110 = vector.extract_strided_slice %101 {offsets = [0, 2], sizes = [64, 1], strides = [1, 1]} : vector<64x3xf32> to vector<64x1xf32>
    %111 = arith.mulf %109, %110 : vector<64x1xf32>
    %112 = arith.addf %108, %111 : vector<64x1xf32>
    %113 = math.sqrt %112 : vector<64x1xf32>
    %cst_13 = arith.constant dense<0.000000e+00> : vector<64x32xf32>
    %114 = tpu.matmul %100, %6, %cst_13 {dimension_numbers = #tpu.dot_dimension_numbers<[1], [0], [0], [1], [0, 0, 1, 1], [], []>} : vector<64x3xf32>, vector<3x32xf32>, vector<64x32xf32> -> vector<64x32xf32>
    %115 = vector.broadcast %113 : vector<64x1xf32> to vector<64x32xf32>
    %116 = vector.broadcast %8 : vector<1x32xf32> to vector<64x32xf32>
    %117 = arith.mulf %115, %116 : vector<64x32xf32>
    %118 = arith.addf %114, %117 : vector<64x32xf32>
    %119 = arith.addf %118, %12 : vector<64x32xf32>
    %120 = vector.extract_strided_slice %2 {offsets = [0, 96], sizes = [64, 32], strides = [1, 1]} : vector<64x256xf32> to vector<64x32xf32>
    %121 = arith.mulf %120, %119 : vector<64x32xf32>
    %122 = arith.addf %93, %121 : vector<64x32xf32>
    %123 = vector.extract_strided_slice %0 {offsets = [0, 4], sizes = [64, 1], strides = [1, 1]} : vector<64x8xi32> to vector<64x1xi32>
    %c0_i32_14 = arith.constant 0 : i32
    %124 = vector.broadcast %c0_i32_14 : i32 to vector<64x1xi32>
    %125 = arith.cmpi eq, %123, %124 : vector<64x1xi32>
    %126 = vector.extract_strided_slice %1 {offsets = [0, 12], sizes = [64, 3], strides = [1, 1]} : vector<64x27xf32> to vector<64x3xf32>
    %127 = vector.shape_cast %125 : vector<64x1xi1> to vector<64x1xi1>
    %128 = vector.broadcast %127 : vector<64x1xi1> to vector<64x3xi1>
    %129 = arith.select %128, %4, %126 : vector<64x3xi1>, vector<64x3xf32>
    %130 = arith.subf %129, %5 : vector<64x3xf32>
    %131 = vector.extract_strided_slice %130 {offsets = [0, 0], sizes = [64, 1], strides = [1, 1]} : vector<64x3xf32> to vector<64x1xf32>
    %132 = vector.extract_strided_slice %130 {offsets = [0, 0], sizes = [64, 1], strides = [1, 1]} : vector<64x3xf32> to vector<64x1xf32>
    %133 = arith.mulf %131, %132 : vector<64x1xf32>
    %134 = vector.extract_strided_slice %130 {offsets = [0, 1], sizes = [64, 1], strides = [1, 1]} : vector<64x3xf32> to vector<64x1xf32>
    %135 = vector.extract_strided_slice %130 {offsets = [0, 1], sizes = [64, 1], strides = [1, 1]} : vector<64x3xf32> to vector<64x1xf32>
    %136 = arith.mulf %134, %135 : vector<64x1xf32>
    %137 = arith.addf %133, %136 : vector<64x1xf32>
    %138 = vector.extract_strided_slice %130 {offsets = [0, 2], sizes = [64, 1], strides = [1, 1]} : vector<64x3xf32> to vector<64x1xf32>
    %139 = vector.extract_strided_slice %130 {offsets = [0, 2], sizes = [64, 1], strides = [1, 1]} : vector<64x3xf32> to vector<64x1xf32>
    %140 = arith.mulf %138, %139 : vector<64x1xf32>
    %141 = arith.addf %137, %140 : vector<64x1xf32>
    %142 = math.sqrt %141 : vector<64x1xf32>
    %cst_15 = arith.constant dense<0.000000e+00> : vector<64x32xf32>
    %143 = tpu.matmul %129, %6, %cst_15 {dimension_numbers = #tpu.dot_dimension_numbers<[1], [0], [0], [1], [0, 0, 1, 1], [], []>} : vector<64x3xf32>, vector<3x32xf32>, vector<64x32xf32> -> vector<64x32xf32>
    %144 = vector.broadcast %142 : vector<64x1xf32> to vector<64x32xf32>
    %145 = vector.broadcast %8 : vector<1x32xf32> to vector<64x32xf32>
    %146 = arith.mulf %144, %145 : vector<64x32xf32>
    %147 = arith.addf %143, %146 : vector<64x32xf32>
    %148 = arith.addf %147, %12 : vector<64x32xf32>
    %149 = vector.extract_strided_slice %2 {offsets = [0, 128], sizes = [64, 32], strides = [1, 1]} : vector<64x256xf32> to vector<64x32xf32>
    %150 = arith.mulf %149, %148 : vector<64x32xf32>
    %151 = arith.addf %122, %150 : vector<64x32xf32>
    %152 = vector.extract_strided_slice %0 {offsets = [0, 5], sizes = [64, 1], strides = [1, 1]} : vector<64x8xi32> to vector<64x1xi32>
    %c0_i32_16 = arith.constant 0 : i32
    %153 = vector.broadcast %c0_i32_16 : i32 to vector<64x1xi32>
    %154 = arith.cmpi eq, %152, %153 : vector<64x1xi32>
    %155 = vector.extract_strided_slice %1 {offsets = [0, 15], sizes = [64, 3], strides = [1, 1]} : vector<64x27xf32> to vector<64x3xf32>
    %156 = vector.shape_cast %154 : vector<64x1xi1> to vector<64x1xi1>
    %157 = vector.broadcast %156 : vector<64x1xi1> to vector<64x3xi1>
    %158 = arith.select %157, %4, %155 : vector<64x3xi1>, vector<64x3xf32>
    %159 = arith.subf %158, %5 : vector<64x3xf32>
    %160 = vector.extract_strided_slice %159 {offsets = [0, 0], sizes = [64, 1], strides = [1, 1]} : vector<64x3xf32> to vector<64x1xf32>
    %161 = vector.extract_strided_slice %159 {offsets = [0, 0], sizes = [64, 1], strides = [1, 1]} : vector<64x3xf32> to vector<64x1xf32>
    %162 = arith.mulf %160, %161 : vector<64x1xf32>
    %163 = vector.extract_strided_slice %159 {offsets = [0, 1], sizes = [64, 1], strides = [1, 1]} : vector<64x3xf32> to vector<64x1xf32>
    %164 = vector.extract_strided_slice %159 {offsets = [0, 1], sizes = [64, 1], strides = [1, 1]} : vector<64x3xf32> to vector<64x1xf32>
    %165 = arith.mulf %163, %164 : vector<64x1xf32>
    %166 = arith.addf %162, %165 : vector<64x1xf32>
    %167 = vector.extract_strided_slice %159 {offsets = [0, 2], sizes = [64, 1], strides = [1, 1]} : vector<64x3xf32> to vector<64x1xf32>
    %168 = vector.extract_strided_slice %159 {offsets = [0, 2], sizes = [64, 1], strides = [1, 1]} : vector<64x3xf32> to vector<64x1xf32>
    %169 = arith.mulf %167, %168 : vector<64x1xf32>
    %170 = arith.addf %166, %169 : vector<64x1xf32>
    %171 = math.sqrt %170 : vector<64x1xf32>
    %cst_17 = arith.constant dense<0.000000e+00> : vector<64x32xf32>
    %172 = tpu.matmul %158, %6, %cst_17 {dimension_numbers = #tpu.dot_dimension_numbers<[1], [0], [0], [1], [0, 0, 1, 1], [], []>} : vector<64x3xf32>, vector<3x32xf32>, vector<64x32xf32> -> vector<64x32xf32>
    %173 = vector.broadcast %171 : vector<64x1xf32> to vector<64x32xf32>
    %174 = vector.broadcast %8 : vector<1x32xf32> to vector<64x32xf32>
    %175 = arith.mulf %173, %174 : vector<64x32xf32>
    %176 = arith.addf %172, %175 : vector<64x32xf32>
    %177 = arith.addf %176, %12 : vector<64x32xf32>
    %178 = vector.extract_strided_slice %2 {offsets = [0, 160], sizes = [64, 32], strides = [1, 1]} : vector<64x256xf32> to vector<64x32xf32>
    %179 = arith.mulf %178, %177 : vector<64x32xf32>
    %180 = arith.addf %151, %179 : vector<64x32xf32>
    %181 = vector.extract_strided_slice %0 {offsets = [0, 6], sizes = [64, 1], strides = [1, 1]} : vector<64x8xi32> to vector<64x1xi32>
    %c0_i32_18 = arith.constant 0 : i32
    %182 = vector.broadcast %c0_i32_18 : i32 to vector<64x1xi32>
    %183 = arith.cmpi eq, %181, %182 : vector<64x1xi32>
    %184 = vector.extract_strided_slice %1 {offsets = [0, 18], sizes = [64, 3], strides = [1, 1]} : vector<64x27xf32> to vector<64x3xf32>
    %185 = vector.shape_cast %183 : vector<64x1xi1> to vector<64x1xi1>
    %186 = vector.broadcast %185 : vector<64x1xi1> to vector<64x3xi1>
    %187 = arith.select %186, %4, %184 : vector<64x3xi1>, vector<64x3xf32>
    %188 = arith.subf %187, %5 : vector<64x3xf32>
    %189 = vector.extract_strided_slice %188 {offsets = [0, 0], sizes = [64, 1], strides = [1, 1]} : vector<64x3xf32> to vector<64x1xf32>
    %190 = vector.extract_strided_slice %188 {offsets = [0, 0], sizes = [64, 1], strides = [1, 1]} : vector<64x3xf32> to vector<64x1xf32>
    %191 = arith.mulf %189, %190 : vector<64x1xf32>
    %192 = vector.extract_strided_slice %188 {offsets = [0, 1], sizes = [64, 1], strides = [1, 1]} : vector<64x3xf32> to vector<64x1xf32>
    %193 = vector.extract_strided_slice %188 {offsets = [0, 1], sizes = [64, 1], strides = [1, 1]} : vector<64x3xf32> to vector<64x1xf32>
    %194 = arith.mulf %192, %193 : vector<64x1xf32>
    %195 = arith.addf %191, %194 : vector<64x1xf32>
    %196 = vector.extract_strided_slice %188 {offsets = [0, 2], sizes = [64, 1], strides = [1, 1]} : vector<64x3xf32> to vector<64x1xf32>
    %197 = vector.extract_strided_slice %188 {offsets = [0, 2], sizes = [64, 1], strides = [1, 1]} : vector<64x3xf32> to vector<64x1xf32>
    %198 = arith.mulf %196, %197 : vector<64x1xf32>
    %199 = arith.addf %195, %198 : vector<64x1xf32>
    %200 = math.sqrt %199 : vector<64x1xf32>
    %cst_19 = arith.constant dense<0.000000e+00> : vector<64x32xf32>
    %201 = tpu.matmul %187, %6, %cst_19 {dimension_numbers = #tpu.dot_dimension_numbers<[1], [0], [0], [1], [0, 0, 1, 1], [], []>} : vector<64x3xf32>, vector<3x32xf32>, vector<64x32xf32> -> vector<64x32xf32>
    %202 = vector.broadcast %200 : vector<64x1xf32> to vector<64x32xf32>
    %203 = vector.broadcast %8 : vector<1x32xf32> to vector<64x32xf32>
    %204 = arith.mulf %202, %203 : vector<64x32xf32>
    %205 = arith.addf %201, %204 : vector<64x32xf32>
    %206 = arith.addf %205, %12 : vector<64x32xf32>
    %207 = vector.extract_strided_slice %2 {offsets = [0, 192], sizes = [64, 32], strides = [1, 1]} : vector<64x256xf32> to vector<64x32xf32>
    %208 = arith.mulf %207, %206 : vector<64x32xf32>
    %209 = arith.addf %180, %208 : vector<64x32xf32>
    %210 = vector.extract_strided_slice %0 {offsets = [0, 7], sizes = [64, 1], strides = [1, 1]} : vector<64x8xi32> to vector<64x1xi32>
    %c0_i32_20 = arith.constant 0 : i32
    %211 = vector.broadcast %c0_i32_20 : i32 to vector<64x1xi32>
    %212 = arith.cmpi eq, %210, %211 : vector<64x1xi32>
    %213 = vector.extract_strided_slice %1 {offsets = [0, 21], sizes = [64, 3], strides = [1, 1]} : vector<64x27xf32> to vector<64x3xf32>
    %214 = vector.shape_cast %212 : vector<64x1xi1> to vector<64x1xi1>
    %215 = vector.broadcast %214 : vector<64x1xi1> to vector<64x3xi1>
    %216 = arith.select %215, %4, %213 : vector<64x3xi1>, vector<64x3xf32>
    %217 = arith.subf %216, %5 : vector<64x3xf32>
    %218 = vector.extract_strided_slice %217 {offsets = [0, 0], sizes = [64, 1], strides = [1, 1]} : vector<64x3xf32> to vector<64x1xf32>
    %219 = vector.extract_strided_slice %217 {offsets = [0, 0], sizes = [64, 1], strides = [1, 1]} : vector<64x3xf32> to vector<64x1xf32>
    %220 = arith.mulf %218, %219 : vector<64x1xf32>
    %221 = vector.extract_strided_slice %217 {offsets = [0, 1], sizes = [64, 1], strides = [1, 1]} : vector<64x3xf32> to vector<64x1xf32>
    %222 = vector.extract_strided_slice %217 {offsets = [0, 1], sizes = [64, 1], strides = [1, 1]} : vector<64x3xf32> to vector<64x1xf32>
    %223 = arith.mulf %221, %222 : vector<64x1xf32>
    %224 = arith.addf %220, %223 : vector<64x1xf32>
    %225 = vector.extract_strided_slice %217 {offsets = [0, 2], sizes = [64, 1], strides = [1, 1]} : vector<64x3xf32> to vector<64x1xf32>
    %226 = vector.extract_strided_slice %217 {offsets = [0, 2], sizes = [64, 1], strides = [1, 1]} : vector<64x3xf32> to vector<64x1xf32>
    %227 = arith.mulf %225, %226 : vector<64x1xf32>
    %228 = arith.addf %224, %227 : vector<64x1xf32>
    %229 = math.sqrt %228 : vector<64x1xf32>
    %cst_21 = arith.constant dense<0.000000e+00> : vector<64x32xf32>
    %230 = tpu.matmul %216, %6, %cst_21 {dimension_numbers = #tpu.dot_dimension_numbers<[1], [0], [0], [1], [0, 0, 1, 1], [], []>} : vector<64x3xf32>, vector<3x32xf32>, vector<64x32xf32> -> vector<64x32xf32>
    %231 = vector.broadcast %229 : vector<64x1xf32> to vector<64x32xf32>
    %232 = vector.broadcast %8 : vector<1x32xf32> to vector<64x32xf32>
    %233 = arith.mulf %231, %232 : vector<64x32xf32>
    %234 = arith.addf %230, %233 : vector<64x32xf32>
    %235 = arith.addf %234, %12 : vector<64x32xf32>
    %236 = vector.extract_strided_slice %2 {offsets = [0, 224], sizes = [64, 32], strides = [1, 1]} : vector<64x256xf32> to vector<64x32xf32>
    %237 = arith.mulf %236, %235 : vector<64x32xf32>
    %238 = arith.addf %209, %237 : vector<64x32xf32>
    %cst_22 = arith.constant 1.250000e-01 : f32
    %239 = vector.broadcast %cst_22 : f32 to vector<64x32xf32>
    %240 = arith.mulf %238, %239 : vector<64x32xf32>
    %c0_23 = arith.constant 0 : index
    %c0_24 = arith.constant 0 : index
    %241 = vector.load %arg5[%c0_23, %c0_24] : memref<64x32xf32, #tpu.memory_space<vmem>>, vector<64x32xf32>
    tpu.vector_store %arg5[%c0_23, %c0_24], %240 {strides = array<i32>} : memref<64x32xf32, #tpu.memory_space<vmem>>, vector<64x32xf32>,
    return
  }
  func.func @transform_0(%arg0: i32) -> (i32, i32) {
    %c0_i32 = arith.constant 0 : i32
    %c0_i32_0 = arith.constant 0 : i32
    return %arg0, %c0_i32 : i32, i32
  }
  func.func @transform_1(%arg0: i32) -> (i32, i32) {
    %c0_i32 = arith.constant 0 : i32
    %c0_i32_0 = arith.constant 0 : i32
    return %arg0, %c0_i32 : i32, i32
  }
  func.func @transform_2(%arg0: i32) -> (i32, i32) {
    %c0_i32 = arith.constant 0 : i32
    %c0_i32_0 = arith.constant 0 : i32
    return %arg0, %c0_i32 : i32, i32
  }
  func.func @transform_3(%arg0: i32) -> (i32, i32) {
    %c0_i32 = arith.constant 0 : i32
    %c0_i32_0 = arith.constant 0 : i32
    %c0_i32_1 = arith.constant 0 : i32
    return %c0_i32, %c0_i32_0 : i32, i32
  }
  func.func @transform_4(%arg0: i32) -> (i32, i32) {
    %c0_i32 = arith.constant 0 : i32
    %c0_i32_0 = arith.constant 0 : i32
    return %arg0, %c0_i32 : i32, i32
  }
}

</mosaic_0001>

<llo_original>
// kernel: voxel_pooling_relation.1
$region0: #{voxel_pooling_relation.1}
  #allocation0 [shape = 'u32[]', space=smem, size = 0x4, offset = 0x4, fixed_abs, tag = 'smem constant byte address 0x4 - core index']
  #allocation1 [shape = 'u32[72,128]{1,0:T(1,128)}', space=vmem, size = 0x9000, scoped, tag = 'internal scratch']
  %s0 = inlined_call_operand.vmem [shape: s32[64,8], index: 0, kind: input, shape index: {}]
  %s1 = inlined_call_operand.vmem [shape: f32[64,27], index: 1, kind: input, shape index: {}]
  %s2 = inlined_call_operand.vmem [shape: f32[128,32], index: 2, kind: input, shape index: {}]
  %s3 = inlined_call_operand.vmem [shape: f32[8,32], index: 3, kind: input, shape index: {}]
  %s4 = inlined_call_operand.vmem [shape: f32[64,32], index: 4, kind: output, shape index: {}]
  %s5 = sld [smem:[#allocation0]]
  $region26: #{voxel_pooling_relation.1} parent=0
    _
  %s7 = ssub.s32 1, %s5
  %s8 = scalar_select 0, %s7, %s5
  // Predicated region
  $region2: #{voxel_pooling_relation.1} parent=0 // pred_check
    _
  $region3: #{voxel_pooling_relation.1} parent=0 // pred_check_branch
    %10 = sbr.rel (0) target = $region5
  $region4: #{voxel_pooling_relation.1} parent=0 // pred_region
    _
  $region5: #{voxel_pooling_relation.1} parent=0 // pred_fallthru
    _
  // Predicated region
  $region6: #{voxel_pooling_relation.1} parent=0 // pred_check
    _
  $region7: #{voxel_pooling_relation.1} parent=0 // pred_check_branch
    %12 = sbr.rel (0) target = $region9
  $region8: #{voxel_pooling_relation.1} parent=0 // pred_region
    _
  $region9: #{voxel_pooling_relation.1} parent=0 // pred_fallthru
    _
  // Predicated region
  $region10: #{voxel_pooling_relation.1} parent=0 // pred_check
    _
  $region11: #{voxel_pooling_relation.1} parent=0 // pred_check_branch
    %14 = sbr.rel (0) target = $region13
  $region12: #{voxel_pooling_relation.1} parent=0 // pred_region
    _
  $region13: #{voxel_pooling_relation.1} parent=0 // pred_fallthru
    _
  // Predicated region
  $region14: #{voxel_pooling_relation.1} parent=0 // pred_check
    _
  $region15: #{voxel_pooling_relation.1} parent=0 // pred_check_branch
    %16 = sbr.rel (0) target = $region17
  $region16: #{voxel_pooling_relation.1} parent=0 // pred_region
    _
  $region17: #{voxel_pooling_relation.1} parent=0 // pred_fallthru
    _
  %v17 = vld [vmem:[%s0] sm:$0xff]
  %v18 = vld [vmem:[%s0 + $0x8] sm:$0xff]
  %v19 = vld [vmem:[%s0 + $0x10] sm:$0xff]
  %v20 = vld [vmem:[%s0 + $0x18] sm:$0xff]
  %v21 = vld [vmem:[%s0 + $0x20] sm:$0xff]
  %v22 = vld [vmem:[%s0 + $0x28] sm:$0xff]
  %v23 = vld [vmem:[%s0 + $0x30] sm:$0xff]
  %v24 = vld [vmem:[%s0 + $0x38] sm:$0xff]
  %v25 = vld [vmem:[%s1] sm:$0xff]
  %v26 = vld [vmem:[%s1 + $0x8] sm:$0xff]
  %v27 = vld [vmem:[%s1 + $0x10] sm:$0xff]
  %v28 = vld [vmem:[%s1 + $0x18] sm:$0xff]
  %v29 = vld [vmem:[%s1 + $0x20] sm:$0xff]
  %v30 = vld [vmem:[%s1 + $0x28] sm:$0xff]
  %v31 = vld [vmem:[%s1 + $0x30] sm:$0xff]
  %v32 = vld [vmem:[%s1 + $0x38] sm:$0xff]
  %v33 = vld [vmem:[%s2] sm:$0xff]
  %v34 = vld [vmem:[%s2 + $0x8] sm:$0xff]
  %v35 = vld [vmem:[%s2 + $0x10] sm:$0xff]
  %v36 = vld [vmem:[%s2 + $0x18] sm:$0xff]
  %v37 = vld [vmem:[%s2 + $0x20] sm:$0xff]
  %v38 = vld [vmem:[%s2 + $0x28] sm:$0xff]
  %v39 = vld [vmem:[%s2 + $0x30] sm:$0xff]
  %v40 = vld [vmem:[%s2 + $0x38] sm:$0xff]
  %v41 = vld [vmem:[%s2 + $0x40] sm:$0xff]
  %v42 = vld [vmem:[%s2 + $0x48] sm:$0xff]
  %v43 = vld [vmem:[%s2 + $0x50] sm:$0xff]
  %v44 = vld [vmem:[%s2 + $0x58] sm:$0xff]
  %v45 = vld [vmem:[%s2 + $0x60] sm:$0xff]
  %v46 = vld [vmem:[%s2 + $0x68] sm:$0xff]
  %v47 = vld [vmem:[%s2 + $0x70] sm:$0xff]
  %v48 = vld [vmem:[%s2 + $0x78] sm:$0xff]
  %v49 = vld [vmem:[%s3] sm:$0xff]
  %v50 = vperm.slane %v49, 7
  %59 = vrot.lane.b32.xlu0 %v25, 104
  %v60 = vpop.permute.xlu0 %59
  %61 = vrot.lane.b32.xlu0 %v26, 104
  %v62 = vpop.permute.xlu0 %61
  %63 = vrot.lane.b32.xlu0 %v27, 104
  %v64 = vpop.permute.xlu0 %63
  %65 = vrot.lane.b32.xlu0 %v28, 104
  %v66 = vpop.permute.xlu0 %65
  %67 = vrot.lane.b32.xlu0 %v29, 104
  %v68 = vpop.permute.xlu0 %67
  %69 = vrot.lane.b32.xlu0 %v30, 104
  %v70 = vpop.permute.xlu0 %69
  %71 = vrot.lane.b32.xlu0 %v31, 104
  %v72 = vpop.permute.xlu0 %71
  %73 = vrot.lane.b32.xlu0 %v32, 104
  %v74 = vpop.permute.xlu0 %73
  %v76 = vrot.slane %v49, 3
  %vm77 = vcmask 23552
  %v78 = vsel %vm77, %v60, 0
  %v80 = vsel %vm77, %v62, 0
  %v82 = vsel %vm77, %v64, 0
  %v84 = vsel %vm77, %v66, 0
  %v86 = vsel %vm77, %v68, 0
  %v88 = vsel %vm77, %v70, 0
  %v90 = vsel %vm77, %v72, 0
  %v92 = vsel %vm77, %v74, 0
  %vm94 = vcmask 1042432
  %v95 = vsel %vm94, %v76, 0
  %97 = vmatpush.msra.mxu0 0.0
  %98 = vmatpush.msra.mxu0 0.0
  %99 = vmatpush.msra.mxu0 0.0
  %100 = vmatpush.msra.mxu0 0.0
  %101 = vmatpush.msra.mxu0 0.0
  %102 = vmatpush.msra.mxu0 0.0
  %103 = vmatpush.msra.mxu0 0.0
  %104 = vmatpush.msra.mxu0 0.0
  %105 = vmatpush.msra.mxu0 0.0
  %106 = vmatpush.msra.mxu0 0.0
  %107 = vmatpush.msra.mxu0 0.0
  %108 = vmatpush.msra.mxu0 0.0
  %109 = vmatpush.msra.mxu0 0.0
  %110 = vmatpush.msra.mxu0 0.0
  %111 = vmatpush.msra.mxu0 0.0
  %112 = vmatpush.msra.mxu0 %v95
  %113 = vmatmul.f32.gmra.mxu0 %v78
  %v114 = vpop.f32.mrf.mxu0
  %v115 = vadd.f32 %v50, %v114
  %116 = vmatmul.f32.gmra.mxu0 %v80
  %v117 = vpop.f32.mrf.mxu0
  %v118 = vadd.f32 %v50, %v117
  %119 = vmatmul.f32.gmra.mxu0 %v82
  %v120 = vpop.f32.mrf.mxu0
  %v121 = vadd.f32 %v50, %v120
  %122 = vmatmul.f32.gmra.mxu0 %v84
  %v123 = vpop.f32.mrf.mxu0
  %v124 = vadd.f32 %v50, %v123
  %125 = vmatmul.f32.gmra.mxu0 %v86
  %v126 = vpop.f32.mrf.mxu0
  %v127 = vadd.f32 %v50, %v126
  %128 = vmatmul.f32.gmra.mxu0 %v88
  %v129 = vpop.f32.mrf.mxu0
  %v130 = vadd.f32 %v50, %v129
  %131 = vmatmul.f32.gmra.mxu0 %v90
  %v132 = vpop.f32.mrf.mxu0
  %v133 = vadd.f32 %v50, %v132
  %134 = vmatmul.f32.gmra.mxu0 %v92
  %v135 = vpop.f32.mrf.mxu0
  %v136 = vadd.f32 %v50, %v135
  %137 = vdwg.mxu0
  %v138 = vlaneseq
  %v139 = vand.u32 %v138, 127
  %v148 = vsub.f32 %v25, %v60
  %v149 = vsub.f32 %v26, %v62
  %v150 = vsub.f32 %v27, %v64
  %v151 = vsub.f32 %v28, %v66
  %v152 = vsub.f32 %v29, %v68
  %v153 = vsub.f32 %v30, %v70
  %v154 = vsub.f32 %v31, %v72
  %v155 = vsub.f32 %v32, %v74
  %v156 = vmul.f32 %v148, %v148
  %v157 = vmul.f32 %v149, %v149
  %v158 = vmul.f32 %v150, %v150
  %v159 = vmul.f32 %v151, %v151
  %v160 = vmul.f32 %v152, %v152
  %v161 = vmul.f32 %v153, %v153
  %v162 = vmul.f32 %v154, %v154
  %v163 = vmul.f32 %v155, %v155
  %172 = vrot.lane.b32.xlu0 %v156, 127
  %v173 = vpop.permute.xlu0 %172
  %174 = vrot.lane.b32.xlu0 %v157, 127
  %v175 = vpop.permute.xlu0 %174
  %176 = vrot.lane.b32.xlu0 %v158, 127
  %v177 = vpop.permute.xlu0 %176
  %178 = vrot.lane.b32.xlu0 %v159, 127
  %v179 = vpop.permute.xlu0 %178
  %180 = vrot.lane.b32.xlu0 %v160, 127
  %v181 = vpop.permute.xlu0 %180
  %182 = vrot.lane.b32.xlu0 %v161, 127
  %v183 = vpop.permute.xlu0 %182
  %184 = vrot.lane.b32.xlu0 %v162, 127
  %v185 = vpop.permute.xlu0 %184
  %186 = vrot.lane.b32.xlu0 %v163, 127
  %v187 = vpop.permute.xlu0 %186
  %v196 = vadd.f32 %v156, %v173
  %v197 = vadd.f32 %v157, %v175
  %v198 = vadd.f32 %v158, %v177
  %v199 = vadd.f32 %v159, %v179
  %v200 = vadd.f32 %v160, %v181
  %v201 = vadd.f32 %v161, %v183
  %v202 = vadd.f32 %v162, %v185
  %v203 = vadd.f32 %v163, %v187
  %204 = vrot.lane.b32.xlu0 %v156, 126
  %v205 = vpop.permute.xlu0 %204
  %206 = vrot.lane.b32.xlu0 %v157, 126
  %v207 = vpop.permute.xlu0 %206
  %208 = vrot.lane.b32.xlu0 %v158, 126
  %v209 = vpop.permute.xlu0 %208
  %210 = vrot.lane.b32.xlu0 %v159, 126
  %v211 = vpop.permute.xlu0 %210
  %212 = vrot.lane.b32.xlu0 %v160, 126
  %v213 = vpop.permute.xlu0 %212
  %214 = vrot.lane.b32.xlu0 %v161, 126
  %v215 = vpop.permute.xlu0 %214
  %216 = vrot.lane.b32.xlu0 %v162, 126
  %v217 = vpop.permute.xlu0 %216
  %218 = vrot.lane.b32.xlu0 %v163, 126
  %v219 = vpop.permute.xlu0 %218
  %v228 = vadd.f32 %v196, %v205
  %v229 = vadd.f32 %v197, %v207
  %v230 = vadd.f32 %v198, %v209
  %v231 = vadd.f32 %v199, %v211
  %v232 = vadd.f32 %v200, %v213
  %v233 = vadd.f32 %v201, %v215
  %v234 = vadd.f32 %v202, %v217
  %v235 = vadd.f32 %v203, %v219
  %v236 = vrsqrt.pop %v228
  %v237 = vmul.f32 %v236, %v228
  %v238 = vmul.f32 %v237, %v236
  %v239 = vmul.f32 0.5, %v238
  %v240 = vsub.f32 1.5, %v239
  %v241 = vmul.f32 %v236, %v240
  %v242 = vmul.f32 %v228, %v241
  %vm243 = vcmp.eq.f32.partialorder %v228, inf
  %v244 = vsel %vm243, %v228, %v242
  %vm245 = vcmp.eq.f32.partialorder %v228, 0.0
  %v246 = vand.u32 %v228, 2147483648
  %v247 = vsel %vm245, %v246, %v244
  %v248 = vrsqrt.pop %v229
  %v249 = vmul.f32 %v248, %v229
  %v250 = vmul.f32 %v249, %v248
  %v251 = vmul.f32 0.5, %v250
  %v252 = vsub.f32 1.5, %v251
  %v253 = vmul.f32 %v248, %v252
  %v254 = vmul.f32 %v229, %v253
  %vm255 = vcmp.eq.f32.partialorder %v229, inf
  %v256 = vsel %vm255, %v229, %v254
  %vm257 = vcmp.eq.f32.partialorder %v229, 0.0
  %v258 = vand.u32 %v229, 2147483648
  %v259 = vsel %vm257, %v258, %v256
  %v260 = vrsqrt.pop %v230
  %v261 = vmul.f32 %v260, %v230
  %v262 = vmul.f32 %v261, %v260
  %v263 = vmul.f32 0.5, %v262
  %v264 = vsub.f32 1.5, %v263
  %v265 = vmul.f32 %v260, %v264
  %v266 = vmul.f32 %v230, %v265
  %vm267 = vcmp.eq.f32.partialorder %v230, inf
  %v268 = vsel %vm267, %v230, %v266
  %vm269 = vcmp.eq.f32.partialorder %v230, 0.0
  %v270 = vand.u32 %v230, 2147483648
  %v271 = vsel %vm269, %v270, %v268
  %v272 = vrsqrt.pop %v231
  %v273 = vmul.f32 %v272, %v231
  %v274 = vmul.f32 %v273, %v272
  %v275 = vmul.f32 0.5, %v274
  %v276 = vsub.f32 1.5, %v275
  %v277 = vmul.f32 %v272, %v276
  %v278 = vmul.f32 %v231, %v277
  %vm279 = vcmp.eq.f32.partialorder %v231, inf
  %v280 = vsel %vm279, %v231, %v278
  %vm281 = vcmp.eq.f32.partialorder %v231, 0.0
  %v282 = vand.u32 %v231, 2147483648
  %v283 = vsel %vm281, %v282, %v280
  %v284 = vrsqrt.pop %v232
  %v285 = vmul.f32 %v284, %v232
  %v286 = vmul.f32 %v285, %v284
  %v287 = vmul.f32 0.5, %v286
  %v288 = vsub.f32 1.5, %v287
  %v289 = vmul.f32 %v284, %v288
  %v290 = vmul.f32 %v232, %v289
  %vm291 = vcmp.eq.f32.partialorder %v232, inf
  %v292 = vsel %vm291, %v232, %v290
  %vm293 = vcmp.eq.f32.partialorder %v232, 0.0
  %v294 = vand.u32 %v232, 2147483648
  %v295 = vsel %vm293, %v294, %v292
  %v296 = vrsqrt.pop %v233
  %v297 = vmul.f32 %v296, %v233
  %v298 = vmul.f32 %v297, %v296
  %v299 = vmul.f32 0.5, %v298
  %v300 = vsub.f32 1.5, %v299
  %v301 = vmul.f32 %v296, %v300
  %v302 = vmul.f32 %v233, %v301
  %vm303 = vcmp.eq.f32.partialorder %v233, inf
  %v304 = vsel %vm303, %v233, %v302
  %vm305 = vcmp.eq.f32.partialorder %v233, 0.0
  %v306 = vand.u32 %v233, 2147483648
  %v307 = vsel %vm305, %v306, %v304
  %v308 = vrsqrt.pop %v234
  %v309 = vmul.f32 %v308, %v234
  %v310 = vmul.f32 %v309, %v308
  %v311 = vmul.f32 0.5, %v310
  %v312 = vsub.f32 1.5, %v311
  %v313 = vmul.f32 %v308, %v312
  %v314 = vmul.f32 %v234, %v313
  %vm315 = vcmp.eq.f32.partialorder %v234, inf
  %v316 = vsel %vm315, %v234, %v314
  %vm317 = vcmp.eq.f32.partialorder %v234, 0.0
  %v318 = vand.u32 %v234, 2147483648
  %v319 = vsel %vm317, %v318, %v316
  %v320 = vrsqrt.pop %v235
  %v321 = vmul.f32 %v320, %v235
  %v322 = vmul.f32 %v321, %v320
  %v323 = vmul.f32 0.5, %v322
  %v324 = vsub.f32 1.5, %v323
  %v325 = vmul.f32 %v320, %v324
  %v326 = vmul.f32 %v235, %v325
  %vm327 = vcmp.eq.f32.partialorder %v235, inf
  %v328 = vsel %vm327, %v235, %v326
  %vm329 = vcmp.eq.f32.partialorder %v235, 0.0
  %v330 = vand.u32 %v235, 2147483648
  %v331 = vsel %vm329, %v330, %v328
  %333 = vset.pattern.permute.xlu0 0
  %334 = vperm.xlu0 %333, %v247
  %v335 = vpop.permute.xlu0 %334
  %338 = vset.pattern.permute.xlu0 0
  %339 = vperm.xlu0 %338, %v259
  %v340 = vpop.permute.xlu0 %339
  %343 = vset.pattern.permute.xlu0 0
  %344 = vperm.xlu0 %343, %v271
  %v345 = vpop.permute.xlu0 %344
  %348 = vset.pattern.permute.xlu0 0
  %349 = vperm.xlu0 %348, %v283
  %v350 = vpop.permute.xlu0 %349
  %353 = vset.pattern.permute.xlu0 0
  %354 = vperm.xlu0 %353, %v295
  %v355 = vpop.permute.xlu0 %354
  %358 = vset.pattern.permute.xlu0 0
  %359 = vperm.xlu0 %358, %v307
  %v360 = vpop.permute.xlu0 %359
  %363 = vset.pattern.permute.xlu0 0
  %364 = vperm.xlu0 %363, %v319
  %v365 = vpop.permute.xlu0 %364
  %368 = vset.pattern.permute.xlu0 0
  %369 = vperm.xlu0 %368, %v331
  %v370 = vpop.permute.xlu0 %369
  %v372 = vperm.slane %v49, 6
  %v373 = vmul.f32 %v335, %v372
  %v374 = vmul.f32 %v340, %v372
  %v375 = vmul.f32 %v345, %v372
  %v376 = vmul.f32 %v350, %v372
  %v377 = vmul.f32 %v355, %v372
  %v378 = vmul.f32 %v360, %v372
  %v379 = vmul.f32 %v365, %v372
  %v380 = vmul.f32 %v370, %v372
  %v381 = vsel %vm77, %v25, 0
  %v383 = vsel %vm77, %v26, 0
  %v385 = vsel %vm77, %v27, 0
  %v387 = vsel %vm77, %v28, 0
  %v389 = vsel %vm77, %v29, 0
  %v391 = vsel %vm77, %v30, 0
  %v393 = vsel %vm77, %v31, 0
  %v395 = vsel %vm77, %v32, 0
  %v397 = vsel %vm94, %v49, 0
  %399 = vmatpush.msra.mxu0 0.0
  %400 = vmatpush.msra.mxu0 0.0
  %401 = vmatpush.msra.mxu0 0.0
  %402 = vmatpush.msra.mxu0 0.0
  %403 = vmatpush.msra.mxu0 0.0
  %404 = vmatpush.msra.mxu0 0.0
  %405 = vmatpush.msra.mxu0 0.0
  %406 = vmatpush.msra.mxu0 0.0
  %407 = vmatpush.msra.mxu0 0.0
  %408 = vmatpush.msra.mxu0 0.0
  %409 = vmatpush.msra.mxu0 0.0
  %410 = vmatpush.msra.mxu0 0.0
  %411 = vmatpush.msra.mxu0 0.0
  %412 = vmatpush.msra.mxu0 0.0
  %413 = vmatpush.msra.mxu0 0.0
  %414 = vmatpush.msra.mxu0 %v397
  %415 = vmatmul.f32.gmra.mxu0 %v381
  %v416 = vpop.f32.mrf.mxu0
  %v417 = vadd.f32 %v373, %v416
  %418 = vmatmul.f32.gmra.mxu0 %v383
  %v419 = vpop.f32.mrf.mxu0
  %v420 = vadd.f32 %v374, %v419
  %421 = vmatmul.f32.gmra.mxu0 %v385
  %v422 = vpop.f32.mrf.mxu0
  %v423 = vadd.f32 %v375, %v422
  %424 = vmatmul.f32.gmra.mxu0 %v387
  %v425 = vpop.f32.mrf.mxu0
  %v426 = vadd.f32 %v376, %v425
  %427 = vmatmul.f32.gmra.mxu0 %v389
  %v428 = vpop.f32.mrf.mxu0
  %v429 = vadd.f32 %v377, %v428
  %430 = vmatmul.f32.gmra.mxu0 %v391
  %v431 = vpop.f32.mrf.mxu0
  %v432 = vadd.f32 %v378, %v431
  %433 = vmatmul.f32.gmra.mxu0 %v393
  %v434 = vpop.f32.mrf.mxu0
  %v435 = vadd.f32 %v379, %v434
  %436 = vmatmul.f32.gmra.mxu0 %v395
  %v437 = vpop.f32.mrf.mxu0
  %v438 = vadd.f32 %v380, %v437
  %439 = vdwg.mxu0
  %v440 = vadd.f32 %v417, %v115
  %v441 = vadd.f32 %v420, %v118
  %v442 = vadd.f32 %v423, %v121
  %v443 = vadd.f32 %v426, %v124
  %v444 = vadd.f32 %v429, %v127
  %v445 = vadd.f32 %v432, %v130
  %v446 = vadd.f32 %v435, %v133
  %v447 = vadd.f32 %v438, %v136
  %448 = vset.pattern.permute.xlu0 0
  %449 = vperm.xlu0 %448, %v17
  %v450 = vpop.permute.xlu0 %449
  %451 = vset.pattern.permute.xlu0 0
  %452 = vperm.xlu0 %451, %v18
  %v453 = vpop.permute.xlu0 %452
  %454 = vset.pattern.permute.xlu0 0
  %455 = vperm.xlu0 %454, %v19
  %v456 = vpop.permute.xlu0 %455
  %457 = vset.pattern.permute.xlu0 0
  %458 = vperm.xlu0 %457, %v20
  %v459 = vpop.permute.xlu0 %458
  %460 = vset.pattern.permute.xlu0 0
  %461 = vperm.xlu0 %460, %v21
  %v462 = vpop.permute.xlu0 %461
  %463 = vset.pattern.permute.xlu0 0
  %464 = vperm.xlu0 %463, %v22
  %v465 = vpop.permute.xlu0 %464
  %466 = vset.pattern.permute.xlu0 0
  %467 = vperm.xlu0 %466, %v23
  %v468 = vpop.permute.xlu0 %467
  %469 = vset.pattern.permute.xlu0 0
  %470 = vperm.xlu0 %469, %v24
  %v471 = vpop.permute.xlu0 %470
  %vm472 = vcmp.eq.s32.totalorder %v450, %v139
  %vm473 = vcmp.eq.s32.totalorder %v453, %v139
  %vm474 = vcmp.eq.s32.totalorder %v456, %v139
  %vm475 = vcmp.eq.s32.totalorder %v459, %v139
  %vm476 = vcmp.eq.s32.totalorder %v462, %v139
  %vm477 = vcmp.eq.s32.totalorder %v465, %v139
  %vm478 = vcmp.eq.s32.totalorder %v468, %v139
  %vm479 = vcmp.eq.s32.totalorder %v471, %v139
  %v480 = vsel %vm472, 1, 0
  %v481 = vsel %vm473, 1, 0
  %v482 = vsel %vm474, 1, 0
  %v483 = vsel %vm475, 1, 0
  %v484 = vsel %vm476, 1, 0
  %v485 = vsel %vm477, 1, 0
  %v486 = vsel %vm478, 1, 0
  %v487 = vsel %vm479, 1, 0
  %v488 = vcvt.s32.f32 %v480
  %v489 = vcvt.s32.f32 %v481
  %v490 = vcvt.s32.f32 %v482
  %v491 = vcvt.s32.f32 %v483
  %v492 = vcvt.s32.f32 %v484
  %v493 = vcvt.s32.f32 %v485
  %v494 = vcvt.s32.f32 %v486
  %v495 = vcvt.s32.f32 %v487
  %496 = vmatpush.msra.mxu0 %v48
  %497 = vmatpush.msra.mxu0 %v47
  %498 = vmatpush.msra.mxu0 %v46
  %499 = vmatpush.msra.mxu0 %v45
  %500 = vmatpush.msra.mxu0 %v44
  %501 = vmatpush.msra.mxu0 %v43
  %502 = vmatpush.msra.mxu0 %v42
  %503 = vmatpush.msra.mxu0 %v41
  %504 = vmatpush.msra.mxu0 %v40
  %505 = vmatpush.msra.mxu0 %v39
  %506 = vmatpush.msra.mxu0 %v38
  %507 = vmatpush.msra.mxu0 %v37
  %508 = vmatpush.msra.mxu0 %v36
  %509 = vmatpush.msra.mxu0 %v35
  %510 = vmatpush.msra.mxu0 %v34
  %511 = vmatpush.msra.mxu0 %v33
  %512 = vmatmul.f32.gmra.mxu0 %v488
  %v513 = vpop.f32.mrf.mxu0
  %v514 = vadd.f32 0.0, %v513
  %515 = vmatmul.f32.gmra.mxu0 %v489
  %v516 = vpop.f32.mrf.mxu0
  %v517 = vadd.f32 0.0, %v516
  %518 = vmatmul.f32.gmra.mxu0 %v490
  %v519 = vpop.f32.mrf.mxu0
  %v520 = vadd.f32 0.0, %v519
  %521 = vmatmul.f32.gmra.mxu0 %v491
  %v522 = vpop.f32.mrf.mxu0
  %v523 = vadd.f32 0.0, %v522
  %524 = vmatmul.f32.gmra.mxu0 %v492
  %v525 = vpop.f32.mrf.mxu0
  %v526 = vadd.f32 0.0, %v525
  %527 = vmatmul.f32.gmra.mxu0 %v493
  %v528 = vpop.f32.mrf.mxu0
  %v529 = vadd.f32 0.0, %v528
  %530 = vmatmul.f32.gmra.mxu0 %v494
  %v531 = vpop.f32.mrf.mxu0
  %v532 = vadd.f32 0.0, %v531
  %533 = vmatmul.f32.gmra.mxu0 %v495
  %v534 = vpop.f32.mrf.mxu0
  %v535 = vadd.f32 0.0, %v534
  %536 = vdwg.mxu0
  %v537 = vmul.f32 %v514, %v440
  %v538 = vmul.f32 %v517, %v441
  %v539 = vmul.f32 %v520, %v442
  %v540 = vmul.f32 %v523, %v443
  %v541 = vmul.f32 %v526, %v444
  %v542 = vmul.f32 %v529, %v445
  %v543 = vmul.f32 %v532, %v446
  %v544 = vmul.f32 %v535, %v447
  %v545 = vadd.f32 %v537, 0.0
  %v546 = vadd.f32 %v538, 0.0
  %v547 = vadd.f32 %v539, 0.0
  %v548 = vadd.f32 %v540, 0.0
  %v549 = vadd.f32 %v541, 0.0
  %v550 = vadd.f32 %v542, 0.0
  %v551 = vadd.f32 %v543, 0.0
  %v552 = vadd.f32 %v544, 0.0
  %vm553 = vcmp.eq.s32.totalorder %v17, 0
  %vm554 = vcmp.eq.s32.totalorder %v18, 0
  %vm555 = vcmp.eq.s32.totalorder %v19, 0
  %vm556 = vcmp.eq.s32.totalorder %v20, 0
  %vm557 = vcmp.eq.s32.totalorder %v21, 0
  %vm558 = vcmp.eq.s32.totalorder %v22, 0
  %vm559 = vcmp.eq.s32.totalorder %v23, 0
  %vm560 = vcmp.eq.s32.totalorder %v24, 0
  %v561 = vsel %vm553, 1, 0
  %v562 = vsel %vm554, 1, 0
  %v563 = vsel %vm555, 1, 0
  %v564 = vsel %vm556, 1, 0
  %v565 = vsel %vm557, 1, 0
  %v566 = vsel %vm558, 1, 0
  %v567 = vsel %vm559, 1, 0
  %v568 = vsel %vm560, 1, 0
  %569 = vset.pattern.permute.xlu0 1
  %570 = vperm.xlu0 %569, %v561
  %v571 = vpop.permute.xlu0 %570
  %572 = vset.pattern.permute.xlu0 1
  %573 = vperm.xlu0 %572, %v562
  %v574 = vpop.permute.xlu0 %573
  %575 = vset.pattern.permute.xlu0 1
  %576 = vperm.xlu0 %575, %v563
  %v577 = vpop.permute.xlu0 %576
  %578 = vset.pattern.permute.xlu0 1
  %579 = vperm.xlu0 %578, %v564
  %v580 = vpop.permute.xlu0 %579
  %581 = vset.pattern.permute.xlu0 1
  %582 = vperm.xlu0 %581, %v565
  %v583 = vpop.permute.xlu0 %582
  %584 = vset.pattern.permute.xlu0 1
  %585 = vperm.xlu0 %584, %v566
  %v586 = vpop.permute.xlu0 %585
  %587 = vset.pattern.permute.xlu0 1
  %588 = vperm.xlu0 %587, %v567
  %v589 = vpop.permute.xlu0 %588
  %590 = vset.pattern.permute.xlu0 1
  %591 = vperm.xlu0 %590, %v568
  %v592 = vpop.permute.xlu0 %591
  %vm593 = vcmp.eq.s32.totalorder %v571, 1
  %vm594 = vcmp.eq.s32.totalorder %v574, 1
  %vm595 = vcmp.eq.s32.totalorder %v577, 1
  %vm596 = vcmp.eq.s32.totalorder %v580, 1
  %vm597 = vcmp.eq.s32.totalorder %v583, 1
  %vm598 = vcmp.eq.s32.totalorder %v586, 1
  %vm599 = vcmp.eq.s32.totalorder %v589, 1
  %vm600 = vcmp.eq.s32.totalorder %v592, 1
  %601 = vrot.lane.b32.xlu0 %v25, 125
  %v602 = vpop.permute.xlu0 %601
  %603 = vrot.lane.b32.xlu0 %v26, 125
  %v604 = vpop.permute.xlu0 %603
  %605 = vrot.lane.b32.xlu0 %v27, 125
  %v606 = vpop.permute.xlu0 %605
  %607 = vrot.lane.b32.xlu0 %v28, 125
  %v608 = vpop.permute.xlu0 %607
  %609 = vrot.lane.b32.xlu0 %v29, 125
  %v610 = vpop.permute.xlu0 %609
  %611 = vrot.lane.b32.xlu0 %v30, 125
  %v612 = vpop.permute.xlu0 %611
  %613 = vrot.lane.b32.xlu0 %v31, 125
  %v614 = vpop.permute.xlu0 %613
  %615 = vrot.lane.b32.xlu0 %v32, 125
  %v616 = vpop.permute.xlu0 %615
  %v625 = vsel %vm593, %v25, %v602
  %v626 = vsel %vm594, %v26, %v604
  %v627 = vsel %vm595, %v27, %v606
  %v628 = vsel %vm596, %v28, %v608
  %v629 = vsel %vm597, %v29, %v610
  %v630 = vsel %vm598, %v30, %v612
  %v631 = vsel %vm599, %v31, %v614
  %v632 = vsel %vm600, %v32, %v616
  %633 = vrot.lane.b32.xlu0 %v17, 1
  %v634 = vpop.permute.xlu0 %633
  %635 = vrot.lane.b32.xlu0 %v18, 1
  %v636 = vpop.permute.xlu0 %635
  %637 = vrot.lane.b32.xlu0 %v19, 1
  %v638 = vpop.permute.xlu0 %637
  %639 = vrot.lane.b32.xlu0 %v20, 1
  %v640 = vpop.permute.xlu0 %639
  %641 = vrot.lane.b32.xlu0 %v21, 1
  %v642 = vpop.permute.xlu0 %641
  %643 = vrot.lane.b32.xlu0 %v22, 1
  %v644 = vpop.permute.xlu0 %643
  %645 = vrot.lane.b32.xlu0 %v23, 1
  %v646 = vpop.permute.xlu0 %645
  %647 = vrot.lane.b32.xlu0 %v24, 1
  %v648 = vpop.permute.xlu0 %647
  %v649 = vsel %vm553, %v634, %v17
  %v650 = vsel %vm554, %v636, %v18
  %v651 = vsel %vm555, %v638, %v19
  %v652 = vsel %vm556, %v640, %v20
  %v653 = vsel %vm557, %v642, %v21
  %v654 = vsel %vm558, %v644, %v22
  %v655 = vsel %vm559, %v646, %v23
  %v656 = vsel %vm560, %v648, %v24
  %v657 = vsub.f32 %v625, %v60
  %v658 = vsub.f32 %v626, %v62
  %v659 = vsub.f32 %v627, %v64
  %v660 = vsub.f32 %v628, %v66
  %v661 = vsub.f32 %v629, %v68
  %v662 = vsub.f32 %v630, %v70
  %v663 = vsub.f32 %v631, %v72
  %v664 = vsub.f32 %v632, %v74
  %v665 = vmul.f32 %v657, %v657
  %v666 = vmul.f32 %v658, %v658
  %v667 = vmul.f32 %v659, %v659
  %v668 = vmul.f32 %v660, %v660
  %v669 = vmul.f32 %v661, %v661
  %v670 = vmul.f32 %v662, %v662
  %v671 = vmul.f32 %v663, %v663
  %v672 = vmul.f32 %v664, %v664
  %681 = vrot.lane.b32.xlu0 %v665, 127
  %v682 = vpop.permute.xlu0 %681
  %683 = vrot.lane.b32.xlu0 %v666, 127
  %v684 = vpop.permute.xlu0 %683
  %685 = vrot.lane.b32.xlu0 %v667, 127
  %v686 = vpop.permute.xlu0 %685
  %687 = vrot.lane.b32.xlu0 %v668, 127
  %v688 = vpop.permute.xlu0 %687
  %689 = vrot.lane.b32.xlu0 %v669, 127
  %v690 = vpop.permute.xlu0 %689
  %691 = vrot.lane.b32.xlu0 %v670, 127
  %v692 = vpop.permute.xlu0 %691
  %693 = vrot.lane.b32.xlu0 %v671, 127
  %v694 = vpop.permute.xlu0 %693
  %695 = vrot.lane.b32.xlu0 %v672, 127
  %v696 = vpop.permute.xlu0 %695
  %v705 = vadd.f32 %v665, %v682
  %v706 = vadd.f32 %v666, %v684
  %v707 = vadd.f32 %v667, %v686
  %v708 = vadd.f32 %v668, %v688
  %v709 = vadd.f32 %v669, %v690
  %v710 = vadd.f32 %v670, %v692
  %v711 = vadd.f32 %v671, %v694
  %v712 = vadd.f32 %v672, %v696
  %713 = vrot.lane.b32.xlu0 %v665, 126
  %v714 = vpop.permute.xlu0 %713
  %715 = vrot.lane.b32.xlu0 %v666, 126
  %v716 = vpop.permute.xlu0 %715
  %717 = vrot.lane.b32.xlu0 %v667, 126
  %v718 = vpop.permute.xlu0 %717
  %719 = vrot.lane.b32.xlu0 %v668, 126
  %v720 = vpop.permute.xlu0 %719
  %721 = vrot.lane.b32.xlu0 %v669, 126
  %v722 = vpop.permute.xlu0 %721
  %723 = vrot.lane.b32.xlu0 %v670, 126
  %v724 = vpop.permute.xlu0 %723
  %725 = vrot.lane.b32.xlu0 %v671, 126
  %v726 = vpop.permute.xlu0 %725
  %727 = vrot.lane.b32.xlu0 %v672, 126
  %v728 = vpop.permute.xlu0 %727
  %v737 = vadd.f32 %v705, %v714
  %v738 = vadd.f32 %v706, %v716
  %v739 = vadd.f32 %v707, %v718
  %v740 = vadd.f32 %v708, %v720
  %v741 = vadd.f32 %v709, %v722
  %v742 = vadd.f32 %v710, %v724
  %v743 = vadd.f32 %v711, %v726
  %v744 = vadd.f32 %v712, %v728
  %v745 = vrsqrt.pop %v737
  %v746 = vmul.f32 %v745, %v737
  %v747 = vmul.f32 %v746, %v745
  %v748 = vmul.f32 0.5, %v747
  %v749 = vsub.f32 1.5, %v748
  %v750 = vmul.f32 %v745, %v749
  %v751 = vmul.f32 %v737, %v750
  %vm752 = vcmp.eq.f32.partialorder %v737, inf
  %v753 = vsel %vm752, %v737, %v751
  %vm754 = vcmp.eq.f32.partialorder %v737, 0.0
  %v755 = vand.u32 %v737, 2147483648
  %v756 = vsel %vm754, %v755, %v753
  %v757 = vrsqrt.pop %v738
  %v758 = vmul.f32 %v757, %v738
  %v759 = vmul.f32 %v758, %v757
  %v760 = vmul.f32 0.5, %v759
  %v761 = vsub.f32 1.5, %v760
  %v762 = vmul.f32 %v757, %v761
  %v763 = vmul.f32 %v738, %v762
  %vm764 = vcmp.eq.f32.partialorder %v738, inf
  %v765 = vsel %vm764, %v738, %v763
  %vm766 = vcmp.eq.f32.partialorder %v738, 0.0
  %v767 = vand.u32 %v738, 2147483648
  %v768 = vsel %vm766, %v767, %v765
  %v769 = vrsqrt.pop %v739
  %v770 = vmul.f32 %v769, %v739
  %v771 = vmul.f32 %v770, %v769
  %v772 = vmul.f32 0.5, %v771
  %v773 = vsub.f32 1.5, %v772
  %v774 = vmul.f32 %v769, %v773
  %v775 = vmul.f32 %v739, %v774
  %vm776 = vcmp.eq.f32.partialorder %v739, inf
  %v777 = vsel %vm776, %v739, %v775
  %vm778 = vcmp.eq.f32.partialorder %v739, 0.0
  %v779 = vand.u32 %v739, 2147483648
  %v780 = vsel %vm778, %v779, %v777
  %v781 = vrsqrt.pop %v740
  %v782 = vmul.f32 %v781, %v740
  %v783 = vmul.f32 %v782, %v781
  %v784 = vmul.f32 0.5, %v783
  %v785 = vsub.f32 1.5, %v784
  %v786 = vmul.f32 %v781, %v785
  %v787 = vmul.f32 %v740, %v786
  %vm788 = vcmp.eq.f32.partialorder %v740, inf
  %v789 = vsel %vm788, %v740, %v787
  %vm790 = vcmp.eq.f32.partialorder %v740, 0.0
  %v791 = vand.u32 %v740, 2147483648
  %v792 = vsel %vm790, %v791, %v789
  %v793 = vrsqrt.pop %v741
  %v794 = vmul.f32 %v793, %v741
  %v795 = vmul.f32 %v794, %v793
  %v796 = vmul.f32 0.5, %v795
  %v797 = vsub.f32 1.5, %v796
  %v798 = vmul.f32 %v793, %v797
  %v799 = vmul.f32 %v741, %v798
  %vm800 = vcmp.eq.f32.partialorder %v741, inf
  %v801 = vsel %vm800, %v741, %v799
  %vm802 = vcmp.eq.f32.partialorder %v741, 0.0
  %v803 = vand.u32 %v741, 2147483648
  %v804 = vsel %vm802, %v803, %v801
  %v805 = vrsqrt.pop %v742
  %v806 = vmul.f32 %v805, %v742
  %v807 = vmul.f32 %v806, %v805
  %v808 = vmul.f32 0.5, %v807
  %v809 = vsub.f32 1.5, %v808
  %v810 = vmul.f32 %v805, %v809
  %v811 = vmul.f32 %v742, %v810
  %vm812 = vcmp.eq.f32.partialorder %v742, inf
  %v813 = vsel %vm812, %v742, %v811
  %vm814 = vcmp.eq.f32.partialorder %v742, 0.0
  %v815 = vand.u32 %v742, 2147483648
  %v816 = vsel %vm814, %v815, %v813
  %v817 = vrsqrt.pop %v743
  %v818 = vmul.f32 %v817, %v743
  %v819 = vmul.f32 %v818, %v817
  %v820 = vmul.f32 0.5, %v819
  %v821 = vsub.f32 1.5, %v820
  %v822 = vmul.f32 %v817, %v821
  %v823 = vmul.f32 %v743, %v822
  %vm824 = vcmp.eq.f32.partialorder %v743, inf
  %v825 = vsel %vm824, %v743, %v823
  %vm826 = vcmp.eq.f32.partialorder %v743, 0.0
  %v827 = vand.u32 %v743, 2147483648
  %v828 = vsel %vm826, %v827, %v825
  %v829 = vrsqrt.pop %v744
  %v830 = vmul.f32 %v829, %v744
  %v831 = vmul.f32 %v830, %v829
  %v832 = vmul.f32 0.5, %v831
  %v833 = vsub.f32 1.5, %v832
  %v834 = vmul.f32 %v829, %v833
  %v835 = vmul.f32 %v744, %v834
  %vm836 = vcmp.eq.f32.partialorder %v744, inf
  %v837 = vsel %vm836, %v744, %v835
  %vm838 = vcmp.eq.f32.partialorder %v744, 0.0
  %v839 = vand.u32 %v744, 2147483648
  %v840 = vsel %vm838, %v839, %v837
  %842 = vset.pattern.permute.xlu0 0
  %843 = vperm.xlu0 %842, %v756
  %v844 = vpop.permute.xlu0 %843
  %847 = vset.pattern.permute.xlu0 0
  %848 = vperm.xlu0 %847, %v768
  %v849 = vpop.permute.xlu0 %848
  %852 = vset.pattern.permute.xlu0 0
  %853 = vperm.xlu0 %852, %v780
  %v854 = vpop.permute.xlu0 %853
  %857 = vset.pattern.permute.xlu0 0
  %858 = vperm.xlu0 %857, %v792
  %v859 = vpop.permute.xlu0 %858
  %862 = vset.pattern.permute.xlu0 0
  %863 = vperm.xlu0 %862, %v804
  %v864 = vpop.permute.xlu0 %863
  %867 = vset.pattern.permute.xlu0 0
  %868 = vperm.xlu0 %867, %v816
  %v869 = vpop.permute.xlu0 %868
  %872 = vset.pattern.permute.xlu0 0
  %873 = vperm.xlu0 %872, %v828
  %v874 = vpop.permute.xlu0 %873
  %877 = vset.pattern.permute.xlu0 0
  %878 = vperm.xlu0 %877, %v840
  %v879 = vpop.permute.xlu0 %878
  %v881 = vmul.f32 %v844, %v372
  %v882 = vmul.f32 %v849, %v372
  %v883 = vmul.f32 %v854, %v372
  %v884 = vmul.f32 %v859, %v372
  %v885 = vmul.f32 %v864, %v372
  %v886 = vmul.f32 %v869, %v372
  %v887 = vmul.f32 %v874, %v372
  %v888 = vmul.f32 %v879, %v372
  %v890 = vsel %vm77, %v625, 0
  %v893 = vsel %vm77, %v626, 0
  %v896 = vsel %vm77, %v627, 0
  %v899 = vsel %vm77, %v628, 0
  %v902 = vsel %vm77, %v629, 0
  %v905 = vsel %vm77, %v630, 0
  %v908 = vsel %vm77, %v631, 0
  %v911 = vsel %vm77, %v632, 0
  %913 = vmatpush.msra.mxu0 0.0
  %914 = vmatpush.msra.mxu0 0.0
  %915 = vmatpush.msra.mxu0 0.0
  %916 = vmatpush.msra.mxu0 0.0
  %917 = vmatpush.msra.mxu0 0.0
  %918 = vmatpush.msra.mxu0 0.0
  %919 = vmatpush.msra.mxu0 0.0
  %920 = vmatpush.msra.mxu0 0.0
  %921 = vmatpush.msra.mxu0 0.0
  %922 = vmatpush.msra.mxu0 0.0
  %923 = vmatpush.msra.mxu0 0.0
  %924 = vmatpush.msra.mxu0 0.0
  %925 = vmatpush.msra.mxu0 0.0
  %926 = vmatpush.msra.mxu0 0.0
  %927 = vmatpush.msra.mxu0 0.0
  %928 = vmatpush.msra.mxu0 %v397
  %929 = vmatmul.f32.gmra.mxu0 %v890
  %v930 = vpop.f32.mrf.mxu0
  %v931 = vadd.f32 %v881, %v930
  %932 = vmatmul.f32.gmra.mxu0 %v893
  %v933 = vpop.f32.mrf.mxu0
  %v934 = vadd.f32 %v882, %v933
  %935 = vmatmul.f32.gmra.mxu0 %v896
  %v936 = vpop.f32.mrf.mxu0
  %v937 = vadd.f32 %v883, %v936
  %938 = vmatmul.f32.gmra.mxu0 %v899
  %v939 = vpop.f32.mrf.mxu0
  %v940 = vadd.f32 %v884, %v939
  %941 = vmatmul.f32.gmra.mxu0 %v902
  %v942 = vpop.f32.mrf.mxu0
  %v943 = vadd.f32 %v885, %v942
  %944 = vmatmul.f32.gmra.mxu0 %v905
  %v945 = vpop.f32.mrf.mxu0
  %v946 = vadd.f32 %v886, %v945
  %947 = vmatmul.f32.gmra.mxu0 %v908
  %v948 = vpop.f32.mrf.mxu0
  %v949 = vadd.f32 %v887, %v948
  %950 = vmatmul.f32.gmra.mxu0 %v911
  %v951 = vpop.f32.mrf.mxu0
  %v952 = vadd.f32 %v888, %v951
  %953 = vdwg.mxu0
  %v954 = vadd.f32 %v931, %v115
  %v955 = vadd.f32 %v934, %v118
  %v956 = vadd.f32 %v937, %v121
  %v957 = vadd.f32 %v940, %v124
  %v958 = vadd.f32 %v943, %v127
  %v959 = vadd.f32 %v946, %v130
  %v960 = vadd.f32 %v949, %v133
  %v961 = vadd.f32 %v952, %v136
  %962 = vset.pattern.permute.xlu0 1
  %963 = vperm.xlu0 %962, %v649
  %v964 = vpop.permute.xlu0 %963
  %965 = vset.pattern.permute.xlu0 1
  %966 = vperm.xlu0 %965, %v650
  %v967 = vpop.permute.xlu0 %966
  %968 = vset.pattern.permute.xlu0 1
  %969 = vperm.xlu0 %968, %v651
  %v970 = vpop.permute.xlu0 %969
  %971 = vset.pattern.permute.xlu0 1
  %972 = vperm.xlu0 %971, %v652
  %v973 = vpop.permute.xlu0 %972
  %974 = vset.pattern.permute.xlu0 1
  %975 = vperm.xlu0 %974, %v653
  %v976 = vpop.permute.xlu0 %975
  %977 = vset.pattern.permute.xlu0 1
  %978 = vperm.xlu0 %977, %v654
  %v979 = vpop.permute.xlu0 %978
  %980 = vset.pattern.permute.xlu0 1
  %981 = vperm.xlu0 %980, %v655
  %v982 = vpop.permute.xlu0 %981
  %983 = vset.pattern.permute.xlu0 1
  %984 = vperm.xlu0 %983, %v656
  %v985 = vpop.permute.xlu0 %984
  %vm986 = vcmp.eq.s32.totalorder %v964, %v139
  %vm987 = vcmp.eq.s32.totalorder %v967, %v139
  %vm988 = vcmp.eq.s32.totalorder %v970, %v139
  %vm989 = vcmp.eq.s32.totalorder %v973, %v139
  %vm990 = vcmp.eq.s32.totalorder %v976, %v139
  %vm991 = vcmp.eq.s32.totalorder %v979, %v139
  %vm992 = vcmp.eq.s32.totalorder %v982, %v139
  %vm993 = vcmp.eq.s32.totalorder %v985, %v139
  %v994 = vsel %vm986, 1, 0
  %v995 = vsel %vm987, 1, 0
  %v996 = vsel %vm988, 1, 0
  %v997 = vsel %vm989, 1, 0
  %v998 = vsel %vm990, 1, 0
  %v999 = vsel %vm991, 1, 0
  %v1000 = vsel %vm992, 1, 0
  %v1001 = vsel %vm993, 1, 0
  %v1002 = vcvt.s32.f32 %v994
  %v1003 = vcvt.s32.f32 %v995
  %v1004 = vcvt.s32.f32 %v996
  %v1005 = vcvt.s32.f32 %v997
  %v1006 = vcvt.s32.f32 %v998
  %v1007 = vcvt.s32.f32 %v999
  %v1008 = vcvt.s32.f32 %v1000
  %v1009 = vcvt.s32.f32 %v1001
  %1010 = vmatpush.msra.mxu0 %v48
  %1011 = vmatpush.msra.mxu0 %v47
  %1012 = vmatpush.msra.mxu0 %v46
  %1013 = vmatpush.msra.mxu0 %v45
  %1014 = vmatpush.msra.mxu0 %v44
  %1015 = vmatpush.msra.mxu0 %v43
  %1016 = vmatpush.msra.mxu0 %v42
  %1017 = vmatpush.msra.mxu0 %v41
  %1018 = vmatpush.msra.mxu0 %v40
  %1019 = vmatpush.msra.mxu0 %v39
  %1020 = vmatpush.msra.mxu0 %v38
  %1021 = vmatpush.msra.mxu0 %v37
  %1022 = vmatpush.msra.mxu0 %v36
  %1023 = vmatpush.msra.mxu0 %v35
  %1024 = vmatpush.msra.mxu0 %v34
  %1025 = vmatpush.msra.mxu0 %v33
  %1026 = vmatmul.f32.gmra.mxu0 %v1002
  %v1027 = vpop.f32.mrf.mxu0
  %v1028 = vadd.f32 0.0, %v1027
  %1029 = vmatmul.f32.gmra.mxu0 %v1003
  %v1030 = vpop.f32.mrf.mxu0
  %v1031 = vadd.f32 0.0, %v1030
  %1032 = vmatmul.f32.gmra.mxu0 %v1004
  %v1033 = vpop.f32.mrf.mxu0
  %v1034 = vadd.f32 0.0, %v1033
  %1035 = vmatmul.f32.gmra.mxu0 %v1005
  %v1036 = vpop.f32.mrf.mxu0
  %v1037 = vadd.f32 0.0, %v1036
  %1038 = vmatmul.f32.gmra.mxu0 %v1006
  %v1039 = vpop.f32.mrf.mxu0
  %v1040 = vadd.f32 0.0, %v1039
  %1041 = vmatmul.f32.gmra.mxu0 %v1007
  %v1042 = vpop.f32.mrf.mxu0
  %v1043 = vadd.f32 0.0, %v1042
  %1044 = vmatmul.f32.gmra.mxu0 %v1008
  %v1045 = vpop.f32.mrf.mxu0
  %v1046 = vadd.f32 0.0, %v1045
  %1047 = vmatmul.f32.gmra.mxu0 %v1009
  %v1048 = vpop.f32.mrf.mxu0
  %v1049 = vadd.f32 0.0, %v1048
  %1050 = vdwg.mxu0
  %v1051 = vmul.f32 %v1028, %v954
  %v1052 = vmul.f32 %v1031, %v955
  %v1053 = vmul.f32 %v1034, %v956
  %v1054 = vmul.f32 %v1037, %v957
  %v1055 = vmul.f32 %v1040, %v958
  %v1056 = vmul.f32 %v1043, %v959
  %v1057 = vmul.f32 %v1046, %v960
  %v1058 = vmul.f32 %v1049, %v961
  %v1059 = vadd.f32 %v545, %v1051
  %v1060 = vadd.f32 %v546, %v1052
  %v1061 = vadd.f32 %v547, %v1053
  %v1062 = vadd.f32 %v548, %v1054
  %v1063 = vadd.f32 %v549, %v1055
  %v1064 = vadd.f32 %v550, %v1056
  %v1065 = vadd.f32 %v551, %v1057
  %v1066 = vadd.f32 %v552, %v1058
  %1067 = vset.pattern.permute.xlu0 2
  %1068 = vperm.xlu0 %1067, %v561
  %v1069 = vpop.permute.xlu0 %1068
  %1070 = vset.pattern.permute.xlu0 2
  %1071 = vperm.xlu0 %1070, %v562
  %v1072 = vpop.permute.xlu0 %1071
  %1073 = vset.pattern.permute.xlu0 2
  %1074 = vperm.xlu0 %1073, %v563
  %v1075 = vpop.permute.xlu0 %1074
  %1076 = vset.pattern.permute.xlu0 2
  %1077 = vperm.xlu0 %1076, %v564
  %v1078 = vpop.permute.xlu0 %1077
  %1079 = vset.pattern.permute.xlu0 2
  %1080 = vperm.xlu0 %1079, %v565
  %v1081 = vpop.permute.xlu0 %1080
  %1082 = vset.pattern.permute.xlu0 2
  %1083 = vperm.xlu0 %1082, %v566
  %v1084 = vpop.permute.xlu0 %1083
  %1085 = vset.pattern.permute.xlu0 2
  %1086 = vperm.xlu0 %1085, %v567
  %v1087 = vpop.permute.xlu0 %1086
  %1088 = vset.pattern.permute.xlu0 2
  %1089 = vperm.xlu0 %1088, %v568
  %v1090 = vpop.permute.xlu0 %1089
  %vm1091 = vcmp.eq.s32.totalorder %v1069, 1
  %vm1092 = vcmp.eq.s32.totalorder %v1072, 1
  %vm1093 = vcmp.eq.s32.totalorder %v1075, 1
  %vm1094 = vcmp.eq.s32.totalorder %v1078, 1
  %vm1095 = vcmp.eq.s32.totalorder %v1081, 1
  %vm1096 = vcmp.eq.s32.totalorder %v1084, 1
  %vm1097 = vcmp.eq.s32.totalorder %v1087, 1
  %vm1098 = vcmp.eq.s32.totalorder %v1090, 1
  %1099 = vrot.lane.b32.xlu0 %v25, 122
  %v1100 = vpop.permute.xlu0 %1099
  %1101 = vrot.lane.b32.xlu0 %v26, 122
  %v1102 = vpop.permute.xlu0 %1101
  %1103 = vrot.lane.b32.xlu0 %v27, 122
  %v1104 = vpop.permute.xlu0 %1103
  %1105 = vrot.lane.b32.xlu0 %v28, 122
  %v1106 = vpop.permute.xlu0 %1105
  %1107 = vrot.lane.b32.xlu0 %v29, 122
  %v1108 = vpop.permute.xlu0 %1107
  %1109 = vrot.lane.b32.xlu0 %v30, 122
  %v1110 = vpop.permute.xlu0 %1109
  %1111 = vrot.lane.b32.xlu0 %v31, 122
  %v1112 = vpop.permute.xlu0 %1111
  %1113 = vrot.lane.b32.xlu0 %v32, 122
  %v1114 = vpop.permute.xlu0 %1113
  %v1123 = vsel %vm1091, %v25, %v1100
  %v1124 = vsel %vm1092, %v26, %v1102
  %v1125 = vsel %vm1093, %v27, %v1104
  %v1126 = vsel %vm1094, %v28, %v1106
  %v1127 = vsel %vm1095, %v29, %v1108
  %v1128 = vsel %vm1096, %v30, %v1110
  %v1129 = vsel %vm1097, %v31, %v1112
  %v1130 = vsel %vm1098, %v32, %v1114
  %1131 = vrot.lane.b32.xlu0 %v17, 2
  %v1132 = vpop.permute.xlu0 %1131
  %1133 = vrot.lane.b32.xlu0 %v18, 2
  %v1134 = vpop.permute.xlu0 %1133
  %1135 = vrot.lane.b32.xlu0 %v19, 2
  %v1136 = vpop.permute.xlu0 %1135
  %1137 = vrot.lane.b32.xlu0 %v20, 2
  %v1138 = vpop.permute.xlu0 %1137
  %1139 = vrot.lane.b32.xlu0 %v21, 2
  %v1140 = vpop.permute.xlu0 %1139
  %1141 = vrot.lane.b32.xlu0 %v22, 2
  %v1142 = vpop.permute.xlu0 %1141
  %1143 = vrot.lane.b32.xlu0 %v23, 2
  %v1144 = vpop.permute.xlu0 %1143
  %1145 = vrot.lane.b32.xlu0 %v24, 2
  %v1146 = vpop.permute.xlu0 %1145
  %v1147 = vsel %vm553, %v1132, %v17
  %v1148 = vsel %vm554, %v1134, %v18
  %v1149 = vsel %vm555, %v1136, %v19
  %v1150 = vsel %vm556, %v1138, %v20
  %v1151 = vsel %vm557, %v1140, %v21
  %v1152 = vsel %vm558, %v1142, %v22
  %v1153 = vsel %vm559, %v1144, %v23
  %v1154 = vsel %vm560, %v1146, %v24
  %v1155 = vsub.f32 %v1123, %v60
  %v1156 = vsub.f32 %v1124, %v62
  %v1157 = vsub.f32 %v1125, %v64
  %v1158 = vsub.f32 %v1126, %v66
  %v1159 = vsub.f32 %v1127, %v68
  %v1160 = vsub.f32 %v1128, %v70
  %v1161 = vsub.f32 %v1129, %v72
  %v1162 = vsub.f32 %v1130, %v74
  %v1163 = vmul.f32 %v1155, %v1155
  %v1164 = vmul.f32 %v1156, %v1156
  %v1165 = vmul.f32 %v1157, %v1157
  %v1166 = vmul.f32 %v1158, %v1158
  %v1167 = vmul.f32 %v1159, %v1159
  %v1168 = vmul.f32 %v1160, %v1160
  %v1169 = vmul.f32 %v1161, %v1161
  %v1170 = vmul.f32 %v1162, %v1162
  %1179 = vrot.lane.b32.xlu0 %v1163, 127
  %v1180 = vpop.permute.xlu0 %1179
  %1181 = vrot.lane.b32.xlu0 %v1164, 127
  %v1182 = vpop.permute.xlu0 %1181
  %1183 = vrot.lane.b32.xlu0 %v1165, 127
  %v1184 = vpop.permute.xlu0 %1183
  %1185 = vrot.lane.b32.xlu0 %v1166, 127
  %v1186 = vpop.permute.xlu0 %1185
  %1187 = vrot.lane.b32.xlu0 %v1167, 127
  %v1188 = vpop.permute.xlu0 %1187
  %1189 = vrot.lane.b32.xlu0 %v1168, 127
  %v1190 = vpop.permute.xlu0 %1189
  %1191 = vrot.lane.b32.xlu0 %v1169, 127
  %v1192 = vpop.permute.xlu0 %1191
  %1193 = vrot.lane.b32.xlu0 %v1170, 127
  %v1194 = vpop.permute.xlu0 %1193
  %v1203 = vadd.f32 %v1163, %v1180
  %v1204 = vadd.f32 %v1164, %v1182
  %v1205 = vadd.f32 %v1165, %v1184
  %v1206 = vadd.f32 %v1166, %v1186
  %v1207 = vadd.f32 %v1167, %v1188
  %v1208 = vadd.f32 %v1168, %v1190
  %v1209 = vadd.f32 %v1169, %v1192
  %v1210 = vadd.f32 %v1170, %v1194
  %1211 = vrot.lane.b32.xlu0 %v1163, 126
  %v1212 = vpop.permute.xlu0 %1211
  %1213 = vrot.lane.b32.xlu0 %v1164, 126
  %v1214 = vpop.permute.xlu0 %1213
  %1215 = vrot.lane.b32.xlu0 %v1165, 126
  %v1216 = vpop.permute.xlu0 %1215
  %1217 = vrot.lane.b32.xlu0 %v1166, 126
  %v1218 = vpop.permute.xlu0 %1217
  %1219 = vrot.lane.b32.xlu0 %v1167, 126
  %v1220 = vpop.permute.xlu0 %1219
  %1221 = vrot.lane.b32.xlu0 %v1168, 126
  %v1222 = vpop.permute.xlu0 %1221
  %1223 = vrot.lane.b32.xlu0 %v1169, 126
  %v1224 = vpop.permute.xlu0 %1223
  %1225 = vrot.lane.b32.xlu0 %v1170, 126
  %v1226 = vpop.permute.xlu0 %1225
  %v1235 = vadd.f32 %v1203, %v1212
  %v1236 = vadd.f32 %v1204, %v1214
  %v1237 = vadd.f32 %v1205, %v1216
  %v1238 = vadd.f32 %v1206, %v1218
  %v1239 = vadd.f32 %v1207, %v1220
  %v1240 = vadd.f32 %v1208, %v1222
  %v1241 = vadd.f32 %v1209, %v1224
  %v1242 = vadd.f32 %v1210, %v1226
  %v1243 = vrsqrt.pop %v1235
  %v1244 = vmul.f32 %v1243, %v1235
  %v1245 = vmul.f32 %v1244, %v1243
  %v1246 = vmul.f32 0.5, %v1245
  %v1247 = vsub.f32 1.5, %v1246
  %v1248 = vmul.f32 %v1243, %v1247
  %v1249 = vmul.f32 %v1235, %v1248
  %vm1250 = vcmp.eq.f32.partialorder %v1235, inf
  %v1251 = vsel %vm1250, %v1235, %v1249
  %vm1252 = vcmp.eq.f32.partialorder %v1235, 0.0
  %v1253 = vand.u32 %v1235, 2147483648
  %v1254 = vsel %vm1252, %v1253, %v1251
  %v1255 = vrsqrt.pop %v1236
  %v1256 = vmul.f32 %v1255, %v1236
  %v1257 = vmul.f32 %v1256, %v1255
  %v1258 = vmul.f32 0.5, %v1257
  %v1259 = vsub.f32 1.5, %v1258
  %v1260 = vmul.f32 %v1255, %v1259
  %v1261 = vmul.f32 %v1236, %v1260
  %vm1262 = vcmp.eq.f32.partialorder %v1236, inf
  %v1263 = vsel %vm1262, %v1236, %v1261
  %vm1264 = vcmp.eq.f32.partialorder %v1236, 0.0
  %v1265 = vand.u32 %v1236, 2147483648
  %v1266 = vsel %vm1264, %v1265, %v1263
  %v1267 = vrsqrt.pop %v1237
  %v1268 = vmul.f32 %v1267, %v1237
  %v1269 = vmul.f32 %v1268, %v1267
  %v1270 = vmul.f32 0.5, %v1269
  %v1271 = vsub.f32 1.5, %v1270
  %v1272 = vmul.f32 %v1267, %v1271
  %v1273 = vmul.f32 %v1237, %v1272
  %vm1274 = vcmp.eq.f32.partialorder %v1237, inf
  %v1275 = vsel %vm1274, %v1237, %v1273
  %vm1276 = vcmp.eq.f32.partialorder %v1237, 0.0
  %v1277 = vand.u32 %v1237, 2147483648
  %v1278 = vsel %vm1276, %v1277, %v1275
  %v1279 = vrsqrt.pop %v1238
  %v1280 = vmul.f32 %v1279, %v1238
  %v1281 = vmul.f32 %v1280, %v1279
  %v1282 = vmul.f32 0.5, %v1281
  %v1283 = vsub.f32 1.5, %v1282
  %v1284 = vmul.f32 %v1279, %v1283
  %v1285 = vmul.f32 %v1238, %v1284
  %vm1286 = vcmp.eq.f32.partialorder %v1238, inf
  %v1287 = vsel %vm1286, %v1238, %v1285
  %vm1288 = vcmp.eq.f32.partialorder %v1238, 0.0
  %v1289 = vand.u32 %v1238, 2147483648
  %v1290 = vsel %vm1288, %v1289, %v1287
  %v1291 = vrsqrt.pop %v1239
  %v1292 = vmul.f32 %v1291, %v1239
  %v1293 = vmul.f32 %v1292, %v1291
  %v1294 = vmul.f32 0.5, %v1293
  %v1295 = vsub.f32 1.5, %v1294
  %v1296 = vmul.f32 %v1291, %v1295
  %v1297 = vmul.f32 %v1239, %v1296
  %vm1298 = vcmp.eq.f32.partialorder %v1239, inf
  %v1299 = vsel %vm1298, %v1239, %v1297
  %vm1300 = vcmp.eq.f32.partialorder %v1239, 0.0
  %v1301 = vand.u32 %v1239, 2147483648
  %v1302 = vsel %vm1300, %v1301, %v1299
  %v1303 = vrsqrt.pop %v1240
  %v1304 = vmul.f32 %v1303, %v1240
  %v1305 = vmul.f32 %v1304, %v1303
  %v1306 = vmul.f32 0.5, %v1305
  %v1307 = vsub.f32 1.5, %v1306
  %v1308 = vmul.f32 %v1303, %v1307
  %v1309 = vmul.f32 %v1240, %v1308
  %vm1310 = vcmp.eq.f32.partialorder %v1240, inf
  %v1311 = vsel %vm1310, %v1240, %v1309
  %vm1312 = vcmp.eq.f32.partialorder %v1240, 0.0
  %v1313 = vand.u32 %v1240, 2147483648
  %v1314 = vsel %vm1312, %v1313, %v1311
  %v1315 = vrsqrt.pop %v1241
  %v1316 = vmul.f32 %v1315, %v1241
  %v1317 = vmul.f32 %v1316, %v1315
  %v1318 = vmul.f32 0.5, %v1317
  %v1319 = vsub.f32 1.5, %v1318
  %v1320 = vmul.f32 %v1315, %v1319
  %v1321 = vmul.f32 %v1241, %v1320
  %vm1322 = vcmp.eq.f32.partialorder %v1241, inf
  %v1323 = vsel %vm1322, %v1241, %v1321
  %vm1324 = vcmp.eq.f32.partialorder %v1241, 0.0
  %v1325 = vand.u32 %v1241, 2147483648
  %v1326 = vsel %vm1324, %v1325, %v1323
  %v1327 = vrsqrt.pop %v1242
  %v1328 = vmul.f32 %v1327, %v1242
  %v1329 = vmul.f32 %v1328, %v1327
  %v1330 = vmul.f32 0.5, %v1329
  %v1331 = vsub.f32 1.5, %v1330
  %v1332 = vmul.f32 %v1327, %v1331
  %v1333 = vmul.f32 %v1242, %v1332
  %vm1334 = vcmp.eq.f32.partialorder %v1242, inf
  %v1335 = vsel %vm1334, %v1242, %v1333
  %vm1336 = vcmp.eq.f32.partialorder %v1242, 0.0
  %v1337 = vand.u32 %v1242, 2147483648
  %v1338 = vsel %vm1336, %v1337, %v1335
  %1340 = vset.pattern.permute.xlu0 0
  %1341 = vperm.xlu0 %1340, %v1254
  %v1342 = vpop.permute.xlu0 %1341
  %1345 = vset.pattern.permute.xlu0 0
  %1346 = vperm.xlu0 %1345, %v1266
  %v1347 = vpop.permute.xlu0 %1346
  %1350 = vset.pattern.permute.xlu0 0
  %1351 = vperm.xlu0 %1350, %v1278
  %v1352 = vpop.permute.xlu0 %1351
  %1355 = vset.pattern.permute.xlu0 0
  %1356 = vperm.xlu0 %1355, %v1290
  %v1357 = vpop.permute.xlu0 %1356
  %1360 = vset.pattern.permute.xlu0 0
  %1361 = vperm.xlu0 %1360, %v1302
  %v1362 = vpop.permute.xlu0 %1361
  %1365 = vset.pattern.permute.xlu0 0
  %1366 = vperm.xlu0 %1365, %v1314
  %v1367 = vpop.permute.xlu0 %1366
  %1370 = vset.pattern.permute.xlu0 0
  %1371 = vperm.xlu0 %1370, %v1326
  %v1372 = vpop.permute.xlu0 %1371
  %1375 = vset.pattern.permute.xlu0 0
  %1376 = vperm.xlu0 %1375, %v1338
  %v1377 = vpop.permute.xlu0 %1376
  %v1379 = vmul.f32 %v1342, %v372
  %v1380 = vmul.f32 %v1347, %v372
  %v1381 = vmul.f32 %v1352, %v372
  %v1382 = vmul.f32 %v1357, %v372
  %v1383 = vmul.f32 %v1362, %v372
  %v1384 = vmul.f32 %v1367, %v372
  %v1385 = vmul.f32 %v1372, %v372
  %v1386 = vmul.f32 %v1377, %v372
  %v1388 = vsel %vm77, %v1123, 0
  %v1391 = vsel %vm77, %v1124, 0
  %v1394 = vsel %vm77, %v1125, 0
  %v1397 = vsel %vm77, %v1126, 0
  %v1400 = vsel %vm77, %v1127, 0
  %v1403 = vsel %vm77, %v1128, 0
  %v1406 = vsel %vm77, %v1129, 0
  %v1409 = vsel %vm77, %v1130, 0
  %1411 = vmatpush.msra.mxu0 0.0
  %1412 = vmatpush.msra.mxu0 0.0
  %1413 = vmatpush.msra.mxu0 0.0
  %1414 = vmatpush.msra.mxu0 0.0
  %1415 = vmatpush.msra.mxu0 0.0
  %1416 = vmatpush.msra.mxu0 0.0
  %1417 = vmatpush.msra.mxu0 0.0
  %1418 = vmatpush.msra.mxu0 0.0
  %1419 = vmatpush.msra.mxu0 0.0
  %1420 = vmatpush.msra.mxu0 0.0
  %1421 = vmatpush.msra.mxu0 0.0
  %1422 = vmatpush.msra.mxu0 0.0
  %1423 = vmatpush.msra.mxu0 0.0
  %1424 = vmatpush.msra.mxu0 0.0
  %1425 = vmatpush.msra.mxu0 0.0
  %1426 = vmatpush.msra.mxu0 %v397
  %1427 = vmatmul.f32.gmra.mxu0 %v1388
  %v1428 = vpop.f32.mrf.mxu0
  %v1429 = vadd.f32 %v1379, %v1428
  %1430 = vmatmul.f32.gmra.mxu0 %v1391
  %v1431 = vpop.f32.mrf.mxu0
  %v1432 = vadd.f32 %v1380, %v1431
  %1433 = vmatmul.f32.gmra.mxu0 %v1394
  %v1434 = vpop.f32.mrf.mxu0
  %v1435 = vadd.f32 %v1381, %v1434
  %1436 = vmatmul.f32.gmra.mxu0 %v1397
  %v1437 = vpop.f32.mrf.mxu0
  %v1438 = vadd.f32 %v1382, %v1437
  %1439 = vmatmul.f32.gmra.mxu0 %v1400
  %v1440 = vpop.f32.mrf.mxu0
  %v1441 = vadd.f32 %v1383, %v1440
  %1442 = vmatmul.f32.gmra.mxu0 %v1403
  %v1443 = vpop.f32.mrf.mxu0
  %v1444 = vadd.f32 %v1384, %v1443
  %1445 = vmatmul.f32.gmra.mxu0 %v1406
  %v1446 = vpop.f32.mrf.mxu0
  %v1447 = vadd.f32 %v1385, %v1446
  %1448 = vmatmul.f32.gmra.mxu0 %v1409
  %v1449 = vpop.f32.mrf.mxu0
  %v1450 = vadd.f32 %v1386, %v1449
  %1451 = vdwg.mxu0
  %v1452 = vadd.f32 %v1429, %v115
  %v1453 = vadd.f32 %v1432, %v118
  %v1454 = vadd.f32 %v1435, %v121
  %v1455 = vadd.f32 %v1438, %v124
  %v1456 = vadd.f32 %v1441, %v127
  %v1457 = vadd.f32 %v1444, %v130
  %v1458 = vadd.f32 %v1447, %v133
  %v1459 = vadd.f32 %v1450, %v136
  %1460 = vset.pattern.permute.xlu0 2
  %1461 = vperm.xlu0 %1460, %v1147
  %v1462 = vpop.permute.xlu0 %1461
  %1463 = vset.pattern.permute.xlu0 2
  %1464 = vperm.xlu0 %1463, %v1148
  %v1465 = vpop.permute.xlu0 %1464
  %1466 = vset.pattern.permute.xlu0 2
  %1467 = vperm.xlu0 %1466, %v1149
  %v1468 = vpop.permute.xlu0 %1467
  %1469 = vset.pattern.permute.xlu0 2
  %1470 = vperm.xlu0 %1469, %v1150
  %v1471 = vpop.permute.xlu0 %1470
  %1472 = vset.pattern.permute.xlu0 2
  %1473 = vperm.xlu0 %1472, %v1151
  %v1474 = vpop.permute.xlu0 %1473
  %1475 = vset.pattern.permute.xlu0 2
  %1476 = vperm.xlu0 %1475, %v1152
  %v1477 = vpop.permute.xlu0 %1476
  %1478 = vset.pattern.permute.xlu0 2
  %1479 = vperm.xlu0 %1478, %v1153
  %v1480 = vpop.permute.xlu0 %1479
  %1481 = vset.pattern.permute.xlu0 2
  %1482 = vperm.xlu0 %1481, %v1154
  %v1483 = vpop.permute.xlu0 %1482
  %vm1484 = vcmp.eq.s32.totalorder %v1462, %v139
  %vm1485 = vcmp.eq.s32.totalorder %v1465, %v139
  %vm1486 = vcmp.eq.s32.totalorder %v1468, %v139
  %vm1487 = vcmp.eq.s32.totalorder %v1471, %v139
  %vm1488 = vcmp.eq.s32.totalorder %v1474, %v139
  %vm1489 = vcmp.eq.s32.totalorder %v1477, %v139
  %vm1490 = vcmp.eq.s32.totalorder %v1480, %v139
  %vm1491 = vcmp.eq.s32.totalorder %v1483, %v139
  %v1492 = vsel %vm1484, 1, 0
  %v1493 = vsel %vm1485, 1, 0
  %v1494 = vsel %vm1486, 1, 0
  %v1495 = vsel %vm1487, 1, 0
  %v1496 = vsel %vm1488, 1, 0
  %v1497 = vsel %vm1489, 1, 0
  %v1498 = vsel %vm1490, 1, 0
  %v1499 = vsel %vm1491, 1, 0
  %v1500 = vcvt.s32.f32 %v1492
  %v1501 = vcvt.s32.f32 %v1493
  %v1502 = vcvt.s32.f32 %v1494
  %v1503 = vcvt.s32.f32 %v1495
  %v1504 = vcvt.s32.f32 %v1496
  %v1505 = vcvt.s32.f32 %v1497
  %v1506 = vcvt.s32.f32 %v1498
  %v1507 = vcvt.s32.f32 %v1499
  %1508 = vmatpush.msra.mxu0 %v48
  %1509 = vmatpush.msra.mxu0 %v47
  %1510 = vmatpush.msra.mxu0 %v46
  %1511 = vmatpush.msra.mxu0 %v45
  %1512 = vmatpush.msra.mxu0 %v44
  %1513 = vmatpush.msra.mxu0 %v43
  %1514 = vmatpush.msra.mxu0 %v42
  %1515 = vmatpush.msra.mxu0 %v41
  %1516 = vmatpush.msra.mxu0 %v40
  %1517 = vmatpush.msra.mxu0 %v39
  %1518 = vmatpush.msra.mxu0 %v38
  %1519 = vmatpush.msra.mxu0 %v37
  %1520 = vmatpush.msra.mxu0 %v36
  %1521 = vmatpush.msra.mxu0 %v35
  %1522 = vmatpush.msra.mxu0 %v34
  %1523 = vmatpush.msra.mxu0 %v33
  %1524 = vmatmul.f32.gmra.mxu0 %v1500
  %v1525 = vpop.f32.mrf.mxu0
  %v1526 = vadd.f32 0.0, %v1525
  %1527 = vmatmul.f32.gmra.mxu0 %v1501
  %v1528 = vpop.f32.mrf.mxu0
  %v1529 = vadd.f32 0.0, %v1528
  %1530 = vmatmul.f32.gmra.mxu0 %v1502
  %v1531 = vpop.f32.mrf.mxu0
  %v1532 = vadd.f32 0.0, %v1531
  %1533 = vmatmul.f32.gmra.mxu0 %v1503
  %v1534 = vpop.f32.mrf.mxu0
  %v1535 = vadd.f32 0.0, %v1534
  %1536 = vmatmul.f32.gmra.mxu0 %v1504
  %v1537 = vpop.f32.mrf.mxu0
  %v1538 = vadd.f32 0.0, %v1537
  %1539 = vmatmul.f32.gmra.mxu0 %v1505
  %v1540 = vpop.f32.mrf.mxu0
  %v1541 = vadd.f32 0.0, %v1540
  %1542 = vmatmul.f32.gmra.mxu0 %v1506
  %v1543 = vpop.f32.mrf.mxu0
  %v1544 = vadd.f32 0.0, %v1543
  %1545 = vmatmul.f32.gmra.mxu0 %v1507
  %v1546 = vpop.f32.mrf.mxu0
  %v1547 = vadd.f32 0.0, %v1546
  %1548 = vdwg.mxu0
  %v1549 = vmul.f32 %v1526, %v1452
  %v1550 = vmul.f32 %v1529, %v1453
  %v1551 = vmul.f32 %v1532, %v1454
  %v1552 = vmul.f32 %v1535, %v1455
  %v1553 = vmul.f32 %v1538, %v1456
  %v1554 = vmul.f32 %v1541, %v1457
  %v1555 = vmul.f32 %v1544, %v1458
  %v1556 = vmul.f32 %v1547, %v1459
  %v1557 = vadd.f32 %v1059, %v1549
  %v1558 = vadd.f32 %v1060, %v1550
  %v1559 = vadd.f32 %v1061, %v1551
  %v1560 = vadd.f32 %v1062, %v1552
  %v1561 = vadd.f32 %v1063, %v1553
  %v1562 = vadd.f32 %v1064, %v1554
  %v1563 = vadd.f32 %v1065, %v1555
  %v1564 = vadd.f32 %v1066, %v1556
  %1565 = vset.pattern.permute.xlu0 3
  %1566 = vperm.xlu0 %1565, %v561
  %v1567 = vpop.permute.xlu0 %1566
  %1568 = vset.pattern.permute.xlu0 3
  %1569 = vperm.xlu0 %1568, %v562
  %v1570 = vpop.permute.xlu0 %1569
  %1571 = vset.pattern.permute.xlu0 3
  %1572 = vperm.xlu0 %1571, %v563
  %v1573 = vpop.permute.xlu0 %1572
  %1574 = vset.pattern.permute.xlu0 3
  %1575 = vperm.xlu0 %1574, %v564
  %v1576 = vpop.permute.xlu0 %1575
  %1577 = vset.pattern.permute.xlu0 3
  %1578 = vperm.xlu0 %1577, %v565
  %v1579 = vpop.permute.xlu0 %1578
  %1580 = vset.pattern.permute.xlu0 3
  %1581 = vperm.xlu0 %1580, %v566
  %v1582 = vpop.permute.xlu0 %1581
  %1583 = vset.pattern.permute.xlu0 3
  %1584 = vperm.xlu0 %1583, %v567
  %v1585 = vpop.permute.xlu0 %1584
  %1586 = vset.pattern.permute.xlu0 3
  %1587 = vperm.xlu0 %1586, %v568
  %v1588 = vpop.permute.xlu0 %1587
  %vm1589 = vcmp.eq.s32.totalorder %v1567, 1
  %vm1590 = vcmp.eq.s32.totalorder %v1570, 1
  %vm1591 = vcmp.eq.s32.totalorder %v1573, 1
  %vm1592 = vcmp.eq.s32.totalorder %v1576, 1
  %vm1593 = vcmp.eq.s32.totalorder %v1579, 1
  %vm1594 = vcmp.eq.s32.totalorder %v1582, 1
  %vm1595 = vcmp.eq.s32.totalorder %v1585, 1
  %vm1596 = vcmp.eq.s32.totalorder %v1588, 1
  %1597 = vrot.lane.b32.xlu0 %v25, 119
  %v1598 = vpop.permute.xlu0 %1597
  %1599 = vrot.lane.b32.xlu0 %v26, 119
  %v1600 = vpop.permute.xlu0 %1599
  %1601 = vrot.lane.b32.xlu0 %v27, 119
  %v1602 = vpop.permute.xlu0 %1601
  %1603 = vrot.lane.b32.xlu0 %v28, 119
  %v1604 = vpop.permute.xlu0 %1603
  %1605 = vrot.lane.b32.xlu0 %v29, 119
  %v1606 = vpop.permute.xlu0 %1605
  %1607 = vrot.lane.b32.xlu0 %v30, 119
  %v1608 = vpop.permute.xlu0 %1607
  %1609 = vrot.lane.b32.xlu0 %v31, 119
  %v1610 = vpop.permute.xlu0 %1609
  %1611 = vrot.lane.b32.xlu0 %v32, 119
  %v1612 = vpop.permute.xlu0 %1611
  %v1621 = vsel %vm1589, %v25, %v1598
  %v1622 = vsel %vm1590, %v26, %v1600
  %v1623 = vsel %vm1591, %v27, %v1602
  %v1624 = vsel %vm1592, %v28, %v1604
  %v1625 = vsel %vm1593, %v29, %v1606
  %v1626 = vsel %vm1594, %v30, %v1608
  %v1627 = vsel %vm1595, %v31, %v1610
  %v1628 = vsel %vm1596, %v32, %v1612
  %1629 = vrot.lane.b32.xlu0 %v17, 3
  %v1630 = vpop.permute.xlu0 %1629
  %1631 = vrot.lane.b32.xlu0 %v18, 3
  %v1632 = vpop.permute.xlu0 %1631
  %1633 = vrot.lane.b32.xlu0 %v19, 3
  %v1634 = vpop.permute.xlu0 %1633
  %1635 = vrot.lane.b32.xlu0 %v20, 3
  %v1636 = vpop.permute.xlu0 %1635
  %1637 = vrot.lane.b32.xlu0 %v21, 3
  %v1638 = vpop.permute.xlu0 %1637
  %1639 = vrot.lane.b32.xlu0 %v22, 3
  %v1640 = vpop.permute.xlu0 %1639
  %1641 = vrot.lane.b32.xlu0 %v23, 3
  %v1642 = vpop.permute.xlu0 %1641
  %1643 = vrot.lane.b32.xlu0 %v24, 3
  %v1644 = vpop.permute.xlu0 %1643
  %v1645 = vsel %vm553, %v1630, %v17
  %v1646 = vsel %vm554, %v1632, %v18
  %v1647 = vsel %vm555, %v1634, %v19
  %v1648 = vsel %vm556, %v1636, %v20
  %v1649 = vsel %vm557, %v1638, %v21
  %v1650 = vsel %vm558, %v1640, %v22
  %v1651 = vsel %vm559, %v1642, %v23
  %v1652 = vsel %vm560, %v1644, %v24
  %v1653 = vsub.f32 %v1621, %v60
  %v1654 = vsub.f32 %v1622, %v62
  %v1655 = vsub.f32 %v1623, %v64
  %v1656 = vsub.f32 %v1624, %v66
  %v1657 = vsub.f32 %v1625, %v68
  %v1658 = vsub.f32 %v1626, %v70
  %v1659 = vsub.f32 %v1627, %v72
  %v1660 = vsub.f32 %v1628, %v74
  %v1661 = vmul.f32 %v1653, %v1653
  %v1662 = vmul.f32 %v1654, %v1654
  %v1663 = vmul.f32 %v1655, %v1655
  %v1664 = vmul.f32 %v1656, %v1656
  %v1665 = vmul.f32 %v1657, %v1657
  %v1666 = vmul.f32 %v1658, %v1658
  %v1667 = vmul.f32 %v1659, %v1659
  %v1668 = vmul.f32 %v1660, %v1660
  %1677 = vrot.lane.b32.xlu0 %v1661, 127
  %v1678 = vpop.permute.xlu0 %1677
  %1679 = vrot.lane.b32.xlu0 %v1662, 127
  %v1680 = vpop.permute.xlu0 %1679
  %1681 = vrot.lane.b32.xlu0 %v1663, 127
  %v1682 = vpop.permute.xlu0 %1681
  %1683 = vrot.lane.b32.xlu0 %v1664, 127
  %v1684 = vpop.permute.xlu0 %1683
  %1685 = vrot.lane.b32.xlu0 %v1665, 127
  %v1686 = vpop.permute.xlu0 %1685
  %1687 = vrot.lane.b32.xlu0 %v1666, 127
  %v1688 = vpop.permute.xlu0 %1687
  %1689 = vrot.lane.b32.xlu0 %v1667, 127
  %v1690 = vpop.permute.xlu0 %1689
  %1691 = vrot.lane.b32.xlu0 %v1668, 127
  %v1692 = vpop.permute.xlu0 %1691
  %v1701 = vadd.f32 %v1661, %v1678
  %v1702 = vadd.f32 %v1662, %v1680
  %v1703 = vadd.f32 %v1663, %v1682
  %v1704 = vadd.f32 %v1664, %v1684
  %v1705 = vadd.f32 %v1665, %v1686
  %v1706 = vadd.f32 %v1666, %v1688
  %v1707 = vadd.f32 %v1667, %v1690
  %v1708 = vadd.f32 %v1668, %v1692
  %1709 = vrot.lane.b32.xlu0 %v1661, 126
  %v1710 = vpop.permute.xlu0 %1709
  %1711 = vrot.lane.b32.xlu0 %v1662, 126
  %v1712 = vpop.permute.xlu0 %1711
  %1713 = vrot.lane.b32.xlu0 %v1663, 126
  %v1714 = vpop.permute.xlu0 %1713
  %1715 = vrot.lane.b32.xlu0 %v1664, 126
  %v1716 = vpop.permute.xlu0 %1715
  %1717 = vrot.lane.b32.xlu0 %v1665, 126
  %v1718 = vpop.permute.xlu0 %1717
  %1719 = vrot.lane.b32.xlu0 %v1666, 126
  %v1720 = vpop.permute.xlu0 %1719
  %1721 = vrot.lane.b32.xlu0 %v1667, 126
  %v1722 = vpop.permute.xlu0 %1721
  %1723 = vrot.lane.b32.xlu0 %v1668, 126
  %v1724 = vpop.permute.xlu0 %1723
  %v1733 = vadd.f32 %v1701, %v1710
  %v1734 = vadd.f32 %v1702, %v1712
  %v1735 = vadd.f32 %v1703, %v1714
  %v1736 = vadd.f32 %v1704, %v1716
  %v1737 = vadd.f32 %v1705, %v1718
  %v1738 = vadd.f32 %v1706, %v1720
  %v1739 = vadd.f32 %v1707, %v1722
  %v1740 = vadd.f32 %v1708, %v1724
  %v1741 = vrsqrt.pop %v1733
  %v1742 = vmul.f32 %v1741, %v1733
  %v1743 = vmul.f32 %v1742, %v1741
  %v1744 = vmul.f32 0.5, %v1743
  %v1745 = vsub.f32 1.5, %v1744
  %v1746 = vmul.f32 %v1741, %v1745
  %v1747 = vmul.f32 %v1733, %v1746
  %vm1748 = vcmp.eq.f32.partialorder %v1733, inf
  %v1749 = vsel %vm1748, %v1733, %v1747
  %vm1750 = vcmp.eq.f32.partialorder %v1733, 0.0
  %v1751 = vand.u32 %v1733, 2147483648
  %v1752 = vsel %vm1750, %v1751, %v1749
  %v1753 = vrsqrt.pop %v1734
  %v1754 = vmul.f32 %v1753, %v1734
  %v1755 = vmul.f32 %v1754, %v1753
  %v1756 = vmul.f32 0.5, %v1755
  %v1757 = vsub.f32 1.5, %v1756
  %v1758 = vmul.f32 %v1753, %v1757
  %v1759 = vmul.f32 %v1734, %v1758
  %vm1760 = vcmp.eq.f32.partialorder %v1734, inf
  %v1761 = vsel %vm1760, %v1734, %v1759
  %vm1762 = vcmp.eq.f32.partialorder %v1734, 0.0
  %v1763 = vand.u32 %v1734, 2147483648
  %v1764 = vsel %vm1762, %v1763, %v1761
  %v1765 = vrsqrt.pop %v1735
  %v1766 = vmul.f32 %v1765, %v1735
  %v1767 = vmul.f32 %v1766, %v1765
  %v1768 = vmul.f32 0.5, %v1767
  %v1769 = vsub.f32 1.5, %v1768
  %v1770 = vmul.f32 %v1765, %v1769
  %v1771 = vmul.f32 %v1735, %v1770
  %vm1772 = vcmp.eq.f32.partialorder %v1735, inf
  %v1773 = vsel %vm1772, %v1735, %v1771
  %vm1774 = vcmp.eq.f32.partialorder %v1735, 0.0
  %v1775 = vand.u32 %v1735, 2147483648
  %v1776 = vsel %vm1774, %v1775, %v1773
  %v1777 = vrsqrt.pop %v1736
  %v1778 = vmul.f32 %v1777, %v1736
  %v1779 = vmul.f32 %v1778, %v1777
  %v1780 = vmul.f32 0.5, %v1779
  %v1781 = vsub.f32 1.5, %v1780
  %v1782 = vmul.f32 %v1777, %v1781
  %v1783 = vmul.f32 %v1736, %v1782
  %vm1784 = vcmp.eq.f32.partialorder %v1736, inf
  %v1785 = vsel %vm1784, %v1736, %v1783
  %vm1786 = vcmp.eq.f32.partialorder %v1736, 0.0
  %v1787 = vand.u32 %v1736, 2147483648
  %v1788 = vsel %vm1786, %v1787, %v1785
  %v1789 = vrsqrt.pop %v1737
  %v1790 = vmul.f32 %v1789, %v1737
  %v1791 = vmul.f32 %v1790, %v1789
  %v1792 = vmul.f32 0.5, %v1791
  %v1793 = vsub.f32 1.5, %v1792
  %v1794 = vmul.f32 %v1789, %v1793
  %v1795 = vmul.f32 %v1737, %v1794
  %vm1796 = vcmp.eq.f32.partialorder %v1737, inf
  %v1797 = vsel %vm1796, %v1737, %v1795
  %vm1798 = vcmp.eq.f32.partialorder %v1737, 0.0
  %v1799 = vand.u32 %v1737, 2147483648
  %v1800 = vsel %vm1798, %v1799, %v1797
  %v1801 = vrsqrt.pop %v1738
  %v1802 = vmul.f32 %v1801, %v1738
  %v1803 = vmul.f32 %v1802, %v1801
  %v1804 = vmul.f32 0.5, %v1803
  %v1805 = vsub.f32 1.5, %v1804
  %v1806 = vmul.f32 %v1801, %v1805
  %v1807 = vmul.f32 %v1738, %v1806
  %vm1808 = vcmp.eq.f32.partialorder %v1738, inf
  %v1809 = vsel %vm1808, %v1738, %v1807
  %vm1810 = vcmp.eq.f32.partialorder %v1738, 0.0
  %v1811 = vand.u32 %v1738, 2147483648
  %v1812 = vsel %vm1810, %v1811, %v1809
  %v1813 = vrsqrt.pop %v1739
  %v1814 = vmul.f32 %v1813, %v1739
  %v1815 = vmul.f32 %v1814, %v1813
  %v1816 = vmul.f32 0.5, %v1815
  %v1817 = vsub.f32 1.5, %v1816
  %v1818 = vmul.f32 %v1813, %v1817
  %v1819 = vmul.f32 %v1739, %v1818
  %vm1820 = vcmp.eq.f32.partialorder %v1739, inf
  %v1821 = vsel %vm1820, %v1739, %v1819
  %vm1822 = vcmp.eq.f32.partialorder %v1739, 0.0
  %v1823 = vand.u32 %v1739, 2147483648
  %v1824 = vsel %vm1822, %v1823, %v1821
  %v1825 = vrsqrt.pop %v1740
  %v1826 = vmul.f32 %v1825, %v1740
  %v1827 = vmul.f32 %v1826, %v1825
  %v1828 = vmul.f32 0.5, %v1827
  %v1829 = vsub.f32 1.5, %v1828
  %v1830 = vmul.f32 %v1825, %v1829
  %v1831 = vmul.f32 %v1740, %v1830
  %vm1832 = vcmp.eq.f32.partialorder %v1740, inf
  %v1833 = vsel %vm1832, %v1740, %v1831
  %vm1834 = vcmp.eq.f32.partialorder %v1740, 0.0
  %v1835 = vand.u32 %v1740, 2147483648
  %v1836 = vsel %vm1834, %v1835, %v1833
  %1838 = vset.pattern.permute.xlu0 0
  %1839 = vperm.xlu0 %1838, %v1752
  %v1840 = vpop.permute.xlu0 %1839
  %1843 = vset.pattern.permute.xlu0 0
  %1844 = vperm.xlu0 %1843, %v1764
  %v1845 = vpop.permute.xlu0 %1844
  %1848 = vset.pattern.permute.xlu0 0
  %1849 = vperm.xlu0 %1848, %v1776
  %v1850 = vpop.permute.xlu0 %1849
  %1853 = vset.pattern.permute.xlu0 0
  %1854 = vperm.xlu0 %1853, %v1788
  %v1855 = vpop.permute.xlu0 %1854
  %1858 = vset.pattern.permute.xlu0 0
  %1859 = vperm.xlu0 %1858, %v1800
  %v1860 = vpop.permute.xlu0 %1859
  %1863 = vset.pattern.permute.xlu0 0
  %1864 = vperm.xlu0 %1863, %v1812
  %v1865 = vpop.permute.xlu0 %1864
  %1868 = vset.pattern.permute.xlu0 0
  %1869 = vperm.xlu0 %1868, %v1824
  %v1870 = vpop.permute.xlu0 %1869
  %1873 = vset.pattern.permute.xlu0 0
  %1874 = vperm.xlu0 %1873, %v1836
  %v1875 = vpop.permute.xlu0 %1874
  %v1877 = vmul.f32 %v1840, %v372
  %v1878 = vmul.f32 %v1845, %v372
  %v1879 = vmul.f32 %v1850, %v372
  %v1880 = vmul.f32 %v1855, %v372
  %v1881 = vmul.f32 %v1860, %v372
  %v1882 = vmul.f32 %v1865, %v372
  %v1883 = vmul.f32 %v1870, %v372
  %v1884 = vmul.f32 %v1875, %v372
  %v1886 = vsel %vm77, %v1621, 0
  %v1889 = vsel %vm77, %v1622, 0
  %v1892 = vsel %vm77, %v1623, 0
  %v1895 = vsel %vm77, %v1624, 0
  %v1898 = vsel %vm77, %v1625, 0
  %v1901 = vsel %vm77, %v1626, 0
  %v1904 = vsel %vm77, %v1627, 0
  %v1907 = vsel %vm77, %v1628, 0
  %1909 = vmatpush.msra.mxu0 0.0
  %1910 = vmatpush.msra.mxu0 0.0
  %1911 = vmatpush.msra.mxu0 0.0
  %1912 = vmatpush.msra.mxu0 0.0
  %1913 = vmatpush.msra.mxu0 0.0
  %1914 = vmatpush.msra.mxu0 0.0
  %1915 = vmatpush.msra.mxu0 0.0
  %1916 = vmatpush.msra.mxu0 0.0
  %1917 = vmatpush.msra.mxu0 0.0
  %1918 = vmatpush.msra.mxu0 0.0
  %1919 = vmatpush.msra.mxu0 0.0
  %1920 = vmatpush.msra.mxu0 0.0
  %1921 = vmatpush.msra.mxu0 0.0
  %1922 = vmatpush.msra.mxu0 0.0
  %1923 = vmatpush.msra.mxu0 0.0
  %1924 = vmatpush.msra.mxu0 %v397
  %1925 = vmatmul.f32.gmra.mxu0 %v1886
  %v1926 = vpop.f32.mrf.mxu0
  %v1927 = vadd.f32 %v1877, %v1926
  %1928 = vmatmul.f32.gmra.mxu0 %v1889
  %v1929 = vpop.f32.mrf.mxu0
  %v1930 = vadd.f32 %v1878, %v1929
  %1931 = vmatmul.f32.gmra.mxu0 %v1892
  %v1932 = vpop.f32.mrf.mxu0
  %v1933 = vadd.f32 %v1879, %v1932
  %1934 = vmatmul.f32.gmra.mxu0 %v1895
  %v1935 = vpop.f32.mrf.mxu0
  %v1936 = vadd.f32 %v1880, %v1935
  %1937 = vmatmul.f32.gmra.mxu0 %v1898
  %v1938 = vpop.f32.mrf.mxu0
  %v1939 = vadd.f32 %v1881, %v1938
  %1940 = vmatmul.f32.gmra.mxu0 %v1901
  %v1941 = vpop.f32.mrf.mxu0
  %v1942 = vadd.f32 %v1882, %v1941
  %1943 = vmatmul.f32.gmra.mxu0 %v1904
  %v1944 = vpop.f32.mrf.mxu0
  %v1945 = vadd.f32 %v1883, %v1944
  %1946 = vmatmul.f32.gmra.mxu0 %v1907
  %v1947 = vpop.f32.mrf.mxu0
  %v1948 = vadd.f32 %v1884, %v1947
  %1949 = vdwg.mxu0
  %v1950 = vadd.f32 %v1927, %v115
  %v1951 = vadd.f32 %v1930, %v118
  %v1952 = vadd.f32 %v1933, %v121
  %v1953 = vadd.f32 %v1936, %v124
  %v1954 = vadd.f32 %v1939, %v127
  %v1955 = vadd.f32 %v1942, %v130
  %v1956 = vadd.f32 %v1945, %v133
  %v1957 = vadd.f32 %v1948, %v136
  %1958 = vset.pattern.permute.xlu0 3
  %1959 = vperm.xlu0 %1958, %v1645
  %v1960 = vpop.permute.xlu0 %1959
  %1961 = vset.pattern.permute.xlu0 3
  %1962 = vperm.xlu0 %1961, %v1646
  %v1963 = vpop.permute.xlu0 %1962
  %1964 = vset.pattern.permute.xlu0 3
  %1965 = vperm.xlu0 %1964, %v1647
  %v1966 = vpop.permute.xlu0 %1965
  %1967 = vset.pattern.permute.xlu0 3
  %1968 = vperm.xlu0 %1967, %v1648
  %v1969 = vpop.permute.xlu0 %1968
  %1970 = vset.pattern.permute.xlu0 3
  %1971 = vperm.xlu0 %1970, %v1649
  %v1972 = vpop.permute.xlu0 %1971
  %1973 = vset.pattern.permute.xlu0 3
  %1974 = vperm.xlu0 %1973, %v1650
  %v1975 = vpop.permute.xlu0 %1974
  %1976 = vset.pattern.permute.xlu0 3
  %1977 = vperm.xlu0 %1976, %v1651
  %v1978 = vpop.permute.xlu0 %1977
  %1979 = vset.pattern.permute.xlu0 3
  %1980 = vperm.xlu0 %1979, %v1652
  %v1981 = vpop.permute.xlu0 %1980
  %vm1982 = vcmp.eq.s32.totalorder %v1960, %v139
  %vm1983 = vcmp.eq.s32.totalorder %v1963, %v139
  %vm1984 = vcmp.eq.s32.totalorder %v1966, %v139
  %vm1985 = vcmp.eq.s32.totalorder %v1969, %v139
  %vm1986 = vcmp.eq.s32.totalorder %v1972, %v139
  %vm1987 = vcmp.eq.s32.totalorder %v1975, %v139
  %vm1988 = vcmp.eq.s32.totalorder %v1978, %v139
  %vm1989 = vcmp.eq.s32.totalorder %v1981, %v139
  %v1990 = vsel %vm1982, 1, 0
  %v1991 = vsel %vm1983, 1, 0
  %v1992 = vsel %vm1984, 1, 0
  %v1993 = vsel %vm1985, 1, 0
  %v1994 = vsel %vm1986, 1, 0
  %v1995 = vsel %vm1987, 1, 0
  %v1996 = vsel %vm1988, 1, 0
  %v1997 = vsel %vm1989, 1, 0
  %v1998 = vcvt.s32.f32 %v1990
  %v1999 = vcvt.s32.f32 %v1991
  %v2000 = vcvt.s32.f32 %v1992
  %v2001 = vcvt.s32.f32 %v1993
  %v2002 = vcvt.s32.f32 %v1994
  %v2003 = vcvt.s32.f32 %v1995
  %v2004 = vcvt.s32.f32 %v1996
  %v2005 = vcvt.s32.f32 %v1997
  %2006 = vmatpush.msra.mxu0 %v48
  %2007 = vmatpush.msra.mxu0 %v47
  %2008 = vmatpush.msra.mxu0 %v46
  %2009 = vmatpush.msra.mxu0 %v45
  %2010 = vmatpush.msra.mxu0 %v44
  %2011 = vmatpush.msra.mxu0 %v43
  %2012 = vmatpush.msra.mxu0 %v42
  %2013 = vmatpush.msra.mxu0 %v41
  %2014 = vmatpush.msra.mxu0 %v40
  %2015 = vmatpush.msra.mxu0 %v39
  %2016 = vmatpush.msra.mxu0 %v38
  %2017 = vmatpush.msra.mxu0 %v37
  %2018 = vmatpush.msra.mxu0 %v36
  %2019 = vmatpush.msra.mxu0 %v35
  %2020 = vmatpush.msra.mxu0 %v34
  %2021 = vmatpush.msra.mxu0 %v33
  %2022 = vmatmul.f32.gmra.mxu0 %v1998
  %v2023 = vpop.f32.mrf.mxu0
  %v2024 = vadd.f32 0.0, %v2023
  %2025 = vmatmul.f32.gmra.mxu0 %v1999
  %v2026 = vpop.f32.mrf.mxu0
  %v2027 = vadd.f32 0.0, %v2026
  %2028 = vmatmul.f32.gmra.mxu0 %v2000
  %v2029 = vpop.f32.mrf.mxu0
  %v2030 = vadd.f32 0.0, %v2029
  %2031 = vmatmul.f32.gmra.mxu0 %v2001
  %v2032 = vpop.f32.mrf.mxu0
  %v2033 = vadd.f32 0.0, %v2032
  %2034 = vmatmul.f32.gmra.mxu0 %v2002
  %v2035 = vpop.f32.mrf.mxu0
  %v2036 = vadd.f32 0.0, %v2035
  %2037 = vmatmul.f32.gmra.mxu0 %v2003
  %v2038 = vpop.f32.mrf.mxu0
  %v2039 = vadd.f32 0.0, %v2038
  %2040 = vmatmul.f32.gmra.mxu0 %v2004
  %v2041 = vpop.f32.mrf.mxu0
  %v2042 = vadd.f32 0.0, %v2041
  %2043 = vmatmul.f32.gmra.mxu0 %v2005
  %v2044 = vpop.f32.mrf.mxu0
  %v2045 = vadd.f32 0.0, %v2044
  %2046 = vdwg.mxu0
  %v2047 = vmul.f32 %v2024, %v1950
  %v2048 = vmul.f32 %v2027, %v1951
  %v2049 = vmul.f32 %v2030, %v1952
  %v2050 = vmul.f32 %v2033, %v1953
  %v2051 = vmul.f32 %v2036, %v1954
  %v2052 = vmul.f32 %v2039, %v1955
  %v2053 = vmul.f32 %v2042, %v1956
  %v2054 = vmul.f32 %v2045, %v1957
  %v2055 = vadd.f32 %v1557, %v2047
  %v2056 = vadd.f32 %v1558, %v2048
  %v2057 = vadd.f32 %v1559, %v2049
  %v2058 = vadd.f32 %v1560, %v2050
  %v2059 = vadd.f32 %v1561, %v2051
  %v2060 = vadd.f32 %v1562, %v2052
  %v2061 = vadd.f32 %v1563, %v2053
  %v2062 = vadd.f32 %v1564, %v2054
  %2063 = vset.pattern.permute.xlu0 4
  %2064 = vperm.xlu0 %2063, %v561
  %v2065 = vpop.permute.xlu0 %2064
  %2066 = vset.pattern.permute.xlu0 4
  %2067 = vperm.xlu0 %2066, %v562
  %v2068 = vpop.permute.xlu0 %2067
  %2069 = vset.pattern.permute.xlu0 4
  %2070 = vperm.xlu0 %2069, %v563
  %v2071 = vpop.permute.xlu0 %2070
  %2072 = vset.pattern.permute.xlu0 4
  %2073 = vperm.xlu0 %2072, %v564
  %v2074 = vpop.permute.xlu0 %2073
  %2075 = vset.pattern.permute.xlu0 4
  %2076 = vperm.xlu0 %2075, %v565
  %v2077 = vpop.permute.xlu0 %2076
  %2078 = vset.pattern.permute.xlu0 4
  %2079 = vperm.xlu0 %2078, %v566
  %v2080 = vpop.permute.xlu0 %2079
  %2081 = vset.pattern.permute.xlu0 4
  %2082 = vperm.xlu0 %2081, %v567
  %v2083 = vpop.permute.xlu0 %2082
  %2084 = vset.pattern.permute.xlu0 4
  %2085 = vperm.xlu0 %2084, %v568
  %v2086 = vpop.permute.xlu0 %2085
  %vm2087 = vcmp.eq.s32.totalorder %v2065, 1
  %vm2088 = vcmp.eq.s32.totalorder %v2068, 1
  %vm2089 = vcmp.eq.s32.totalorder %v2071, 1
  %vm2090 = vcmp.eq.s32.totalorder %v2074, 1
  %vm2091 = vcmp.eq.s32.totalorder %v2077, 1
  %vm2092 = vcmp.eq.s32.totalorder %v2080, 1
  %vm2093 = vcmp.eq.s32.totalorder %v2083, 1
  %vm2094 = vcmp.eq.s32.totalorder %v2086, 1
  %2095 = vrot.lane.b32.xlu0 %v25, 116
  %v2096 = vpop.permute.xlu0 %2095
  %2097 = vrot.lane.b32.xlu0 %v26, 116
  %v2098 = vpop.permute.xlu0 %2097
  %2099 = vrot.lane.b32.xlu0 %v27, 116
  %v2100 = vpop.permute.xlu0 %2099
  %2101 = vrot.lane.b32.xlu0 %v28, 116
  %v2102 = vpop.permute.xlu0 %2101
  %2103 = vrot.lane.b32.xlu0 %v29, 116
  %v2104 = vpop.permute.xlu0 %2103
  %2105 = vrot.lane.b32.xlu0 %v30, 116
  %v2106 = vpop.permute.xlu0 %2105
  %2107 = vrot.lane.b32.xlu0 %v31, 116
  %v2108 = vpop.permute.xlu0 %2107
  %2109 = vrot.lane.b32.xlu0 %v32, 116
  %v2110 = vpop.permute.xlu0 %2109
  %v2119 = vsel %vm2087, %v25, %v2096
  %v2120 = vsel %vm2088, %v26, %v2098
  %v2121 = vsel %vm2089, %v27, %v2100
  %v2122 = vsel %vm2090, %v28, %v2102
  %v2123 = vsel %vm2091, %v29, %v2104
  %v2124 = vsel %vm2092, %v30, %v2106
  %v2125 = vsel %vm2093, %v31, %v2108
  %v2126 = vsel %vm2094, %v32, %v2110
  %2127 = vrot.lane.b32.xlu0 %v17, 4
  %v2128 = vpop.permute.xlu0 %2127
  %2129 = vrot.lane.b32.xlu0 %v18, 4
  %v2130 = vpop.permute.xlu0 %2129
  %2131 = vrot.lane.b32.xlu0 %v19, 4
  %v2132 = vpop.permute.xlu0 %2131
  %2133 = vrot.lane.b32.xlu0 %v20, 4
  %v2134 = vpop.permute.xlu0 %2133
  %2135 = vrot.lane.b32.xlu0 %v21, 4
  %v2136 = vpop.permute.xlu0 %2135
  %2137 = vrot.lane.b32.xlu0 %v22, 4
  %v2138 = vpop.permute.xlu0 %2137
  %2139 = vrot.lane.b32.xlu0 %v23, 4
  %v2140 = vpop.permute.xlu0 %2139
  %2141 = vrot.lane.b32.xlu0 %v24, 4
  %v2142 = vpop.permute.xlu0 %2141
  %v2143 = vsel %vm553, %v2128, %v17
  %v2144 = vsel %vm554, %v2130, %v18
  %v2145 = vsel %vm555, %v2132, %v19
  %v2146 = vsel %vm556, %v2134, %v20
  %v2147 = vsel %vm557, %v2136, %v21
  %v2148 = vsel %vm558, %v2138, %v22
  %v2149 = vsel %vm559, %v2140, %v23
  %v2150 = vsel %vm560, %v2142, %v24
  %v2151 = vsub.f32 %v2119, %v60
  %v2152 = vsub.f32 %v2120, %v62
  %v2153 = vsub.f32 %v2121, %v64
  %v2154 = vsub.f32 %v2122, %v66
  %v2155 = vsub.f32 %v2123, %v68
  %v2156 = vsub.f32 %v2124, %v70
  %v2157 = vsub.f32 %v2125, %v72
  %v2158 = vsub.f32 %v2126, %v74
  %v2159 = vmul.f32 %v2151, %v2151
  %v2160 = vmul.f32 %v2152, %v2152
  %v2161 = vmul.f32 %v2153, %v2153
  %v2162 = vmul.f32 %v2154, %v2154
  %v2163 = vmul.f32 %v2155, %v2155
  %v2164 = vmul.f32 %v2156, %v2156
  %v2165 = vmul.f32 %v2157, %v2157
  %v2166 = vmul.f32 %v2158, %v2158
  %2175 = vrot.lane.b32.xlu0 %v2159, 127
  %v2176 = vpop.permute.xlu0 %2175
  %2177 = vrot.lane.b32.xlu0 %v2160, 127
  %v2178 = vpop.permute.xlu0 %2177
  %2179 = vrot.lane.b32.xlu0 %v2161, 127
  %v2180 = vpop.permute.xlu0 %2179
  %2181 = vrot.lane.b32.xlu0 %v2162, 127
  %v2182 = vpop.permute.xlu0 %2181
  %2183 = vrot.lane.b32.xlu0 %v2163, 127
  %v2184 = vpop.permute.xlu0 %2183
  %2185 = vrot.lane.b32.xlu0 %v2164, 127
  %v2186 = vpop.permute.xlu0 %2185
  %2187 = vrot.lane.b32.xlu0 %v2165, 127
  %v2188 = vpop.permute.xlu0 %2187
  %2189 = vrot.lane.b32.xlu0 %v2166, 127
  %v2190 = vpop.permute.xlu0 %2189
  %v2199 = vadd.f32 %v2159, %v2176
  %v2200 = vadd.f32 %v2160, %v2178
  %v2201 = vadd.f32 %v2161, %v2180
  %v2202 = vadd.f32 %v2162, %v2182
  %v2203 = vadd.f32 %v2163, %v2184
  %v2204 = vadd.f32 %v2164, %v2186
  %v2205 = vadd.f32 %v2165, %v2188
  %v2206 = vadd.f32 %v2166, %v2190
  %2207 = vrot.lane.b32.xlu0 %v2159, 126
  %v2208 = vpop.permute.xlu0 %2207
  %2209 = vrot.lane.b32.xlu0 %v2160, 126
  %v2210 = vpop.permute.xlu0 %2209
  %2211 = vrot.lane.b32.xlu0 %v2161, 126
  %v2212 = vpop.permute.xlu0 %2211
  %2213 = vrot.lane.b32.xlu0 %v2162, 126
  %v2214 = vpop.permute.xlu0 %2213
  %2215 = vrot.lane.b32.xlu0 %v2163, 126
  %v2216 = vpop.permute.xlu0 %2215
  %2217 = vrot.lane.b32.xlu0 %v2164, 126
  %v2218 = vpop.permute.xlu0 %2217
  %2219 = vrot.lane.b32.xlu0 %v2165, 126
  %v2220 = vpop.permute.xlu0 %2219
  %2221 = vrot.lane.b32.xlu0 %v2166, 126
  %v2222 = vpop.permute.xlu0 %2221
  %v2231 = vadd.f32 %v2199, %v2208
  %v2232 = vadd.f32 %v2200, %v2210
  %v2233 = vadd.f32 %v2201, %v2212
  %v2234 = vadd.f32 %v2202, %v2214
  %v2235 = vadd.f32 %v2203, %v2216
  %v2236 = vadd.f32 %v2204, %v2218
  %v2237 = vadd.f32 %v2205, %v2220
  %v2238 = vadd.f32 %v2206, %v2222
  %v2239 = vrsqrt.pop %v2231
  %v2240 = vmul.f32 %v2239, %v2231
  %v2241 = vmul.f32 %v2240, %v2239
  %v2242 = vmul.f32 0.5, %v2241
  %v2243 = vsub.f32 1.5, %v2242
  %v2244 = vmul.f32 %v2239, %v2243
  %v2245 = vmul.f32 %v2231, %v2244
  %vm2246 = vcmp.eq.f32.partialorder %v2231, inf
  %v2247 = vsel %vm2246, %v2231, %v2245
  %vm2248 = vcmp.eq.f32.partialorder %v2231, 0.0
  %v2249 = vand.u32 %v2231, 2147483648
  %v2250 = vsel %vm2248, %v2249, %v2247
  %v2251 = vrsqrt.pop %v2232
  %v2252 = vmul.f32 %v2251, %v2232
  %v2253 = vmul.f32 %v2252, %v2251
  %v2254 = vmul.f32 0.5, %v2253
  %v2255 = vsub.f32 1.5, %v2254
  %v2256 = vmul.f32 %v2251, %v2255
  %v2257 = vmul.f32 %v2232, %v2256
  %vm2258 = vcmp.eq.f32.partialorder %v2232, inf
  %v2259 = vsel %vm2258, %v2232, %v2257
  %vm2260 = vcmp.eq.f32.partialorder %v2232, 0.0
  %v2261 = vand.u32 %v2232, 2147483648
  %v2262 = vsel %vm2260, %v2261, %v2259
  %v2263 = vrsqrt.pop %v2233
  %v2264 = vmul.f32 %v2263, %v2233
  %v2265 = vmul.f32 %v2264, %v2263
  %v2266 = vmul.f32 0.5, %v2265
  %v2267 = vsub.f32 1.5, %v2266
  %v2268 = vmul.f32 %v2263, %v2267
  %v2269 = vmul.f32 %v2233, %v2268
  %vm2270 = vcmp.eq.f32.partialorder %v2233, inf
  %v2271 = vsel %vm2270, %v2233, %v2269
  %vm2272 = vcmp.eq.f32.partialorder %v2233, 0.0
  %v2273 = vand.u32 %v2233, 2147483648
  %v2274 = vsel %vm2272, %v2273, %v2271
  %v2275 = vrsqrt.pop %v2234
  %v2276 = vmul.f32 %v2275, %v2234
  %v2277 = vmul.f32 %v2276, %v2275
  %v2278 = vmul.f32 0.5, %v2277
  %v2279 = vsub.f32 1.5, %v2278
  %v2280 = vmul.f32 %v2275, %v2279
  %v2281 = vmul.f32 %v2234, %v2280
  %vm2282 = vcmp.eq.f32.partialorder %v2234, inf
  %v2283 = vsel %vm2282, %v2234, %v2281
  %vm2284 = vcmp.eq.f32.partialorder %v2234, 0.0
  %v2285 = vand.u32 %v2234, 2147483648
  %v2286 = vsel %vm2284, %v2285, %v2283
  %v2287 = vrsqrt.pop %v2235
  %v2288 = vmul.f32 %v2287, %v2235
  %v2289 = vmul.f32 %v2288, %v2287
  %v2290 = vmul.f32 0.5, %v2289
  %v2291 = vsub.f32 1.5, %v2290
  %v2292 = vmul.f32 %v2287, %v2291
  %v2293 = vmul.f32 %v2235, %v2292
  %vm2294 = vcmp.eq.f32.partialorder %v2235, inf
  %v2295 = vsel %vm2294, %v2235, %v2293
  %vm2296 = vcmp.eq.f32.partialorder %v2235, 0.0
  %v2297 = vand.u32 %v2235, 2147483648
  %v2298 = vsel %vm2296, %v2297, %v2295
  %v2299 = vrsqrt.pop %v2236
  %v2300 = vmul.f32 %v2299, %v2236
  %v2301 = vmul.f32 %v2300, %v2299
  %v2302 = vmul.f32 0.5, %v2301
  %v2303 = vsub.f32 1.5, %v2302
  %v2304 = vmul.f32 %v2299, %v2303
  %v2305 = vmul.f32 %v2236, %v2304
  %vm2306 = vcmp.eq.f32.partialorder %v2236, inf
  %v2307 = vsel %vm2306, %v2236, %v2305
  %vm2308 = vcmp.eq.f32.partialorder %v2236, 0.0
  %v2309 = vand.u32 %v2236, 2147483648
  %v2310 = vsel %vm2308, %v2309, %v2307
  %v2311 = vrsqrt.pop %v2237
  %v2312 = vmul.f32 %v2311, %v2237
  %v2313 = vmul.f32 %v2312, %v2311
  %v2314 = vmul.f32 0.5, %v2313
  %v2315 = vsub.f32 1.5, %v2314
  %v2316 = vmul.f32 %v2311, %v2315
  %v2317 = vmul.f32 %v2237, %v2316
  %vm2318 = vcmp.eq.f32.partialorder %v2237, inf
  %v2319 = vsel %vm2318, %v2237, %v2317
  %vm2320 = vcmp.eq.f32.partialorder %v2237, 0.0
  %v2321 = vand.u32 %v2237, 2147483648
  %v2322 = vsel %vm2320, %v2321, %v2319
  %v2323 = vrsqrt.pop %v2238
  %v2324 = vmul.f32 %v2323, %v2238
  %v2325 = vmul.f32 %v2324, %v2323
  %v2326 = vmul.f32 0.5, %v2325
  %v2327 = vsub.f32 1.5, %v2326
  %v2328 = vmul.f32 %v2323, %v2327
  %v2329 = vmul.f32 %v2238, %v2328
  %vm2330 = vcmp.eq.f32.partialorder %v2238, inf
  %v2331 = vsel %vm2330, %v2238, %v2329
  %vm2332 = vcmp.eq.f32.partialorder %v2238, 0.0
  %v2333 = vand.u32 %v2238, 2147483648
  %v2334 = vsel %vm2332, %v2333, %v2331
  %2336 = vset.pattern.permute.xlu0 0
  %2337 = vperm.xlu0 %2336, %v2250
  %v2338 = vpop.permute.xlu0 %2337
  %2341 = vset.pattern.permute.xlu0 0
  %2342 = vperm.xlu0 %2341, %v2262
  %v2343 = vpop.permute.xlu0 %2342
  %2346 = vset.pattern.permute.xlu0 0
  %2347 = vperm.xlu0 %2346, %v2274
  %v2348 = vpop.permute.xlu0 %2347
  %2351 = vset.pattern.permute.xlu0 0
  %2352 = vperm.xlu0 %2351, %v2286
  %v2353 = vpop.permute.xlu0 %2352
  %2356 = vset.pattern.permute.xlu0 0
  %2357 = vperm.xlu0 %2356, %v2298
  %v2358 = vpop.permute.xlu0 %2357
  %2361 = vset.pattern.permute.xlu0 0
  %2362 = vperm.xlu0 %2361, %v2310
  %v2363 = vpop.permute.xlu0 %2362
  %2366 = vset.pattern.permute.xlu0 0
  %2367 = vperm.xlu0 %2366, %v2322
  %v2368 = vpop.permute.xlu0 %2367
  %2371 = vset.pattern.permute.xlu0 0
  %2372 = vperm.xlu0 %2371, %v2334
  %v2373 = vpop.permute.xlu0 %2372
  %v2375 = vmul.f32 %v2338, %v372
  %v2376 = vmul.f32 %v2343, %v372
  %v2377 = vmul.f32 %v2348, %v372
  %v2378 = vmul.f32 %v2353, %v372
  %v2379 = vmul.f32 %v2358, %v372
  %v2380 = vmul.f32 %v2363, %v372
  %v2381 = vmul.f32 %v2368, %v372
  %v2382 = vmul.f32 %v2373, %v372
  %v2384 = vsel %vm77, %v2119, 0
  %v2387 = vsel %vm77, %v2120, 0
  %v2390 = vsel %vm77, %v2121, 0
  %v2393 = vsel %vm77, %v2122, 0
  %v2396 = vsel %vm77, %v2123, 0
  %v2399 = vsel %vm77, %v2124, 0
  %v2402 = vsel %vm77, %v2125, 0
  %v2405 = vsel %vm77, %v2126, 0
  %2407 = vmatpush.msra.mxu0 0.0
  %2408 = vmatpush.msra.mxu0 0.0
  %2409 = vmatpush.msra.mxu0 0.0
  %2410 = vmatpush.msra.mxu0 0.0
  %2411 = vmatpush.msra.mxu0 0.0
  %2412 = vmatpush.msra.mxu0 0.0
  %2413 = vmatpush.msra.mxu0 0.0
  %2414 = vmatpush.msra.mxu0 0.0
  %2415 = vmatpush.msra.mxu0 0.0
  %2416 = vmatpush.msra.mxu0 0.0
  %2417 = vmatpush.msra.mxu0 0.0
  %2418 = vmatpush.msra.mxu0 0.0
  %2419 = vmatpush.msra.mxu0 0.0
  %2420 = vmatpush.msra.mxu0 0.0
  %2421 = vmatpush.msra.mxu0 0.0
  %2422 = vmatpush.msra.mxu0 %v397
  %2423 = vmatmul.f32.gmra.mxu0 %v2384
  %v2424 = vpop.f32.mrf.mxu0
  %v2425 = vadd.f32 %v2375, %v2424
  %2426 = vmatmul.f32.gmra.mxu0 %v2387
  %v2427 = vpop.f32.mrf.mxu0
  %v2428 = vadd.f32 %v2376, %v2427
  %2429 = vmatmul.f32.gmra.mxu0 %v2390
  %v2430 = vpop.f32.mrf.mxu0
  %v2431 = vadd.f32 %v2377, %v2430
  %2432 = vmatmul.f32.gmra.mxu0 %v2393
  %v2433 = vpop.f32.mrf.mxu0
  %v2434 = vadd.f32 %v2378, %v2433
  %2435 = vmatmul.f32.gmra.mxu0 %v2396
  %v2436 = vpop.f32.mrf.mxu0
  %v2437 = vadd.f32 %v2379, %v2436
  %2438 = vmatmul.f32.gmra.mxu0 %v2399
  %v2439 = vpop.f32.mrf.mxu0
  %v2440 = vadd.f32 %v2380, %v2439
  %2441 = vmatmul.f32.gmra.mxu0 %v2402
  %v2442 = vpop.f32.mrf.mxu0
  %v2443 = vadd.f32 %v2381, %v2442
  %2444 = vmatmul.f32.gmra.mxu0 %v2405
  %v2445 = vpop.f32.mrf.mxu0
  %v2446 = vadd.f32 %v2382, %v2445
  %2447 = vdwg.mxu0
  %v2448 = vadd.f32 %v2425, %v115
  %v2449 = vadd.f32 %v2428, %v118
  %v2450 = vadd.f32 %v2431, %v121
  %v2451 = vadd.f32 %v2434, %v124
  %v2452 = vadd.f32 %v2437, %v127
  %v2453 = vadd.f32 %v2440, %v130
  %v2454 = vadd.f32 %v2443, %v133
  %v2455 = vadd.f32 %v2446, %v136
  %2456 = vset.pattern.permute.xlu0 4
  %2457 = vperm.xlu0 %2456, %v2143
  %v2458 = vpop.permute.xlu0 %2457
  %2459 = vset.pattern.permute.xlu0 4
  %2460 = vperm.xlu0 %2459, %v2144
  %v2461 = vpop.permute.xlu0 %2460
  %2462 = vset.pattern.permute.xlu0 4
  %2463 = vperm.xlu0 %2462, %v2145
  %v2464 = vpop.permute.xlu0 %2463
  %2465 = vset.pattern.permute.xlu0 4
  %2466 = vperm.xlu0 %2465, %v2146
  %v2467 = vpop.permute.xlu0 %2466
  %2468 = vset.pattern.permute.xlu0 4
  %2469 = vperm.xlu0 %2468, %v2147
  %v2470 = vpop.permute.xlu0 %2469
  %2471 = vset.pattern.permute.xlu0 4
  %2472 = vperm.xlu0 %2471, %v2148
  %v2473 = vpop.permute.xlu0 %2472
  %2474 = vset.pattern.permute.xlu0 4
  %2475 = vperm.xlu0 %2474, %v2149
  %v2476 = vpop.permute.xlu0 %2475
  %2477 = vset.pattern.permute.xlu0 4
  %2478 = vperm.xlu0 %2477, %v2150
  %v2479 = vpop.permute.xlu0 %2478
  %vm2480 = vcmp.eq.s32.totalorder %v2458, %v139
  %vm2481 = vcmp.eq.s32.totalorder %v2461, %v139
  %vm2482 = vcmp.eq.s32.totalorder %v2464, %v139
  %vm2483 = vcmp.eq.s32.totalorder %v2467, %v139
  %vm2484 = vcmp.eq.s32.totalorder %v2470, %v139
  %vm2485 = vcmp.eq.s32.totalorder %v2473, %v139
  %vm2486 = vcmp.eq.s32.totalorder %v2476, %v139
  %vm2487 = vcmp.eq.s32.totalorder %v2479, %v139
  %v2488 = vsel %vm2480, 1, 0
  %v2489 = vsel %vm2481, 1, 0
  %v2490 = vsel %vm2482, 1, 0
  %v2491 = vsel %vm2483, 1, 0
  %v2492 = vsel %vm2484, 1, 0
  %v2493 = vsel %vm2485, 1, 0
  %v2494 = vsel %vm2486, 1, 0
  %v2495 = vsel %vm2487, 1, 0
  %v2496 = vcvt.s32.f32 %v2488
  %v2497 = vcvt.s32.f32 %v2489
  %v2498 = vcvt.s32.f32 %v2490
  %v2499 = vcvt.s32.f32 %v2491
  %v2500 = vcvt.s32.f32 %v2492
  %v2501 = vcvt.s32.f32 %v2493
  %v2502 = vcvt.s32.f32 %v2494
  %v2503 = vcvt.s32.f32 %v2495
  %2504 = vmatpush.msra.mxu0 %v48
  %2505 = vmatpush.msra.mxu0 %v47
  %2506 = vmatpush.msra.mxu0 %v46
  %2507 = vmatpush.msra.mxu0 %v45
  %2508 = vmatpush.msra.mxu0 %v44
  %2509 = vmatpush.msra.mxu0 %v43
  %2510 = vmatpush.msra.mxu0 %v42
  %2511 = vmatpush.msra.mxu0 %v41
  %2512 = vmatpush.msra.mxu0 %v40
  %2513 = vmatpush.msra.mxu0 %v39
  %2514 = vmatpush.msra.mxu0 %v38
  %2515 = vmatpush.msra.mxu0 %v37
  %2516 = vmatpush.msra.mxu0 %v36
  %2517 = vmatpush.msra.mxu0 %v35
  %2518 = vmatpush.msra.mxu0 %v34
  %2519 = vmatpush.msra.mxu0 %v33
  %2520 = vmatmul.f32.gmra.mxu0 %v2496
  %v2521 = vpop.f32.mrf.mxu0
  %v2522 = vadd.f32 0.0, %v2521
  %2523 = vmatmul.f32.gmra.mxu0 %v2497
  %v2524 = vpop.f32.mrf.mxu0
  %v2525 = vadd.f32 0.0, %v2524
  %2526 = vmatmul.f32.gmra.mxu0 %v2498
  %v2527 = vpop.f32.mrf.mxu0
  %v2528 = vadd.f32 0.0, %v2527
  %2529 = vmatmul.f32.gmra.mxu0 %v2499
  %v2530 = vpop.f32.mrf.mxu0
  %v2531 = vadd.f32 0.0, %v2530
  %2532 = vmatmul.f32.gmra.mxu0 %v2500
  %v2533 = vpop.f32.mrf.mxu0
  %v2534 = vadd.f32 0.0, %v2533
  %2535 = vmatmul.f32.gmra.mxu0 %v2501
  %v2536 = vpop.f32.mrf.mxu0
  %v2537 = vadd.f32 0.0, %v2536
  %2538 = vmatmul.f32.gmra.mxu0 %v2502
  %v2539 = vpop.f32.mrf.mxu0
  %v2540 = vadd.f32 0.0, %v2539
  %2541 = vmatmul.f32.gmra.mxu0 %v2503
  %v2542 = vpop.f32.mrf.mxu0
  %v2543 = vadd.f32 0.0, %v2542
  %2544 = vdwg.mxu0
  %v2545 = vmul.f32 %v2522, %v2448
  %v2546 = vmul.f32 %v2525, %v2449
  %v2547 = vmul.f32 %v2528, %v2450
  %v2548 = vmul.f32 %v2531, %v2451
  %v2549 = vmul.f32 %v2534, %v2452
  %v2550 = vmul.f32 %v2537, %v2453
  %v2551 = vmul.f32 %v2540, %v2454
  %v2552 = vmul.f32 %v2543, %v2455
  %v2553 = vadd.f32 %v2055, %v2545
  %v2554 = vadd.f32 %v2056, %v2546
  %v2555 = vadd.f32 %v2057, %v2547
  %v2556 = vadd.f32 %v2058, %v2548
  %v2557 = vadd.f32 %v2059, %v2549
  %v2558 = vadd.f32 %v2060, %v2550
  %v2559 = vadd.f32 %v2061, %v2551
  %v2560 = vadd.f32 %v2062, %v2552
  %2561 = vset.pattern.permute.xlu0 5
  %2562 = vperm.xlu0 %2561, %v561
  %v2563 = vpop.permute.xlu0 %2562
  %2564 = vset.pattern.permute.xlu0 5
  %2565 = vperm.xlu0 %2564, %v562
  %v2566 = vpop.permute.xlu0 %2565
  %2567 = vset.pattern.permute.xlu0 5
  %2568 = vperm.xlu0 %2567, %v563
  %v2569 = vpop.permute.xlu0 %2568
  %2570 = vset.pattern.permute.xlu0 5
  %2571 = vperm.xlu0 %2570, %v564
  %v2572 = vpop.permute.xlu0 %2571
  %2573 = vset.pattern.permute.xlu0 5
  %2574 = vperm.xlu0 %2573, %v565
  %v2575 = vpop.permute.xlu0 %2574
  %2576 = vset.pattern.permute.xlu0 5
  %2577 = vperm.xlu0 %2576, %v566
  %v2578 = vpop.permute.xlu0 %2577
  %2579 = vset.pattern.permute.xlu0 5
  %2580 = vperm.xlu0 %2579, %v567
  %v2581 = vpop.permute.xlu0 %2580
  %2582 = vset.pattern.permute.xlu0 5
  %2583 = vperm.xlu0 %2582, %v568
  %v2584 = vpop.permute.xlu0 %2583
  %vm2585 = vcmp.eq.s32.totalorder %v2563, 1
  %vm2586 = vcmp.eq.s32.totalorder %v2566, 1
  %vm2587 = vcmp.eq.s32.totalorder %v2569, 1
  %vm2588 = vcmp.eq.s32.totalorder %v2572, 1
  %vm2589 = vcmp.eq.s32.totalorder %v2575, 1
  %vm2590 = vcmp.eq.s32.totalorder %v2578, 1
  %vm2591 = vcmp.eq.s32.totalorder %v2581, 1
  %vm2592 = vcmp.eq.s32.totalorder %v2584, 1
  %2593 = vrot.lane.b32.xlu0 %v25, 113
  %v2594 = vpop.permute.xlu0 %2593
  %2595 = vrot.lane.b32.xlu0 %v26, 113
  %v2596 = vpop.permute.xlu0 %2595
  %2597 = vrot.lane.b32.xlu0 %v27, 113
  %v2598 = vpop.permute.xlu0 %2597
  %2599 = vrot.lane.b32.xlu0 %v28, 113
  %v2600 = vpop.permute.xlu0 %2599
  %2601 = vrot.lane.b32.xlu0 %v29, 113
  %v2602 = vpop.permute.xlu0 %2601
  %2603 = vrot.lane.b32.xlu0 %v30, 113
  %v2604 = vpop.permute.xlu0 %2603
  %2605 = vrot.lane.b32.xlu0 %v31, 113
  %v2606 = vpop.permute.xlu0 %2605
  %2607 = vrot.lane.b32.xlu0 %v32, 113
  %v2608 = vpop.permute.xlu0 %2607
  %v2617 = vsel %vm2585, %v25, %v2594
  %v2618 = vsel %vm2586, %v26, %v2596
  %v2619 = vsel %vm2587, %v27, %v2598
  %v2620 = vsel %vm2588, %v28, %v2600
  %v2621 = vsel %vm2589, %v29, %v2602
  %v2622 = vsel %vm2590, %v30, %v2604
  %v2623 = vsel %vm2591, %v31, %v2606
  %v2624 = vsel %vm2592, %v32, %v2608
  %2625 = vrot.lane.b32.xlu0 %v17, 5
  %v2626 = vpop.permute.xlu0 %2625
  %2627 = vrot.lane.b32.xlu0 %v18, 5
  %v2628 = vpop.permute.xlu0 %2627
  %2629 = vrot.lane.b32.xlu0 %v19, 5
  %v2630 = vpop.permute.xlu0 %2629
  %2631 = vrot.lane.b32.xlu0 %v20, 5
  %v2632 = vpop.permute.xlu0 %2631
  %2633 = vrot.lane.b32.xlu0 %v21, 5
  %v2634 = vpop.permute.xlu0 %2633
  %2635 = vrot.lane.b32.xlu0 %v22, 5
  %v2636 = vpop.permute.xlu0 %2635
  %2637 = vrot.lane.b32.xlu0 %v23, 5
  %v2638 = vpop.permute.xlu0 %2637
  %2639 = vrot.lane.b32.xlu0 %v24, 5
  %v2640 = vpop.permute.xlu0 %2639
  %v2641 = vsel %vm553, %v2626, %v17
  %v2642 = vsel %vm554, %v2628, %v18
  %v2643 = vsel %vm555, %v2630, %v19
  %v2644 = vsel %vm556, %v2632, %v20
  %v2645 = vsel %vm557, %v2634, %v21
  %v2646 = vsel %vm558, %v2636, %v22
  %v2647 = vsel %vm559, %v2638, %v23
  %v2648 = vsel %vm560, %v2640, %v24
  %v2649 = vsub.f32 %v2617, %v60
  %v2650 = vsub.f32 %v2618, %v62
  %v2651 = vsub.f32 %v2619, %v64
  %v2652 = vsub.f32 %v2620, %v66
  %v2653 = vsub.f32 %v2621, %v68
  %v2654 = vsub.f32 %v2622, %v70
  %v2655 = vsub.f32 %v2623, %v72
  %v2656 = vsub.f32 %v2624, %v74
  %v2657 = vmul.f32 %v2649, %v2649
  %v2658 = vmul.f32 %v2650, %v2650
  %v2659 = vmul.f32 %v2651, %v2651
  %v2660 = vmul.f32 %v2652, %v2652
  %v2661 = vmul.f32 %v2653, %v2653
  %v2662 = vmul.f32 %v2654, %v2654
  %v2663 = vmul.f32 %v2655, %v2655
  %v2664 = vmul.f32 %v2656, %v2656
  %2673 = vrot.lane.b32.xlu0 %v2657, 127
  %v2674 = vpop.permute.xlu0 %2673
  %2675 = vrot.lane.b32.xlu0 %v2658, 127
  %v2676 = vpop.permute.xlu0 %2675
  %2677 = vrot.lane.b32.xlu0 %v2659, 127
  %v2678 = vpop.permute.xlu0 %2677
  %2679 = vrot.lane.b32.xlu0 %v2660, 127
  %v2680 = vpop.permute.xlu0 %2679
  %2681 = vrot.lane.b32.xlu0 %v2661, 127
  %v2682 = vpop.permute.xlu0 %2681
  %2683 = vrot.lane.b32.xlu0 %v2662, 127
  %v2684 = vpop.permute.xlu0 %2683
  %2685 = vrot.lane.b32.xlu0 %v2663, 127
  %v2686 = vpop.permute.xlu0 %2685
  %2687 = vrot.lane.b32.xlu0 %v2664, 127
  %v2688 = vpop.permute.xlu0 %2687
  %v2697 = vadd.f32 %v2657, %v2674
  %v2698 = vadd.f32 %v2658, %v2676
  %v2699 = vadd.f32 %v2659, %v2678
  %v2700 = vadd.f32 %v2660, %v2680
  %v2701 = vadd.f32 %v2661, %v2682
  %v2702 = vadd.f32 %v2662, %v2684
  %v2703 = vadd.f32 %v2663, %v2686
  %v2704 = vadd.f32 %v2664, %v2688
  %2705 = vrot.lane.b32.xlu0 %v2657, 126
  %v2706 = vpop.permute.xlu0 %2705
  %2707 = vrot.lane.b32.xlu0 %v2658, 126
  %v2708 = vpop.permute.xlu0 %2707
  %2709 = vrot.lane.b32.xlu0 %v2659, 126
  %v2710 = vpop.permute.xlu0 %2709
  %2711 = vrot.lane.b32.xlu0 %v2660, 126
  %v2712 = vpop.permute.xlu0 %2711
  %2713 = vrot.lane.b32.xlu0 %v2661, 126
  %v2714 = vpop.permute.xlu0 %2713
  %2715 = vrot.lane.b32.xlu0 %v2662, 126
  %v2716 = vpop.permute.xlu0 %2715
  %2717 = vrot.lane.b32.xlu0 %v2663, 126
  %v2718 = vpop.permute.xlu0 %2717
  %2719 = vrot.lane.b32.xlu0 %v2664, 126
  %v2720 = vpop.permute.xlu0 %2719
  %v2729 = vadd.f32 %v2697, %v2706
  %v2730 = vadd.f32 %v2698, %v2708
  %v2731 = vadd.f32 %v2699, %v2710
  %v2732 = vadd.f32 %v2700, %v2712
  %v2733 = vadd.f32 %v2701, %v2714
  %v2734 = vadd.f32 %v2702, %v2716
  %v2735 = vadd.f32 %v2703, %v2718
  %v2736 = vadd.f32 %v2704, %v2720
  %v2737 = vrsqrt.pop %v2729
  %v2738 = vmul.f32 %v2737, %v2729
  %v2739 = vmul.f32 %v2738, %v2737
  %v2740 = vmul.f32 0.5, %v2739
  %v2741 = vsub.f32 1.5, %v2740
  %v2742 = vmul.f32 %v2737, %v2741
  %v2743 = vmul.f32 %v2729, %v2742
  %vm2744 = vcmp.eq.f32.partialorder %v2729, inf
  %v2745 = vsel %vm2744, %v2729, %v2743
  %vm2746 = vcmp.eq.f32.partialorder %v2729, 0.0
  %v2747 = vand.u32 %v2729, 2147483648
  %v2748 = vsel %vm2746, %v2747, %v2745
  %v2749 = vrsqrt.pop %v2730
  %v2750 = vmul.f32 %v2749, %v2730
  %v2751 = vmul.f32 %v2750, %v2749
  %v2752 = vmul.f32 0.5, %v2751
  %v2753 = vsub.f32 1.5, %v2752
  %v2754 = vmul.f32 %v2749, %v2753
  %v2755 = vmul.f32 %v2730, %v2754
  %vm2756 = vcmp.eq.f32.partialorder %v2730, inf
  %v2757 = vsel %vm2756, %v2730, %v2755
  %vm2758 = vcmp.eq.f32.partialorder %v2730, 0.0
  %v2759 = vand.u32 %v2730, 2147483648
  %v2760 = vsel %vm2758, %v2759, %v2757
  %v2761 = vrsqrt.pop %v2731
  %v2762 = vmul.f32 %v2761, %v2731
  %v2763 = vmul.f32 %v2762, %v2761
  %v2764 = vmul.f32 0.5, %v2763
  %v2765 = vsub.f32 1.5, %v2764
  %v2766 = vmul.f32 %v2761, %v2765
  %v2767 = vmul.f32 %v2731, %v2766
  %vm2768 = vcmp.eq.f32.partialorder %v2731, inf
  %v2769 = vsel %vm2768, %v2731, %v2767
  %vm2770 = vcmp.eq.f32.partialorder %v2731, 0.0
  %v2771 = vand.u32 %v2731, 2147483648
  %v2772 = vsel %vm2770, %v2771, %v2769
  %v2773 = vrsqrt.pop %v2732
  %v2774 = vmul.f32 %v2773, %v2732
  %v2775 = vmul.f32 %v2774, %v2773
  %v2776 = vmul.f32 0.5, %v2775
  %v2777 = vsub.f32 1.5, %v2776
  %v2778 = vmul.f32 %v2773, %v2777
  %v2779 = vmul.f32 %v2732, %v2778
  %vm2780 = vcmp.eq.f32.partialorder %v2732, inf
  %v2781 = vsel %vm2780, %v2732, %v2779
  %vm2782 = vcmp.eq.f32.partialorder %v2732, 0.0
  %v2783 = vand.u32 %v2732, 2147483648
  %v2784 = vsel %vm2782, %v2783, %v2781
  %v2785 = vrsqrt.pop %v2733
  %v2786 = vmul.f32 %v2785, %v2733
  %v2787 = vmul.f32 %v2786, %v2785
  %v2788 = vmul.f32 0.5, %v2787
  %v2789 = vsub.f32 1.5, %v2788
  %v2790 = vmul.f32 %v2785, %v2789
  %v2791 = vmul.f32 %v2733, %v2790
  %vm2792 = vcmp.eq.f32.partialorder %v2733, inf
  %v2793 = vsel %vm2792, %v2733, %v2791
  %vm2794 = vcmp.eq.f32.partialorder %v2733, 0.0
  %v2795 = vand.u32 %v2733, 2147483648
  %v2796 = vsel %vm2794, %v2795, %v2793
  %v2797 = vrsqrt.pop %v2734
  %v2798 = vmul.f32 %v2797, %v2734
  %v2799 = vmul.f32 %v2798, %v2797
  %v2800 = vmul.f32 0.5, %v2799
  %v2801 = vsub.f32 1.5, %v2800
  %v2802 = vmul.f32 %v2797, %v2801
  %v2803 = vmul.f32 %v2734, %v2802
  %vm2804 = vcmp.eq.f32.partialorder %v2734, inf
  %v2805 = vsel %vm2804, %v2734, %v2803
  %vm2806 = vcmp.eq.f32.partialorder %v2734, 0.0
  %v2807 = vand.u32 %v2734, 2147483648
  %v2808 = vsel %vm2806, %v2807, %v2805
  %v2809 = vrsqrt.pop %v2735
  %v2810 = vmul.f32 %v2809, %v2735
  %v2811 = vmul.f32 %v2810, %v2809
  %v2812 = vmul.f32 0.5, %v2811
  %v2813 = vsub.f32 1.5, %v2812
  %v2814 = vmul.f32 %v2809, %v2813
  %v2815 = vmul.f32 %v2735, %v2814
  %vm2816 = vcmp.eq.f32.partialorder %v2735, inf
  %v2817 = vsel %vm2816, %v2735, %v2815
  %vm2818 = vcmp.eq.f32.partialorder %v2735, 0.0
  %v2819 = vand.u32 %v2735, 2147483648
  %v2820 = vsel %vm2818, %v2819, %v2817
  %v2821 = vrsqrt.pop %v2736
  %v2822 = vmul.f32 %v2821, %v2736
  %v2823 = vmul.f32 %v2822, %v2821
  %v2824 = vmul.f32 0.5, %v2823
  %v2825 = vsub.f32 1.5, %v2824
  %v2826 = vmul.f32 %v2821, %v2825
  %v2827 = vmul.f32 %v2736, %v2826
  %vm2828 = vcmp.eq.f32.partialorder %v2736, inf
  %v2829 = vsel %vm2828, %v2736, %v2827
  %vm2830 = vcmp.eq.f32.partialorder %v2736, 0.0
  %v2831 = vand.u32 %v2736, 2147483648
  %v2832 = vsel %vm2830, %v2831, %v2829
  %2834 = vset.pattern.permute.xlu0 0
  %2835 = vperm.xlu0 %2834, %v2748
  %v2836 = vpop.permute.xlu0 %2835
  %2839 = vset.pattern.permute.xlu0 0
  %2840 = vperm.xlu0 %2839, %v2760
  %v2841 = vpop.permute.xlu0 %2840
  %2844 = vset.pattern.permute.xlu0 0
  %2845 = vperm.xlu0 %2844, %v2772
  %v2846 = vpop.permute.xlu0 %2845
  %2849 = vset.pattern.permute.xlu0 0
  %2850 = vperm.xlu0 %2849, %v2784
  %v2851 = vpop.permute.xlu0 %2850
  %2854 = vset.pattern.permute.xlu0 0
  %2855 = vperm.xlu0 %2854, %v2796
  %v2856 = vpop.permute.xlu0 %2855
  %2859 = vset.pattern.permute.xlu0 0
  %2860 = vperm.xlu0 %2859, %v2808
  %v2861 = vpop.permute.xlu0 %2860
  %2864 = vset.pattern.permute.xlu0 0
  %2865 = vperm.xlu0 %2864, %v2820
  %v2866 = vpop.permute.xlu0 %2865
  %2869 = vset.pattern.permute.xlu0 0
  %2870 = vperm.xlu0 %2869, %v2832
  %v2871 = vpop.permute.xlu0 %2870
  %v2873 = vmul.f32 %v2836, %v372
  %v2874 = vmul.f32 %v2841, %v372
  %v2875 = vmul.f32 %v2846, %v372
  %v2876 = vmul.f32 %v2851, %v372
  %v2877 = vmul.f32 %v2856, %v372
  %v2878 = vmul.f32 %v2861, %v372
  %v2879 = vmul.f32 %v2866, %v372
  %v2880 = vmul.f32 %v2871, %v372
  %v2882 = vsel %vm77, %v2617, 0
  %v2885 = vsel %vm77, %v2618, 0
  %v2888 = vsel %vm77, %v2619, 0
  %v2891 = vsel %vm77, %v2620, 0
  %v2894 = vsel %vm77, %v2621, 0
  %v2897 = vsel %vm77, %v2622, 0
  %v2900 = vsel %vm77, %v2623, 0
  %v2903 = vsel %vm77, %v2624, 0
  %2905 = vmatpush.msra.mxu0 0.0
  %2906 = vmatpush.msra.mxu0 0.0
  %2907 = vmatpush.msra.mxu0 0.0
  %2908 = vmatpush.msra.mxu0 0.0
  %2909 = vmatpush.msra.mxu0 0.0
  %2910 = vmatpush.msra.mxu0 0.0
  %2911 = vmatpush.msra.mxu0 0.0
  %2912 = vmatpush.msra.mxu0 0.0
  %2913 = vmatpush.msra.mxu0 0.0
  %2914 = vmatpush.msra.mxu0 0.0
  %2915 = vmatpush.msra.mxu0 0.0
  %2916 = vmatpush.msra.mxu0 0.0
  %2917 = vmatpush.msra.mxu0 0.0
  %2918 = vmatpush.msra.mxu0 0.0
  %2919 = vmatpush.msra.mxu0 0.0
  %2920 = vmatpush.msra.mxu0 %v397
  %2921 = vmatmul.f32.gmra.mxu0 %v2882
  %v2922 = vpop.f32.mrf.mxu0
  %v2923 = vadd.f32 %v2873, %v2922
  %2924 = vmatmul.f32.gmra.mxu0 %v2885
  %v2925 = vpop.f32.mrf.mxu0
  %v2926 = vadd.f32 %v2874, %v2925
  %2927 = vmatmul.f32.gmra.mxu0 %v2888
  %v2928 = vpop.f32.mrf.mxu0
  %v2929 = vadd.f32 %v2875, %v2928
  %2930 = vmatmul.f32.gmra.mxu0 %v2891
  %v2931 = vpop.f32.mrf.mxu0
  %v2932 = vadd.f32 %v2876, %v2931
  %2933 = vmatmul.f32.gmra.mxu0 %v2894
  %v2934 = vpop.f32.mrf.mxu0
  %v2935 = vadd.f32 %v2877, %v2934
  %2936 = vmatmul.f32.gmra.mxu0 %v2897
  %v2937 = vpop.f32.mrf.mxu0
  %v2938 = vadd.f32 %v2878, %v2937
  %2939 = vmatmul.f32.gmra.mxu0 %v2900
  %v2940 = vpop.f32.mrf.mxu0
  %v2941 = vadd.f32 %v2879, %v2940
  %2942 = vmatmul.f32.gmra.mxu0 %v2903
  %v2943 = vpop.f32.mrf.mxu0
  %v2944 = vadd.f32 %v2880, %v2943
  %2945 = vdwg.mxu0
  %v2946 = vadd.f32 %v2923, %v115
  %v2947 = vadd.f32 %v2926, %v118
  %v2948 = vadd.f32 %v2929, %v121
  %v2949 = vadd.f32 %v2932, %v124
  %v2950 = vadd.f32 %v2935, %v127
  %v2951 = vadd.f32 %v2938, %v130
  %v2952 = vadd.f32 %v2941, %v133
  %v2953 = vadd.f32 %v2944, %v136
  %2954 = vset.pattern.permute.xlu0 5
  %2955 = vperm.xlu0 %2954, %v2641
  %v2956 = vpop.permute.xlu0 %2955
  %2957 = vset.pattern.permute.xlu0 5
  %2958 = vperm.xlu0 %2957, %v2642
  %v2959 = vpop.permute.xlu0 %2958
  %2960 = vset.pattern.permute.xlu0 5
  %2961 = vperm.xlu0 %2960, %v2643
  %v2962 = vpop.permute.xlu0 %2961
  %2963 = vset.pattern.permute.xlu0 5
  %2964 = vperm.xlu0 %2963, %v2644
  %v2965 = vpop.permute.xlu0 %2964
  %2966 = vset.pattern.permute.xlu0 5
  %2967 = vperm.xlu0 %2966, %v2645
  %v2968 = vpop.permute.xlu0 %2967
  %2969 = vset.pattern.permute.xlu0 5
  %2970 = vperm.xlu0 %2969, %v2646
  %v2971 = vpop.permute.xlu0 %2970
  %2972 = vset.pattern.permute.xlu0 5
  %2973 = vperm.xlu0 %2972, %v2647
  %v2974 = vpop.permute.xlu0 %2973
  %2975 = vset.pattern.permute.xlu0 5
  %2976 = vperm.xlu0 %2975, %v2648
  %v2977 = vpop.permute.xlu0 %2976
  %vm2978 = vcmp.eq.s32.totalorder %v2956, %v139
  %vm2979 = vcmp.eq.s32.totalorder %v2959, %v139
  %vm2980 = vcmp.eq.s32.totalorder %v2962, %v139
  %vm2981 = vcmp.eq.s32.totalorder %v2965, %v139
  %vm2982 = vcmp.eq.s32.totalorder %v2968, %v139
  %vm2983 = vcmp.eq.s32.totalorder %v2971, %v139
  %vm2984 = vcmp.eq.s32.totalorder %v2974, %v139
  %vm2985 = vcmp.eq.s32.totalorder %v2977, %v139
  %v2986 = vsel %vm2978, 1, 0
  %v2987 = vsel %vm2979, 1, 0
  %v2988 = vsel %vm2980, 1, 0
  %v2989 = vsel %vm2981, 1, 0
  %v2990 = vsel %vm2982, 1, 0
  %v2991 = vsel %vm2983, 1, 0
  %v2992 = vsel %vm2984, 1, 0
  %v2993 = vsel %vm2985, 1, 0
  %v2994 = vcvt.s32.f32 %v2986
  %v2995 = vcvt.s32.f32 %v2987
  %v2996 = vcvt.s32.f32 %v2988
  %v2997 = vcvt.s32.f32 %v2989
  %v2998 = vcvt.s32.f32 %v2990
  %v2999 = vcvt.s32.f32 %v2991
  %v3000 = vcvt.s32.f32 %v2992
  %v3001 = vcvt.s32.f32 %v2993
  %3002 = vmatpush.msra.mxu0 %v48
  %3003 = vmatpush.msra.mxu0 %v47
  %3004 = vmatpush.msra.mxu0 %v46
  %3005 = vmatpush.msra.mxu0 %v45
  %3006 = vmatpush.msra.mxu0 %v44
  %3007 = vmatpush.msra.mxu0 %v43
  %3008 = vmatpush.msra.mxu0 %v42
  %3009 = vmatpush.msra.mxu0 %v41
  %3010 = vmatpush.msra.mxu0 %v40
  %3011 = vmatpush.msra.mxu0 %v39
  %3012 = vmatpush.msra.mxu0 %v38
  %3013 = vmatpush.msra.mxu0 %v37
  %3014 = vmatpush.msra.mxu0 %v36
  %3015 = vmatpush.msra.mxu0 %v35
  %3016 = vmatpush.msra.mxu0 %v34
  %3017 = vmatpush.msra.mxu0 %v33
  %3018 = vmatmul.f32.gmra.mxu0 %v2994
  %v3019 = vpop.f32.mrf.mxu0
  %v3020 = vadd.f32 0.0, %v3019
  %3021 = vmatmul.f32.gmra.mxu0 %v2995
  %v3022 = vpop.f32.mrf.mxu0
  %v3023 = vadd.f32 0.0, %v3022
  %3024 = vmatmul.f32.gmra.mxu0 %v2996
  %v3025 = vpop.f32.mrf.mxu0
  %v3026 = vadd.f32 0.0, %v3025
  %3027 = vmatmul.f32.gmra.mxu0 %v2997
  %v3028 = vpop.f32.mrf.mxu0
  %v3029 = vadd.f32 0.0, %v3028
  %3030 = vmatmul.f32.gmra.mxu0 %v2998
  %v3031 = vpop.f32.mrf.mxu0
  %v3032 = vadd.f32 0.0, %v3031
  %3033 = vmatmul.f32.gmra.mxu0 %v2999
  %v3034 = vpop.f32.mrf.mxu0
  %v3035 = vadd.f32 0.0, %v3034
  %3036 = vmatmul.f32.gmra.mxu0 %v3000
  %v3037 = vpop.f32.mrf.mxu0
  %v3038 = vadd.f32 0.0, %v3037
  %3039 = vmatmul.f32.gmra.mxu0 %v3001
  %v3040 = vpop.f32.mrf.mxu0
  %v3041 = vadd.f32 0.0, %v3040
  %3042 = vdwg.mxu0
  %v3043 = vmul.f32 %v3020, %v2946
  %v3044 = vmul.f32 %v3023, %v2947
  %v3045 = vmul.f32 %v3026, %v2948
  %v3046 = vmul.f32 %v3029, %v2949
  %v3047 = vmul.f32 %v3032, %v2950
  %v3048 = vmul.f32 %v3035, %v2951
  %v3049 = vmul.f32 %v3038, %v2952
  %v3050 = vmul.f32 %v3041, %v2953
  %v3051 = vadd.f32 %v2553, %v3043
  %v3052 = vadd.f32 %v2554, %v3044
  %v3053 = vadd.f32 %v2555, %v3045
  %v3054 = vadd.f32 %v2556, %v3046
  %v3055 = vadd.f32 %v2557, %v3047
  %v3056 = vadd.f32 %v2558, %v3048
  %v3057 = vadd.f32 %v2559, %v3049
  %v3058 = vadd.f32 %v2560, %v3050
  %3059 = vset.pattern.permute.xlu0 6
  %3060 = vperm.xlu0 %3059, %v561
  %v3061 = vpop.permute.xlu0 %3060
  %3062 = vset.pattern.permute.xlu0 6
  %3063 = vperm.xlu0 %3062, %v562
  %v3064 = vpop.permute.xlu0 %3063
  %3065 = vset.pattern.permute.xlu0 6
  %3066 = vperm.xlu0 %3065, %v563
  %v3067 = vpop.permute.xlu0 %3066
  %3068 = vset.pattern.permute.xlu0 6
  %3069 = vperm.xlu0 %3068, %v564
  %v3070 = vpop.permute.xlu0 %3069
  %3071 = vset.pattern.permute.xlu0 6
  %3072 = vperm.xlu0 %3071, %v565
  %v3073 = vpop.permute.xlu0 %3072
  %3074 = vset.pattern.permute.xlu0 6
  %3075 = vperm.xlu0 %3074, %v566
  %v3076 = vpop.permute.xlu0 %3075
  %3077 = vset.pattern.permute.xlu0 6
  %3078 = vperm.xlu0 %3077, %v567
  %v3079 = vpop.permute.xlu0 %3078
  %3080 = vset.pattern.permute.xlu0 6
  %3081 = vperm.xlu0 %3080, %v568
  %v3082 = vpop.permute.xlu0 %3081
  %vm3083 = vcmp.eq.s32.totalorder %v3061, 1
  %vm3084 = vcmp.eq.s32.totalorder %v3064, 1
  %vm3085 = vcmp.eq.s32.totalorder %v3067, 1
  %vm3086 = vcmp.eq.s32.totalorder %v3070, 1
  %vm3087 = vcmp.eq.s32.totalorder %v3073, 1
  %vm3088 = vcmp.eq.s32.totalorder %v3076, 1
  %vm3089 = vcmp.eq.s32.totalorder %v3079, 1
  %vm3090 = vcmp.eq.s32.totalorder %v3082, 1
  %3091 = vrot.lane.b32.xlu0 %v25, 110
  %v3092 = vpop.permute.xlu0 %3091
  %3093 = vrot.lane.b32.xlu0 %v26, 110
  %v3094 = vpop.permute.xlu0 %3093
  %3095 = vrot.lane.b32.xlu0 %v27, 110
  %v3096 = vpop.permute.xlu0 %3095
  %3097 = vrot.lane.b32.xlu0 %v28, 110
  %v3098 = vpop.permute.xlu0 %3097
  %3099 = vrot.lane.b32.xlu0 %v29, 110
  %v3100 = vpop.permute.xlu0 %3099
  %3101 = vrot.lane.b32.xlu0 %v30, 110
  %v3102 = vpop.permute.xlu0 %3101
  %3103 = vrot.lane.b32.xlu0 %v31, 110
  %v3104 = vpop.permute.xlu0 %3103
  %3105 = vrot.lane.b32.xlu0 %v32, 110
  %v3106 = vpop.permute.xlu0 %3105
  %v3115 = vsel %vm3083, %v25, %v3092
  %v3116 = vsel %vm3084, %v26, %v3094
  %v3117 = vsel %vm3085, %v27, %v3096
  %v3118 = vsel %vm3086, %v28, %v3098
  %v3119 = vsel %vm3087, %v29, %v3100
  %v3120 = vsel %vm3088, %v30, %v3102
  %v3121 = vsel %vm3089, %v31, %v3104
  %v3122 = vsel %vm3090, %v32, %v3106
  %3123 = vrot.lane.b32.xlu0 %v17, 6
  %v3124 = vpop.permute.xlu0 %3123
  %3125 = vrot.lane.b32.xlu0 %v18, 6
  %v3126 = vpop.permute.xlu0 %3125
  %3127 = vrot.lane.b32.xlu0 %v19, 6
  %v3128 = vpop.permute.xlu0 %3127
  %3129 = vrot.lane.b32.xlu0 %v20, 6
  %v3130 = vpop.permute.xlu0 %3129
  %3131 = vrot.lane.b32.xlu0 %v21, 6
  %v3132 = vpop.permute.xlu0 %3131
  %3133 = vrot.lane.b32.xlu0 %v22, 6
  %v3134 = vpop.permute.xlu0 %3133
  %3135 = vrot.lane.b32.xlu0 %v23, 6
  %v3136 = vpop.permute.xlu0 %3135
  %3137 = vrot.lane.b32.xlu0 %v24, 6
  %v3138 = vpop.permute.xlu0 %3137
  %v3139 = vsel %vm553, %v3124, %v17
  %v3140 = vsel %vm554, %v3126, %v18
  %v3141 = vsel %vm555, %v3128, %v19
  %v3142 = vsel %vm556, %v3130, %v20
  %v3143 = vsel %vm557, %v3132, %v21
  %v3144 = vsel %vm558, %v3134, %v22
  %v3145 = vsel %vm559, %v3136, %v23
  %v3146 = vsel %vm560, %v3138, %v24
  %v3147 = vsub.f32 %v3115, %v60
  %v3148 = vsub.f32 %v3116, %v62
  %v3149 = vsub.f32 %v3117, %v64
  %v3150 = vsub.f32 %v3118, %v66
  %v3151 = vsub.f32 %v3119, %v68
  %v3152 = vsub.f32 %v3120, %v70
  %v3153 = vsub.f32 %v3121, %v72
  %v3154 = vsub.f32 %v3122, %v74
  %v3155 = vmul.f32 %v3147, %v3147
  %v3156 = vmul.f32 %v3148, %v3148
  %v3157 = vmul.f32 %v3149, %v3149
  %v3158 = vmul.f32 %v3150, %v3150
  %v3159 = vmul.f32 %v3151, %v3151
  %v3160 = vmul.f32 %v3152, %v3152
  %v3161 = vmul.f32 %v3153, %v3153
  %v3162 = vmul.f32 %v3154, %v3154
  %3171 = vrot.lane.b32.xlu0 %v3155, 127
  %v3172 = vpop.permute.xlu0 %3171
  %3173 = vrot.lane.b32.xlu0 %v3156, 127
  %v3174 = vpop.permute.xlu0 %3173
  %3175 = vrot.lane.b32.xlu0 %v3157, 127
  %v3176 = vpop.permute.xlu0 %3175
  %3177 = vrot.lane.b32.xlu0 %v3158, 127
  %v3178 = vpop.permute.xlu0 %3177
  %3179 = vrot.lane.b32.xlu0 %v3159, 127
  %v3180 = vpop.permute.xlu0 %3179
  %3181 = vrot.lane.b32.xlu0 %v3160, 127
  %v3182 = vpop.permute.xlu0 %3181
  %3183 = vrot.lane.b32.xlu0 %v3161, 127
  %v3184 = vpop.permute.xlu0 %3183
  %3185 = vrot.lane.b32.xlu0 %v3162, 127
  %v3186 = vpop.permute.xlu0 %3185
  %v3195 = vadd.f32 %v3155, %v3172
  %v3196 = vadd.f32 %v3156, %v3174
  %v3197 = vadd.f32 %v3157, %v3176
  %v3198 = vadd.f32 %v3158, %v3178
  %v3199 = vadd.f32 %v3159, %v3180
  %v3200 = vadd.f32 %v3160, %v3182
  %v3201 = vadd.f32 %v3161, %v3184
  %v3202 = vadd.f32 %v3162, %v3186
  %3203 = vrot.lane.b32.xlu0 %v3155, 126
  %v3204 = vpop.permute.xlu0 %3203
  %3205 = vrot.lane.b32.xlu0 %v3156, 126
  %v3206 = vpop.permute.xlu0 %3205
  %3207 = vrot.lane.b32.xlu0 %v3157, 126
  %v3208 = vpop.permute.xlu0 %3207
  %3209 = vrot.lane.b32.xlu0 %v3158, 126
  %v3210 = vpop.permute.xlu0 %3209
  %3211 = vrot.lane.b32.xlu0 %v3159, 126
  %v3212 = vpop.permute.xlu0 %3211
  %3213 = vrot.lane.b32.xlu0 %v3160, 126
  %v3214 = vpop.permute.xlu0 %3213
  %3215 = vrot.lane.b32.xlu0 %v3161, 126
  %v3216 = vpop.permute.xlu0 %3215
  %3217 = vrot.lane.b32.xlu0 %v3162, 126
  %v3218 = vpop.permute.xlu0 %3217
  %v3227 = vadd.f32 %v3195, %v3204
  %v3228 = vadd.f32 %v3196, %v3206
  %v3229 = vadd.f32 %v3197, %v3208
  %v3230 = vadd.f32 %v3198, %v3210
  %v3231 = vadd.f32 %v3199, %v3212
  %v3232 = vadd.f32 %v3200, %v3214
  %v3233 = vadd.f32 %v3201, %v3216
  %v3234 = vadd.f32 %v3202, %v3218
  %v3235 = vrsqrt.pop %v3227
  %v3236 = vmul.f32 %v3235, %v3227
  %v3237 = vmul.f32 %v3236, %v3235
  %v3238 = vmul.f32 0.5, %v3237
  %v3239 = vsub.f32 1.5, %v3238
  %v3240 = vmul.f32 %v3235, %v3239
  %v3241 = vmul.f32 %v3227, %v3240
  %vm3242 = vcmp.eq.f32.partialorder %v3227, inf
  %v3243 = vsel %vm3242, %v3227, %v3241
  %vm3244 = vcmp.eq.f32.partialorder %v3227, 0.0
  %v3245 = vand.u32 %v3227, 2147483648
  %v3246 = vsel %vm3244, %v3245, %v3243
  %v3247 = vrsqrt.pop %v3228
  %v3248 = vmul.f32 %v3247, %v3228
  %v3249 = vmul.f32 %v3248, %v3247
  %v3250 = vmul.f32 0.5, %v3249
  %v3251 = vsub.f32 1.5, %v3250
  %v3252 = vmul.f32 %v3247, %v3251
  %v3253 = vmul.f32 %v3228, %v3252
  %vm3254 = vcmp.eq.f32.partialorder %v3228, inf
  %v3255 = vsel %vm3254, %v3228, %v3253
  %vm3256 = vcmp.eq.f32.partialorder %v3228, 0.0
  %v3257 = vand.u32 %v3228, 2147483648
  %v3258 = vsel %vm3256, %v3257, %v3255
  %v3259 = vrsqrt.pop %v3229
  %v3260 = vmul.f32 %v3259, %v3229
  %v3261 = vmul.f32 %v3260, %v3259
  %v3262 = vmul.f32 0.5, %v3261
  %v3263 = vsub.f32 1.5, %v3262
  %v3264 = vmul.f32 %v3259, %v3263
  %v3265 = vmul.f32 %v3229, %v3264
  %vm3266 = vcmp.eq.f32.partialorder %v3229, inf
  %v3267 = vsel %vm3266, %v3229, %v3265
  %vm3268 = vcmp.eq.f32.partialorder %v3229, 0.0
  %v3269 = vand.u32 %v3229, 2147483648
  %v3270 = vsel %vm3268, %v3269, %v3267
  %v3271 = vrsqrt.pop %v3230
  %v3272 = vmul.f32 %v3271, %v3230
  %v3273 = vmul.f32 %v3272, %v3271
  %v3274 = vmul.f32 0.5, %v3273
  %v3275 = vsub.f32 1.5, %v3274
  %v3276 = vmul.f32 %v3271, %v3275
  %v3277 = vmul.f32 %v3230, %v3276
  %vm3278 = vcmp.eq.f32.partialorder %v3230, inf
  %v3279 = vsel %vm3278, %v3230, %v3277
  %vm3280 = vcmp.eq.f32.partialorder %v3230, 0.0
  %v3281 = vand.u32 %v3230, 2147483648
  %v3282 = vsel %vm3280, %v3281, %v3279
  %v3283 = vrsqrt.pop %v3231
  %v3284 = vmul.f32 %v3283, %v3231
  %v3285 = vmul.f32 %v3284, %v3283
  %v3286 = vmul.f32 0.5, %v3285
  %v3287 = vsub.f32 1.5, %v3286
  %v3288 = vmul.f32 %v3283, %v3287
  %v3289 = vmul.f32 %v3231, %v3288
  %vm3290 = vcmp.eq.f32.partialorder %v3231, inf
  %v3291 = vsel %vm3290, %v3231, %v3289
  %vm3292 = vcmp.eq.f32.partialorder %v3231, 0.0
  %v3293 = vand.u32 %v3231, 2147483648
  %v3294 = vsel %vm3292, %v3293, %v3291
  %v3295 = vrsqrt.pop %v3232
  %v3296 = vmul.f32 %v3295, %v3232
  %v3297 = vmul.f32 %v3296, %v3295
  %v3298 = vmul.f32 0.5, %v3297
  %v3299 = vsub.f32 1.5, %v3298
  %v3300 = vmul.f32 %v3295, %v3299
  %v3301 = vmul.f32 %v3232, %v3300
  %vm3302 = vcmp.eq.f32.partialorder %v3232, inf
  %v3303 = vsel %vm3302, %v3232, %v3301
  %vm3304 = vcmp.eq.f32.partialorder %v3232, 0.0
  %v3305 = vand.u32 %v3232, 2147483648
  %v3306 = vsel %vm3304, %v3305, %v3303
  %v3307 = vrsqrt.pop %v3233
  %v3308 = vmul.f32 %v3307, %v3233
  %v3309 = vmul.f32 %v3308, %v3307
  %v3310 = vmul.f32 0.5, %v3309
  %v3311 = vsub.f32 1.5, %v3310
  %v3312 = vmul.f32 %v3307, %v3311
  %v3313 = vmul.f32 %v3233, %v3312
  %vm3314 = vcmp.eq.f32.partialorder %v3233, inf
  %v3315 = vsel %vm3314, %v3233, %v3313
  %vm3316 = vcmp.eq.f32.partialorder %v3233, 0.0
  %v3317 = vand.u32 %v3233, 2147483648
  %v3318 = vsel %vm3316, %v3317, %v3315
  %v3319 = vrsqrt.pop %v3234
  %v3320 = vmul.f32 %v3319, %v3234
  %v3321 = vmul.f32 %v3320, %v3319
  %v3322 = vmul.f32 0.5, %v3321
  %v3323 = vsub.f32 1.5, %v3322
  %v3324 = vmul.f32 %v3319, %v3323
  %v3325 = vmul.f32 %v3234, %v3324
  %vm3326 = vcmp.eq.f32.partialorder %v3234, inf
  %v3327 = vsel %vm3326, %v3234, %v3325
  %vm3328 = vcmp.eq.f32.partialorder %v3234, 0.0
  %v3329 = vand.u32 %v3234, 2147483648
  %v3330 = vsel %vm3328, %v3329, %v3327
  %3332 = vset.pattern.permute.xlu0 0
  %3333 = vperm.xlu0 %3332, %v3246
  %v3334 = vpop.permute.xlu0 %3333
  %3337 = vset.pattern.permute.xlu0 0
  %3338 = vperm.xlu0 %3337, %v3258
  %v3339 = vpop.permute.xlu0 %3338
  %3342 = vset.pattern.permute.xlu0 0
  %3343 = vperm.xlu0 %3342, %v3270
  %v3344 = vpop.permute.xlu0 %3343
  %3347 = vset.pattern.permute.xlu0 0
  %3348 = vperm.xlu0 %3347, %v3282
  %v3349 = vpop.permute.xlu0 %3348
  %3352 = vset.pattern.permute.xlu0 0
  %3353 = vperm.xlu0 %3352, %v3294
  %v3354 = vpop.permute.xlu0 %3353
  %3357 = vset.pattern.permute.xlu0 0
  %3358 = vperm.xlu0 %3357, %v3306
  %v3359 = vpop.permute.xlu0 %3358
  %3362 = vset.pattern.permute.xlu0 0
  %3363 = vperm.xlu0 %3362, %v3318
  %v3364 = vpop.permute.xlu0 %3363
  %3367 = vset.pattern.permute.xlu0 0
  %3368 = vperm.xlu0 %3367, %v3330
  %v3369 = vpop.permute.xlu0 %3368
  %v3371 = vmul.f32 %v3334, %v372
  %v3372 = vmul.f32 %v3339, %v372
  %v3373 = vmul.f32 %v3344, %v372
  %v3374 = vmul.f32 %v3349, %v372
  %v3375 = vmul.f32 %v3354, %v372
  %v3376 = vmul.f32 %v3359, %v372
  %v3377 = vmul.f32 %v3364, %v372
  %v3378 = vmul.f32 %v3369, %v372
  %v3380 = vsel %vm77, %v3115, 0
  %v3383 = vsel %vm77, %v3116, 0
  %v3386 = vsel %vm77, %v3117, 0
  %v3389 = vsel %vm77, %v3118, 0
  %v3392 = vsel %vm77, %v3119, 0
  %v3395 = vsel %vm77, %v3120, 0
  %v3398 = vsel %vm77, %v3121, 0
  %v3401 = vsel %vm77, %v3122, 0
  %3403 = vmatpush.msra.mxu0 0.0
  %3404 = vmatpush.msra.mxu0 0.0
  %3405 = vmatpush.msra.mxu0 0.0
  %3406 = vmatpush.msra.mxu0 0.0
  %3407 = vmatpush.msra.mxu0 0.0
  %3408 = vmatpush.msra.mxu0 0.0
  %3409 = vmatpush.msra.mxu0 0.0
  %3410 = vmatpush.msra.mxu0 0.0
  %3411 = vmatpush.msra.mxu0 0.0
  %3412 = vmatpush.msra.mxu0 0.0
  %3413 = vmatpush.msra.mxu0 0.0
  %3414 = vmatpush.msra.mxu0 0.0
  %3415 = vmatpush.msra.mxu0 0.0
  %3416 = vmatpush.msra.mxu0 0.0
  %3417 = vmatpush.msra.mxu0 0.0
  %3418 = vmatpush.msra.mxu0 %v397
  %3419 = vmatmul.f32.gmra.mxu0 %v3380
  %v3420 = vpop.f32.mrf.mxu0
  %v3421 = vadd.f32 %v3371, %v3420
  %3422 = vmatmul.f32.gmra.mxu0 %v3383
  %v3423 = vpop.f32.mrf.mxu0
  %v3424 = vadd.f32 %v3372, %v3423
  %3425 = vmatmul.f32.gmra.mxu0 %v3386
  %v3426 = vpop.f32.mrf.mxu0
  %v3427 = vadd.f32 %v3373, %v3426
  %3428 = vmatmul.f32.gmra.mxu0 %v3389
  %v3429 = vpop.f32.mrf.mxu0
  %v3430 = vadd.f32 %v3374, %v3429
  %3431 = vmatmul.f32.gmra.mxu0 %v3392
  %v3432 = vpop.f32.mrf.mxu0
  %v3433 = vadd.f32 %v3375, %v3432
  %3434 = vmatmul.f32.gmra.mxu0 %v3395
  %v3435 = vpop.f32.mrf.mxu0
  %v3436 = vadd.f32 %v3376, %v3435
  %3437 = vmatmul.f32.gmra.mxu0 %v3398
  %v3438 = vpop.f32.mrf.mxu0
  %v3439 = vadd.f32 %v3377, %v3438
  %3440 = vmatmul.f32.gmra.mxu0 %v3401
  %v3441 = vpop.f32.mrf.mxu0
  %v3442 = vadd.f32 %v3378, %v3441
  %3443 = vdwg.mxu0
  %v3444 = vadd.f32 %v3421, %v115
  %v3445 = vadd.f32 %v3424, %v118
  %v3446 = vadd.f32 %v3427, %v121
  %v3447 = vadd.f32 %v3430, %v124
  %v3448 = vadd.f32 %v3433, %v127
  %v3449 = vadd.f32 %v3436, %v130
  %v3450 = vadd.f32 %v3439, %v133
  %v3451 = vadd.f32 %v3442, %v136
  %3452 = vset.pattern.permute.xlu0 6
  %3453 = vperm.xlu0 %3452, %v3139
  %v3454 = vpop.permute.xlu0 %3453
  %3455 = vset.pattern.permute.xlu0 6
  %3456 = vperm.xlu0 %3455, %v3140
  %v3457 = vpop.permute.xlu0 %3456
  %3458 = vset.pattern.permute.xlu0 6
  %3459 = vperm.xlu0 %3458, %v3141
  %v3460 = vpop.permute.xlu0 %3459
  %3461 = vset.pattern.permute.xlu0 6
  %3462 = vperm.xlu0 %3461, %v3142
  %v3463 = vpop.permute.xlu0 %3462
  %3464 = vset.pattern.permute.xlu0 6
  %3465 = vperm.xlu0 %3464, %v3143
  %v3466 = vpop.permute.xlu0 %3465
  %3467 = vset.pattern.permute.xlu0 6
  %3468 = vperm.xlu0 %3467, %v3144
  %v3469 = vpop.permute.xlu0 %3468
  %3470 = vset.pattern.permute.xlu0 6
  %3471 = vperm.xlu0 %3470, %v3145
  %v3472 = vpop.permute.xlu0 %3471
  %3473 = vset.pattern.permute.xlu0 6
  %3474 = vperm.xlu0 %3473, %v3146
  %v3475 = vpop.permute.xlu0 %3474
  %vm3476 = vcmp.eq.s32.totalorder %v3454, %v139
  %vm3477 = vcmp.eq.s32.totalorder %v3457, %v139
  %vm3478 = vcmp.eq.s32.totalorder %v3460, %v139
  %vm3479 = vcmp.eq.s32.totalorder %v3463, %v139
  %vm3480 = vcmp.eq.s32.totalorder %v3466, %v139
  %vm3481 = vcmp.eq.s32.totalorder %v3469, %v139
  %vm3482 = vcmp.eq.s32.totalorder %v3472, %v139
  %vm3483 = vcmp.eq.s32.totalorder %v3475, %v139
  %v3484 = vsel %vm3476, 1, 0
  %v3485 = vsel %vm3477, 1, 0
  %v3486 = vsel %vm3478, 1, 0
  %v3487 = vsel %vm3479, 1, 0
  %v3488 = vsel %vm3480, 1, 0
  %v3489 = vsel %vm3481, 1, 0
  %v3490 = vsel %vm3482, 1, 0
  %v3491 = vsel %vm3483, 1, 0
  %v3492 = vcvt.s32.f32 %v3484
  %v3493 = vcvt.s32.f32 %v3485
  %v3494 = vcvt.s32.f32 %v3486
  %v3495 = vcvt.s32.f32 %v3487
  %v3496 = vcvt.s32.f32 %v3488
  %v3497 = vcvt.s32.f32 %v3489
  %v3498 = vcvt.s32.f32 %v3490
  %v3499 = vcvt.s32.f32 %v3491
  %3500 = vmatpush.msra.mxu0 %v48
  %3501 = vmatpush.msra.mxu0 %v47
  %3502 = vmatpush.msra.mxu0 %v46
  %3503 = vmatpush.msra.mxu0 %v45
  %3504 = vmatpush.msra.mxu0 %v44
  %3505 = vmatpush.msra.mxu0 %v43
  %3506 = vmatpush.msra.mxu0 %v42
  %3507 = vmatpush.msra.mxu0 %v41
  %3508 = vmatpush.msra.mxu0 %v40
  %3509 = vmatpush.msra.mxu0 %v39
  %3510 = vmatpush.msra.mxu0 %v38
  %3511 = vmatpush.msra.mxu0 %v37
  %3512 = vmatpush.msra.mxu0 %v36
  %3513 = vmatpush.msra.mxu0 %v35
  %3514 = vmatpush.msra.mxu0 %v34
  %3515 = vmatpush.msra.mxu0 %v33
  %3516 = vmatmul.f32.gmra.mxu0 %v3492
  %v3517 = vpop.f32.mrf.mxu0
  %v3518 = vadd.f32 0.0, %v3517
  %3519 = vmatmul.f32.gmra.mxu0 %v3493
  %v3520 = vpop.f32.mrf.mxu0
  %v3521 = vadd.f32 0.0, %v3520
  %3522 = vmatmul.f32.gmra.mxu0 %v3494
  %v3523 = vpop.f32.mrf.mxu0
  %v3524 = vadd.f32 0.0, %v3523
  %3525 = vmatmul.f32.gmra.mxu0 %v3495
  %v3526 = vpop.f32.mrf.mxu0
  %v3527 = vadd.f32 0.0, %v3526
  %3528 = vmatmul.f32.gmra.mxu0 %v3496
  %v3529 = vpop.f32.mrf.mxu0
  %v3530 = vadd.f32 0.0, %v3529
  %3531 = vmatmul.f32.gmra.mxu0 %v3497
  %v3532 = vpop.f32.mrf.mxu0
  %v3533 = vadd.f32 0.0, %v3532
  %3534 = vmatmul.f32.gmra.mxu0 %v3498
  %v3535 = vpop.f32.mrf.mxu0
  %v3536 = vadd.f32 0.0, %v3535
  %3537 = vmatmul.f32.gmra.mxu0 %v3499
  %v3538 = vpop.f32.mrf.mxu0
  %v3539 = vadd.f32 0.0, %v3538
  %3540 = vdwg.mxu0
  %v3541 = vmul.f32 %v3518, %v3444
  %v3542 = vmul.f32 %v3521, %v3445
  %v3543 = vmul.f32 %v3524, %v3446
  %v3544 = vmul.f32 %v3527, %v3447
  %v3545 = vmul.f32 %v3530, %v3448
  %v3546 = vmul.f32 %v3533, %v3449
  %v3547 = vmul.f32 %v3536, %v3450
  %v3548 = vmul.f32 %v3539, %v3451
  %v3549 = vadd.f32 %v3051, %v3541
  %v3550 = vadd.f32 %v3052, %v3542
  %v3551 = vadd.f32 %v3053, %v3543
  %v3552 = vadd.f32 %v3054, %v3544
  %v3553 = vadd.f32 %v3055, %v3545
  %v3554 = vadd.f32 %v3056, %v3546
  %v3555 = vadd.f32 %v3057, %v3547
  %v3556 = vadd.f32 %v3058, %v3548
  %3557 = vset.pattern.permute.xlu0 7
  %3558 = vperm.xlu0 %3557, %v561
  %v3559 = vpop.permute.xlu0 %3558
  %3560 = vset.pattern.permute.xlu0 7
  %3561 = vperm.xlu0 %3560, %v562
  %v3562 = vpop.permute.xlu0 %3561
  %3563 = vset.pattern.permute.xlu0 7
  %3564 = vperm.xlu0 %3563, %v563
  %v3565 = vpop.permute.xlu0 %3564
  %3566 = vset.pattern.permute.xlu0 7
  %3567 = vperm.xlu0 %3566, %v564
  %v3568 = vpop.permute.xlu0 %3567
  %3569 = vset.pattern.permute.xlu0 7
  %3570 = vperm.xlu0 %3569, %v565
  %v3571 = vpop.permute.xlu0 %3570
  %3572 = vset.pattern.permute.xlu0 7
  %3573 = vperm.xlu0 %3572, %v566
  %v3574 = vpop.permute.xlu0 %3573
  %3575 = vset.pattern.permute.xlu0 7
  %3576 = vperm.xlu0 %3575, %v567
  %v3577 = vpop.permute.xlu0 %3576
  %3578 = vset.pattern.permute.xlu0 7
  %3579 = vperm.xlu0 %3578, %v568
  %v3580 = vpop.permute.xlu0 %3579
  %vm3581 = vcmp.eq.s32.totalorder %v3559, 1
  %vm3582 = vcmp.eq.s32.totalorder %v3562, 1
  %vm3583 = vcmp.eq.s32.totalorder %v3565, 1
  %vm3584 = vcmp.eq.s32.totalorder %v3568, 1
  %vm3585 = vcmp.eq.s32.totalorder %v3571, 1
  %vm3586 = vcmp.eq.s32.totalorder %v3574, 1
  %vm3587 = vcmp.eq.s32.totalorder %v3577, 1
  %vm3588 = vcmp.eq.s32.totalorder %v3580, 1
  %3589 = vrot.lane.b32.xlu0 %v25, 107
  %v3590 = vpop.permute.xlu0 %3589
  %3591 = vrot.lane.b32.xlu0 %v26, 107
  %v3592 = vpop.permute.xlu0 %3591
  %3593 = vrot.lane.b32.xlu0 %v27, 107
  %v3594 = vpop.permute.xlu0 %3593
  %3595 = vrot.lane.b32.xlu0 %v28, 107
  %v3596 = vpop.permute.xlu0 %3595
  %3597 = vrot.lane.b32.xlu0 %v29, 107
  %v3598 = vpop.permute.xlu0 %3597
  %3599 = vrot.lane.b32.xlu0 %v30, 107
  %v3600 = vpop.permute.xlu0 %3599
  %3601 = vrot.lane.b32.xlu0 %v31, 107
  %v3602 = vpop.permute.xlu0 %3601
  %3603 = vrot.lane.b32.xlu0 %v32, 107
  %v3604 = vpop.permute.xlu0 %3603
  %v3613 = vsel %vm3581, %v25, %v3590
  %v3614 = vsel %vm3582, %v26, %v3592
  %v3615 = vsel %vm3583, %v27, %v3594
  %v3616 = vsel %vm3584, %v28, %v3596
  %v3617 = vsel %vm3585, %v29, %v3598
  %v3618 = vsel %vm3586, %v30, %v3600
  %v3619 = vsel %vm3587, %v31, %v3602
  %v3620 = vsel %vm3588, %v32, %v3604
  %3621 = vrot.lane.b32.xlu0 %v17, 7
  %v3622 = vpop.permute.xlu0 %3621
  %3623 = vrot.lane.b32.xlu0 %v18, 7
  %v3624 = vpop.permute.xlu0 %3623
  %3625 = vrot.lane.b32.xlu0 %v19, 7
  %v3626 = vpop.permute.xlu0 %3625
  %3627 = vrot.lane.b32.xlu0 %v20, 7
  %v3628 = vpop.permute.xlu0 %3627
  %3629 = vrot.lane.b32.xlu0 %v21, 7
  %v3630 = vpop.permute.xlu0 %3629
  %3631 = vrot.lane.b32.xlu0 %v22, 7
  %v3632 = vpop.permute.xlu0 %3631
  %3633 = vrot.lane.b32.xlu0 %v23, 7
  %v3634 = vpop.permute.xlu0 %3633
  %3635 = vrot.lane.b32.xlu0 %v24, 7
  %v3636 = vpop.permute.xlu0 %3635
  %v3637 = vsel %vm553, %v3622, %v17
  %v3638 = vsel %vm554, %v3624, %v18
  %v3639 = vsel %vm555, %v3626, %v19
  %v3640 = vsel %vm556, %v3628, %v20
  %v3641 = vsel %vm557, %v3630, %v21
  %v3642 = vsel %vm558, %v3632, %v22
  %v3643 = vsel %vm559, %v3634, %v23
  %v3644 = vsel %vm560, %v3636, %v24
  %v3645 = vsub.f32 %v3613, %v60
  %v3646 = vsub.f32 %v3614, %v62
  %v3647 = vsub.f32 %v3615, %v64
  %v3648 = vsub.f32 %v3616, %v66
  %v3649 = vsub.f32 %v3617, %v68
  %v3650 = vsub.f32 %v3618, %v70
  %v3651 = vsub.f32 %v3619, %v72
  %v3652 = vsub.f32 %v3620, %v74
  %v3653 = vmul.f32 %v3645, %v3645
  %v3654 = vmul.f32 %v3646, %v3646
  %v3655 = vmul.f32 %v3647, %v3647
  %v3656 = vmul.f32 %v3648, %v3648
  %v3657 = vmul.f32 %v3649, %v3649
  %v3658 = vmul.f32 %v3650, %v3650
  %v3659 = vmul.f32 %v3651, %v3651
  %v3660 = vmul.f32 %v3652, %v3652
  %3669 = vrot.lane.b32.xlu0 %v3653, 127
  %v3670 = vpop.permute.xlu0 %3669
  %3671 = vrot.lane.b32.xlu0 %v3654, 127
  %v3672 = vpop.permute.xlu0 %3671
  %3673 = vrot.lane.b32.xlu0 %v3655, 127
  %v3674 = vpop.permute.xlu0 %3673
  %3675 = vrot.lane.b32.xlu0 %v3656, 127
  %v3676 = vpop.permute.xlu0 %3675
  %3677 = vrot.lane.b32.xlu0 %v3657, 127
  %v3678 = vpop.permute.xlu0 %3677
  %3679 = vrot.lane.b32.xlu0 %v3658, 127
  %v3680 = vpop.permute.xlu0 %3679
  %3681 = vrot.lane.b32.xlu0 %v3659, 127
  %v3682 = vpop.permute.xlu0 %3681
  %3683 = vrot.lane.b32.xlu0 %v3660, 127
  %v3684 = vpop.permute.xlu0 %3683
  %v3693 = vadd.f32 %v3653, %v3670
  %v3694 = vadd.f32 %v3654, %v3672
  %v3695 = vadd.f32 %v3655, %v3674
  %v3696 = vadd.f32 %v3656, %v3676
  %v3697 = vadd.f32 %v3657, %v3678
  %v3698 = vadd.f32 %v3658, %v3680
  %v3699 = vadd.f32 %v3659, %v3682
  %v3700 = vadd.f32 %v3660, %v3684
  %3701 = vrot.lane.b32.xlu0 %v3653, 126
  %v3702 = vpop.permute.xlu0 %3701
  %3703 = vrot.lane.b32.xlu0 %v3654, 126
  %v3704 = vpop.permute.xlu0 %3703
  %3705 = vrot.lane.b32.xlu0 %v3655, 126
  %v3706 = vpop.permute.xlu0 %3705
  %3707 = vrot.lane.b32.xlu0 %v3656, 126
  %v3708 = vpop.permute.xlu0 %3707
  %3709 = vrot.lane.b32.xlu0 %v3657, 126
  %v3710 = vpop.permute.xlu0 %3709
  %3711 = vrot.lane.b32.xlu0 %v3658, 126
  %v3712 = vpop.permute.xlu0 %3711
  %3713 = vrot.lane.b32.xlu0 %v3659, 126
  %v3714 = vpop.permute.xlu0 %3713
  %3715 = vrot.lane.b32.xlu0 %v3660, 126
  %v3716 = vpop.permute.xlu0 %3715
  %v3725 = vadd.f32 %v3693, %v3702
  %v3726 = vadd.f32 %v3694, %v3704
  %v3727 = vadd.f32 %v3695, %v3706
  %v3728 = vadd.f32 %v3696, %v3708
  %v3729 = vadd.f32 %v3697, %v3710
  %v3730 = vadd.f32 %v3698, %v3712
  %v3731 = vadd.f32 %v3699, %v3714
  %v3732 = vadd.f32 %v3700, %v3716
  %v3733 = vrsqrt.pop %v3725
  %v3734 = vmul.f32 %v3733, %v3725
  %v3735 = vmul.f32 %v3734, %v3733
  %v3736 = vmul.f32 0.5, %v3735
  %v3737 = vsub.f32 1.5, %v3736
  %v3738 = vmul.f32 %v3733, %v3737
  %v3739 = vmul.f32 %v3725, %v3738
  %vm3740 = vcmp.eq.f32.partialorder %v3725, inf
  %v3741 = vsel %vm3740, %v3725, %v3739
  %vm3742 = vcmp.eq.f32.partialorder %v3725, 0.0
  %v3743 = vand.u32 %v3725, 2147483648
  %v3744 = vsel %vm3742, %v3743, %v3741
  %v3745 = vrsqrt.pop %v3726
  %v3746 = vmul.f32 %v3745, %v3726
  %v3747 = vmul.f32 %v3746, %v3745
  %v3748 = vmul.f32 0.5, %v3747
  %v3749 = vsub.f32 1.5, %v3748
  %v3750 = vmul.f32 %v3745, %v3749
  %v3751 = vmul.f32 %v3726, %v3750
  %vm3752 = vcmp.eq.f32.partialorder %v3726, inf
  %v3753 = vsel %vm3752, %v3726, %v3751
  %vm3754 = vcmp.eq.f32.partialorder %v3726, 0.0
  %v3755 = vand.u32 %v3726, 2147483648
  %v3756 = vsel %vm3754, %v3755, %v3753
  %v3757 = vrsqrt.pop %v3727
  %v3758 = vmul.f32 %v3757, %v3727
  %v3759 = vmul.f32 %v3758, %v3757
  %v3760 = vmul.f32 0.5, %v3759
  %v3761 = vsub.f32 1.5, %v3760
  %v3762 = vmul.f32 %v3757, %v3761
  %v3763 = vmul.f32 %v3727, %v3762
  %vm3764 = vcmp.eq.f32.partialorder %v3727, inf
  %v3765 = vsel %vm3764, %v3727, %v3763
  %vm3766 = vcmp.eq.f32.partialorder %v3727, 0.0
  %v3767 = vand.u32 %v3727, 2147483648
  %v3768 = vsel %vm3766, %v3767, %v3765
  %v3769 = vrsqrt.pop %v3728
  %v3770 = vmul.f32 %v3769, %v3728
  %v3771 = vmul.f32 %v3770, %v3769
  %v3772 = vmul.f32 0.5, %v3771
  %v3773 = vsub.f32 1.5, %v3772
  %v3774 = vmul.f32 %v3769, %v3773
  %v3775 = vmul.f32 %v3728, %v3774
  %vm3776 = vcmp.eq.f32.partialorder %v3728, inf
  %v3777 = vsel %vm3776, %v3728, %v3775
  %vm3778 = vcmp.eq.f32.partialorder %v3728, 0.0
  %v3779 = vand.u32 %v3728, 2147483648
  %v3780 = vsel %vm3778, %v3779, %v3777
  %v3781 = vrsqrt.pop %v3729
  %v3782 = vmul.f32 %v3781, %v3729
  %v3783 = vmul.f32 %v3782, %v3781
  %v3784 = vmul.f32 0.5, %v3783
  %v3785 = vsub.f32 1.5, %v3784
  %v3786 = vmul.f32 %v3781, %v3785
  %v3787 = vmul.f32 %v3729, %v3786
  %vm3788 = vcmp.eq.f32.partialorder %v3729, inf
  %v3789 = vsel %vm3788, %v3729, %v3787
  %vm3790 = vcmp.eq.f32.partialorder %v3729, 0.0
  %v3791 = vand.u32 %v3729, 2147483648
  %v3792 = vsel %vm3790, %v3791, %v3789
  %v3793 = vrsqrt.pop %v3730
  %v3794 = vmul.f32 %v3793, %v3730
  %v3795 = vmul.f32 %v3794, %v3793
  %v3796 = vmul.f32 0.5, %v3795
  %v3797 = vsub.f32 1.5, %v3796
  %v3798 = vmul.f32 %v3793, %v3797
  %v3799 = vmul.f32 %v3730, %v3798
  %vm3800 = vcmp.eq.f32.partialorder %v3730, inf
  %v3801 = vsel %vm3800, %v3730, %v3799
  %vm3802 = vcmp.eq.f32.partialorder %v3730, 0.0
  %v3803 = vand.u32 %v3730, 2147483648
  %v3804 = vsel %vm3802, %v3803, %v3801
  %v3805 = vrsqrt.pop %v3731
  %v3806 = vmul.f32 %v3805, %v3731
  %v3807 = vmul.f32 %v3806, %v3805
  %v3808 = vmul.f32 0.5, %v3807
  %v3809 = vsub.f32 1.5, %v3808
  %v3810 = vmul.f32 %v3805, %v3809
  %v3811 = vmul.f32 %v3731, %v3810
  %vm3812 = vcmp.eq.f32.partialorder %v3731, inf
  %v3813 = vsel %vm3812, %v3731, %v3811
  %vm3814 = vcmp.eq.f32.partialorder %v3731, 0.0
  %v3815 = vand.u32 %v3731, 2147483648
  %v3816 = vsel %vm3814, %v3815, %v3813
  %v3817 = vrsqrt.pop %v3732
  %v3818 = vmul.f32 %v3817, %v3732
  %v3819 = vmul.f32 %v3818, %v3817
  %v3820 = vmul.f32 0.5, %v3819
  %v3821 = vsub.f32 1.5, %v3820
  %v3822 = vmul.f32 %v3817, %v3821
  %v3823 = vmul.f32 %v3732, %v3822
  %vm3824 = vcmp.eq.f32.partialorder %v3732, inf
  %v3825 = vsel %vm3824, %v3732, %v3823
  %vm3826 = vcmp.eq.f32.partialorder %v3732, 0.0
  %v3827 = vand.u32 %v3732, 2147483648
  %v3828 = vsel %vm3826, %v3827, %v3825
  %3830 = vset.pattern.permute.xlu0 0
  %3831 = vperm.xlu0 %3830, %v3744
  %v3832 = vpop.permute.xlu0 %3831
  %3835 = vset.pattern.permute.xlu0 0
  %3836 = vperm.xlu0 %3835, %v3756
  %v3837 = vpop.permute.xlu0 %3836
  %3840 = vset.pattern.permute.xlu0 0
  %3841 = vperm.xlu0 %3840, %v3768
  %v3842 = vpop.permute.xlu0 %3841
  %3845 = vset.pattern.permute.xlu0 0
  %3846 = vperm.xlu0 %3845, %v3780
  %v3847 = vpop.permute.xlu0 %3846
  %3850 = vset.pattern.permute.xlu0 0
  %3851 = vperm.xlu0 %3850, %v3792
  %v3852 = vpop.permute.xlu0 %3851
  %3855 = vset.pattern.permute.xlu0 0
  %3856 = vperm.xlu0 %3855, %v3804
  %v3857 = vpop.permute.xlu0 %3856
  %3860 = vset.pattern.permute.xlu0 0
  %3861 = vperm.xlu0 %3860, %v3816
  %v3862 = vpop.permute.xlu0 %3861
  %3865 = vset.pattern.permute.xlu0 0
  %3866 = vperm.xlu0 %3865, %v3828
  %v3867 = vpop.permute.xlu0 %3866
  %v3869 = vmul.f32 %v3832, %v372
  %v3870 = vmul.f32 %v3837, %v372
  %v3871 = vmul.f32 %v3842, %v372
  %v3872 = vmul.f32 %v3847, %v372
  %v3873 = vmul.f32 %v3852, %v372
  %v3874 = vmul.f32 %v3857, %v372
  %v3875 = vmul.f32 %v3862, %v372
  %v3876 = vmul.f32 %v3867, %v372
  %v3878 = vsel %vm77, %v3613, 0
  %v3881 = vsel %vm77, %v3614, 0
  %v3884 = vsel %vm77, %v3615, 0
  %v3887 = vsel %vm77, %v3616, 0
  %v3890 = vsel %vm77, %v3617, 0
  %v3893 = vsel %vm77, %v3618, 0
  %v3896 = vsel %vm77, %v3619, 0
  %v3899 = vsel %vm77, %v3620, 0
  %3901 = vmatpush.msra.mxu0 0.0
  %3902 = vmatpush.msra.mxu0 0.0
  %3903 = vmatpush.msra.mxu0 0.0
  %3904 = vmatpush.msra.mxu0 0.0
  %3905 = vmatpush.msra.mxu0 0.0
  %3906 = vmatpush.msra.mxu0 0.0
  %3907 = vmatpush.msra.mxu0 0.0
  %3908 = vmatpush.msra.mxu0 0.0
  %3909 = vmatpush.msra.mxu0 0.0
  %3910 = vmatpush.msra.mxu0 0.0
  %3911 = vmatpush.msra.mxu0 0.0
  %3912 = vmatpush.msra.mxu0 0.0
  %3913 = vmatpush.msra.mxu0 0.0
  %3914 = vmatpush.msra.mxu0 0.0
  %3915 = vmatpush.msra.mxu0 0.0
  %3916 = vmatpush.msra.mxu0 %v397
  %3917 = vmatmul.f32.gmra.mxu0 %v3878
  %v3918 = vpop.f32.mrf.mxu0
  %v3919 = vadd.f32 %v3869, %v3918
  %3920 = vmatmul.f32.gmra.mxu0 %v3881
  %v3921 = vpop.f32.mrf.mxu0
  %v3922 = vadd.f32 %v3870, %v3921
  %3923 = vmatmul.f32.gmra.mxu0 %v3884
  %v3924 = vpop.f32.mrf.mxu0
  %v3925 = vadd.f32 %v3871, %v3924
  %3926 = vmatmul.f32.gmra.mxu0 %v3887
  %v3927 = vpop.f32.mrf.mxu0
  %v3928 = vadd.f32 %v3872, %v3927
  %3929 = vmatmul.f32.gmra.mxu0 %v3890
  %v3930 = vpop.f32.mrf.mxu0
  %v3931 = vadd.f32 %v3873, %v3930
  %3932 = vmatmul.f32.gmra.mxu0 %v3893
  %v3933 = vpop.f32.mrf.mxu0
  %v3934 = vadd.f32 %v3874, %v3933
  %3935 = vmatmul.f32.gmra.mxu0 %v3896
  %v3936 = vpop.f32.mrf.mxu0
  %v3937 = vadd.f32 %v3875, %v3936
  %3938 = vmatmul.f32.gmra.mxu0 %v3899
  %v3939 = vpop.f32.mrf.mxu0
  %v3940 = vadd.f32 %v3876, %v3939
  %3941 = vdwg.mxu0
  %v3942 = vadd.f32 %v3919, %v115
  %v3943 = vadd.f32 %v3922, %v118
  %v3944 = vadd.f32 %v3925, %v121
  %v3945 = vadd.f32 %v3928, %v124
  %v3946 = vadd.f32 %v3931, %v127
  %v3947 = vadd.f32 %v3934, %v130
  %v3948 = vadd.f32 %v3937, %v133
  %v3949 = vadd.f32 %v3940, %v136
  %3950 = vset.pattern.permute.xlu0 7
  %3951 = vperm.xlu0 %3950, %v3637
  %v3952 = vpop.permute.xlu0 %3951
  %3953 = vset.pattern.permute.xlu0 7
  %3954 = vperm.xlu0 %3953, %v3638
  %v3955 = vpop.permute.xlu0 %3954
  %3956 = vset.pattern.permute.xlu0 7
  %3957 = vperm.xlu0 %3956, %v3639
  %v3958 = vpop.permute.xlu0 %3957
  %3959 = vset.pattern.permute.xlu0 7
  %3960 = vperm.xlu0 %3959, %v3640
  %v3961 = vpop.permute.xlu0 %3960
  %3962 = vset.pattern.permute.xlu0 7
  %3963 = vperm.xlu0 %3962, %v3641
  %v3964 = vpop.permute.xlu0 %3963
  %3965 = vset.pattern.permute.xlu0 7
  %3966 = vperm.xlu0 %3965, %v3642
  %v3967 = vpop.permute.xlu0 %3966
  %3968 = vset.pattern.permute.xlu0 7
  %3969 = vperm.xlu0 %3968, %v3643
  %v3970 = vpop.permute.xlu0 %3969
  %3971 = vset.pattern.permute.xlu0 7
  %3972 = vperm.xlu0 %3971, %v3644
  %v3973 = vpop.permute.xlu0 %3972
  %vm3974 = vcmp.eq.s32.totalorder %v3952, %v139
  %vm3975 = vcmp.eq.s32.totalorder %v3955, %v139
  %vm3976 = vcmp.eq.s32.totalorder %v3958, %v139
  %vm3977 = vcmp.eq.s32.totalorder %v3961, %v139
  %vm3978 = vcmp.eq.s32.totalorder %v3964, %v139
  %vm3979 = vcmp.eq.s32.totalorder %v3967, %v139
  %vm3980 = vcmp.eq.s32.totalorder %v3970, %v139
  %vm3981 = vcmp.eq.s32.totalorder %v3973, %v139
  %v3982 = vsel %vm3974, 1, 0
  %v3983 = vsel %vm3975, 1, 0
  %v3984 = vsel %vm3976, 1, 0
  %v3985 = vsel %vm3977, 1, 0
  %v3986 = vsel %vm3978, 1, 0
  %v3987 = vsel %vm3979, 1, 0
  %v3988 = vsel %vm3980, 1, 0
  %v3989 = vsel %vm3981, 1, 0
  %v3990 = vcvt.s32.f32 %v3982
  %v3991 = vcvt.s32.f32 %v3983
  %v3992 = vcvt.s32.f32 %v3984
  %v3993 = vcvt.s32.f32 %v3985
  %v3994 = vcvt.s32.f32 %v3986
  %v3995 = vcvt.s32.f32 %v3987
  %v3996 = vcvt.s32.f32 %v3988
  %v3997 = vcvt.s32.f32 %v3989
  %3998 = vmatpush.msra.mxu0 %v48
  %3999 = vmatpush.msra.mxu0 %v47
  %4000 = vmatpush.msra.mxu0 %v46
  %4001 = vmatpush.msra.mxu0 %v45
  %4002 = vmatpush.msra.mxu0 %v44
  %4003 = vmatpush.msra.mxu0 %v43
  %4004 = vmatpush.msra.mxu0 %v42
  %4005 = vmatpush.msra.mxu0 %v41
  %4006 = vmatpush.msra.mxu0 %v40
  %4007 = vmatpush.msra.mxu0 %v39
  %4008 = vmatpush.msra.mxu0 %v38
  %4009 = vmatpush.msra.mxu0 %v37
  %4010 = vmatpush.msra.mxu0 %v36
  %4011 = vmatpush.msra.mxu0 %v35
  %4012 = vmatpush.msra.mxu0 %v34
  %4013 = vmatpush.msra.mxu0 %v33
  %4014 = vmatmul.f32.gmra.mxu0 %v3990
  %v4015 = vpop.f32.mrf.mxu0
  %v4016 = vadd.f32 0.0, %v4015
  %4017 = vmatmul.f32.gmra.mxu0 %v3991
  %v4018 = vpop.f32.mrf.mxu0
  %v4019 = vadd.f32 0.0, %v4018
  %4020 = vmatmul.f32.gmra.mxu0 %v3992
  %v4021 = vpop.f32.mrf.mxu0
  %v4022 = vadd.f32 0.0, %v4021
  %4023 = vmatmul.f32.gmra.mxu0 %v3993
  %v4024 = vpop.f32.mrf.mxu0
  %v4025 = vadd.f32 0.0, %v4024
  %4026 = vmatmul.f32.gmra.mxu0 %v3994
  %v4027 = vpop.f32.mrf.mxu0
  %v4028 = vadd.f32 0.0, %v4027
  %4029 = vmatmul.f32.gmra.mxu0 %v3995
  %v4030 = vpop.f32.mrf.mxu0
  %v4031 = vadd.f32 0.0, %v4030
  %4032 = vmatmul.f32.gmra.mxu0 %v3996
  %v4033 = vpop.f32.mrf.mxu0
  %v4034 = vadd.f32 0.0, %v4033
  %4035 = vmatmul.f32.gmra.mxu0 %v3997
  %v4036 = vpop.f32.mrf.mxu0
  %v4037 = vadd.f32 0.0, %v4036
  %4038 = vdwg.mxu0
  %v4039 = vmul.f32 %v4016, %v3942
  %v4040 = vmul.f32 %v4019, %v3943
  %v4041 = vmul.f32 %v4022, %v3944
  %v4042 = vmul.f32 %v4025, %v3945
  %v4043 = vmul.f32 %v4028, %v3946
  %v4044 = vmul.f32 %v4031, %v3947
  %v4045 = vmul.f32 %v4034, %v3948
  %v4046 = vmul.f32 %v4037, %v3949
  %v4047 = vadd.f32 %v3549, %v4039
  %v4048 = vadd.f32 %v3550, %v4040
  %v4049 = vadd.f32 %v3551, %v4041
  %v4050 = vadd.f32 %v3552, %v4042
  %v4051 = vadd.f32 %v3553, %v4043
  %v4052 = vadd.f32 %v3554, %v4044
  %v4053 = vadd.f32 %v3555, %v4045
  %v4054 = vadd.f32 %v3556, %v4046
  %v4055 = vmul.f32 %v4047, 0.125
  %v4056 = vmul.f32 %v4048, 0.125
  %v4057 = vmul.f32 %v4049, 0.125
  %v4058 = vmul.f32 %v4050, 0.125
  %v4059 = vmul.f32 %v4051, 0.125
  %v4060 = vmul.f32 %v4052, 0.125
  %v4061 = vmul.f32 %v4053, 0.125
  %v4062 = vmul.f32 %v4054, 0.125
  %vm4063 = vcmask 261120
  %4064 = vst.msk [vmem:[%s4] sm:$0xff] %vm4063, %v4055
  %4065 = vst.msk [vmem:[%s4 + $0x8] sm:$0xff] %vm4063, %v4056
  %4066 = vst.msk [vmem:[%s4 + $0x10] sm:$0xff] %vm4063, %v4057
  %4067 = vst.msk [vmem:[%s4 + $0x18] sm:$0xff] %vm4063, %v4058
  %4068 = vst.msk [vmem:[%s4 + $0x20] sm:$0xff] %vm4063, %v4059
  %4069 = vst.msk [vmem:[%s4 + $0x28] sm:$0xff] %vm4063, %v4060
  %4070 = vst.msk [vmem:[%s4 + $0x30] sm:$0xff] %vm4063, %v4061
  %4071 = vst.msk [vmem:[%s4 + $0x38] sm:$0xff] %vm4063, %v4062
  // Predicated region
  $region18: #{voxel_pooling_relation.1} parent=0 // pred_check
    _
  $region19: #{voxel_pooling_relation.1} parent=0 // pred_check_branch
    %4073 = sbr.rel (0) target = $region21
  $region20: #{voxel_pooling_relation.1} parent=0 // pred_region
    _
  $region21: #{voxel_pooling_relation.1} parent=0 // pred_fallthru
    _
  // Predicated region
  $region22: #{voxel_pooling_relation.1} parent=0 // pred_check
    _
  $region23: #{voxel_pooling_relation.1} parent=0 // pred_check_branch
    %4075 = sbr.rel (0) target = $region25
  $region24: #{voxel_pooling_relation.1} parent=0 // pred_region
    _
  $region25: #{voxel_pooling_relation.1} parent=0 // pred_fallthru
    _

// kernel: voxel_pooling_relation.1
$region0: #{voxel_pooling_relation.1}
  #allocation0 [shape = 'u32[]', space=smem, size = 0x4, offset = 0x4, fixed_abs, tag = 'smem constant byte address 0x4 - core index']
  #allocation1 [shape = 'u32[72,128]{1,0:T(1,128)}', space=vmem, size = 0x9000, scoped, tag = 'internal scratch']
  %s0 = inlined_call_operand.vmem [shape: s32[64,8], index: 0, kind: input, shape index: {}]
  %s1 = inlined_call_operand.vmem [shape: f32[64,27], index: 1, kind: input, shape index: {}]
  %s2 = inlined_call_operand.vmem [shape: f32[64,256], index: 2, kind: input, shape index: {}]
  %s3 = inlined_call_operand.vmem [shape: f32[8,32], index: 3, kind: input, shape index: {}]
  %s4 = inlined_call_operand.vmem [shape: f32[64,32], index: 4, kind: output, shape index: {}]
  %s5 = sld [smem:[#allocation0]]
  $region26: #{voxel_pooling_relation.1} parent=0
    _
  %s7 = ssub.s32 1, %s5
  %s8 = scalar_select 0, %s7, %s5
  // Predicated region
  $region2: #{voxel_pooling_relation.1} parent=0 // pred_check
    _
  $region3: #{voxel_pooling_relation.1} parent=0 // pred_check_branch
    %10 = sbr.rel (0) target = $region5
  $region4: #{voxel_pooling_relation.1} parent=0 // pred_region
    _
  $region5: #{voxel_pooling_relation.1} parent=0 // pred_fallthru
    _
  // Predicated region
  $region6: #{voxel_pooling_relation.1} parent=0 // pred_check
    _
  $region7: #{voxel_pooling_relation.1} parent=0 // pred_check_branch
    %12 = sbr.rel (0) target = $region9
  $region8: #{voxel_pooling_relation.1} parent=0 // pred_region
    _
  $region9: #{voxel_pooling_relation.1} parent=0 // pred_fallthru
    _
  // Predicated region
  $region10: #{voxel_pooling_relation.1} parent=0 // pred_check
    _
  $region11: #{voxel_pooling_relation.1} parent=0 // pred_check_branch
    %14 = sbr.rel (0) target = $region13
  $region12: #{voxel_pooling_relation.1} parent=0 // pred_region
    _
  $region13: #{voxel_pooling_relation.1} parent=0 // pred_fallthru
    _
  // Predicated region
  $region14: #{voxel_pooling_relation.1} parent=0 // pred_check
    _
  $region15: #{voxel_pooling_relation.1} parent=0 // pred_check_branch
    %16 = sbr.rel (0) target = $region17
  $region16: #{voxel_pooling_relation.1} parent=0 // pred_region
    _
  $region17: #{voxel_pooling_relation.1} parent=0 // pred_fallthru
    _
  %v17 = vld [vmem:[%s0] sm:$0xff]
  %v18 = vld [vmem:[%s0 + $0x8] sm:$0xff]
  %v19 = vld [vmem:[%s0 + $0x10] sm:$0xff]
  %v20 = vld [vmem:[%s0 + $0x18] sm:$0xff]
  %v21 = vld [vmem:[%s0 + $0x20] sm:$0xff]
  %v22 = vld [vmem:[%s0 + $0x28] sm:$0xff]
  %v23 = vld [vmem:[%s0 + $0x30] sm:$0xff]
  %v24 = vld [vmem:[%s0 + $0x38] sm:$0xff]
  %v25 = vld [vmem:[%s1] sm:$0xff]
  %v26 = vld [vmem:[%s1 + $0x8] sm:$0xff]
  %v27 = vld [vmem:[%s1 + $0x10] sm:$0xff]
  %v28 = vld [vmem:[%s1 + $0x18] sm:$0xff]
  %v29 = vld [vmem:[%s1 + $0x20] sm:$0xff]
  %v30 = vld [vmem:[%s1 + $0x28] sm:$0xff]
  %v31 = vld [vmem:[%s1 + $0x30] sm:$0xff]
  %v32 = vld [vmem:[%s1 + $0x38] sm:$0xff]
  %v33 = vld [vmem:[%s2] sm:$0xff]
  %v34 = vld [vmem:[%s2 + $0x8] sm:$0xff]
  %v35 = vld [vmem:[%s2 + $0x10] sm:$0xff]
  %v36 = vld [vmem:[%s2 + $0x18] sm:$0xff]
  %v37 = vld [vmem:[%s2 + $0x20] sm:$0xff]
  %v38 = vld [vmem:[%s2 + $0x28] sm:$0xff]
  %v39 = vld [vmem:[%s2 + $0x30] sm:$0xff]
  %v40 = vld [vmem:[%s2 + $0x38] sm:$0xff]
  %v41 = vld [vmem:[%s2 + $0x40] sm:$0xff]
  %v42 = vld [vmem:[%s2 + $0x48] sm:$0xff]
  %v43 = vld [vmem:[%s2 + $0x50] sm:$0xff]
  %v44 = vld [vmem:[%s2 + $0x58] sm:$0xff]
  %v45 = vld [vmem:[%s2 + $0x60] sm:$0xff]
  %v46 = vld [vmem:[%s2 + $0x68] sm:$0xff]
  %v47 = vld [vmem:[%s2 + $0x70] sm:$0xff]
  %v48 = vld [vmem:[%s2 + $0x78] sm:$0xff]
  %v49 = vld [vmem:[%s3] sm:$0xff]
  %v50 = vperm.slane %v49, 7
  %59 = vrot.lane.b32.xlu0 %v25, 104
  %v60 = vpop.permute.xlu0 %59
  %61 = vrot.lane.b32.xlu0 %v26, 104
  %v62 = vpop.permute.xlu0 %61
  %63 = vrot.lane.b32.xlu0 %v27, 104
  %v64 = vpop.permute.xlu0 %63
  %65 = vrot.lane.b32.xlu0 %v28, 104
  %v66 = vpop.permute.xlu0 %65
  %67 = vrot.lane.b32.xlu0 %v29, 104
  %v68 = vpop.permute.xlu0 %67
  %69 = vrot.lane.b32.xlu0 %v30, 104
  %v70 = vpop.permute.xlu0 %69
  %71 = vrot.lane.b32.xlu0 %v31, 104
  %v72 = vpop.permute.xlu0 %71
  %73 = vrot.lane.b32.xlu0 %v32, 104
  %v74 = vpop.permute.xlu0 %73
  %v76 = vrot.slane %v49, 3
  %vm77 = vcmask 23552
  %v78 = vsel %vm77, %v60, 0
  %v80 = vsel %vm77, %v62, 0
  %v82 = vsel %vm77, %v64, 0
  %v84 = vsel %vm77, %v66, 0
  %v86 = vsel %vm77, %v68, 0
  %v88 = vsel %vm77, %v70, 0
  %v90 = vsel %vm77, %v72, 0
  %v92 = vsel %vm77, %v74, 0
  %vm94 = vcmask 1042432
  %v95 = vsel %vm94, %v76, 0
  %97 = vmatpush.msra.mxu0 0.0
  %98 = vmatpush.msra.mxu0 0.0
  %99 = vmatpush.msra.mxu0 0.0
  %100 = vmatpush.msra.mxu0 0.0
  %101 = vmatpush.msra.mxu0 0.0
  %102 = vmatpush.msra.mxu0 0.0
  %103 = vmatpush.msra.mxu0 0.0
  %104 = vmatpush.msra.mxu0 0.0
  %105 = vmatpush.msra.mxu0 0.0
  %106 = vmatpush.msra.mxu0 0.0
  %107 = vmatpush.msra.mxu0 0.0
  %108 = vmatpush.msra.mxu0 0.0
  %109 = vmatpush.msra.mxu0 0.0
  %110 = vmatpush.msra.mxu0 0.0
  %111 = vmatpush.msra.mxu0 0.0
  %112 = vmatpush.msra.mxu0 %v95
  %113 = vmatmul.f32.gmra.mxu0 %v78
  %v114 = vpop.f32.mrf.mxu0
  %v115 = vadd.f32 %v50, %v114
  %116 = vmatmul.f32.gmra.mxu0 %v80
  %v117 = vpop.f32.mrf.mxu0
  %v118 = vadd.f32 %v50, %v117
  %119 = vmatmul.f32.gmra.mxu0 %v82
  %v120 = vpop.f32.mrf.mxu0
  %v121 = vadd.f32 %v50, %v120
  %122 = vmatmul.f32.gmra.mxu0 %v84
  %v123 = vpop.f32.mrf.mxu0
  %v124 = vadd.f32 %v50, %v123
  %125 = vmatmul.f32.gmra.mxu0 %v86
  %v126 = vpop.f32.mrf.mxu0
  %v127 = vadd.f32 %v50, %v126
  %128 = vmatmul.f32.gmra.mxu0 %v88
  %v129 = vpop.f32.mrf.mxu0
  %v130 = vadd.f32 %v50, %v129
  %131 = vmatmul.f32.gmra.mxu0 %v90
  %v132 = vpop.f32.mrf.mxu0
  %v133 = vadd.f32 %v50, %v132
  %134 = vmatmul.f32.gmra.mxu0 %v92
  %v135 = vpop.f32.mrf.mxu0
  %v136 = vadd.f32 %v50, %v135
  %137 = vdwg.mxu0
  %v146 = vsub.f32 %v25, %v60
  %v147 = vsub.f32 %v26, %v62
  %v148 = vsub.f32 %v27, %v64
  %v149 = vsub.f32 %v28, %v66
  %v150 = vsub.f32 %v29, %v68
  %v151 = vsub.f32 %v30, %v70
  %v152 = vsub.f32 %v31, %v72
  %v153 = vsub.f32 %v32, %v74
  %v154 = vmul.f32 %v146, %v146
  %v155 = vmul.f32 %v147, %v147
  %v156 = vmul.f32 %v148, %v148
  %v157 = vmul.f32 %v149, %v149
  %v158 = vmul.f32 %v150, %v150
  %v159 = vmul.f32 %v151, %v151
  %v160 = vmul.f32 %v152, %v152
  %v161 = vmul.f32 %v153, %v153
  %170 = vrot.lane.b32.xlu0 %v154, 127
  %v171 = vpop.permute.xlu0 %170
  %172 = vrot.lane.b32.xlu0 %v155, 127
  %v173 = vpop.permute.xlu0 %172
  %174 = vrot.lane.b32.xlu0 %v156, 127
  %v175 = vpop.permute.xlu0 %174
  %176 = vrot.lane.b32.xlu0 %v157, 127
  %v177 = vpop.permute.xlu0 %176
  %178 = vrot.lane.b32.xlu0 %v158, 127
  %v179 = vpop.permute.xlu0 %178
  %180 = vrot.lane.b32.xlu0 %v159, 127
  %v181 = vpop.permute.xlu0 %180
  %182 = vrot.lane.b32.xlu0 %v160, 127
  %v183 = vpop.permute.xlu0 %182
  %184 = vrot.lane.b32.xlu0 %v161, 127
  %v185 = vpop.permute.xlu0 %184
  %v194 = vadd.f32 %v154, %v171
  %v195 = vadd.f32 %v155, %v173
  %v196 = vadd.f32 %v156, %v175
  %v197 = vadd.f32 %v157, %v177
  %v198 = vadd.f32 %v158, %v179
  %v199 = vadd.f32 %v159, %v181
  %v200 = vadd.f32 %v160, %v183
  %v201 = vadd.f32 %v161, %v185
  %202 = vrot.lane.b32.xlu0 %v154, 126
  %v203 = vpop.permute.xlu0 %202
  %204 = vrot.lane.b32.xlu0 %v155, 126
  %v205 = vpop.permute.xlu0 %204
  %206 = vrot.lane.b32.xlu0 %v156, 126
  %v207 = vpop.permute.xlu0 %206
  %208 = vrot.lane.b32.xlu0 %v157, 126
  %v209 = vpop.permute.xlu0 %208
  %210 = vrot.lane.b32.xlu0 %v158, 126
  %v211 = vpop.permute.xlu0 %210
  %212 = vrot.lane.b32.xlu0 %v159, 126
  %v213 = vpop.permute.xlu0 %212
  %214 = vrot.lane.b32.xlu0 %v160, 126
  %v215 = vpop.permute.xlu0 %214
  %216 = vrot.lane.b32.xlu0 %v161, 126
  %v217 = vpop.permute.xlu0 %216
  %v226 = vadd.f32 %v194, %v203
  %v227 = vadd.f32 %v195, %v205
  %v228 = vadd.f32 %v196, %v207
  %v229 = vadd.f32 %v197, %v209
  %v230 = vadd.f32 %v198, %v211
  %v231 = vadd.f32 %v199, %v213
  %v232 = vadd.f32 %v200, %v215
  %v233 = vadd.f32 %v201, %v217
  %v234 = vrsqrt.pop %v226
  %v235 = vmul.f32 %v234, %v226
  %v236 = vmul.f32 %v235, %v234
  %v237 = vmul.f32 0.5, %v236
  %v238 = vsub.f32 1.5, %v237
  %v239 = vmul.f32 %v234, %v238
  %v240 = vmul.f32 %v226, %v239
  %vm241 = vcmp.eq.f32.partialorder %v226, inf
  %v242 = vsel %vm241, %v226, %v240
  %vm243 = vcmp.eq.f32.partialorder %v226, 0.0
  %v244 = vand.u32 %v226, 2147483648
  %v245 = vsel %vm243, %v244, %v242
  %v246 = vrsqrt.pop %v227
  %v247 = vmul.f32 %v246, %v227
  %v248 = vmul.f32 %v247, %v246
  %v249 = vmul.f32 0.5, %v248
  %v250 = vsub.f32 1.5, %v249
  %v251 = vmul.f32 %v246, %v250
  %v252 = vmul.f32 %v227, %v251
  %vm253 = vcmp.eq.f32.partialorder %v227, inf
  %v254 = vsel %vm253, %v227, %v252
  %vm255 = vcmp.eq.f32.partialorder %v227, 0.0
  %v256 = vand.u32 %v227, 2147483648
  %v257 = vsel %vm255, %v256, %v254
  %v258 = vrsqrt.pop %v228
  %v259 = vmul.f32 %v258, %v228
  %v260 = vmul.f32 %v259, %v258
  %v261 = vmul.f32 0.5, %v260
  %v262 = vsub.f32 1.5, %v261
  %v263 = vmul.f32 %v258, %v262
  %v264 = vmul.f32 %v228, %v263
  %vm265 = vcmp.eq.f32.partialorder %v228, inf
  %v266 = vsel %vm265, %v228, %v264
  %vm267 = vcmp.eq.f32.partialorder %v228, 0.0
  %v268 = vand.u32 %v228, 2147483648
  %v269 = vsel %vm267, %v268, %v266
  %v270 = vrsqrt.pop %v229
  %v271 = vmul.f32 %v270, %v229
  %v272 = vmul.f32 %v271, %v270
  %v273 = vmul.f32 0.5, %v272
  %v274 = vsub.f32 1.5, %v273
  %v275 = vmul.f32 %v270, %v274
  %v276 = vmul.f32 %v229, %v275
  %vm277 = vcmp.eq.f32.partialorder %v229, inf
  %v278 = vsel %vm277, %v229, %v276
  %vm279 = vcmp.eq.f32.partialorder %v229, 0.0
  %v280 = vand.u32 %v229, 2147483648
  %v281 = vsel %vm279, %v280, %v278
  %v282 = vrsqrt.pop %v230
  %v283 = vmul.f32 %v282, %v230
  %v284 = vmul.f32 %v283, %v282
  %v285 = vmul.f32 0.5, %v284
  %v286 = vsub.f32 1.5, %v285
  %v287 = vmul.f32 %v282, %v286
  %v288 = vmul.f32 %v230, %v287
  %vm289 = vcmp.eq.f32.partialorder %v230, inf
  %v290 = vsel %vm289, %v230, %v288
  %vm291 = vcmp.eq.f32.partialorder %v230, 0.0
  %v292 = vand.u32 %v230, 2147483648
  %v293 = vsel %vm291, %v292, %v290
  %v294 = vrsqrt.pop %v231
  %v295 = vmul.f32 %v294, %v231
  %v296 = vmul.f32 %v295, %v294
  %v297 = vmul.f32 0.5, %v296
  %v298 = vsub.f32 1.5, %v297
  %v299 = vmul.f32 %v294, %v298
  %v300 = vmul.f32 %v231, %v299
  %vm301 = vcmp.eq.f32.partialorder %v231, inf
  %v302 = vsel %vm301, %v231, %v300
  %vm303 = vcmp.eq.f32.partialorder %v231, 0.0
  %v304 = vand.u32 %v231, 2147483648
  %v305 = vsel %vm303, %v304, %v302
  %v306 = vrsqrt.pop %v232
  %v307 = vmul.f32 %v306, %v232
  %v308 = vmul.f32 %v307, %v306
  %v309 = vmul.f32 0.5, %v308
  %v310 = vsub.f32 1.5, %v309
  %v311 = vmul.f32 %v306, %v310
  %v312 = vmul.f32 %v232, %v311
  %vm313 = vcmp.eq.f32.partialorder %v232, inf
  %v314 = vsel %vm313, %v232, %v312
  %vm315 = vcmp.eq.f32.partialorder %v232, 0.0
  %v316 = vand.u32 %v232, 2147483648
  %v317 = vsel %vm315, %v316, %v314
  %v318 = vrsqrt.pop %v233
  %v319 = vmul.f32 %v318, %v233
  %v320 = vmul.f32 %v319, %v318
  %v321 = vmul.f32 0.5, %v320
  %v322 = vsub.f32 1.5, %v321
  %v323 = vmul.f32 %v318, %v322
  %v324 = vmul.f32 %v233, %v323
  %vm325 = vcmp.eq.f32.partialorder %v233, inf
  %v326 = vsel %vm325, %v233, %v324
  %vm327 = vcmp.eq.f32.partialorder %v233, 0.0
  %v328 = vand.u32 %v233, 2147483648
  %v329 = vsel %vm327, %v328, %v326
  %331 = vset.pattern.permute.xlu0 0
  %332 = vperm.xlu0 %331, %v245
  %v333 = vpop.permute.xlu0 %332
  %336 = vset.pattern.permute.xlu0 0
  %337 = vperm.xlu0 %336, %v257
  %v338 = vpop.permute.xlu0 %337
  %341 = vset.pattern.permute.xlu0 0
  %342 = vperm.xlu0 %341, %v269
  %v343 = vpop.permute.xlu0 %342
  %346 = vset.pattern.permute.xlu0 0
  %347 = vperm.xlu0 %346, %v281
  %v348 = vpop.permute.xlu0 %347
  %351 = vset.pattern.permute.xlu0 0
  %352 = vperm.xlu0 %351, %v293
  %v353 = vpop.permute.xlu0 %352
  %356 = vset.pattern.permute.xlu0 0
  %357 = vperm.xlu0 %356, %v305
  %v358 = vpop.permute.xlu0 %357
  %361 = vset.pattern.permute.xlu0 0
  %362 = vperm.xlu0 %361, %v317
  %v363 = vpop.permute.xlu0 %362
  %366 = vset.pattern.permute.xlu0 0
  %367 = vperm.xlu0 %366, %v329
  %v368 = vpop.permute.xlu0 %367
  %v370 = vperm.slane %v49, 6
  %v371 = vmul.f32 %v333, %v370
  %v372 = vmul.f32 %v338, %v370
  %v373 = vmul.f32 %v343, %v370
  %v374 = vmul.f32 %v348, %v370
  %v375 = vmul.f32 %v353, %v370
  %v376 = vmul.f32 %v358, %v370
  %v377 = vmul.f32 %v363, %v370
  %v378 = vmul.f32 %v368, %v370
  %v379 = vsel %vm77, %v25, 0
  %v381 = vsel %vm77, %v26, 0
  %v383 = vsel %vm77, %v27, 0
  %v385 = vsel %vm77, %v28, 0
  %v387 = vsel %vm77, %v29, 0
  %v389 = vsel %vm77, %v30, 0
  %v391 = vsel %vm77, %v31, 0
  %v393 = vsel %vm77, %v32, 0
  %v395 = vsel %vm94, %v49, 0
  %397 = vmatpush.msra.mxu0 0.0
  %398 = vmatpush.msra.mxu0 0.0
  %399 = vmatpush.msra.mxu0 0.0
  %400 = vmatpush.msra.mxu0 0.0
  %401 = vmatpush.msra.mxu0 0.0
  %402 = vmatpush.msra.mxu0 0.0
  %403 = vmatpush.msra.mxu0 0.0
  %404 = vmatpush.msra.mxu0 0.0
  %405 = vmatpush.msra.mxu0 0.0
  %406 = vmatpush.msra.mxu0 0.0
  %407 = vmatpush.msra.mxu0 0.0
  %408 = vmatpush.msra.mxu0 0.0
  %409 = vmatpush.msra.mxu0 0.0
  %410 = vmatpush.msra.mxu0 0.0
  %411 = vmatpush.msra.mxu0 0.0
  %412 = vmatpush.msra.mxu0 %v395
  %413 = vmatmul.f32.gmra.mxu0 %v379
  %v414 = vpop.f32.mrf.mxu0
  %v415 = vadd.f32 %v371, %v414
  %416 = vmatmul.f32.gmra.mxu0 %v381
  %v417 = vpop.f32.mrf.mxu0
  %v418 = vadd.f32 %v372, %v417
  %419 = vmatmul.f32.gmra.mxu0 %v383
  %v420 = vpop.f32.mrf.mxu0
  %v421 = vadd.f32 %v373, %v420
  %422 = vmatmul.f32.gmra.mxu0 %v385
  %v423 = vpop.f32.mrf.mxu0
  %v424 = vadd.f32 %v374, %v423
  %425 = vmatmul.f32.gmra.mxu0 %v387
  %v426 = vpop.f32.mrf.mxu0
  %v427 = vadd.f32 %v375, %v426
  %428 = vmatmul.f32.gmra.mxu0 %v389
  %v429 = vpop.f32.mrf.mxu0
  %v430 = vadd.f32 %v376, %v429
  %431 = vmatmul.f32.gmra.mxu0 %v391
  %v432 = vpop.f32.mrf.mxu0
  %v433 = vadd.f32 %v377, %v432
  %434 = vmatmul.f32.gmra.mxu0 %v393
  %v435 = vpop.f32.mrf.mxu0
  %v436 = vadd.f32 %v378, %v435
  %437 = vdwg.mxu0
  %v438 = vadd.f32 %v415, %v115
  %v439 = vadd.f32 %v418, %v118
  %v440 = vadd.f32 %v421, %v121
  %v441 = vadd.f32 %v424, %v124
  %v442 = vadd.f32 %v427, %v127
  %v443 = vadd.f32 %v430, %v130
  %v444 = vadd.f32 %v433, %v133
  %v445 = vadd.f32 %v436, %v136
  %v446 = vmul.f32 %v33, %v438
  %v447 = vmul.f32 %v35, %v439
  %v448 = vmul.f32 %v37, %v440
  %v449 = vmul.f32 %v39, %v441
  %v450 = vmul.f32 %v41, %v442
  %v451 = vmul.f32 %v43, %v443
  %v452 = vmul.f32 %v45, %v444
  %v453 = vmul.f32 %v47, %v445
  %v454 = vadd.f32 %v446, 0.0
  %v455 = vadd.f32 %v447, 0.0
  %v456 = vadd.f32 %v448, 0.0
  %v457 = vadd.f32 %v449, 0.0
  %v458 = vadd.f32 %v450, 0.0
  %v459 = vadd.f32 %v451, 0.0
  %v460 = vadd.f32 %v452, 0.0
  %v461 = vadd.f32 %v453, 0.0
  %vm462 = vcmp.eq.s32.totalorder %v17, 0
  %vm463 = vcmp.eq.s32.totalorder %v18, 0
  %vm464 = vcmp.eq.s32.totalorder %v19, 0
  %vm465 = vcmp.eq.s32.totalorder %v20, 0
  %vm466 = vcmp.eq.s32.totalorder %v21, 0
  %vm467 = vcmp.eq.s32.totalorder %v22, 0
  %vm468 = vcmp.eq.s32.totalorder %v23, 0
  %vm469 = vcmp.eq.s32.totalorder %v24, 0
  %v470 = vsel %vm462, 1, 0
  %v471 = vsel %vm463, 1, 0
  %v472 = vsel %vm464, 1, 0
  %v473 = vsel %vm465, 1, 0
  %v474 = vsel %vm466, 1, 0
  %v475 = vsel %vm467, 1, 0
  %v476 = vsel %vm468, 1, 0
  %v477 = vsel %vm469, 1, 0
  %478 = vset.pattern.permute.xlu0 1
  %479 = vperm.xlu0 %478, %v470
  %v480 = vpop.permute.xlu0 %479
  %481 = vset.pattern.permute.xlu0 1
  %482 = vperm.xlu0 %481, %v471
  %v483 = vpop.permute.xlu0 %482
  %484 = vset.pattern.permute.xlu0 1
  %485 = vperm.xlu0 %484, %v472
  %v486 = vpop.permute.xlu0 %485
  %487 = vset.pattern.permute.xlu0 1
  %488 = vperm.xlu0 %487, %v473
  %v489 = vpop.permute.xlu0 %488
  %490 = vset.pattern.permute.xlu0 1
  %491 = vperm.xlu0 %490, %v474
  %v492 = vpop.permute.xlu0 %491
  %493 = vset.pattern.permute.xlu0 1
  %494 = vperm.xlu0 %493, %v475
  %v495 = vpop.permute.xlu0 %494
  %496 = vset.pattern.permute.xlu0 1
  %497 = vperm.xlu0 %496, %v476
  %v498 = vpop.permute.xlu0 %497
  %499 = vset.pattern.permute.xlu0 1
  %500 = vperm.xlu0 %499, %v477
  %v501 = vpop.permute.xlu0 %500
  %vm502 = vcmp.eq.s32.totalorder %v480, 1
  %vm503 = vcmp.eq.s32.totalorder %v483, 1
  %vm504 = vcmp.eq.s32.totalorder %v486, 1
  %vm505 = vcmp.eq.s32.totalorder %v489, 1
  %vm506 = vcmp.eq.s32.totalorder %v492, 1
  %vm507 = vcmp.eq.s32.totalorder %v495, 1
  %vm508 = vcmp.eq.s32.totalorder %v498, 1
  %vm509 = vcmp.eq.s32.totalorder %v501, 1
  %510 = vrot.lane.b32.xlu0 %v25, 125
  %v511 = vpop.permute.xlu0 %510
  %512 = vrot.lane.b32.xlu0 %v26, 125
  %v513 = vpop.permute.xlu0 %512
  %514 = vrot.lane.b32.xlu0 %v27, 125
  %v515 = vpop.permute.xlu0 %514
  %516 = vrot.lane.b32.xlu0 %v28, 125
  %v517 = vpop.permute.xlu0 %516
  %518 = vrot.lane.b32.xlu0 %v29, 125
  %v519 = vpop.permute.xlu0 %518
  %520 = vrot.lane.b32.xlu0 %v30, 125
  %v521 = vpop.permute.xlu0 %520
  %522 = vrot.lane.b32.xlu0 %v31, 125
  %v523 = vpop.permute.xlu0 %522
  %524 = vrot.lane.b32.xlu0 %v32, 125
  %v525 = vpop.permute.xlu0 %524
  %v534 = vsel %vm502, %v25, %v511
  %v535 = vsel %vm503, %v26, %v513
  %v536 = vsel %vm504, %v27, %v515
  %v537 = vsel %vm505, %v28, %v517
  %v538 = vsel %vm506, %v29, %v519
  %v539 = vsel %vm507, %v30, %v521
  %v540 = vsel %vm508, %v31, %v523
  %v541 = vsel %vm509, %v32, %v525
  %v542 = vsub.f32 %v534, %v60
  %v543 = vsub.f32 %v535, %v62
  %v544 = vsub.f32 %v536, %v64
  %v545 = vsub.f32 %v537, %v66
  %v546 = vsub.f32 %v538, %v68
  %v547 = vsub.f32 %v539, %v70
  %v548 = vsub.f32 %v540, %v72
  %v549 = vsub.f32 %v541, %v74
  %v550 = vmul.f32 %v542, %v542
  %v551 = vmul.f32 %v543, %v543
  %v552 = vmul.f32 %v544, %v544
  %v553 = vmul.f32 %v545, %v545
  %v554 = vmul.f32 %v546, %v546
  %v555 = vmul.f32 %v547, %v547
  %v556 = vmul.f32 %v548, %v548
  %v557 = vmul.f32 %v549, %v549
  %566 = vrot.lane.b32.xlu0 %v550, 127
  %v567 = vpop.permute.xlu0 %566
  %568 = vrot.lane.b32.xlu0 %v551, 127
  %v569 = vpop.permute.xlu0 %568
  %570 = vrot.lane.b32.xlu0 %v552, 127
  %v571 = vpop.permute.xlu0 %570
  %572 = vrot.lane.b32.xlu0 %v553, 127
  %v573 = vpop.permute.xlu0 %572
  %574 = vrot.lane.b32.xlu0 %v554, 127
  %v575 = vpop.permute.xlu0 %574
  %576 = vrot.lane.b32.xlu0 %v555, 127
  %v577 = vpop.permute.xlu0 %576
  %578 = vrot.lane.b32.xlu0 %v556, 127
  %v579 = vpop.permute.xlu0 %578
  %580 = vrot.lane.b32.xlu0 %v557, 127
  %v581 = vpop.permute.xlu0 %580
  %v590 = vadd.f32 %v550, %v567
  %v591 = vadd.f32 %v551, %v569
  %v592 = vadd.f32 %v552, %v571
  %v593 = vadd.f32 %v553, %v573
  %v594 = vadd.f32 %v554, %v575
  %v595 = vadd.f32 %v555, %v577
  %v596 = vadd.f32 %v556, %v579
  %v597 = vadd.f32 %v557, %v581
  %598 = vrot.lane.b32.xlu0 %v550, 126
  %v599 = vpop.permute.xlu0 %598
  %600 = vrot.lane.b32.xlu0 %v551, 126
  %v601 = vpop.permute.xlu0 %600
  %602 = vrot.lane.b32.xlu0 %v552, 126
  %v603 = vpop.permute.xlu0 %602
  %604 = vrot.lane.b32.xlu0 %v553, 126
  %v605 = vpop.permute.xlu0 %604
  %606 = vrot.lane.b32.xlu0 %v554, 126
  %v607 = vpop.permute.xlu0 %606
  %608 = vrot.lane.b32.xlu0 %v555, 126
  %v609 = vpop.permute.xlu0 %608
  %610 = vrot.lane.b32.xlu0 %v556, 126
  %v611 = vpop.permute.xlu0 %610
  %612 = vrot.lane.b32.xlu0 %v557, 126
  %v613 = vpop.permute.xlu0 %612
  %v622 = vadd.f32 %v590, %v599
  %v623 = vadd.f32 %v591, %v601
  %v624 = vadd.f32 %v592, %v603
  %v625 = vadd.f32 %v593, %v605
  %v626 = vadd.f32 %v594, %v607
  %v627 = vadd.f32 %v595, %v609
  %v628 = vadd.f32 %v596, %v611
  %v629 = vadd.f32 %v597, %v613
  %v630 = vrsqrt.pop %v622
  %v631 = vmul.f32 %v630, %v622
  %v632 = vmul.f32 %v631, %v630
  %v633 = vmul.f32 0.5, %v632
  %v634 = vsub.f32 1.5, %v633
  %v635 = vmul.f32 %v630, %v634
  %v636 = vmul.f32 %v622, %v635
  %vm637 = vcmp.eq.f32.partialorder %v622, inf
  %v638 = vsel %vm637, %v622, %v636
  %vm639 = vcmp.eq.f32.partialorder %v622, 0.0
  %v640 = vand.u32 %v622, 2147483648
  %v641 = vsel %vm639, %v640, %v638
  %v642 = vrsqrt.pop %v623
  %v643 = vmul.f32 %v642, %v623
  %v644 = vmul.f32 %v643, %v642
  %v645 = vmul.f32 0.5, %v644
  %v646 = vsub.f32 1.5, %v645
  %v647 = vmul.f32 %v642, %v646
  %v648 = vmul.f32 %v623, %v647
  %vm649 = vcmp.eq.f32.partialorder %v623, inf
  %v650 = vsel %vm649, %v623, %v648
  %vm651 = vcmp.eq.f32.partialorder %v623, 0.0
  %v652 = vand.u32 %v623, 2147483648
  %v653 = vsel %vm651, %v652, %v650
  %v654 = vrsqrt.pop %v624
  %v655 = vmul.f32 %v654, %v624
  %v656 = vmul.f32 %v655, %v654
  %v657 = vmul.f32 0.5, %v656
  %v658 = vsub.f32 1.5, %v657
  %v659 = vmul.f32 %v654, %v658
  %v660 = vmul.f32 %v624, %v659
  %vm661 = vcmp.eq.f32.partialorder %v624, inf
  %v662 = vsel %vm661, %v624, %v660
  %vm663 = vcmp.eq.f32.partialorder %v624, 0.0
  %v664 = vand.u32 %v624, 2147483648
  %v665 = vsel %vm663, %v664, %v662
  %v666 = vrsqrt.pop %v625
  %v667 = vmul.f32 %v666, %v625
  %v668 = vmul.f32 %v667, %v666
  %v669 = vmul.f32 0.5, %v668
  %v670 = vsub.f32 1.5, %v669
  %v671 = vmul.f32 %v666, %v670
  %v672 = vmul.f32 %v625, %v671
  %vm673 = vcmp.eq.f32.partialorder %v625, inf
  %v674 = vsel %vm673, %v625, %v672
  %vm675 = vcmp.eq.f32.partialorder %v625, 0.0
  %v676 = vand.u32 %v625, 2147483648
  %v677 = vsel %vm675, %v676, %v674
  %v678 = vrsqrt.pop %v626
  %v679 = vmul.f32 %v678, %v626
  %v680 = vmul.f32 %v679, %v678
  %v681 = vmul.f32 0.5, %v680
  %v682 = vsub.f32 1.5, %v681
  %v683 = vmul.f32 %v678, %v682
  %v684 = vmul.f32 %v626, %v683
  %vm685 = vcmp.eq.f32.partialorder %v626, inf
  %v686 = vsel %vm685, %v626, %v684
  %vm687 = vcmp.eq.f32.partialorder %v626, 0.0
  %v688 = vand.u32 %v626, 2147483648
  %v689 = vsel %vm687, %v688, %v686
  %v690 = vrsqrt.pop %v627
  %v691 = vmul.f32 %v690, %v627
  %v692 = vmul.f32 %v691, %v690
  %v693 = vmul.f32 0.5, %v692
  %v694 = vsub.f32 1.5, %v693
  %v695 = vmul.f32 %v690, %v694
  %v696 = vmul.f32 %v627, %v695
  %vm697 = vcmp.eq.f32.partialorder %v627, inf
  %v698 = vsel %vm697, %v627, %v696
  %vm699 = vcmp.eq.f32.partialorder %v627, 0.0
  %v700 = vand.u32 %v627, 2147483648
  %v701 = vsel %vm699, %v700, %v698
  %v702 = vrsqrt.pop %v628
  %v703 = vmul.f32 %v702, %v628
  %v704 = vmul.f32 %v703, %v702
  %v705 = vmul.f32 0.5, %v704
  %v706 = vsub.f32 1.5, %v705
  %v707 = vmul.f32 %v702, %v706
  %v708 = vmul.f32 %v628, %v707
  %vm709 = vcmp.eq.f32.partialorder %v628, inf
  %v710 = vsel %vm709, %v628, %v708
  %vm711 = vcmp.eq.f32.partialorder %v628, 0.0
  %v712 = vand.u32 %v628, 2147483648
  %v713 = vsel %vm711, %v712, %v710
  %v714 = vrsqrt.pop %v629
  %v715 = vmul.f32 %v714, %v629
  %v716 = vmul.f32 %v715, %v714
  %v717 = vmul.f32 0.5, %v716
  %v718 = vsub.f32 1.5, %v717
  %v719 = vmul.f32 %v714, %v718
  %v720 = vmul.f32 %v629, %v719
  %vm721 = vcmp.eq.f32.partialorder %v629, inf
  %v722 = vsel %vm721, %v629, %v720
  %vm723 = vcmp.eq.f32.partialorder %v629, 0.0
  %v724 = vand.u32 %v629, 2147483648
  %v725 = vsel %vm723, %v724, %v722
  %727 = vset.pattern.permute.xlu0 0
  %728 = vperm.xlu0 %727, %v641
  %v729 = vpop.permute.xlu0 %728
  %732 = vset.pattern.permute.xlu0 0
  %733 = vperm.xlu0 %732, %v653
  %v734 = vpop.permute.xlu0 %733
  %737 = vset.pattern.permute.xlu0 0
  %738 = vperm.xlu0 %737, %v665
  %v739 = vpop.permute.xlu0 %738
  %742 = vset.pattern.permute.xlu0 0
  %743 = vperm.xlu0 %742, %v677
  %v744 = vpop.permute.xlu0 %743
  %747 = vset.pattern.permute.xlu0 0
  %748 = vperm.xlu0 %747, %v689
  %v749 = vpop.permute.xlu0 %748
  %752 = vset.pattern.permute.xlu0 0
  %753 = vperm.xlu0 %752, %v701
  %v754 = vpop.permute.xlu0 %753
  %757 = vset.pattern.permute.xlu0 0
  %758 = vperm.xlu0 %757, %v713
  %v759 = vpop.permute.xlu0 %758
  %762 = vset.pattern.permute.xlu0 0
  %763 = vperm.xlu0 %762, %v725
  %v764 = vpop.permute.xlu0 %763
  %v766 = vmul.f32 %v729, %v370
  %v767 = vmul.f32 %v734, %v370
  %v768 = vmul.f32 %v739, %v370
  %v769 = vmul.f32 %v744, %v370
  %v770 = vmul.f32 %v749, %v370
  %v771 = vmul.f32 %v754, %v370
  %v772 = vmul.f32 %v759, %v370
  %v773 = vmul.f32 %v764, %v370
  %v775 = vsel %vm77, %v534, 0
  %v778 = vsel %vm77, %v535, 0
  %v781 = vsel %vm77, %v536, 0
  %v784 = vsel %vm77, %v537, 0
  %v787 = vsel %vm77, %v538, 0
  %v790 = vsel %vm77, %v539, 0
  %v793 = vsel %vm77, %v540, 0
  %v796 = vsel %vm77, %v541, 0
  %798 = vmatpush.msra.mxu0 0.0
  %799 = vmatpush.msra.mxu0 0.0
  %800 = vmatpush.msra.mxu0 0.0
  %801 = vmatpush.msra.mxu0 0.0
  %802 = vmatpush.msra.mxu0 0.0
  %803 = vmatpush.msra.mxu0 0.0
  %804 = vmatpush.msra.mxu0 0.0
  %805 = vmatpush.msra.mxu0 0.0
  %806 = vmatpush.msra.mxu0 0.0
  %807 = vmatpush.msra.mxu0 0.0
  %808 = vmatpush.msra.mxu0 0.0
  %809 = vmatpush.msra.mxu0 0.0
  %810 = vmatpush.msra.mxu0 0.0
  %811 = vmatpush.msra.mxu0 0.0
  %812 = vmatpush.msra.mxu0 0.0
  %813 = vmatpush.msra.mxu0 %v395
  %814 = vmatmul.f32.gmra.mxu0 %v775
  %v815 = vpop.f32.mrf.mxu0
  %v816 = vadd.f32 %v766, %v815
  %817 = vmatmul.f32.gmra.mxu0 %v778
  %v818 = vpop.f32.mrf.mxu0
  %v819 = vadd.f32 %v767, %v818
  %820 = vmatmul.f32.gmra.mxu0 %v781
  %v821 = vpop.f32.mrf.mxu0
  %v822 = vadd.f32 %v768, %v821
  %823 = vmatmul.f32.gmra.mxu0 %v784
  %v824 = vpop.f32.mrf.mxu0
  %v825 = vadd.f32 %v769, %v824
  %826 = vmatmul.f32.gmra.mxu0 %v787
  %v827 = vpop.f32.mrf.mxu0
  %v828 = vadd.f32 %v770, %v827
  %829 = vmatmul.f32.gmra.mxu0 %v790
  %v830 = vpop.f32.mrf.mxu0
  %v831 = vadd.f32 %v771, %v830
  %832 = vmatmul.f32.gmra.mxu0 %v793
  %v833 = vpop.f32.mrf.mxu0
  %v834 = vadd.f32 %v772, %v833
  %835 = vmatmul.f32.gmra.mxu0 %v796
  %v836 = vpop.f32.mrf.mxu0
  %v837 = vadd.f32 %v773, %v836
  %838 = vdwg.mxu0
  %v839 = vadd.f32 %v816, %v115
  %v840 = vadd.f32 %v819, %v118
  %v841 = vadd.f32 %v822, %v121
  %v842 = vadd.f32 %v825, %v124
  %v843 = vadd.f32 %v828, %v127
  %v844 = vadd.f32 %v831, %v130
  %v845 = vadd.f32 %v834, %v133
  %v846 = vadd.f32 %v837, %v136
  %855 = vrot.lane.b32.xlu0 %v839, 32
  %v856 = vpop.permute.xlu0 %855
  %857 = vrot.lane.b32.xlu0 %v840, 32
  %v858 = vpop.permute.xlu0 %857
  %859 = vrot.lane.b32.xlu0 %v841, 32
  %v860 = vpop.permute.xlu0 %859
  %861 = vrot.lane.b32.xlu0 %v842, 32
  %v862 = vpop.permute.xlu0 %861
  %863 = vrot.lane.b32.xlu0 %v843, 32
  %v864 = vpop.permute.xlu0 %863
  %865 = vrot.lane.b32.xlu0 %v844, 32
  %v866 = vpop.permute.xlu0 %865
  %867 = vrot.lane.b32.xlu0 %v845, 32
  %v868 = vpop.permute.xlu0 %867
  %869 = vrot.lane.b32.xlu0 %v846, 32
  %v870 = vpop.permute.xlu0 %869
  %v879 = vmul.f32 %v33, %v856
  %v880 = vmul.f32 %v35, %v858
  %v881 = vmul.f32 %v37, %v860
  %v882 = vmul.f32 %v39, %v862
  %v883 = vmul.f32 %v41, %v864
  %v884 = vmul.f32 %v43, %v866
  %v885 = vmul.f32 %v45, %v868
  %v886 = vmul.f32 %v47, %v870
  %895 = vrot.lane.b32.xlu0 %v879, 96
  %v896 = vpop.permute.xlu0 %895
  %897 = vrot.lane.b32.xlu0 %v880, 96
  %v898 = vpop.permute.xlu0 %897
  %899 = vrot.lane.b32.xlu0 %v881, 96
  %v900 = vpop.permute.xlu0 %899
  %901 = vrot.lane.b32.xlu0 %v882, 96
  %v902 = vpop.permute.xlu0 %901
  %903 = vrot.lane.b32.xlu0 %v883, 96
  %v904 = vpop.permute.xlu0 %903
  %905 = vrot.lane.b32.xlu0 %v884, 96
  %v906 = vpop.permute.xlu0 %905
  %907 = vrot.lane.b32.xlu0 %v885, 96
  %v908 = vpop.permute.xlu0 %907
  %909 = vrot.lane.b32.xlu0 %v886, 96
  %v910 = vpop.permute.xlu0 %909
  %v919 = vadd.f32 %v454, %v896
  %v920 = vadd.f32 %v455, %v898
  %v921 = vadd.f32 %v456, %v900
  %v922 = vadd.f32 %v457, %v902
  %v923 = vadd.f32 %v458, %v904
  %v924 = vadd.f32 %v459, %v906
  %v925 = vadd.f32 %v460, %v908
  %v926 = vadd.f32 %v461, %v910
  %927 = vset.pattern.permute.xlu0 2
  %928 = vperm.xlu0 %927, %v470
  %v929 = vpop.permute.xlu0 %928
  %930 = vset.pattern.permute.xlu0 2
  %931 = vperm.xlu0 %930, %v471
  %v932 = vpop.permute.xlu0 %931
  %933 = vset.pattern.permute.xlu0 2
  %934 = vperm.xlu0 %933, %v472
  %v935 = vpop.permute.xlu0 %934
  %936 = vset.pattern.permute.xlu0 2
  %937 = vperm.xlu0 %936, %v473
  %v938 = vpop.permute.xlu0 %937
  %939 = vset.pattern.permute.xlu0 2
  %940 = vperm.xlu0 %939, %v474
  %v941 = vpop.permute.xlu0 %940
  %942 = vset.pattern.permute.xlu0 2
  %943 = vperm.xlu0 %942, %v475
  %v944 = vpop.permute.xlu0 %943
  %945 = vset.pattern.permute.xlu0 2
  %946 = vperm.xlu0 %945, %v476
  %v947 = vpop.permute.xlu0 %946
  %948 = vset.pattern.permute.xlu0 2
  %949 = vperm.xlu0 %948, %v477
  %v950 = vpop.permute.xlu0 %949
  %vm951 = vcmp.eq.s32.totalorder %v929, 1
  %vm952 = vcmp.eq.s32.totalorder %v932, 1
  %vm953 = vcmp.eq.s32.totalorder %v935, 1
  %vm954 = vcmp.eq.s32.totalorder %v938, 1
  %vm955 = vcmp.eq.s32.totalorder %v941, 1
  %vm956 = vcmp.eq.s32.totalorder %v944, 1
  %vm957 = vcmp.eq.s32.totalorder %v947, 1
  %vm958 = vcmp.eq.s32.totalorder %v950, 1
  %959 = vrot.lane.b32.xlu0 %v25, 122
  %v960 = vpop.permute.xlu0 %959
  %961 = vrot.lane.b32.xlu0 %v26, 122
  %v962 = vpop.permute.xlu0 %961
  %963 = vrot.lane.b32.xlu0 %v27, 122
  %v964 = vpop.permute.xlu0 %963
  %965 = vrot.lane.b32.xlu0 %v28, 122
  %v966 = vpop.permute.xlu0 %965
  %967 = vrot.lane.b32.xlu0 %v29, 122
  %v968 = vpop.permute.xlu0 %967
  %969 = vrot.lane.b32.xlu0 %v30, 122
  %v970 = vpop.permute.xlu0 %969
  %971 = vrot.lane.b32.xlu0 %v31, 122
  %v972 = vpop.permute.xlu0 %971
  %973 = vrot.lane.b32.xlu0 %v32, 122
  %v974 = vpop.permute.xlu0 %973
  %v983 = vsel %vm951, %v25, %v960
  %v984 = vsel %vm952, %v26, %v962
  %v985 = vsel %vm953, %v27, %v964
  %v986 = vsel %vm954, %v28, %v966
  %v987 = vsel %vm955, %v29, %v968
  %v988 = vsel %vm956, %v30, %v970
  %v989 = vsel %vm957, %v31, %v972
  %v990 = vsel %vm958, %v32, %v974
  %v991 = vsub.f32 %v983, %v60
  %v992 = vsub.f32 %v984, %v62
  %v993 = vsub.f32 %v985, %v64
  %v994 = vsub.f32 %v986, %v66
  %v995 = vsub.f32 %v987, %v68
  %v996 = vsub.f32 %v988, %v70
  %v997 = vsub.f32 %v989, %v72
  %v998 = vsub.f32 %v990, %v74
  %v999 = vmul.f32 %v991, %v991
  %v1000 = vmul.f32 %v992, %v992
  %v1001 = vmul.f32 %v993, %v993
  %v1002 = vmul.f32 %v994, %v994
  %v1003 = vmul.f32 %v995, %v995
  %v1004 = vmul.f32 %v996, %v996
  %v1005 = vmul.f32 %v997, %v997
  %v1006 = vmul.f32 %v998, %v998
  %1015 = vrot.lane.b32.xlu0 %v999, 127
  %v1016 = vpop.permute.xlu0 %1015
  %1017 = vrot.lane.b32.xlu0 %v1000, 127
  %v1018 = vpop.permute.xlu0 %1017
  %1019 = vrot.lane.b32.xlu0 %v1001, 127
  %v1020 = vpop.permute.xlu0 %1019
  %1021 = vrot.lane.b32.xlu0 %v1002, 127
  %v1022 = vpop.permute.xlu0 %1021
  %1023 = vrot.lane.b32.xlu0 %v1003, 127
  %v1024 = vpop.permute.xlu0 %1023
  %1025 = vrot.lane.b32.xlu0 %v1004, 127
  %v1026 = vpop.permute.xlu0 %1025
  %1027 = vrot.lane.b32.xlu0 %v1005, 127
  %v1028 = vpop.permute.xlu0 %1027
  %1029 = vrot.lane.b32.xlu0 %v1006, 127
  %v1030 = vpop.permute.xlu0 %1029
  %v1039 = vadd.f32 %v999, %v1016
  %v1040 = vadd.f32 %v1000, %v1018
  %v1041 = vadd.f32 %v1001, %v1020
  %v1042 = vadd.f32 %v1002, %v1022
  %v1043 = vadd.f32 %v1003, %v1024
  %v1044 = vadd.f32 %v1004, %v1026
  %v1045 = vadd.f32 %v1005, %v1028
  %v1046 = vadd.f32 %v1006, %v1030
  %1047 = vrot.lane.b32.xlu0 %v999, 126
  %v1048 = vpop.permute.xlu0 %1047
  %1049 = vrot.lane.b32.xlu0 %v1000, 126
  %v1050 = vpop.permute.xlu0 %1049
  %1051 = vrot.lane.b32.xlu0 %v1001, 126
  %v1052 = vpop.permute.xlu0 %1051
  %1053 = vrot.lane.b32.xlu0 %v1002, 126
  %v1054 = vpop.permute.xlu0 %1053
  %1055 = vrot.lane.b32.xlu0 %v1003, 126
  %v1056 = vpop.permute.xlu0 %1055
  %1057 = vrot.lane.b32.xlu0 %v1004, 126
  %v1058 = vpop.permute.xlu0 %1057
  %1059 = vrot.lane.b32.xlu0 %v1005, 126
  %v1060 = vpop.permute.xlu0 %1059
  %1061 = vrot.lane.b32.xlu0 %v1006, 126
  %v1062 = vpop.permute.xlu0 %1061
  %v1071 = vadd.f32 %v1039, %v1048
  %v1072 = vadd.f32 %v1040, %v1050
  %v1073 = vadd.f32 %v1041, %v1052
  %v1074 = vadd.f32 %v1042, %v1054
  %v1075 = vadd.f32 %v1043, %v1056
  %v1076 = vadd.f32 %v1044, %v1058
  %v1077 = vadd.f32 %v1045, %v1060
  %v1078 = vadd.f32 %v1046, %v1062
  %v1079 = vrsqrt.pop %v1071
  %v1080 = vmul.f32 %v1079, %v1071
  %v1081 = vmul.f32 %v1080, %v1079
  %v1082 = vmul.f32 0.5, %v1081
  %v1083 = vsub.f32 1.5, %v1082
  %v1084 = vmul.f32 %v1079, %v1083
  %v1085 = vmul.f32 %v1071, %v1084
  %vm1086 = vcmp.eq.f32.partialorder %v1071, inf
  %v1087 = vsel %vm1086, %v1071, %v1085
  %vm1088 = vcmp.eq.f32.partialorder %v1071, 0.0
  %v1089 = vand.u32 %v1071, 2147483648
  %v1090 = vsel %vm1088, %v1089, %v1087
  %v1091 = vrsqrt.pop %v1072
  %v1092 = vmul.f32 %v1091, %v1072
  %v1093 = vmul.f32 %v1092, %v1091
  %v1094 = vmul.f32 0.5, %v1093
  %v1095 = vsub.f32 1.5, %v1094
  %v1096 = vmul.f32 %v1091, %v1095
  %v1097 = vmul.f32 %v1072, %v1096
  %vm1098 = vcmp.eq.f32.partialorder %v1072, inf
  %v1099 = vsel %vm1098, %v1072, %v1097
  %vm1100 = vcmp.eq.f32.partialorder %v1072, 0.0
  %v1101 = vand.u32 %v1072, 2147483648
  %v1102 = vsel %vm1100, %v1101, %v1099
  %v1103 = vrsqrt.pop %v1073
  %v1104 = vmul.f32 %v1103, %v1073
  %v1105 = vmul.f32 %v1104, %v1103
  %v1106 = vmul.f32 0.5, %v1105
  %v1107 = vsub.f32 1.5, %v1106
  %v1108 = vmul.f32 %v1103, %v1107
  %v1109 = vmul.f32 %v1073, %v1108
  %vm1110 = vcmp.eq.f32.partialorder %v1073, inf
  %v1111 = vsel %vm1110, %v1073, %v1109
  %vm1112 = vcmp.eq.f32.partialorder %v1073, 0.0
  %v1113 = vand.u32 %v1073, 2147483648
  %v1114 = vsel %vm1112, %v1113, %v1111
  %v1115 = vrsqrt.pop %v1074
  %v1116 = vmul.f32 %v1115, %v1074
  %v1117 = vmul.f32 %v1116, %v1115
  %v1118 = vmul.f32 0.5, %v1117
  %v1119 = vsub.f32 1.5, %v1118
  %v1120 = vmul.f32 %v1115, %v1119
  %v1121 = vmul.f32 %v1074, %v1120
  %vm1122 = vcmp.eq.f32.partialorder %v1074, inf
  %v1123 = vsel %vm1122, %v1074, %v1121
  %vm1124 = vcmp.eq.f32.partialorder %v1074, 0.0
  %v1125 = vand.u32 %v1074, 2147483648
  %v1126 = vsel %vm1124, %v1125, %v1123
  %v1127 = vrsqrt.pop %v1075
  %v1128 = vmul.f32 %v1127, %v1075
  %v1129 = vmul.f32 %v1128, %v1127
  %v1130 = vmul.f32 0.5, %v1129
  %v1131 = vsub.f32 1.5, %v1130
  %v1132 = vmul.f32 %v1127, %v1131
  %v1133 = vmul.f32 %v1075, %v1132
  %vm1134 = vcmp.eq.f32.partialorder %v1075, inf
  %v1135 = vsel %vm1134, %v1075, %v1133
  %vm1136 = vcmp.eq.f32.partialorder %v1075, 0.0
  %v1137 = vand.u32 %v1075, 2147483648
  %v1138 = vsel %vm1136, %v1137, %v1135
  %v1139 = vrsqrt.pop %v1076
  %v1140 = vmul.f32 %v1139, %v1076
  %v1141 = vmul.f32 %v1140, %v1139
  %v1142 = vmul.f32 0.5, %v1141
  %v1143 = vsub.f32 1.5, %v1142
  %v1144 = vmul.f32 %v1139, %v1143
  %v1145 = vmul.f32 %v1076, %v1144
  %vm1146 = vcmp.eq.f32.partialorder %v1076, inf
  %v1147 = vsel %vm1146, %v1076, %v1145
  %vm1148 = vcmp.eq.f32.partialorder %v1076, 0.0
  %v1149 = vand.u32 %v1076, 2147483648
  %v1150 = vsel %vm1148, %v1149, %v1147
  %v1151 = vrsqrt.pop %v1077
  %v1152 = vmul.f32 %v1151, %v1077
  %v1153 = vmul.f32 %v1152, %v1151
  %v1154 = vmul.f32 0.5, %v1153
  %v1155 = vsub.f32 1.5, %v1154
  %v1156 = vmul.f32 %v1151, %v1155
  %v1157 = vmul.f32 %v1077, %v1156
  %vm1158 = vcmp.eq.f32.partialorder %v1077, inf
  %v1159 = vsel %vm1158, %v1077, %v1157
  %vm1160 = vcmp.eq.f32.partialorder %v1077, 0.0
  %v1161 = vand.u32 %v1077, 2147483648
  %v1162 = vsel %vm1160, %v1161, %v1159
  %v1163 = vrsqrt.pop %v1078
  %v1164 = vmul.f32 %v1163, %v1078
  %v1165 = vmul.f32 %v1164, %v1163
  %v1166 = vmul.f32 0.5, %v1165
  %v1167 = vsub.f32 1.5, %v1166
  %v1168 = vmul.f32 %v1163, %v1167
  %v1169 = vmul.f32 %v1078, %v1168
  %vm1170 = vcmp.eq.f32.partialorder %v1078, inf
  %v1171 = vsel %vm1170, %v1078, %v1169
  %vm1172 = vcmp.eq.f32.partialorder %v1078, 0.0
  %v1173 = vand.u32 %v1078, 2147483648
  %v1174 = vsel %vm1172, %v1173, %v1171
  %1176 = vset.pattern.permute.xlu0 0
  %1177 = vperm.xlu0 %1176, %v1090
  %v1178 = vpop.permute.xlu0 %1177
  %1181 = vset.pattern.permute.xlu0 0
  %1182 = vperm.xlu0 %1181, %v1102
  %v1183 = vpop.permute.xlu0 %1182
  %1186 = vset.pattern.permute.xlu0 0
  %1187 = vperm.xlu0 %1186, %v1114
  %v1188 = vpop.permute.xlu0 %1187
  %1191 = vset.pattern.permute.xlu0 0
  %1192 = vperm.xlu0 %1191, %v1126
  %v1193 = vpop.permute.xlu0 %1192
  %1196 = vset.pattern.permute.xlu0 0
  %1197 = vperm.xlu0 %1196, %v1138
  %v1198 = vpop.permute.xlu0 %1197
  %1201 = vset.pattern.permute.xlu0 0
  %1202 = vperm.xlu0 %1201, %v1150
  %v1203 = vpop.permute.xlu0 %1202
  %1206 = vset.pattern.permute.xlu0 0
  %1207 = vperm.xlu0 %1206, %v1162
  %v1208 = vpop.permute.xlu0 %1207
  %1211 = vset.pattern.permute.xlu0 0
  %1212 = vperm.xlu0 %1211, %v1174
  %v1213 = vpop.permute.xlu0 %1212
  %v1215 = vmul.f32 %v1178, %v370
  %v1216 = vmul.f32 %v1183, %v370
  %v1217 = vmul.f32 %v1188, %v370
  %v1218 = vmul.f32 %v1193, %v370
  %v1219 = vmul.f32 %v1198, %v370
  %v1220 = vmul.f32 %v1203, %v370
  %v1221 = vmul.f32 %v1208, %v370
  %v1222 = vmul.f32 %v1213, %v370
  %v1224 = vsel %vm77, %v983, 0
  %v1227 = vsel %vm77, %v984, 0
  %v1230 = vsel %vm77, %v985, 0
  %v1233 = vsel %vm77, %v986, 0
  %v1236 = vsel %vm77, %v987, 0
  %v1239 = vsel %vm77, %v988, 0
  %v1242 = vsel %vm77, %v989, 0
  %v1245 = vsel %vm77, %v990, 0
  %1247 = vmatpush.msra.mxu0 0.0
  %1248 = vmatpush.msra.mxu0 0.0
  %1249 = vmatpush.msra.mxu0 0.0
  %1250 = vmatpush.msra.mxu0 0.0
  %1251 = vmatpush.msra.mxu0 0.0
  %1252 = vmatpush.msra.mxu0 0.0
  %1253 = vmatpush.msra.mxu0 0.0
  %1254 = vmatpush.msra.mxu0 0.0
  %1255 = vmatpush.msra.mxu0 0.0
  %1256 = vmatpush.msra.mxu0 0.0
  %1257 = vmatpush.msra.mxu0 0.0
  %1258 = vmatpush.msra.mxu0 0.0
  %1259 = vmatpush.msra.mxu0 0.0
  %1260 = vmatpush.msra.mxu0 0.0
  %1261 = vmatpush.msra.mxu0 0.0
  %1262 = vmatpush.msra.mxu0 %v395
  %1263 = vmatmul.f32.gmra.mxu0 %v1224
  %v1264 = vpop.f32.mrf.mxu0
  %v1265 = vadd.f32 %v1215, %v1264
  %1266 = vmatmul.f32.gmra.mxu0 %v1227
  %v1267 = vpop.f32.mrf.mxu0
  %v1268 = vadd.f32 %v1216, %v1267
  %1269 = vmatmul.f32.gmra.mxu0 %v1230
  %v1270 = vpop.f32.mrf.mxu0
  %v1271 = vadd.f32 %v1217, %v1270
  %1272 = vmatmul.f32.gmra.mxu0 %v1233
  %v1273 = vpop.f32.mrf.mxu0
  %v1274 = vadd.f32 %v1218, %v1273
  %1275 = vmatmul.f32.gmra.mxu0 %v1236
  %v1276 = vpop.f32.mrf.mxu0
  %v1277 = vadd.f32 %v1219, %v1276
  %1278 = vmatmul.f32.gmra.mxu0 %v1239
  %v1279 = vpop.f32.mrf.mxu0
  %v1280 = vadd.f32 %v1220, %v1279
  %1281 = vmatmul.f32.gmra.mxu0 %v1242
  %v1282 = vpop.f32.mrf.mxu0
  %v1283 = vadd.f32 %v1221, %v1282
  %1284 = vmatmul.f32.gmra.mxu0 %v1245
  %v1285 = vpop.f32.mrf.mxu0
  %v1286 = vadd.f32 %v1222, %v1285
  %1287 = vdwg.mxu0
  %v1288 = vadd.f32 %v1265, %v115
  %v1289 = vadd.f32 %v1268, %v118
  %v1290 = vadd.f32 %v1271, %v121
  %v1291 = vadd.f32 %v1274, %v124
  %v1292 = vadd.f32 %v1277, %v127
  %v1293 = vadd.f32 %v1280, %v130
  %v1294 = vadd.f32 %v1283, %v133
  %v1295 = vadd.f32 %v1286, %v136
  %1304 = vrot.lane.b32.xlu0 %v1288, 64
  %v1305 = vpop.permute.xlu0 %1304
  %1306 = vrot.lane.b32.xlu0 %v1289, 64
  %v1307 = vpop.permute.xlu0 %1306
  %1308 = vrot.lane.b32.xlu0 %v1290, 64
  %v1309 = vpop.permute.xlu0 %1308
  %1310 = vrot.lane.b32.xlu0 %v1291, 64
  %v1311 = vpop.permute.xlu0 %1310
  %1312 = vrot.lane.b32.xlu0 %v1292, 64
  %v1313 = vpop.permute.xlu0 %1312
  %1314 = vrot.lane.b32.xlu0 %v1293, 64
  %v1315 = vpop.permute.xlu0 %1314
  %1316 = vrot.lane.b32.xlu0 %v1294, 64
  %v1317 = vpop.permute.xlu0 %1316
  %1318 = vrot.lane.b32.xlu0 %v1295, 64
  %v1319 = vpop.permute.xlu0 %1318
  %v1328 = vmul.f32 %v33, %v1305
  %v1329 = vmul.f32 %v35, %v1307
  %v1330 = vmul.f32 %v37, %v1309
  %v1331 = vmul.f32 %v39, %v1311
  %v1332 = vmul.f32 %v41, %v1313
  %v1333 = vmul.f32 %v43, %v1315
  %v1334 = vmul.f32 %v45, %v1317
  %v1335 = vmul.f32 %v47, %v1319
  %1344 = vrot.lane.b32.xlu0 %v1328, 64
  %v1345 = vpop.permute.xlu0 %1344
  %1346 = vrot.lane.b32.xlu0 %v1329, 64
  %v1347 = vpop.permute.xlu0 %1346
  %1348 = vrot.lane.b32.xlu0 %v1330, 64
  %v1349 = vpop.permute.xlu0 %1348
  %1350 = vrot.lane.b32.xlu0 %v1331, 64
  %v1351 = vpop.permute.xlu0 %1350
  %1352 = vrot.lane.b32.xlu0 %v1332, 64
  %v1353 = vpop.permute.xlu0 %1352
  %1354 = vrot.lane.b32.xlu0 %v1333, 64
  %v1355 = vpop.permute.xlu0 %1354
  %1356 = vrot.lane.b32.xlu0 %v1334, 64
  %v1357 = vpop.permute.xlu0 %1356
  %1358 = vrot.lane.b32.xlu0 %v1335, 64
  %v1359 = vpop.permute.xlu0 %1358
  %v1368 = vadd.f32 %v919, %v1345
  %v1369 = vadd.f32 %v920, %v1347
  %v1370 = vadd.f32 %v921, %v1349
  %v1371 = vadd.f32 %v922, %v1351
  %v1372 = vadd.f32 %v923, %v1353
  %v1373 = vadd.f32 %v924, %v1355
  %v1374 = vadd.f32 %v925, %v1357
  %v1375 = vadd.f32 %v926, %v1359
  %1376 = vset.pattern.permute.xlu0 3
  %1377 = vperm.xlu0 %1376, %v470
  %v1378 = vpop.permute.xlu0 %1377
  %1379 = vset.pattern.permute.xlu0 3
  %1380 = vperm.xlu0 %1379, %v471
  %v1381 = vpop.permute.xlu0 %1380
  %1382 = vset.pattern.permute.xlu0 3
  %1383 = vperm.xlu0 %1382, %v472
  %v1384 = vpop.permute.xlu0 %1383
  %1385 = vset.pattern.permute.xlu0 3
  %1386 = vperm.xlu0 %1385, %v473
  %v1387 = vpop.permute.xlu0 %1386
  %1388 = vset.pattern.permute.xlu0 3
  %1389 = vperm.xlu0 %1388, %v474
  %v1390 = vpop.permute.xlu0 %1389
  %1391 = vset.pattern.permute.xlu0 3
  %1392 = vperm.xlu0 %1391, %v475
  %v1393 = vpop.permute.xlu0 %1392
  %1394 = vset.pattern.permute.xlu0 3
  %1395 = vperm.xlu0 %1394, %v476
  %v1396 = vpop.permute.xlu0 %1395
  %1397 = vset.pattern.permute.xlu0 3
  %1398 = vperm.xlu0 %1397, %v477
  %v1399 = vpop.permute.xlu0 %1398
  %vm1400 = vcmp.eq.s32.totalorder %v1378, 1
  %vm1401 = vcmp.eq.s32.totalorder %v1381, 1
  %vm1402 = vcmp.eq.s32.totalorder %v1384, 1
  %vm1403 = vcmp.eq.s32.totalorder %v1387, 1
  %vm1404 = vcmp.eq.s32.totalorder %v1390, 1
  %vm1405 = vcmp.eq.s32.totalorder %v1393, 1
  %vm1406 = vcmp.eq.s32.totalorder %v1396, 1
  %vm1407 = vcmp.eq.s32.totalorder %v1399, 1
  %1408 = vrot.lane.b32.xlu0 %v25, 119
  %v1409 = vpop.permute.xlu0 %1408
  %1410 = vrot.lane.b32.xlu0 %v26, 119
  %v1411 = vpop.permute.xlu0 %1410
  %1412 = vrot.lane.b32.xlu0 %v27, 119
  %v1413 = vpop.permute.xlu0 %1412
  %1414 = vrot.lane.b32.xlu0 %v28, 119
  %v1415 = vpop.permute.xlu0 %1414
  %1416 = vrot.lane.b32.xlu0 %v29, 119
  %v1417 = vpop.permute.xlu0 %1416
  %1418 = vrot.lane.b32.xlu0 %v30, 119
  %v1419 = vpop.permute.xlu0 %1418
  %1420 = vrot.lane.b32.xlu0 %v31, 119
  %v1421 = vpop.permute.xlu0 %1420
  %1422 = vrot.lane.b32.xlu0 %v32, 119
  %v1423 = vpop.permute.xlu0 %1422
  %v1432 = vsel %vm1400, %v25, %v1409
  %v1433 = vsel %vm1401, %v26, %v1411
  %v1434 = vsel %vm1402, %v27, %v1413
  %v1435 = vsel %vm1403, %v28, %v1415
  %v1436 = vsel %vm1404, %v29, %v1417
  %v1437 = vsel %vm1405, %v30, %v1419
  %v1438 = vsel %vm1406, %v31, %v1421
  %v1439 = vsel %vm1407, %v32, %v1423
  %v1440 = vsub.f32 %v1432, %v60
  %v1441 = vsub.f32 %v1433, %v62
  %v1442 = vsub.f32 %v1434, %v64
  %v1443 = vsub.f32 %v1435, %v66
  %v1444 = vsub.f32 %v1436, %v68
  %v1445 = vsub.f32 %v1437, %v70
  %v1446 = vsub.f32 %v1438, %v72
  %v1447 = vsub.f32 %v1439, %v74
  %v1448 = vmul.f32 %v1440, %v1440
  %v1449 = vmul.f32 %v1441, %v1441
  %v1450 = vmul.f32 %v1442, %v1442
  %v1451 = vmul.f32 %v1443, %v1443
  %v1452 = vmul.f32 %v1444, %v1444
  %v1453 = vmul.f32 %v1445, %v1445
  %v1454 = vmul.f32 %v1446, %v1446
  %v1455 = vmul.f32 %v1447, %v1447
  %1464 = vrot.lane.b32.xlu0 %v1448, 127
  %v1465 = vpop.permute.xlu0 %1464
  %1466 = vrot.lane.b32.xlu0 %v1449, 127
  %v1467 = vpop.permute.xlu0 %1466
  %1468 = vrot.lane.b32.xlu0 %v1450, 127
  %v1469 = vpop.permute.xlu0 %1468
  %1470 = vrot.lane.b32.xlu0 %v1451, 127
  %v1471 = vpop.permute.xlu0 %1470
  %1472 = vrot.lane.b32.xlu0 %v1452, 127
  %v1473 = vpop.permute.xlu0 %1472
  %1474 = vrot.lane.b32.xlu0 %v1453, 127
  %v1475 = vpop.permute.xlu0 %1474
  %1476 = vrot.lane.b32.xlu0 %v1454, 127
  %v1477 = vpop.permute.xlu0 %1476
  %1478 = vrot.lane.b32.xlu0 %v1455, 127
  %v1479 = vpop.permute.xlu0 %1478
  %v1488 = vadd.f32 %v1448, %v1465
  %v1489 = vadd.f32 %v1449, %v1467
  %v1490 = vadd.f32 %v1450, %v1469
  %v1491 = vadd.f32 %v1451, %v1471
  %v1492 = vadd.f32 %v1452, %v1473
  %v1493 = vadd.f32 %v1453, %v1475
  %v1494 = vadd.f32 %v1454, %v1477
  %v1495 = vadd.f32 %v1455, %v1479
  %1496 = vrot.lane.b32.xlu0 %v1448, 126
  %v1497 = vpop.permute.xlu0 %1496
  %1498 = vrot.lane.b32.xlu0 %v1449, 126
  %v1499 = vpop.permute.xlu0 %1498
  %1500 = vrot.lane.b32.xlu0 %v1450, 126
  %v1501 = vpop.permute.xlu0 %1500
  %1502 = vrot.lane.b32.xlu0 %v1451, 126
  %v1503 = vpop.permute.xlu0 %1502
  %1504 = vrot.lane.b32.xlu0 %v1452, 126
  %v1505 = vpop.permute.xlu0 %1504
  %1506 = vrot.lane.b32.xlu0 %v1453, 126
  %v1507 = vpop.permute.xlu0 %1506
  %1508 = vrot.lane.b32.xlu0 %v1454, 126
  %v1509 = vpop.permute.xlu0 %1508
  %1510 = vrot.lane.b32.xlu0 %v1455, 126
  %v1511 = vpop.permute.xlu0 %1510
  %v1520 = vadd.f32 %v1488, %v1497
  %v1521 = vadd.f32 %v1489, %v1499
  %v1522 = vadd.f32 %v1490, %v1501
  %v1523 = vadd.f32 %v1491, %v1503
  %v1524 = vadd.f32 %v1492, %v1505
  %v1525 = vadd.f32 %v1493, %v1507
  %v1526 = vadd.f32 %v1494, %v1509
  %v1527 = vadd.f32 %v1495, %v1511
  %v1528 = vrsqrt.pop %v1520
  %v1529 = vmul.f32 %v1528, %v1520
  %v1530 = vmul.f32 %v1529, %v1528
  %v1531 = vmul.f32 0.5, %v1530
  %v1532 = vsub.f32 1.5, %v1531
  %v1533 = vmul.f32 %v1528, %v1532
  %v1534 = vmul.f32 %v1520, %v1533
  %vm1535 = vcmp.eq.f32.partialorder %v1520, inf
  %v1536 = vsel %vm1535, %v1520, %v1534
  %vm1537 = vcmp.eq.f32.partialorder %v1520, 0.0
  %v1538 = vand.u32 %v1520, 2147483648
  %v1539 = vsel %vm1537, %v1538, %v1536
  %v1540 = vrsqrt.pop %v1521
  %v1541 = vmul.f32 %v1540, %v1521
  %v1542 = vmul.f32 %v1541, %v1540
  %v1543 = vmul.f32 0.5, %v1542
  %v1544 = vsub.f32 1.5, %v1543
  %v1545 = vmul.f32 %v1540, %v1544
  %v1546 = vmul.f32 %v1521, %v1545
  %vm1547 = vcmp.eq.f32.partialorder %v1521, inf
  %v1548 = vsel %vm1547, %v1521, %v1546
  %vm1549 = vcmp.eq.f32.partialorder %v1521, 0.0
  %v1550 = vand.u32 %v1521, 2147483648
  %v1551 = vsel %vm1549, %v1550, %v1548
  %v1552 = vrsqrt.pop %v1522
  %v1553 = vmul.f32 %v1552, %v1522
  %v1554 = vmul.f32 %v1553, %v1552
  %v1555 = vmul.f32 0.5, %v1554
  %v1556 = vsub.f32 1.5, %v1555
  %v1557 = vmul.f32 %v1552, %v1556
  %v1558 = vmul.f32 %v1522, %v1557
  %vm1559 = vcmp.eq.f32.partialorder %v1522, inf
  %v1560 = vsel %vm1559, %v1522, %v1558
  %vm1561 = vcmp.eq.f32.partialorder %v1522, 0.0
  %v1562 = vand.u32 %v1522, 2147483648
  %v1563 = vsel %vm1561, %v1562, %v1560
  %v1564 = vrsqrt.pop %v1523
  %v1565 = vmul.f32 %v1564, %v1523
  %v1566 = vmul.f32 %v1565, %v1564
  %v1567 = vmul.f32 0.5, %v1566
  %v1568 = vsub.f32 1.5, %v1567
  %v1569 = vmul.f32 %v1564, %v1568
  %v1570 = vmul.f32 %v1523, %v1569
  %vm1571 = vcmp.eq.f32.partialorder %v1523, inf
  %v1572 = vsel %vm1571, %v1523, %v1570
  %vm1573 = vcmp.eq.f32.partialorder %v1523, 0.0
  %v1574 = vand.u32 %v1523, 2147483648
  %v1575 = vsel %vm1573, %v1574, %v1572
  %v1576 = vrsqrt.pop %v1524
  %v1577 = vmul.f32 %v1576, %v1524
  %v1578 = vmul.f32 %v1577, %v1576
  %v1579 = vmul.f32 0.5, %v1578
  %v1580 = vsub.f32 1.5, %v1579
  %v1581 = vmul.f32 %v1576, %v1580
  %v1582 = vmul.f32 %v1524, %v1581
  %vm1583 = vcmp.eq.f32.partialorder %v1524, inf
  %v1584 = vsel %vm1583, %v1524, %v1582
  %vm1585 = vcmp.eq.f32.partialorder %v1524, 0.0
  %v1586 = vand.u32 %v1524, 2147483648
  %v1587 = vsel %vm1585, %v1586, %v1584
  %v1588 = vrsqrt.pop %v1525
  %v1589 = vmul.f32 %v1588, %v1525
  %v1590 = vmul.f32 %v1589, %v1588
  %v1591 = vmul.f32 0.5, %v1590
  %v1592 = vsub.f32 1.5, %v1591
  %v1593 = vmul.f32 %v1588, %v1592
  %v1594 = vmul.f32 %v1525, %v1593
  %vm1595 = vcmp.eq.f32.partialorder %v1525, inf
  %v1596 = vsel %vm1595, %v1525, %v1594
  %vm1597 = vcmp.eq.f32.partialorder %v1525, 0.0
  %v1598 = vand.u32 %v1525, 2147483648
  %v1599 = vsel %vm1597, %v1598, %v1596
  %v1600 = vrsqrt.pop %v1526
  %v1601 = vmul.f32 %v1600, %v1526
  %v1602 = vmul.f32 %v1601, %v1600
  %v1603 = vmul.f32 0.5, %v1602
  %v1604 = vsub.f32 1.5, %v1603
  %v1605 = vmul.f32 %v1600, %v1604
  %v1606 = vmul.f32 %v1526, %v1605
  %vm1607 = vcmp.eq.f32.partialorder %v1526, inf
  %v1608 = vsel %vm1607, %v1526, %v1606
  %vm1609 = vcmp.eq.f32.partialorder %v1526, 0.0
  %v1610 = vand.u32 %v1526, 2147483648
  %v1611 = vsel %vm1609, %v1610, %v1608
  %v1612 = vrsqrt.pop %v1527
  %v1613 = vmul.f32 %v1612, %v1527
  %v1614 = vmul.f32 %v1613, %v1612
  %v1615 = vmul.f32 0.5, %v1614
  %v1616 = vsub.f32 1.5, %v1615
  %v1617 = vmul.f32 %v1612, %v1616
  %v1618 = vmul.f32 %v1527, %v1617
  %vm1619 = vcmp.eq.f32.partialorder %v1527, inf
  %v1620 = vsel %vm1619, %v1527, %v1618
  %vm1621 = vcmp.eq.f32.partialorder %v1527, 0.0
  %v1622 = vand.u32 %v1527, 2147483648
  %v1623 = vsel %vm1621, %v1622, %v1620
  %1625 = vset.pattern.permute.xlu0 0
  %1626 = vperm.xlu0 %1625, %v1539
  %v1627 = vpop.permute.xlu0 %1626
  %1630 = vset.pattern.permute.xlu0 0
  %1631 = vperm.xlu0 %1630, %v1551
  %v1632 = vpop.permute.xlu0 %1631
  %1635 = vset.pattern.permute.xlu0 0
  %1636 = vperm.xlu0 %1635, %v1563
  %v1637 = vpop.permute.xlu0 %1636
  %1640 = vset.pattern.permute.xlu0 0
  %1641 = vperm.xlu0 %1640, %v1575
  %v1642 = vpop.permute.xlu0 %1641
  %1645 = vset.pattern.permute.xlu0 0
  %1646 = vperm.xlu0 %1645, %v1587
  %v1647 = vpop.permute.xlu0 %1646
  %1650 = vset.pattern.permute.xlu0 0
  %1651 = vperm.xlu0 %1650, %v1599
  %v1652 = vpop.permute.xlu0 %1651
  %1655 = vset.pattern.permute.xlu0 0
  %1656 = vperm.xlu0 %1655, %v1611
  %v1657 = vpop.permute.xlu0 %1656
  %1660 = vset.pattern.permute.xlu0 0
  %1661 = vperm.xlu0 %1660, %v1623
  %v1662 = vpop.permute.xlu0 %1661
  %v1664 = vmul.f32 %v1627, %v370
  %v1665 = vmul.f32 %v1632, %v370
  %v1666 = vmul.f32 %v1637, %v370
  %v1667 = vmul.f32 %v1642, %v370
  %v1668 = vmul.f32 %v1647, %v370
  %v1669 = vmul.f32 %v1652, %v370
  %v1670 = vmul.f32 %v1657, %v370
  %v1671 = vmul.f32 %v1662, %v370
  %v1673 = vsel %vm77, %v1432, 0
  %v1676 = vsel %vm77, %v1433, 0
  %v1679 = vsel %vm77, %v1434, 0
  %v1682 = vsel %vm77, %v1435, 0
  %v1685 = vsel %vm77, %v1436, 0
  %v1688 = vsel %vm77, %v1437, 0
  %v1691 = vsel %vm77, %v1438, 0
  %v1694 = vsel %vm77, %v1439, 0
  %1696 = vmatpush.msra.mxu0 0.0
  %1697 = vmatpush.msra.mxu0 0.0
  %1698 = vmatpush.msra.mxu0 0.0
  %1699 = vmatpush.msra.mxu0 0.0
  %1700 = vmatpush.msra.mxu0 0.0
  %1701 = vmatpush.msra.mxu0 0.0
  %1702 = vmatpush.msra.mxu0 0.0
  %1703 = vmatpush.msra.mxu0 0.0
  %1704 = vmatpush.msra.mxu0 0.0
  %1705 = vmatpush.msra.mxu0 0.0
  %1706 = vmatpush.msra.mxu0 0.0
  %1707 = vmatpush.msra.mxu0 0.0
  %1708 = vmatpush.msra.mxu0 0.0
  %1709 = vmatpush.msra.mxu0 0.0
  %1710 = vmatpush.msra.mxu0 0.0
  %1711 = vmatpush.msra.mxu0 %v395
  %1712 = vmatmul.f32.gmra.mxu0 %v1673
  %v1713 = vpop.f32.mrf.mxu0
  %v1714 = vadd.f32 %v1664, %v1713
  %1715 = vmatmul.f32.gmra.mxu0 %v1676
  %v1716 = vpop.f32.mrf.mxu0
  %v1717 = vadd.f32 %v1665, %v1716
  %1718 = vmatmul.f32.gmra.mxu0 %v1679
  %v1719 = vpop.f32.mrf.mxu0
  %v1720 = vadd.f32 %v1666, %v1719
  %1721 = vmatmul.f32.gmra.mxu0 %v1682
  %v1722 = vpop.f32.mrf.mxu0
  %v1723 = vadd.f32 %v1667, %v1722
  %1724 = vmatmul.f32.gmra.mxu0 %v1685
  %v1725 = vpop.f32.mrf.mxu0
  %v1726 = vadd.f32 %v1668, %v1725
  %1727 = vmatmul.f32.gmra.mxu0 %v1688
  %v1728 = vpop.f32.mrf.mxu0
  %v1729 = vadd.f32 %v1669, %v1728
  %1730 = vmatmul.f32.gmra.mxu0 %v1691
  %v1731 = vpop.f32.mrf.mxu0
  %v1732 = vadd.f32 %v1670, %v1731
  %1733 = vmatmul.f32.gmra.mxu0 %v1694
  %v1734 = vpop.f32.mrf.mxu0
  %v1735 = vadd.f32 %v1671, %v1734
  %1736 = vdwg.mxu0
  %v1737 = vadd.f32 %v1714, %v115
  %v1738 = vadd.f32 %v1717, %v118
  %v1739 = vadd.f32 %v1720, %v121
  %v1740 = vadd.f32 %v1723, %v124
  %v1741 = vadd.f32 %v1726, %v127
  %v1742 = vadd.f32 %v1729, %v130
  %v1743 = vadd.f32 %v1732, %v133
  %v1744 = vadd.f32 %v1735, %v136
  %1753 = vrot.lane.b32.xlu0 %v1737, 96
  %v1754 = vpop.permute.xlu0 %1753
  %1755 = vrot.lane.b32.xlu0 %v1738, 96
  %v1756 = vpop.permute.xlu0 %1755
  %1757 = vrot.lane.b32.xlu0 %v1739, 96
  %v1758 = vpop.permute.xlu0 %1757
  %1759 = vrot.lane.b32.xlu0 %v1740, 96
  %v1760 = vpop.permute.xlu0 %1759
  %1761 = vrot.lane.b32.xlu0 %v1741, 96
  %v1762 = vpop.permute.xlu0 %1761
  %1763 = vrot.lane.b32.xlu0 %v1742, 96
  %v1764 = vpop.permute.xlu0 %1763
  %1765 = vrot.lane.b32.xlu0 %v1743, 96
  %v1766 = vpop.permute.xlu0 %1765
  %1767 = vrot.lane.b32.xlu0 %v1744, 96
  %v1768 = vpop.permute.xlu0 %1767
  %v1777 = vmul.f32 %v33, %v1754
  %v1778 = vmul.f32 %v35, %v1756
  %v1779 = vmul.f32 %v37, %v1758
  %v1780 = vmul.f32 %v39, %v1760
  %v1781 = vmul.f32 %v41, %v1762
  %v1782 = vmul.f32 %v43, %v1764
  %v1783 = vmul.f32 %v45, %v1766
  %v1784 = vmul.f32 %v47, %v1768
  %1793 = vrot.lane.b32.xlu0 %v1777, 32
  %v1794 = vpop.permute.xlu0 %1793
  %1795 = vrot.lane.b32.xlu0 %v1778, 32
  %v1796 = vpop.permute.xlu0 %1795
  %1797 = vrot.lane.b32.xlu0 %v1779, 32
  %v1798 = vpop.permute.xlu0 %1797
  %1799 = vrot.lane.b32.xlu0 %v1780, 32
  %v1800 = vpop.permute.xlu0 %1799
  %1801 = vrot.lane.b32.xlu0 %v1781, 32
  %v1802 = vpop.permute.xlu0 %1801
  %1803 = vrot.lane.b32.xlu0 %v1782, 32
  %v1804 = vpop.permute.xlu0 %1803
  %1805 = vrot.lane.b32.xlu0 %v1783, 32
  %v1806 = vpop.permute.xlu0 %1805
  %1807 = vrot.lane.b32.xlu0 %v1784, 32
  %v1808 = vpop.permute.xlu0 %1807
  %v1817 = vadd.f32 %v1368, %v1794
  %v1818 = vadd.f32 %v1369, %v1796
  %v1819 = vadd.f32 %v1370, %v1798
  %v1820 = vadd.f32 %v1371, %v1800
  %v1821 = vadd.f32 %v1372, %v1802
  %v1822 = vadd.f32 %v1373, %v1804
  %v1823 = vadd.f32 %v1374, %v1806
  %v1824 = vadd.f32 %v1375, %v1808
  %1825 = vset.pattern.permute.xlu0 4
  %1826 = vperm.xlu0 %1825, %v470
  %v1827 = vpop.permute.xlu0 %1826
  %1828 = vset.pattern.permute.xlu0 4
  %1829 = vperm.xlu0 %1828, %v471
  %v1830 = vpop.permute.xlu0 %1829
  %1831 = vset.pattern.permute.xlu0 4
  %1832 = vperm.xlu0 %1831, %v472
  %v1833 = vpop.permute.xlu0 %1832
  %1834 = vset.pattern.permute.xlu0 4
  %1835 = vperm.xlu0 %1834, %v473
  %v1836 = vpop.permute.xlu0 %1835
  %1837 = vset.pattern.permute.xlu0 4
  %1838 = vperm.xlu0 %1837, %v474
  %v1839 = vpop.permute.xlu0 %1838
  %1840 = vset.pattern.permute.xlu0 4
  %1841 = vperm.xlu0 %1840, %v475
  %v1842 = vpop.permute.xlu0 %1841
  %1843 = vset.pattern.permute.xlu0 4
  %1844 = vperm.xlu0 %1843, %v476
  %v1845 = vpop.permute.xlu0 %1844
  %1846 = vset.pattern.permute.xlu0 4
  %1847 = vperm.xlu0 %1846, %v477
  %v1848 = vpop.permute.xlu0 %1847
  %vm1849 = vcmp.eq.s32.totalorder %v1827, 1
  %vm1850 = vcmp.eq.s32.totalorder %v1830, 1
  %vm1851 = vcmp.eq.s32.totalorder %v1833, 1
  %vm1852 = vcmp.eq.s32.totalorder %v1836, 1
  %vm1853 = vcmp.eq.s32.totalorder %v1839, 1
  %vm1854 = vcmp.eq.s32.totalorder %v1842, 1
  %vm1855 = vcmp.eq.s32.totalorder %v1845, 1
  %vm1856 = vcmp.eq.s32.totalorder %v1848, 1
  %1857 = vrot.lane.b32.xlu0 %v25, 116
  %v1858 = vpop.permute.xlu0 %1857
  %1859 = vrot.lane.b32.xlu0 %v26, 116
  %v1860 = vpop.permute.xlu0 %1859
  %1861 = vrot.lane.b32.xlu0 %v27, 116
  %v1862 = vpop.permute.xlu0 %1861
  %1863 = vrot.lane.b32.xlu0 %v28, 116
  %v1864 = vpop.permute.xlu0 %1863
  %1865 = vrot.lane.b32.xlu0 %v29, 116
  %v1866 = vpop.permute.xlu0 %1865
  %1867 = vrot.lane.b32.xlu0 %v30, 116
  %v1868 = vpop.permute.xlu0 %1867
  %1869 = vrot.lane.b32.xlu0 %v31, 116
  %v1870 = vpop.permute.xlu0 %1869
  %1871 = vrot.lane.b32.xlu0 %v32, 116
  %v1872 = vpop.permute.xlu0 %1871
  %v1881 = vsel %vm1849, %v25, %v1858
  %v1882 = vsel %vm1850, %v26, %v1860
  %v1883 = vsel %vm1851, %v27, %v1862
  %v1884 = vsel %vm1852, %v28, %v1864
  %v1885 = vsel %vm1853, %v29, %v1866
  %v1886 = vsel %vm1854, %v30, %v1868
  %v1887 = vsel %vm1855, %v31, %v1870
  %v1888 = vsel %vm1856, %v32, %v1872
  %v1889 = vsub.f32 %v1881, %v60
  %v1890 = vsub.f32 %v1882, %v62
  %v1891 = vsub.f32 %v1883, %v64
  %v1892 = vsub.f32 %v1884, %v66
  %v1893 = vsub.f32 %v1885, %v68
  %v1894 = vsub.f32 %v1886, %v70
  %v1895 = vsub.f32 %v1887, %v72
  %v1896 = vsub.f32 %v1888, %v74
  %v1897 = vmul.f32 %v1889, %v1889
  %v1898 = vmul.f32 %v1890, %v1890
  %v1899 = vmul.f32 %v1891, %v1891
  %v1900 = vmul.f32 %v1892, %v1892
  %v1901 = vmul.f32 %v1893, %v1893
  %v1902 = vmul.f32 %v1894, %v1894
  %v1903 = vmul.f32 %v1895, %v1895
  %v1904 = vmul.f32 %v1896, %v1896
  %1913 = vrot.lane.b32.xlu0 %v1897, 127
  %v1914 = vpop.permute.xlu0 %1913
  %1915 = vrot.lane.b32.xlu0 %v1898, 127
  %v1916 = vpop.permute.xlu0 %1915
  %1917 = vrot.lane.b32.xlu0 %v1899, 127
  %v1918 = vpop.permute.xlu0 %1917
  %1919 = vrot.lane.b32.xlu0 %v1900, 127
  %v1920 = vpop.permute.xlu0 %1919
  %1921 = vrot.lane.b32.xlu0 %v1901, 127
  %v1922 = vpop.permute.xlu0 %1921
  %1923 = vrot.lane.b32.xlu0 %v1902, 127
  %v1924 = vpop.permute.xlu0 %1923
  %1925 = vrot.lane.b32.xlu0 %v1903, 127
  %v1926 = vpop.permute.xlu0 %1925
  %1927 = vrot.lane.b32.xlu0 %v1904, 127
  %v1928 = vpop.permute.xlu0 %1927
  %v1937 = vadd.f32 %v1897, %v1914
  %v1938 = vadd.f32 %v1898, %v1916
  %v1939 = vadd.f32 %v1899, %v1918
  %v1940 = vadd.f32 %v1900, %v1920
  %v1941 = vadd.f32 %v1901, %v1922
  %v1942 = vadd.f32 %v1902, %v1924
  %v1943 = vadd.f32 %v1903, %v1926
  %v1944 = vadd.f32 %v1904, %v1928
  %1945 = vrot.lane.b32.xlu0 %v1897, 126
  %v1946 = vpop.permute.xlu0 %1945
  %1947 = vrot.lane.b32.xlu0 %v1898, 126
  %v1948 = vpop.permute.xlu0 %1947
  %1949 = vrot.lane.b32.xlu0 %v1899, 126
  %v1950 = vpop.permute.xlu0 %1949
  %1951 = vrot.lane.b32.xlu0 %v1900, 126
  %v1952 = vpop.permute.xlu0 %1951
  %1953 = vrot.lane.b32.xlu0 %v1901, 126
  %v1954 = vpop.permute.xlu0 %1953
  %1955 = vrot.lane.b32.xlu0 %v1902, 126
  %v1956 = vpop.permute.xlu0 %1955
  %1957 = vrot.lane.b32.xlu0 %v1903, 126
  %v1958 = vpop.permute.xlu0 %1957
  %1959 = vrot.lane.b32.xlu0 %v1904, 126
  %v1960 = vpop.permute.xlu0 %1959
  %v1969 = vadd.f32 %v1937, %v1946
  %v1970 = vadd.f32 %v1938, %v1948
  %v1971 = vadd.f32 %v1939, %v1950
  %v1972 = vadd.f32 %v1940, %v1952
  %v1973 = vadd.f32 %v1941, %v1954
  %v1974 = vadd.f32 %v1942, %v1956
  %v1975 = vadd.f32 %v1943, %v1958
  %v1976 = vadd.f32 %v1944, %v1960
  %v1977 = vrsqrt.pop %v1969
  %v1978 = vmul.f32 %v1977, %v1969
  %v1979 = vmul.f32 %v1978, %v1977
  %v1980 = vmul.f32 0.5, %v1979
  %v1981 = vsub.f32 1.5, %v1980
  %v1982 = vmul.f32 %v1977, %v1981
  %v1983 = vmul.f32 %v1969, %v1982
  %vm1984 = vcmp.eq.f32.partialorder %v1969, inf
  %v1985 = vsel %vm1984, %v1969, %v1983
  %vm1986 = vcmp.eq.f32.partialorder %v1969, 0.0
  %v1987 = vand.u32 %v1969, 2147483648
  %v1988 = vsel %vm1986, %v1987, %v1985
  %v1989 = vrsqrt.pop %v1970
  %v1990 = vmul.f32 %v1989, %v1970
  %v1991 = vmul.f32 %v1990, %v1989
  %v1992 = vmul.f32 0.5, %v1991
  %v1993 = vsub.f32 1.5, %v1992
  %v1994 = vmul.f32 %v1989, %v1993
  %v1995 = vmul.f32 %v1970, %v1994
  %vm1996 = vcmp.eq.f32.partialorder %v1970, inf
  %v1997 = vsel %vm1996, %v1970, %v1995
  %vm1998 = vcmp.eq.f32.partialorder %v1970, 0.0
  %v1999 = vand.u32 %v1970, 2147483648
  %v2000 = vsel %vm1998, %v1999, %v1997
  %v2001 = vrsqrt.pop %v1971
  %v2002 = vmul.f32 %v2001, %v1971
  %v2003 = vmul.f32 %v2002, %v2001
  %v2004 = vmul.f32 0.5, %v2003
  %v2005 = vsub.f32 1.5, %v2004
  %v2006 = vmul.f32 %v2001, %v2005
  %v2007 = vmul.f32 %v1971, %v2006
  %vm2008 = vcmp.eq.f32.partialorder %v1971, inf
  %v2009 = vsel %vm2008, %v1971, %v2007
  %vm2010 = vcmp.eq.f32.partialorder %v1971, 0.0
  %v2011 = vand.u32 %v1971, 2147483648
  %v2012 = vsel %vm2010, %v2011, %v2009
  %v2013 = vrsqrt.pop %v1972
  %v2014 = vmul.f32 %v2013, %v1972
  %v2015 = vmul.f32 %v2014, %v2013
  %v2016 = vmul.f32 0.5, %v2015
  %v2017 = vsub.f32 1.5, %v2016
  %v2018 = vmul.f32 %v2013, %v2017
  %v2019 = vmul.f32 %v1972, %v2018
  %vm2020 = vcmp.eq.f32.partialorder %v1972, inf
  %v2021 = vsel %vm2020, %v1972, %v2019
  %vm2022 = vcmp.eq.f32.partialorder %v1972, 0.0
  %v2023 = vand.u32 %v1972, 2147483648
  %v2024 = vsel %vm2022, %v2023, %v2021
  %v2025 = vrsqrt.pop %v1973
  %v2026 = vmul.f32 %v2025, %v1973
  %v2027 = vmul.f32 %v2026, %v2025
  %v2028 = vmul.f32 0.5, %v2027
  %v2029 = vsub.f32 1.5, %v2028
  %v2030 = vmul.f32 %v2025, %v2029
  %v2031 = vmul.f32 %v1973, %v2030
  %vm2032 = vcmp.eq.f32.partialorder %v1973, inf
  %v2033 = vsel %vm2032, %v1973, %v2031
  %vm2034 = vcmp.eq.f32.partialorder %v1973, 0.0
  %v2035 = vand.u32 %v1973, 2147483648
  %v2036 = vsel %vm2034, %v2035, %v2033
  %v2037 = vrsqrt.pop %v1974
  %v2038 = vmul.f32 %v2037, %v1974
  %v2039 = vmul.f32 %v2038, %v2037
  %v2040 = vmul.f32 0.5, %v2039
  %v2041 = vsub.f32 1.5, %v2040
  %v2042 = vmul.f32 %v2037, %v2041
  %v2043 = vmul.f32 %v1974, %v2042
  %vm2044 = vcmp.eq.f32.partialorder %v1974, inf
  %v2045 = vsel %vm2044, %v1974, %v2043
  %vm2046 = vcmp.eq.f32.partialorder %v1974, 0.0
  %v2047 = vand.u32 %v1974, 2147483648
  %v2048 = vsel %vm2046, %v2047, %v2045
  %v2049 = vrsqrt.pop %v1975
  %v2050 = vmul.f32 %v2049, %v1975
  %v2051 = vmul.f32 %v2050, %v2049
  %v2052 = vmul.f32 0.5, %v2051
  %v2053 = vsub.f32 1.5, %v2052
  %v2054 = vmul.f32 %v2049, %v2053
  %v2055 = vmul.f32 %v1975, %v2054
  %vm2056 = vcmp.eq.f32.partialorder %v1975, inf
  %v2057 = vsel %vm2056, %v1975, %v2055
  %vm2058 = vcmp.eq.f32.partialorder %v1975, 0.0
  %v2059 = vand.u32 %v1975, 2147483648
  %v2060 = vsel %vm2058, %v2059, %v2057
  %v2061 = vrsqrt.pop %v1976
  %v2062 = vmul.f32 %v2061, %v1976
  %v2063 = vmul.f32 %v2062, %v2061
  %v2064 = vmul.f32 0.5, %v2063
  %v2065 = vsub.f32 1.5, %v2064
  %v2066 = vmul.f32 %v2061, %v2065
  %v2067 = vmul.f32 %v1976, %v2066
  %vm2068 = vcmp.eq.f32.partialorder %v1976, inf
  %v2069 = vsel %vm2068, %v1976, %v2067
  %vm2070 = vcmp.eq.f32.partialorder %v1976, 0.0
  %v2071 = vand.u32 %v1976, 2147483648
  %v2072 = vsel %vm2070, %v2071, %v2069
  %2074 = vset.pattern.permute.xlu0 0
  %2075 = vperm.xlu0 %2074, %v1988
  %v2076 = vpop.permute.xlu0 %2075
  %2079 = vset.pattern.permute.xlu0 0
  %2080 = vperm.xlu0 %2079, %v2000
  %v2081 = vpop.permute.xlu0 %2080
  %2084 = vset.pattern.permute.xlu0 0
  %2085 = vperm.xlu0 %2084, %v2012
  %v2086 = vpop.permute.xlu0 %2085
  %2089 = vset.pattern.permute.xlu0 0
  %2090 = vperm.xlu0 %2089, %v2024
  %v2091 = vpop.permute.xlu0 %2090
  %2094 = vset.pattern.permute.xlu0 0
  %2095 = vperm.xlu0 %2094, %v2036
  %v2096 = vpop.permute.xlu0 %2095
  %2099 = vset.pattern.permute.xlu0 0
  %2100 = vperm.xlu0 %2099, %v2048
  %v2101 = vpop.permute.xlu0 %2100
  %2104 = vset.pattern.permute.xlu0 0
  %2105 = vperm.xlu0 %2104, %v2060
  %v2106 = vpop.permute.xlu0 %2105
  %2109 = vset.pattern.permute.xlu0 0
  %2110 = vperm.xlu0 %2109, %v2072
  %v2111 = vpop.permute.xlu0 %2110
  %v2113 = vmul.f32 %v2076, %v370
  %v2114 = vmul.f32 %v2081, %v370
  %v2115 = vmul.f32 %v2086, %v370
  %v2116 = vmul.f32 %v2091, %v370
  %v2117 = vmul.f32 %v2096, %v370
  %v2118 = vmul.f32 %v2101, %v370
  %v2119 = vmul.f32 %v2106, %v370
  %v2120 = vmul.f32 %v2111, %v370
  %v2122 = vsel %vm77, %v1881, 0
  %v2125 = vsel %vm77, %v1882, 0
  %v2128 = vsel %vm77, %v1883, 0
  %v2131 = vsel %vm77, %v1884, 0
  %v2134 = vsel %vm77, %v1885, 0
  %v2137 = vsel %vm77, %v1886, 0
  %v2140 = vsel %vm77, %v1887, 0
  %v2143 = vsel %vm77, %v1888, 0
  %2145 = vmatpush.msra.mxu0 0.0
  %2146 = vmatpush.msra.mxu0 0.0
  %2147 = vmatpush.msra.mxu0 0.0
  %2148 = vmatpush.msra.mxu0 0.0
  %2149 = vmatpush.msra.mxu0 0.0
  %2150 = vmatpush.msra.mxu0 0.0
  %2151 = vmatpush.msra.mxu0 0.0
  %2152 = vmatpush.msra.mxu0 0.0
  %2153 = vmatpush.msra.mxu0 0.0
  %2154 = vmatpush.msra.mxu0 0.0
  %2155 = vmatpush.msra.mxu0 0.0
  %2156 = vmatpush.msra.mxu0 0.0
  %2157 = vmatpush.msra.mxu0 0.0
  %2158 = vmatpush.msra.mxu0 0.0
  %2159 = vmatpush.msra.mxu0 0.0
  %2160 = vmatpush.msra.mxu0 %v395
  %2161 = vmatmul.f32.gmra.mxu0 %v2122
  %v2162 = vpop.f32.mrf.mxu0
  %v2163 = vadd.f32 %v2113, %v2162
  %2164 = vmatmul.f32.gmra.mxu0 %v2125
  %v2165 = vpop.f32.mrf.mxu0
  %v2166 = vadd.f32 %v2114, %v2165
  %2167 = vmatmul.f32.gmra.mxu0 %v2128
  %v2168 = vpop.f32.mrf.mxu0
  %v2169 = vadd.f32 %v2115, %v2168
  %2170 = vmatmul.f32.gmra.mxu0 %v2131
  %v2171 = vpop.f32.mrf.mxu0
  %v2172 = vadd.f32 %v2116, %v2171
  %2173 = vmatmul.f32.gmra.mxu0 %v2134
  %v2174 = vpop.f32.mrf.mxu0
  %v2175 = vadd.f32 %v2117, %v2174
  %2176 = vmatmul.f32.gmra.mxu0 %v2137
  %v2177 = vpop.f32.mrf.mxu0
  %v2178 = vadd.f32 %v2118, %v2177
  %2179 = vmatmul.f32.gmra.mxu0 %v2140
  %v2180 = vpop.f32.mrf.mxu0
  %v2181 = vadd.f32 %v2119, %v2180
  %2182 = vmatmul.f32.gmra.mxu0 %v2143
  %v2183 = vpop.f32.mrf.mxu0
  %v2184 = vadd.f32 %v2120, %v2183
  %2185 = vdwg.mxu0
  %v2186 = vadd.f32 %v2163, %v115
  %v2187 = vadd.f32 %v2166, %v118
  %v2188 = vadd.f32 %v2169, %v121
  %v2189 = vadd.f32 %v2172, %v124
  %v2190 = vadd.f32 %v2175, %v127
  %v2191 = vadd.f32 %v2178, %v130
  %v2192 = vadd.f32 %v2181, %v133
  %v2193 = vadd.f32 %v2184, %v136
  %v2194 = vmul.f32 %v34, %v2186
  %v2195 = vmul.f32 %v36, %v2187
  %v2196 = vmul.f32 %v38, %v2188
  %v2197 = vmul.f32 %v40, %v2189
  %v2198 = vmul.f32 %v42, %v2190
  %v2199 = vmul.f32 %v44, %v2191
  %v2200 = vmul.f32 %v46, %v2192
  %v2201 = vmul.f32 %v48, %v2193
  %v2202 = vadd.f32 %v1817, %v2194
  %v2203 = vadd.f32 %v1818, %v2195
  %v2204 = vadd.f32 %v1819, %v2196
  %v2205 = vadd.f32 %v1820, %v2197
  %v2206 = vadd.f32 %v1821, %v2198
  %v2207 = vadd.f32 %v1822, %v2199
  %v2208 = vadd.f32 %v1823, %v2200
  %v2209 = vadd.f32 %v1824, %v2201
  %2210 = vset.pattern.permute.xlu0 5
  %2211 = vperm.xlu0 %2210, %v470
  %v2212 = vpop.permute.xlu0 %2211
  %2213 = vset.pattern.permute.xlu0 5
  %2214 = vperm.xlu0 %2213, %v471
  %v2215 = vpop.permute.xlu0 %2214
  %2216 = vset.pattern.permute.xlu0 5
  %2217 = vperm.xlu0 %2216, %v472
  %v2218 = vpop.permute.xlu0 %2217
  %2219 = vset.pattern.permute.xlu0 5
  %2220 = vperm.xlu0 %2219, %v473
  %v2221 = vpop.permute.xlu0 %2220
  %2222 = vset.pattern.permute.xlu0 5
  %2223 = vperm.xlu0 %2222, %v474
  %v2224 = vpop.permute.xlu0 %2223
  %2225 = vset.pattern.permute.xlu0 5
  %2226 = vperm.xlu0 %2225, %v475
  %v2227 = vpop.permute.xlu0 %2226
  %2228 = vset.pattern.permute.xlu0 5
  %2229 = vperm.xlu0 %2228, %v476
  %v2230 = vpop.permute.xlu0 %2229
  %2231 = vset.pattern.permute.xlu0 5
  %2232 = vperm.xlu0 %2231, %v477
  %v2233 = vpop.permute.xlu0 %2232
  %vm2234 = vcmp.eq.s32.totalorder %v2212, 1
  %vm2235 = vcmp.eq.s32.totalorder %v2215, 1
  %vm2236 = vcmp.eq.s32.totalorder %v2218, 1
  %vm2237 = vcmp.eq.s32.totalorder %v2221, 1
  %vm2238 = vcmp.eq.s32.totalorder %v2224, 1
  %vm2239 = vcmp.eq.s32.totalorder %v2227, 1
  %vm2240 = vcmp.eq.s32.totalorder %v2230, 1
  %vm2241 = vcmp.eq.s32.totalorder %v2233, 1
  %2242 = vrot.lane.b32.xlu0 %v25, 113
  %v2243 = vpop.permute.xlu0 %2242
  %2244 = vrot.lane.b32.xlu0 %v26, 113
  %v2245 = vpop.permute.xlu0 %2244
  %2246 = vrot.lane.b32.xlu0 %v27, 113
  %v2247 = vpop.permute.xlu0 %2246
  %2248 = vrot.lane.b32.xlu0 %v28, 113
  %v2249 = vpop.permute.xlu0 %2248
  %2250 = vrot.lane.b32.xlu0 %v29, 113
  %v2251 = vpop.permute.xlu0 %2250
  %2252 = vrot.lane.b32.xlu0 %v30, 113
  %v2253 = vpop.permute.xlu0 %2252
  %2254 = vrot.lane.b32.xlu0 %v31, 113
  %v2255 = vpop.permute.xlu0 %2254
  %2256 = vrot.lane.b32.xlu0 %v32, 113
  %v2257 = vpop.permute.xlu0 %2256
  %v2266 = vsel %vm2234, %v25, %v2243
  %v2267 = vsel %vm2235, %v26, %v2245
  %v2268 = vsel %vm2236, %v27, %v2247
  %v2269 = vsel %vm2237, %v28, %v2249
  %v2270 = vsel %vm2238, %v29, %v2251
  %v2271 = vsel %vm2239, %v30, %v2253
  %v2272 = vsel %vm2240, %v31, %v2255
  %v2273 = vsel %vm2241, %v32, %v2257
  %v2274 = vsub.f32 %v2266, %v60
  %v2275 = vsub.f32 %v2267, %v62
  %v2276 = vsub.f32 %v2268, %v64
  %v2277 = vsub.f32 %v2269, %v66
  %v2278 = vsub.f32 %v2270, %v68
  %v2279 = vsub.f32 %v2271, %v70
  %v2280 = vsub.f32 %v2272, %v72
  %v2281 = vsub.f32 %v2273, %v74
  %v2282 = vmul.f32 %v2274, %v2274
  %v2283 = vmul.f32 %v2275, %v2275
  %v2284 = vmul.f32 %v2276, %v2276
  %v2285 = vmul.f32 %v2277, %v2277
  %v2286 = vmul.f32 %v2278, %v2278
  %v2287 = vmul.f32 %v2279, %v2279
  %v2288 = vmul.f32 %v2280, %v2280
  %v2289 = vmul.f32 %v2281, %v2281
  %2298 = vrot.lane.b32.xlu0 %v2282, 127
  %v2299 = vpop.permute.xlu0 %2298
  %2300 = vrot.lane.b32.xlu0 %v2283, 127
  %v2301 = vpop.permute.xlu0 %2300
  %2302 = vrot.lane.b32.xlu0 %v2284, 127
  %v2303 = vpop.permute.xlu0 %2302
  %2304 = vrot.lane.b32.xlu0 %v2285, 127
  %v2305 = vpop.permute.xlu0 %2304
  %2306 = vrot.lane.b32.xlu0 %v2286, 127
  %v2307 = vpop.permute.xlu0 %2306
  %2308 = vrot.lane.b32.xlu0 %v2287, 127
  %v2309 = vpop.permute.xlu0 %2308
  %2310 = vrot.lane.b32.xlu0 %v2288, 127
  %v2311 = vpop.permute.xlu0 %2310
  %2312 = vrot.lane.b32.xlu0 %v2289, 127
  %v2313 = vpop.permute.xlu0 %2312
  %v2322 = vadd.f32 %v2282, %v2299
  %v2323 = vadd.f32 %v2283, %v2301
  %v2324 = vadd.f32 %v2284, %v2303
  %v2325 = vadd.f32 %v2285, %v2305
  %v2326 = vadd.f32 %v2286, %v2307
  %v2327 = vadd.f32 %v2287, %v2309
  %v2328 = vadd.f32 %v2288, %v2311
  %v2329 = vadd.f32 %v2289, %v2313
  %2330 = vrot.lane.b32.xlu0 %v2282, 126
  %v2331 = vpop.permute.xlu0 %2330
  %2332 = vrot.lane.b32.xlu0 %v2283, 126
  %v2333 = vpop.permute.xlu0 %2332
  %2334 = vrot.lane.b32.xlu0 %v2284, 126
  %v2335 = vpop.permute.xlu0 %2334
  %2336 = vrot.lane.b32.xlu0 %v2285, 126
  %v2337 = vpop.permute.xlu0 %2336
  %2338 = vrot.lane.b32.xlu0 %v2286, 126
  %v2339 = vpop.permute.xlu0 %2338
  %2340 = vrot.lane.b32.xlu0 %v2287, 126
  %v2341 = vpop.permute.xlu0 %2340
  %2342 = vrot.lane.b32.xlu0 %v2288, 126
  %v2343 = vpop.permute.xlu0 %2342
  %2344 = vrot.lane.b32.xlu0 %v2289, 126
  %v2345 = vpop.permute.xlu0 %2344
  %v2354 = vadd.f32 %v2322, %v2331
  %v2355 = vadd.f32 %v2323, %v2333
  %v2356 = vadd.f32 %v2324, %v2335
  %v2357 = vadd.f32 %v2325, %v2337
  %v2358 = vadd.f32 %v2326, %v2339
  %v2359 = vadd.f32 %v2327, %v2341
  %v2360 = vadd.f32 %v2328, %v2343
  %v2361 = vadd.f32 %v2329, %v2345
  %v2362 = vrsqrt.pop %v2354
  %v2363 = vmul.f32 %v2362, %v2354
  %v2364 = vmul.f32 %v2363, %v2362
  %v2365 = vmul.f32 0.5, %v2364
  %v2366 = vsub.f32 1.5, %v2365
  %v2367 = vmul.f32 %v2362, %v2366
  %v2368 = vmul.f32 %v2354, %v2367
  %vm2369 = vcmp.eq.f32.partialorder %v2354, inf
  %v2370 = vsel %vm2369, %v2354, %v2368
  %vm2371 = vcmp.eq.f32.partialorder %v2354, 0.0
  %v2372 = vand.u32 %v2354, 2147483648
  %v2373 = vsel %vm2371, %v2372, %v2370
  %v2374 = vrsqrt.pop %v2355
  %v2375 = vmul.f32 %v2374, %v2355
  %v2376 = vmul.f32 %v2375, %v2374
  %v2377 = vmul.f32 0.5, %v2376
  %v2378 = vsub.f32 1.5, %v2377
  %v2379 = vmul.f32 %v2374, %v2378
  %v2380 = vmul.f32 %v2355, %v2379
  %vm2381 = vcmp.eq.f32.partialorder %v2355, inf
  %v2382 = vsel %vm2381, %v2355, %v2380
  %vm2383 = vcmp.eq.f32.partialorder %v2355, 0.0
  %v2384 = vand.u32 %v2355, 2147483648
  %v2385 = vsel %vm2383, %v2384, %v2382
  %v2386 = vrsqrt.pop %v2356
  %v2387 = vmul.f32 %v2386, %v2356
  %v2388 = vmul.f32 %v2387, %v2386
  %v2389 = vmul.f32 0.5, %v2388
  %v2390 = vsub.f32 1.5, %v2389
  %v2391 = vmul.f32 %v2386, %v2390
  %v2392 = vmul.f32 %v2356, %v2391
  %vm2393 = vcmp.eq.f32.partialorder %v2356, inf
  %v2394 = vsel %vm2393, %v2356, %v2392
  %vm2395 = vcmp.eq.f32.partialorder %v2356, 0.0
  %v2396 = vand.u32 %v2356, 2147483648
  %v2397 = vsel %vm2395, %v2396, %v2394
  %v2398 = vrsqrt.pop %v2357
  %v2399 = vmul.f32 %v2398, %v2357
  %v2400 = vmul.f32 %v2399, %v2398
  %v2401 = vmul.f32 0.5, %v2400
  %v2402 = vsub.f32 1.5, %v2401
  %v2403 = vmul.f32 %v2398, %v2402
  %v2404 = vmul.f32 %v2357, %v2403
  %vm2405 = vcmp.eq.f32.partialorder %v2357, inf
  %v2406 = vsel %vm2405, %v2357, %v2404
  %vm2407 = vcmp.eq.f32.partialorder %v2357, 0.0
  %v2408 = vand.u32 %v2357, 2147483648
  %v2409 = vsel %vm2407, %v2408, %v2406
  %v2410 = vrsqrt.pop %v2358
  %v2411 = vmul.f32 %v2410, %v2358
  %v2412 = vmul.f32 %v2411, %v2410
  %v2413 = vmul.f32 0.5, %v2412
  %v2414 = vsub.f32 1.5, %v2413
  %v2415 = vmul.f32 %v2410, %v2414
  %v2416 = vmul.f32 %v2358, %v2415
  %vm2417 = vcmp.eq.f32.partialorder %v2358, inf
  %v2418 = vsel %vm2417, %v2358, %v2416
  %vm2419 = vcmp.eq.f32.partialorder %v2358, 0.0
  %v2420 = vand.u32 %v2358, 2147483648
  %v2421 = vsel %vm2419, %v2420, %v2418
  %v2422 = vrsqrt.pop %v2359
  %v2423 = vmul.f32 %v2422, %v2359
  %v2424 = vmul.f32 %v2423, %v2422
  %v2425 = vmul.f32 0.5, %v2424
  %v2426 = vsub.f32 1.5, %v2425
  %v2427 = vmul.f32 %v2422, %v2426
  %v2428 = vmul.f32 %v2359, %v2427
  %vm2429 = vcmp.eq.f32.partialorder %v2359, inf
  %v2430 = vsel %vm2429, %v2359, %v2428
  %vm2431 = vcmp.eq.f32.partialorder %v2359, 0.0
  %v2432 = vand.u32 %v2359, 2147483648
  %v2433 = vsel %vm2431, %v2432, %v2430
  %v2434 = vrsqrt.pop %v2360
  %v2435 = vmul.f32 %v2434, %v2360
  %v2436 = vmul.f32 %v2435, %v2434
  %v2437 = vmul.f32 0.5, %v2436
  %v2438 = vsub.f32 1.5, %v2437
  %v2439 = vmul.f32 %v2434, %v2438
  %v2440 = vmul.f32 %v2360, %v2439
  %vm2441 = vcmp.eq.f32.partialorder %v2360, inf
  %v2442 = vsel %vm2441, %v2360, %v2440
  %vm2443 = vcmp.eq.f32.partialorder %v2360, 0.0
  %v2444 = vand.u32 %v2360, 2147483648
  %v2445 = vsel %vm2443, %v2444, %v2442
  %v2446 = vrsqrt.pop %v2361
  %v2447 = vmul.f32 %v2446, %v2361
  %v2448 = vmul.f32 %v2447, %v2446
  %v2449 = vmul.f32 0.5, %v2448
  %v2450 = vsub.f32 1.5, %v2449
  %v2451 = vmul.f32 %v2446, %v2450
  %v2452 = vmul.f32 %v2361, %v2451
  %vm2453 = vcmp.eq.f32.partialorder %v2361, inf
  %v2454 = vsel %vm2453, %v2361, %v2452
  %vm2455 = vcmp.eq.f32.partialorder %v2361, 0.0
  %v2456 = vand.u32 %v2361, 2147483648
  %v2457 = vsel %vm2455, %v2456, %v2454
  %2459 = vset.pattern.permute.xlu0 0
  %2460 = vperm.xlu0 %2459, %v2373
  %v2461 = vpop.permute.xlu0 %2460
  %2464 = vset.pattern.permute.xlu0 0
  %2465 = vperm.xlu0 %2464, %v2385
  %v2466 = vpop.permute.xlu0 %2465
  %2469 = vset.pattern.permute.xlu0 0
  %2470 = vperm.xlu0 %2469, %v2397
  %v2471 = vpop.permute.xlu0 %2470
  %2474 = vset.pattern.permute.xlu0 0
  %2475 = vperm.xlu0 %2474, %v2409
  %v2476 = vpop.permute.xlu0 %2475
  %2479 = vset.pattern.permute.xlu0 0
  %2480 = vperm.xlu0 %2479, %v2421
  %v2481 = vpop.permute.xlu0 %2480
  %2484 = vset.pattern.permute.xlu0 0
  %2485 = vperm.xlu0 %2484, %v2433
  %v2486 = vpop.permute.xlu0 %2485
  %2489 = vset.pattern.permute.xlu0 0
  %2490 = vperm.xlu0 %2489, %v2445
  %v2491 = vpop.permute.xlu0 %2490
  %2494 = vset.pattern.permute.xlu0 0
  %2495 = vperm.xlu0 %2494, %v2457
  %v2496 = vpop.permute.xlu0 %2495
  %v2498 = vmul.f32 %v2461, %v370
  %v2499 = vmul.f32 %v2466, %v370
  %v2500 = vmul.f32 %v2471, %v370
  %v2501 = vmul.f32 %v2476, %v370
  %v2502 = vmul.f32 %v2481, %v370
  %v2503 = vmul.f32 %v2486, %v370
  %v2504 = vmul.f32 %v2491, %v370
  %v2505 = vmul.f32 %v2496, %v370
  %v2507 = vsel %vm77, %v2266, 0
  %v2510 = vsel %vm77, %v2267, 0
  %v2513 = vsel %vm77, %v2268, 0
  %v2516 = vsel %vm77, %v2269, 0
  %v2519 = vsel %vm77, %v2270, 0
  %v2522 = vsel %vm77, %v2271, 0
  %v2525 = vsel %vm77, %v2272, 0
  %v2528 = vsel %vm77, %v2273, 0
  %2530 = vmatpush.msra.mxu0 0.0
  %2531 = vmatpush.msra.mxu0 0.0
  %2532 = vmatpush.msra.mxu0 0.0
  %2533 = vmatpush.msra.mxu0 0.0
  %2534 = vmatpush.msra.mxu0 0.0
  %2535 = vmatpush.msra.mxu0 0.0
  %2536 = vmatpush.msra.mxu0 0.0
  %2537 = vmatpush.msra.mxu0 0.0
  %2538 = vmatpush.msra.mxu0 0.0
  %2539 = vmatpush.msra.mxu0 0.0
  %2540 = vmatpush.msra.mxu0 0.0
  %2541 = vmatpush.msra.mxu0 0.0
  %2542 = vmatpush.msra.mxu0 0.0
  %2543 = vmatpush.msra.mxu0 0.0
  %2544 = vmatpush.msra.mxu0 0.0
  %2545 = vmatpush.msra.mxu0 %v395
  %2546 = vmatmul.f32.gmra.mxu0 %v2507
  %v2547 = vpop.f32.mrf.mxu0
  %v2548 = vadd.f32 %v2498, %v2547
  %2549 = vmatmul.f32.gmra.mxu0 %v2510
  %v2550 = vpop.f32.mrf.mxu0
  %v2551 = vadd.f32 %v2499, %v2550
  %2552 = vmatmul.f32.gmra.mxu0 %v2513
  %v2553 = vpop.f32.mrf.mxu0
  %v2554 = vadd.f32 %v2500, %v2553
  %2555 = vmatmul.f32.gmra.mxu0 %v2516
  %v2556 = vpop.f32.mrf.mxu0
  %v2557 = vadd.f32 %v2501, %v2556
  %2558 = vmatmul.f32.gmra.mxu0 %v2519
  %v2559 = vpop.f32.mrf.mxu0
  %v2560 = vadd.f32 %v2502, %v2559
  %2561 = vmatmul.f32.gmra.mxu0 %v2522
  %v2562 = vpop.f32.mrf.mxu0
  %v2563 = vadd.f32 %v2503, %v2562
  %2564 = vmatmul.f32.gmra.mxu0 %v2525
  %v2565 = vpop.f32.mrf.mxu0
  %v2566 = vadd.f32 %v2504, %v2565
  %2567 = vmatmul.f32.gmra.mxu0 %v2528
  %v2568 = vpop.f32.mrf.mxu0
  %v2569 = vadd.f32 %v2505, %v2568
  %2570 = vdwg.mxu0
  %v2571 = vadd.f32 %v2548, %v115
  %v2572 = vadd.f32 %v2551, %v118
  %v2573 = vadd.f32 %v2554, %v121
  %v2574 = vadd.f32 %v2557, %v124
  %v2575 = vadd.f32 %v2560, %v127
  %v2576 = vadd.f32 %v2563, %v130
  %v2577 = vadd.f32 %v2566, %v133
  %v2578 = vadd.f32 %v2569, %v136
  %2587 = vrot.lane.b32.xlu0 %v2571, 32
  %v2588 = vpop.permute.xlu0 %2587
  %2589 = vrot.lane.b32.xlu0 %v2572, 32
  %v2590 = vpop.permute.xlu0 %2589
  %2591 = vrot.lane.b32.xlu0 %v2573, 32
  %v2592 = vpop.permute.xlu0 %2591
  %2593 = vrot.lane.b32.xlu0 %v2574, 32
  %v2594 = vpop.permute.xlu0 %2593
  %2595 = vrot.lane.b32.xlu0 %v2575, 32
  %v2596 = vpop.permute.xlu0 %2595
  %2597 = vrot.lane.b32.xlu0 %v2576, 32
  %v2598 = vpop.permute.xlu0 %2597
  %2599 = vrot.lane.b32.xlu0 %v2577, 32
  %v2600 = vpop.permute.xlu0 %2599
  %2601 = vrot.lane.b32.xlu0 %v2578, 32
  %v2602 = vpop.permute.xlu0 %2601
  %v2611 = vmul.f32 %v34, %v2588
  %v2612 = vmul.f32 %v36, %v2590
  %v2613 = vmul.f32 %v38, %v2592
  %v2614 = vmul.f32 %v40, %v2594
  %v2615 = vmul.f32 %v42, %v2596
  %v2616 = vmul.f32 %v44, %v2598
  %v2617 = vmul.f32 %v46, %v2600
  %v2618 = vmul.f32 %v48, %v2602
  %2627 = vrot.lane.b32.xlu0 %v2611, 96
  %v2628 = vpop.permute.xlu0 %2627
  %2629 = vrot.lane.b32.xlu0 %v2612, 96
  %v2630 = vpop.permute.xlu0 %2629
  %2631 = vrot.lane.b32.xlu0 %v2613, 96
  %v2632 = vpop.permute.xlu0 %2631
  %2633 = vrot.lane.b32.xlu0 %v2614, 96
  %v2634 = vpop.permute.xlu0 %2633
  %2635 = vrot.lane.b32.xlu0 %v2615, 96
  %v2636 = vpop.permute.xlu0 %2635
  %2637 = vrot.lane.b32.xlu0 %v2616, 96
  %v2638 = vpop.permute.xlu0 %2637
  %2639 = vrot.lane.b32.xlu0 %v2617, 96
  %v2640 = vpop.permute.xlu0 %2639
  %2641 = vrot.lane.b32.xlu0 %v2618, 96
  %v2642 = vpop.permute.xlu0 %2641
  %v2651 = vadd.f32 %v2202, %v2628
  %v2652 = vadd.f32 %v2203, %v2630
  %v2653 = vadd.f32 %v2204, %v2632
  %v2654 = vadd.f32 %v2205, %v2634
  %v2655 = vadd.f32 %v2206, %v2636
  %v2656 = vadd.f32 %v2207, %v2638
  %v2657 = vadd.f32 %v2208, %v2640
  %v2658 = vadd.f32 %v2209, %v2642
  %2659 = vset.pattern.permute.xlu0 6
  %2660 = vperm.xlu0 %2659, %v470
  %v2661 = vpop.permute.xlu0 %2660
  %2662 = vset.pattern.permute.xlu0 6
  %2663 = vperm.xlu0 %2662, %v471
  %v2664 = vpop.permute.xlu0 %2663
  %2665 = vset.pattern.permute.xlu0 6
  %2666 = vperm.xlu0 %2665, %v472
  %v2667 = vpop.permute.xlu0 %2666
  %2668 = vset.pattern.permute.xlu0 6
  %2669 = vperm.xlu0 %2668, %v473
  %v2670 = vpop.permute.xlu0 %2669
  %2671 = vset.pattern.permute.xlu0 6
  %2672 = vperm.xlu0 %2671, %v474
  %v2673 = vpop.permute.xlu0 %2672
  %2674 = vset.pattern.permute.xlu0 6
  %2675 = vperm.xlu0 %2674, %v475
  %v2676 = vpop.permute.xlu0 %2675
  %2677 = vset.pattern.permute.xlu0 6
  %2678 = vperm.xlu0 %2677, %v476
  %v2679 = vpop.permute.xlu0 %2678
  %2680 = vset.pattern.permute.xlu0 6
  %2681 = vperm.xlu0 %2680, %v477
  %v2682 = vpop.permute.xlu0 %2681
  %vm2683 = vcmp.eq.s32.totalorder %v2661, 1
  %vm2684 = vcmp.eq.s32.totalorder %v2664, 1
  %vm2685 = vcmp.eq.s32.totalorder %v2667, 1
  %vm2686 = vcmp.eq.s32.totalorder %v2670, 1
  %vm2687 = vcmp.eq.s32.totalorder %v2673, 1
  %vm2688 = vcmp.eq.s32.totalorder %v2676, 1
  %vm2689 = vcmp.eq.s32.totalorder %v2679, 1
  %vm2690 = vcmp.eq.s32.totalorder %v2682, 1
  %2691 = vrot.lane.b32.xlu0 %v25, 110
  %v2692 = vpop.permute.xlu0 %2691
  %2693 = vrot.lane.b32.xlu0 %v26, 110
  %v2694 = vpop.permute.xlu0 %2693
  %2695 = vrot.lane.b32.xlu0 %v27, 110
  %v2696 = vpop.permute.xlu0 %2695
  %2697 = vrot.lane.b32.xlu0 %v28, 110
  %v2698 = vpop.permute.xlu0 %2697
  %2699 = vrot.lane.b32.xlu0 %v29, 110
  %v2700 = vpop.permute.xlu0 %2699
  %2701 = vrot.lane.b32.xlu0 %v30, 110
  %v2702 = vpop.permute.xlu0 %2701
  %2703 = vrot.lane.b32.xlu0 %v31, 110
  %v2704 = vpop.permute.xlu0 %2703
  %2705 = vrot.lane.b32.xlu0 %v32, 110
  %v2706 = vpop.permute.xlu0 %2705
  %v2715 = vsel %vm2683, %v25, %v2692
  %v2716 = vsel %vm2684, %v26, %v2694
  %v2717 = vsel %vm2685, %v27, %v2696
  %v2718 = vsel %vm2686, %v28, %v2698
  %v2719 = vsel %vm2687, %v29, %v2700
  %v2720 = vsel %vm2688, %v30, %v2702
  %v2721 = vsel %vm2689, %v31, %v2704
  %v2722 = vsel %vm2690, %v32, %v2706
  %v2723 = vsub.f32 %v2715, %v60
  %v2724 = vsub.f32 %v2716, %v62
  %v2725 = vsub.f32 %v2717, %v64
  %v2726 = vsub.f32 %v2718, %v66
  %v2727 = vsub.f32 %v2719, %v68
  %v2728 = vsub.f32 %v2720, %v70
  %v2729 = vsub.f32 %v2721, %v72
  %v2730 = vsub.f32 %v2722, %v74
  %v2731 = vmul.f32 %v2723, %v2723
  %v2732 = vmul.f32 %v2724, %v2724
  %v2733 = vmul.f32 %v2725, %v2725
  %v2734 = vmul.f32 %v2726, %v2726
  %v2735 = vmul.f32 %v2727, %v2727
  %v2736 = vmul.f32 %v2728, %v2728
  %v2737 = vmul.f32 %v2729, %v2729
  %v2738 = vmul.f32 %v2730, %v2730
  %2747 = vrot.lane.b32.xlu0 %v2731, 127
  %v2748 = vpop.permute.xlu0 %2747
  %2749 = vrot.lane.b32.xlu0 %v2732, 127
  %v2750 = vpop.permute.xlu0 %2749
  %2751 = vrot.lane.b32.xlu0 %v2733, 127
  %v2752 = vpop.permute.xlu0 %2751
  %2753 = vrot.lane.b32.xlu0 %v2734, 127
  %v2754 = vpop.permute.xlu0 %2753
  %2755 = vrot.lane.b32.xlu0 %v2735, 127
  %v2756 = vpop.permute.xlu0 %2755
  %2757 = vrot.lane.b32.xlu0 %v2736, 127
  %v2758 = vpop.permute.xlu0 %2757
  %2759 = vrot.lane.b32.xlu0 %v2737, 127
  %v2760 = vpop.permute.xlu0 %2759
  %2761 = vrot.lane.b32.xlu0 %v2738, 127
  %v2762 = vpop.permute.xlu0 %2761
  %v2771 = vadd.f32 %v2731, %v2748
  %v2772 = vadd.f32 %v2732, %v2750
  %v2773 = vadd.f32 %v2733, %v2752
  %v2774 = vadd.f32 %v2734, %v2754
  %v2775 = vadd.f32 %v2735, %v2756
  %v2776 = vadd.f32 %v2736, %v2758
  %v2777 = vadd.f32 %v2737, %v2760
  %v2778 = vadd.f32 %v2738, %v2762
  %2779 = vrot.lane.b32.xlu0 %v2731, 126
  %v2780 = vpop.permute.xlu0 %2779
  %2781 = vrot.lane.b32.xlu0 %v2732, 126
  %v2782 = vpop.permute.xlu0 %2781
  %2783 = vrot.lane.b32.xlu0 %v2733, 126
  %v2784 = vpop.permute.xlu0 %2783
  %2785 = vrot.lane.b32.xlu0 %v2734, 126
  %v2786 = vpop.permute.xlu0 %2785
  %2787 = vrot.lane.b32.xlu0 %v2735, 126
  %v2788 = vpop.permute.xlu0 %2787
  %2789 = vrot.lane.b32.xlu0 %v2736, 126
  %v2790 = vpop.permute.xlu0 %2789
  %2791 = vrot.lane.b32.xlu0 %v2737, 126
  %v2792 = vpop.permute.xlu0 %2791
  %2793 = vrot.lane.b32.xlu0 %v2738, 126
  %v2794 = vpop.permute.xlu0 %2793
  %v2803 = vadd.f32 %v2771, %v2780
  %v2804 = vadd.f32 %v2772, %v2782
  %v2805 = vadd.f32 %v2773, %v2784
  %v2806 = vadd.f32 %v2774, %v2786
  %v2807 = vadd.f32 %v2775, %v2788
  %v2808 = vadd.f32 %v2776, %v2790
  %v2809 = vadd.f32 %v2777, %v2792
  %v2810 = vadd.f32 %v2778, %v2794
  %v2811 = vrsqrt.pop %v2803
  %v2812 = vmul.f32 %v2811, %v2803
  %v2813 = vmul.f32 %v2812, %v2811
  %v2814 = vmul.f32 0.5, %v2813
  %v2815 = vsub.f32 1.5, %v2814
  %v2816 = vmul.f32 %v2811, %v2815
  %v2817 = vmul.f32 %v2803, %v2816
  %vm2818 = vcmp.eq.f32.partialorder %v2803, inf
  %v2819 = vsel %vm2818, %v2803, %v2817
  %vm2820 = vcmp.eq.f32.partialorder %v2803, 0.0
  %v2821 = vand.u32 %v2803, 2147483648
  %v2822 = vsel %vm2820, %v2821, %v2819
  %v2823 = vrsqrt.pop %v2804
  %v2824 = vmul.f32 %v2823, %v2804
  %v2825 = vmul.f32 %v2824, %v2823
  %v2826 = vmul.f32 0.5, %v2825
  %v2827 = vsub.f32 1.5, %v2826
  %v2828 = vmul.f32 %v2823, %v2827
  %v2829 = vmul.f32 %v2804, %v2828
  %vm2830 = vcmp.eq.f32.partialorder %v2804, inf
  %v2831 = vsel %vm2830, %v2804, %v2829
  %vm2832 = vcmp.eq.f32.partialorder %v2804, 0.0
  %v2833 = vand.u32 %v2804, 2147483648
  %v2834 = vsel %vm2832, %v2833, %v2831
  %v2835 = vrsqrt.pop %v2805
  %v2836 = vmul.f32 %v2835, %v2805
  %v2837 = vmul.f32 %v2836, %v2835
  %v2838 = vmul.f32 0.5, %v2837
  %v2839 = vsub.f32 1.5, %v2838
  %v2840 = vmul.f32 %v2835, %v2839
  %v2841 = vmul.f32 %v2805, %v2840
  %vm2842 = vcmp.eq.f32.partialorder %v2805, inf
  %v2843 = vsel %vm2842, %v2805, %v2841
  %vm2844 = vcmp.eq.f32.partialorder %v2805, 0.0
  %v2845 = vand.u32 %v2805, 2147483648
  %v2846 = vsel %vm2844, %v2845, %v2843
  %v2847 = vrsqrt.pop %v2806
  %v2848 = vmul.f32 %v2847, %v2806
  %v2849 = vmul.f32 %v2848, %v2847
  %v2850 = vmul.f32 0.5, %v2849
  %v2851 = vsub.f32 1.5, %v2850
  %v2852 = vmul.f32 %v2847, %v2851
  %v2853 = vmul.f32 %v2806, %v2852
  %vm2854 = vcmp.eq.f32.partialorder %v2806, inf
  %v2855 = vsel %vm2854, %v2806, %v2853
  %vm2856 = vcmp.eq.f32.partialorder %v2806, 0.0
  %v2857 = vand.u32 %v2806, 2147483648
  %v2858 = vsel %vm2856, %v2857, %v2855
  %v2859 = vrsqrt.pop %v2807
  %v2860 = vmul.f32 %v2859, %v2807
  %v2861 = vmul.f32 %v2860, %v2859
  %v2862 = vmul.f32 0.5, %v2861
  %v2863 = vsub.f32 1.5, %v2862
  %v2864 = vmul.f32 %v2859, %v2863
  %v2865 = vmul.f32 %v2807, %v2864
  %vm2866 = vcmp.eq.f32.partialorder %v2807, inf
  %v2867 = vsel %vm2866, %v2807, %v2865
  %vm2868 = vcmp.eq.f32.partialorder %v2807, 0.0
  %v2869 = vand.u32 %v2807, 2147483648
  %v2870 = vsel %vm2868, %v2869, %v2867
  %v2871 = vrsqrt.pop %v2808
  %v2872 = vmul.f32 %v2871, %v2808
  %v2873 = vmul.f32 %v2872, %v2871
  %v2874 = vmul.f32 0.5, %v2873
  %v2875 = vsub.f32 1.5, %v2874
  %v2876 = vmul.f32 %v2871, %v2875
  %v2877 = vmul.f32 %v2808, %v2876
  %vm2878 = vcmp.eq.f32.partialorder %v2808, inf
  %v2879 = vsel %vm2878, %v2808, %v2877
  %vm2880 = vcmp.eq.f32.partialorder %v2808, 0.0
  %v2881 = vand.u32 %v2808, 2147483648
  %v2882 = vsel %vm2880, %v2881, %v2879
  %v2883 = vrsqrt.pop %v2809
  %v2884 = vmul.f32 %v2883, %v2809
  %v2885 = vmul.f32 %v2884, %v2883
  %v2886 = vmul.f32 0.5, %v2885
  %v2887 = vsub.f32 1.5, %v2886
  %v2888 = vmul.f32 %v2883, %v2887
  %v2889 = vmul.f32 %v2809, %v2888
  %vm2890 = vcmp.eq.f32.partialorder %v2809, inf
  %v2891 = vsel %vm2890, %v2809, %v2889
  %vm2892 = vcmp.eq.f32.partialorder %v2809, 0.0
  %v2893 = vand.u32 %v2809, 2147483648
  %v2894 = vsel %vm2892, %v2893, %v2891
  %v2895 = vrsqrt.pop %v2810
  %v2896 = vmul.f32 %v2895, %v2810
  %v2897 = vmul.f32 %v2896, %v2895
  %v2898 = vmul.f32 0.5, %v2897
  %v2899 = vsub.f32 1.5, %v2898
  %v2900 = vmul.f32 %v2895, %v2899
  %v2901 = vmul.f32 %v2810, %v2900
  %vm2902 = vcmp.eq.f32.partialorder %v2810, inf
  %v2903 = vsel %vm2902, %v2810, %v2901
  %vm2904 = vcmp.eq.f32.partialorder %v2810, 0.0
  %v2905 = vand.u32 %v2810, 2147483648
  %v2906 = vsel %vm2904, %v2905, %v2903
  %2908 = vset.pattern.permute.xlu0 0
  %2909 = vperm.xlu0 %2908, %v2822
  %v2910 = vpop.permute.xlu0 %2909
  %2913 = vset.pattern.permute.xlu0 0
  %2914 = vperm.xlu0 %2913, %v2834
  %v2915 = vpop.permute.xlu0 %2914
  %2918 = vset.pattern.permute.xlu0 0
  %2919 = vperm.xlu0 %2918, %v2846
  %v2920 = vpop.permute.xlu0 %2919
  %2923 = vset.pattern.permute.xlu0 0
  %2924 = vperm.xlu0 %2923, %v2858
  %v2925 = vpop.permute.xlu0 %2924
  %2928 = vset.pattern.permute.xlu0 0
  %2929 = vperm.xlu0 %2928, %v2870
  %v2930 = vpop.permute.xlu0 %2929
  %2933 = vset.pattern.permute.xlu0 0
  %2934 = vperm.xlu0 %2933, %v2882
  %v2935 = vpop.permute.xlu0 %2934
  %2938 = vset.pattern.permute.xlu0 0
  %2939 = vperm.xlu0 %2938, %v2894
  %v2940 = vpop.permute.xlu0 %2939
  %2943 = vset.pattern.permute.xlu0 0
  %2944 = vperm.xlu0 %2943, %v2906
  %v2945 = vpop.permute.xlu0 %2944
  %v2947 = vmul.f32 %v2910, %v370
  %v2948 = vmul.f32 %v2915, %v370
  %v2949 = vmul.f32 %v2920, %v370
  %v2950 = vmul.f32 %v2925, %v370
  %v2951 = vmul.f32 %v2930, %v370
  %v2952 = vmul.f32 %v2935, %v370
  %v2953 = vmul.f32 %v2940, %v370
  %v2954 = vmul.f32 %v2945, %v370
  %v2956 = vsel %vm77, %v2715, 0
  %v2959 = vsel %vm77, %v2716, 0
  %v2962 = vsel %vm77, %v2717, 0
  %v2965 = vsel %vm77, %v2718, 0
  %v2968 = vsel %vm77, %v2719, 0
  %v2971 = vsel %vm77, %v2720, 0
  %v2974 = vsel %vm77, %v2721, 0
  %v2977 = vsel %vm77, %v2722, 0
  %2979 = vmatpush.msra.mxu0 0.0
  %2980 = vmatpush.msra.mxu0 0.0
  %2981 = vmatpush.msra.mxu0 0.0
  %2982 = vmatpush.msra.mxu0 0.0
  %2983 = vmatpush.msra.mxu0 0.0
  %2984 = vmatpush.msra.mxu0 0.0
  %2985 = vmatpush.msra.mxu0 0.0
  %2986 = vmatpush.msra.mxu0 0.0
  %2987 = vmatpush.msra.mxu0 0.0
  %2988 = vmatpush.msra.mxu0 0.0
  %2989 = vmatpush.msra.mxu0 0.0
  %2990 = vmatpush.msra.mxu0 0.0
  %2991 = vmatpush.msra.mxu0 0.0
  %2992 = vmatpush.msra.mxu0 0.0
  %2993 = vmatpush.msra.mxu0 0.0
  %2994 = vmatpush.msra.mxu0 %v395
  %2995 = vmatmul.f32.gmra.mxu0 %v2956
  %v2996 = vpop.f32.mrf.mxu0
  %v2997 = vadd.f32 %v2947, %v2996
  %2998 = vmatmul.f32.gmra.mxu0 %v2959
  %v2999 = vpop.f32.mrf.mxu0
  %v3000 = vadd.f32 %v2948, %v2999
  %3001 = vmatmul.f32.gmra.mxu0 %v2962
  %v3002 = vpop.f32.mrf.mxu0
  %v3003 = vadd.f32 %v2949, %v3002
  %3004 = vmatmul.f32.gmra.mxu0 %v2965
  %v3005 = vpop.f32.mrf.mxu0
  %v3006 = vadd.f32 %v2950, %v3005
  %3007 = vmatmul.f32.gmra.mxu0 %v2968
  %v3008 = vpop.f32.mrf.mxu0
  %v3009 = vadd.f32 %v2951, %v3008
  %3010 = vmatmul.f32.gmra.mxu0 %v2971
  %v3011 = vpop.f32.mrf.mxu0
  %v3012 = vadd.f32 %v2952, %v3011
  %3013 = vmatmul.f32.gmra.mxu0 %v2974
  %v3014 = vpop.f32.mrf.mxu0
  %v3015 = vadd.f32 %v2953, %v3014
  %3016 = vmatmul.f32.gmra.mxu0 %v2977
  %v3017 = vpop.f32.mrf.mxu0
  %v3018 = vadd.f32 %v2954, %v3017
  %3019 = vdwg.mxu0
  %v3020 = vadd.f32 %v2997, %v115
  %v3021 = vadd.f32 %v3000, %v118
  %v3022 = vadd.f32 %v3003, %v121
  %v3023 = vadd.f32 %v3006, %v124
  %v3024 = vadd.f32 %v3009, %v127
  %v3025 = vadd.f32 %v3012, %v130
  %v3026 = vadd.f32 %v3015, %v133
  %v3027 = vadd.f32 %v3018, %v136
  %3036 = vrot.lane.b32.xlu0 %v3020, 64
  %v3037 = vpop.permute.xlu0 %3036
  %3038 = vrot.lane.b32.xlu0 %v3021, 64
  %v3039 = vpop.permute.xlu0 %3038
  %3040 = vrot.lane.b32.xlu0 %v3022, 64
  %v3041 = vpop.permute.xlu0 %3040
  %3042 = vrot.lane.b32.xlu0 %v3023, 64
  %v3043 = vpop.permute.xlu0 %3042
  %3044 = vrot.lane.b32.xlu0 %v3024, 64
  %v3045 = vpop.permute.xlu0 %3044
  %3046 = vrot.lane.b32.xlu0 %v3025, 64
  %v3047 = vpop.permute.xlu0 %3046
  %3048 = vrot.lane.b32.xlu0 %v3026, 64
  %v3049 = vpop.permute.xlu0 %3048
  %3050 = vrot.lane.b32.xlu0 %v3027, 64
  %v3051 = vpop.permute.xlu0 %3050
  %v3060 = vmul.f32 %v34, %v3037
  %v3061 = vmul.f32 %v36, %v3039
  %v3062 = vmul.f32 %v38, %v3041
  %v3063 = vmul.f32 %v40, %v3043
  %v3064 = vmul.f32 %v42, %v3045
  %v3065 = vmul.f32 %v44, %v3047
  %v3066 = vmul.f32 %v46, %v3049
  %v3067 = vmul.f32 %v48, %v3051
  %3076 = vrot.lane.b32.xlu0 %v3060, 64
  %v3077 = vpop.permute.xlu0 %3076
  %3078 = vrot.lane.b32.xlu0 %v3061, 64
  %v3079 = vpop.permute.xlu0 %3078
  %3080 = vrot.lane.b32.xlu0 %v3062, 64
  %v3081 = vpop.permute.xlu0 %3080
  %3082 = vrot.lane.b32.xlu0 %v3063, 64
  %v3083 = vpop.permute.xlu0 %3082
  %3084 = vrot.lane.b32.xlu0 %v3064, 64
  %v3085 = vpop.permute.xlu0 %3084
  %3086 = vrot.lane.b32.xlu0 %v3065, 64
  %v3087 = vpop.permute.xlu0 %3086
  %3088 = vrot.lane.b32.xlu0 %v3066, 64
  %v3089 = vpop.permute.xlu0 %3088
  %3090 = vrot.lane.b32.xlu0 %v3067, 64
  %v3091 = vpop.permute.xlu0 %3090
  %v3100 = vadd.f32 %v2651, %v3077
  %v3101 = vadd.f32 %v2652, %v3079
  %v3102 = vadd.f32 %v2653, %v3081
  %v3103 = vadd.f32 %v2654, %v3083
  %v3104 = vadd.f32 %v2655, %v3085
  %v3105 = vadd.f32 %v2656, %v3087
  %v3106 = vadd.f32 %v2657, %v3089
  %v3107 = vadd.f32 %v2658, %v3091
  %3108 = vset.pattern.permute.xlu0 7
  %3109 = vperm.xlu0 %3108, %v470
  %v3110 = vpop.permute.xlu0 %3109
  %3111 = vset.pattern.permute.xlu0 7
  %3112 = vperm.xlu0 %3111, %v471
  %v3113 = vpop.permute.xlu0 %3112
  %3114 = vset.pattern.permute.xlu0 7
  %3115 = vperm.xlu0 %3114, %v472
  %v3116 = vpop.permute.xlu0 %3115
  %3117 = vset.pattern.permute.xlu0 7
  %3118 = vperm.xlu0 %3117, %v473
  %v3119 = vpop.permute.xlu0 %3118
  %3120 = vset.pattern.permute.xlu0 7
  %3121 = vperm.xlu0 %3120, %v474
  %v3122 = vpop.permute.xlu0 %3121
  %3123 = vset.pattern.permute.xlu0 7
  %3124 = vperm.xlu0 %3123, %v475
  %v3125 = vpop.permute.xlu0 %3124
  %3126 = vset.pattern.permute.xlu0 7
  %3127 = vperm.xlu0 %3126, %v476
  %v3128 = vpop.permute.xlu0 %3127
  %3129 = vset.pattern.permute.xlu0 7
  %3130 = vperm.xlu0 %3129, %v477
  %v3131 = vpop.permute.xlu0 %3130
  %vm3132 = vcmp.eq.s32.totalorder %v3110, 1
  %vm3133 = vcmp.eq.s32.totalorder %v3113, 1
  %vm3134 = vcmp.eq.s32.totalorder %v3116, 1
  %vm3135 = vcmp.eq.s32.totalorder %v3119, 1
  %vm3136 = vcmp.eq.s32.totalorder %v3122, 1
  %vm3137 = vcmp.eq.s32.totalorder %v3125, 1
  %vm3138 = vcmp.eq.s32.totalorder %v3128, 1
  %vm3139 = vcmp.eq.s32.totalorder %v3131, 1
  %3140 = vrot.lane.b32.xlu0 %v25, 107
  %v3141 = vpop.permute.xlu0 %3140
  %3142 = vrot.lane.b32.xlu0 %v26, 107
  %v3143 = vpop.permute.xlu0 %3142
  %3144 = vrot.lane.b32.xlu0 %v27, 107
  %v3145 = vpop.permute.xlu0 %3144
  %3146 = vrot.lane.b32.xlu0 %v28, 107
  %v3147 = vpop.permute.xlu0 %3146
  %3148 = vrot.lane.b32.xlu0 %v29, 107
  %v3149 = vpop.permute.xlu0 %3148
  %3150 = vrot.lane.b32.xlu0 %v30, 107
  %v3151 = vpop.permute.xlu0 %3150
  %3152 = vrot.lane.b32.xlu0 %v31, 107
  %v3153 = vpop.permute.xlu0 %3152
  %3154 = vrot.lane.b32.xlu0 %v32, 107
  %v3155 = vpop.permute.xlu0 %3154
  %v3164 = vsel %vm3132, %v25, %v3141
  %v3165 = vsel %vm3133, %v26, %v3143
  %v3166 = vsel %vm3134, %v27, %v3145
  %v3167 = vsel %vm3135, %v28, %v3147
  %v3168 = vsel %vm3136, %v29, %v3149
  %v3169 = vsel %vm3137, %v30, %v3151
  %v3170 = vsel %vm3138, %v31, %v3153
  %v3171 = vsel %vm3139, %v32, %v3155
  %v3172 = vsub.f32 %v3164, %v60
  %v3173 = vsub.f32 %v3165, %v62
  %v3174 = vsub.f32 %v3166, %v64
  %v3175 = vsub.f32 %v3167, %v66
  %v3176 = vsub.f32 %v3168, %v68
  %v3177 = vsub.f32 %v3169, %v70
  %v3178 = vsub.f32 %v3170, %v72
  %v3179 = vsub.f32 %v3171, %v74
  %v3180 = vmul.f32 %v3172, %v3172
  %v3181 = vmul.f32 %v3173, %v3173
  %v3182 = vmul.f32 %v3174, %v3174
  %v3183 = vmul.f32 %v3175, %v3175
  %v3184 = vmul.f32 %v3176, %v3176
  %v3185 = vmul.f32 %v3177, %v3177
  %v3186 = vmul.f32 %v3178, %v3178
  %v3187 = vmul.f32 %v3179, %v3179
  %3196 = vrot.lane.b32.xlu0 %v3180, 127
  %v3197 = vpop.permute.xlu0 %3196
  %3198 = vrot.lane.b32.xlu0 %v3181, 127
  %v3199 = vpop.permute.xlu0 %3198
  %3200 = vrot.lane.b32.xlu0 %v3182, 127
  %v3201 = vpop.permute.xlu0 %3200
  %3202 = vrot.lane.b32.xlu0 %v3183, 127
  %v3203 = vpop.permute.xlu0 %3202
  %3204 = vrot.lane.b32.xlu0 %v3184, 127
  %v3205 = vpop.permute.xlu0 %3204
  %3206 = vrot.lane.b32.xlu0 %v3185, 127
  %v3207 = vpop.permute.xlu0 %3206
  %3208 = vrot.lane.b32.xlu0 %v3186, 127
  %v3209 = vpop.permute.xlu0 %3208
  %3210 = vrot.lane.b32.xlu0 %v3187, 127
  %v3211 = vpop.permute.xlu0 %3210
  %v3220 = vadd.f32 %v3180, %v3197
  %v3221 = vadd.f32 %v3181, %v3199
  %v3222 = vadd.f32 %v3182, %v3201
  %v3223 = vadd.f32 %v3183, %v3203
  %v3224 = vadd.f32 %v3184, %v3205
  %v3225 = vadd.f32 %v3185, %v3207
  %v3226 = vadd.f32 %v3186, %v3209
  %v3227 = vadd.f32 %v3187, %v3211
  %3228 = vrot.lane.b32.xlu0 %v3180, 126
  %v3229 = vpop.permute.xlu0 %3228
  %3230 = vrot.lane.b32.xlu0 %v3181, 126
  %v3231 = vpop.permute.xlu0 %3230
  %3232 = vrot.lane.b32.xlu0 %v3182, 126
  %v3233 = vpop.permute.xlu0 %3232
  %3234 = vrot.lane.b32.xlu0 %v3183, 126
  %v3235 = vpop.permute.xlu0 %3234
  %3236 = vrot.lane.b32.xlu0 %v3184, 126
  %v3237 = vpop.permute.xlu0 %3236
  %3238 = vrot.lane.b32.xlu0 %v3185, 126
  %v3239 = vpop.permute.xlu0 %3238
  %3240 = vrot.lane.b32.xlu0 %v3186, 126
  %v3241 = vpop.permute.xlu0 %3240
  %3242 = vrot.lane.b32.xlu0 %v3187, 126
  %v3243 = vpop.permute.xlu0 %3242
  %v3252 = vadd.f32 %v3220, %v3229
  %v3253 = vadd.f32 %v3221, %v3231
  %v3254 = vadd.f32 %v3222, %v3233
  %v3255 = vadd.f32 %v3223, %v3235
  %v3256 = vadd.f32 %v3224, %v3237
  %v3257 = vadd.f32 %v3225, %v3239
  %v3258 = vadd.f32 %v3226, %v3241
  %v3259 = vadd.f32 %v3227, %v3243
  %v3260 = vrsqrt.pop %v3252
  %v3261 = vmul.f32 %v3260, %v3252
  %v3262 = vmul.f32 %v3261, %v3260
  %v3263 = vmul.f32 0.5, %v3262
  %v3264 = vsub.f32 1.5, %v3263
  %v3265 = vmul.f32 %v3260, %v3264
  %v3266 = vmul.f32 %v3252, %v3265
  %vm3267 = vcmp.eq.f32.partialorder %v3252, inf
  %v3268 = vsel %vm3267, %v3252, %v3266
  %vm3269 = vcmp.eq.f32.partialorder %v3252, 0.0
  %v3270 = vand.u32 %v3252, 2147483648
  %v3271 = vsel %vm3269, %v3270, %v3268
  %v3272 = vrsqrt.pop %v3253
  %v3273 = vmul.f32 %v3272, %v3253
  %v3274 = vmul.f32 %v3273, %v3272
  %v3275 = vmul.f32 0.5, %v3274
  %v3276 = vsub.f32 1.5, %v3275
  %v3277 = vmul.f32 %v3272, %v3276
  %v3278 = vmul.f32 %v3253, %v3277
  %vm3279 = vcmp.eq.f32.partialorder %v3253, inf
  %v3280 = vsel %vm3279, %v3253, %v3278
  %vm3281 = vcmp.eq.f32.partialorder %v3253, 0.0
  %v3282 = vand.u32 %v3253, 2147483648
  %v3283 = vsel %vm3281, %v3282, %v3280
  %v3284 = vrsqrt.pop %v3254
  %v3285 = vmul.f32 %v3284, %v3254
  %v3286 = vmul.f32 %v3285, %v3284
  %v3287 = vmul.f32 0.5, %v3286
  %v3288 = vsub.f32 1.5, %v3287
  %v3289 = vmul.f32 %v3284, %v3288
  %v3290 = vmul.f32 %v3254, %v3289
  %vm3291 = vcmp.eq.f32.partialorder %v3254, inf
  %v3292 = vsel %vm3291, %v3254, %v3290
  %vm3293 = vcmp.eq.f32.partialorder %v3254, 0.0
  %v3294 = vand.u32 %v3254, 2147483648
  %v3295 = vsel %vm3293, %v3294, %v3292
  %v3296 = vrsqrt.pop %v3255
  %v3297 = vmul.f32 %v3296, %v3255
  %v3298 = vmul.f32 %v3297, %v3296
  %v3299 = vmul.f32 0.5, %v3298
  %v3300 = vsub.f32 1.5, %v3299
  %v3301 = vmul.f32 %v3296, %v3300
  %v3302 = vmul.f32 %v3255, %v3301
  %vm3303 = vcmp.eq.f32.partialorder %v3255, inf
  %v3304 = vsel %vm3303, %v3255, %v3302
  %vm3305 = vcmp.eq.f32.partialorder %v3255, 0.0
  %v3306 = vand.u32 %v3255, 2147483648
  %v3307 = vsel %vm3305, %v3306, %v3304
  %v3308 = vrsqrt.pop %v3256
  %v3309 = vmul.f32 %v3308, %v3256
  %v3310 = vmul.f32 %v3309, %v3308
  %v3311 = vmul.f32 0.5, %v3310
  %v3312 = vsub.f32 1.5, %v3311
  %v3313 = vmul.f32 %v3308, %v3312
  %v3314 = vmul.f32 %v3256, %v3313
  %vm3315 = vcmp.eq.f32.partialorder %v3256, inf
  %v3316 = vsel %vm3315, %v3256, %v3314
  %vm3317 = vcmp.eq.f32.partialorder %v3256, 0.0
  %v3318 = vand.u32 %v3256, 2147483648
  %v3319 = vsel %vm3317, %v3318, %v3316
  %v3320 = vrsqrt.pop %v3257
  %v3321 = vmul.f32 %v3320, %v3257
  %v3322 = vmul.f32 %v3321, %v3320
  %v3323 = vmul.f32 0.5, %v3322
  %v3324 = vsub.f32 1.5, %v3323
  %v3325 = vmul.f32 %v3320, %v3324
  %v3326 = vmul.f32 %v3257, %v3325
  %vm3327 = vcmp.eq.f32.partialorder %v3257, inf
  %v3328 = vsel %vm3327, %v3257, %v3326
  %vm3329 = vcmp.eq.f32.partialorder %v3257, 0.0
  %v3330 = vand.u32 %v3257, 2147483648
  %v3331 = vsel %vm3329, %v3330, %v3328
  %v3332 = vrsqrt.pop %v3258
  %v3333 = vmul.f32 %v3332, %v3258
  %v3334 = vmul.f32 %v3333, %v3332
  %v3335 = vmul.f32 0.5, %v3334
  %v3336 = vsub.f32 1.5, %v3335
  %v3337 = vmul.f32 %v3332, %v3336
  %v3338 = vmul.f32 %v3258, %v3337
  %vm3339 = vcmp.eq.f32.partialorder %v3258, inf
  %v3340 = vsel %vm3339, %v3258, %v3338
  %vm3341 = vcmp.eq.f32.partialorder %v3258, 0.0
  %v3342 = vand.u32 %v3258, 2147483648
  %v3343 = vsel %vm3341, %v3342, %v3340
  %v3344 = vrsqrt.pop %v3259
  %v3345 = vmul.f32 %v3344, %v3259
  %v3346 = vmul.f32 %v3345, %v3344
  %v3347 = vmul.f32 0.5, %v3346
  %v3348 = vsub.f32 1.5, %v3347
  %v3349 = vmul.f32 %v3344, %v3348
  %v3350 = vmul.f32 %v3259, %v3349
  %vm3351 = vcmp.eq.f32.partialorder %v3259, inf
  %v3352 = vsel %vm3351, %v3259, %v3350
  %vm3353 = vcmp.eq.f32.partialorder %v3259, 0.0
  %v3354 = vand.u32 %v3259, 2147483648
  %v3355 = vsel %vm3353, %v3354, %v3352
  %3357 = vset.pattern.permute.xlu0 0
  %3358 = vperm.xlu0 %3357, %v3271
  %v3359 = vpop.permute.xlu0 %3358
  %3362 = vset.pattern.permute.xlu0 0
  %3363 = vperm.xlu0 %3362, %v3283
  %v3364 = vpop.permute.xlu0 %3363
  %3367 = vset.pattern.permute.xlu0 0
  %3368 = vperm.xlu0 %3367, %v3295
  %v3369 = vpop.permute.xlu0 %3368
  %3372 = vset.pattern.permute.xlu0 0
  %3373 = vperm.xlu0 %3372, %v3307
  %v3374 = vpop.permute.xlu0 %3373
  %3377 = vset.pattern.permute.xlu0 0
  %3378 = vperm.xlu0 %3377, %v3319
  %v3379 = vpop.permute.xlu0 %3378
  %3382 = vset.pattern.permute.xlu0 0
  %3383 = vperm.xlu0 %3382, %v3331
  %v3384 = vpop.permute.xlu0 %3383
  %3387 = vset.pattern.permute.xlu0 0
  %3388 = vperm.xlu0 %3387, %v3343
  %v3389 = vpop.permute.xlu0 %3388
  %3392 = vset.pattern.permute.xlu0 0
  %3393 = vperm.xlu0 %3392, %v3355
  %v3394 = vpop.permute.xlu0 %3393
  %v3396 = vmul.f32 %v3359, %v370
  %v3397 = vmul.f32 %v3364, %v370
  %v3398 = vmul.f32 %v3369, %v370
  %v3399 = vmul.f32 %v3374, %v370
  %v3400 = vmul.f32 %v3379, %v370
  %v3401 = vmul.f32 %v3384, %v370
  %v3402 = vmul.f32 %v3389, %v370
  %v3403 = vmul.f32 %v3394, %v370
  %v3405 = vsel %vm77, %v3164, 0
  %v3408 = vsel %vm77, %v3165, 0
  %v3411 = vsel %vm77, %v3166, 0
  %v3414 = vsel %vm77, %v3167, 0
  %v3417 = vsel %vm77, %v3168, 0
  %v3420 = vsel %vm77, %v3169, 0
  %v3423 = vsel %vm77, %v3170, 0
  %v3426 = vsel %vm77, %v3171, 0
  %3428 = vmatpush.msra.mxu0 0.0
  %3429 = vmatpush.msra.mxu0 0.0
  %3430 = vmatpush.msra.mxu0 0.0
  %3431 = vmatpush.msra.mxu0 0.0
  %3432 = vmatpush.msra.mxu0 0.0
  %3433 = vmatpush.msra.mxu0 0.0
  %3434 = vmatpush.msra.mxu0 0.0
  %3435 = vmatpush.msra.mxu0 0.0
  %3436 = vmatpush.msra.mxu0 0.0
  %3437 = vmatpush.msra.mxu0 0.0
  %3438 = vmatpush.msra.mxu0 0.0
  %3439 = vmatpush.msra.mxu0 0.0
  %3440 = vmatpush.msra.mxu0 0.0
  %3441 = vmatpush.msra.mxu0 0.0
  %3442 = vmatpush.msra.mxu0 0.0
  %3443 = vmatpush.msra.mxu0 %v395
  %3444 = vmatmul.f32.gmra.mxu0 %v3405
  %v3445 = vpop.f32.mrf.mxu0
  %v3446 = vadd.f32 %v3396, %v3445
  %3447 = vmatmul.f32.gmra.mxu0 %v3408
  %v3448 = vpop.f32.mrf.mxu0
  %v3449 = vadd.f32 %v3397, %v3448
  %3450 = vmatmul.f32.gmra.mxu0 %v3411
  %v3451 = vpop.f32.mrf.mxu0
  %v3452 = vadd.f32 %v3398, %v3451
  %3453 = vmatmul.f32.gmra.mxu0 %v3414
  %v3454 = vpop.f32.mrf.mxu0
  %v3455 = vadd.f32 %v3399, %v3454
  %3456 = vmatmul.f32.gmra.mxu0 %v3417
  %v3457 = vpop.f32.mrf.mxu0
  %v3458 = vadd.f32 %v3400, %v3457
  %3459 = vmatmul.f32.gmra.mxu0 %v3420
  %v3460 = vpop.f32.mrf.mxu0
  %v3461 = vadd.f32 %v3401, %v3460
  %3462 = vmatmul.f32.gmra.mxu0 %v3423
  %v3463 = vpop.f32.mrf.mxu0
  %v3464 = vadd.f32 %v3402, %v3463
  %3465 = vmatmul.f32.gmra.mxu0 %v3426
  %v3466 = vpop.f32.mrf.mxu0
  %v3467 = vadd.f32 %v3403, %v3466
  %3468 = vdwg.mxu0
  %v3469 = vadd.f32 %v3446, %v115
  %v3470 = vadd.f32 %v3449, %v118
  %v3471 = vadd.f32 %v3452, %v121
  %v3472 = vadd.f32 %v3455, %v124
  %v3473 = vadd.f32 %v3458, %v127
  %v3474 = vadd.f32 %v3461, %v130
  %v3475 = vadd.f32 %v3464, %v133
  %v3476 = vadd.f32 %v3467, %v136
  %3485 = vrot.lane.b32.xlu0 %v3469, 96
  %v3486 = vpop.permute.xlu0 %3485
  %3487 = vrot.lane.b32.xlu0 %v3470, 96
  %v3488 = vpop.permute.xlu0 %3487
  %3489 = vrot.lane.b32.xlu0 %v3471, 96
  %v3490 = vpop.permute.xlu0 %3489
  %3491 = vrot.lane.b32.xlu0 %v3472, 96
  %v3492 = vpop.permute.xlu0 %3491
  %3493 = vrot.lane.b32.xlu0 %v3473, 96
  %v3494 = vpop.permute.xlu0 %3493
  %3495 = vrot.lane.b32.xlu0 %v3474, 96
  %v3496 = vpop.permute.xlu0 %3495
  %3497 = vrot.lane.b32.xlu0 %v3475, 96
  %v3498 = vpop.permute.xlu0 %3497
  %3499 = vrot.lane.b32.xlu0 %v3476, 96
  %v3500 = vpop.permute.xlu0 %3499
  %v3509 = vmul.f32 %v34, %v3486
  %v3510 = vmul.f32 %v36, %v3488
  %v3511 = vmul.f32 %v38, %v3490
  %v3512 = vmul.f32 %v40, %v3492
  %v3513 = vmul.f32 %v42, %v3494
  %v3514 = vmul.f32 %v44, %v3496
  %v3515 = vmul.f32 %v46, %v3498
  %v3516 = vmul.f32 %v48, %v3500
  %3525 = vrot.lane.b32.xlu0 %v3509, 32
  %v3526 = vpop.permute.xlu0 %3525
  %3527 = vrot.lane.b32.xlu0 %v3510, 32
  %v3528 = vpop.permute.xlu0 %3527
  %3529 = vrot.lane.b32.xlu0 %v3511, 32
  %v3530 = vpop.permute.xlu0 %3529
  %3531 = vrot.lane.b32.xlu0 %v3512, 32
  %v3532 = vpop.permute.xlu0 %3531
  %3533 = vrot.lane.b32.xlu0 %v3513, 32
  %v3534 = vpop.permute.xlu0 %3533
  %3535 = vrot.lane.b32.xlu0 %v3514, 32
  %v3536 = vpop.permute.xlu0 %3535
  %3537 = vrot.lane.b32.xlu0 %v3515, 32
  %v3538 = vpop.permute.xlu0 %3537
  %3539 = vrot.lane.b32.xlu0 %v3516, 32
  %v3540 = vpop.permute.xlu0 %3539
  %v3549 = vadd.f32 %v3100, %v3526
  %v3550 = vadd.f32 %v3101, %v3528
  %v3551 = vadd.f32 %v3102, %v3530
  %v3552 = vadd.f32 %v3103, %v3532
  %v3553 = vadd.f32 %v3104, %v3534
  %v3554 = vadd.f32 %v3105, %v3536
  %v3555 = vadd.f32 %v3106, %v3538
  %v3556 = vadd.f32 %v3107, %v3540
  %v3557 = vmul.f32 %v3549, 0.125
  %v3558 = vmul.f32 %v3550, 0.125
  %v3559 = vmul.f32 %v3551, 0.125
  %v3560 = vmul.f32 %v3552, 0.125
  %v3561 = vmul.f32 %v3553, 0.125
  %v3562 = vmul.f32 %v3554, 0.125
  %v3563 = vmul.f32 %v3555, 0.125
  %v3564 = vmul.f32 %v3556, 0.125
  %vm3565 = vcmask 261120
  %3566 = vst.msk [vmem:[%s4] sm:$0xff] %vm3565, %v3557
  %3567 = vst.msk [vmem:[%s4 + $0x8] sm:$0xff] %vm3565, %v3558
  %3568 = vst.msk [vmem:[%s4 + $0x10] sm:$0xff] %vm3565, %v3559
  %3569 = vst.msk [vmem:[%s4 + $0x18] sm:$0xff] %vm3565, %v3560
  %3570 = vst.msk [vmem:[%s4 + $0x20] sm:$0xff] %vm3565, %v3561
  %3571 = vst.msk [vmem:[%s4 + $0x28] sm:$0xff] %vm3565, %v3562
  %3572 = vst.msk [vmem:[%s4 + $0x30] sm:$0xff] %vm3565, %v3563
  %3573 = vst.msk [vmem:[%s4 + $0x38] sm:$0xff] %vm3565, %v3564
  // Predicated region
  $region18: #{voxel_pooling_relation.1} parent=0 // pred_check
    _
  $region19: #{voxel_pooling_relation.1} parent=0 // pred_check_branch
    %3575 = sbr.rel (0) target = $region21
  $region20: #{voxel_pooling_relation.1} parent=0 // pred_region
    _
  $region21: #{voxel_pooling_relation.1} parent=0 // pred_fallthru
    _
  // Predicated region
  $region22: #{voxel_pooling_relation.1} parent=0 // pred_check
    _
  $region23: #{voxel_pooling_relation.1} parent=0 // pred_check_branch
    %3577 = sbr.rel (0) target = $region25
  $region24: #{voxel_pooling_relation.1} parent=0 // pred_region
    _
  $region25: #{voxel_pooling_relation.1} parent=0 // pred_fallthru
    _

</llo_original>
